<compile_context>
chip_gen: v7x
topology: tpu7x:2x2x1
jax: 0.10.0
libtpu: 0.0.40
codegen_flags: <defaults>
</compile_context>

<pallas_src>
import functools

import jax
import jax.numpy as jnp
from jax.experimental import pallas as pl
from jax.experimental.pallas import tpu as pltpu

_VMEM_LIMIT = 32 * 1024 * 1024     # safe on v5e/v6e (128 MiB phys) and v7x (64 MiB phys)


def _sigmoid(v):
    return 1.0 / (1.0 + jnp.exp(-v))


# --------------------------------------------------------------------------- wrapper helpers
def _interleave_gates(wf, wb, h):
    """Per-direction [r|z|n] columns -> combined [r_f|r_b|z_f|z_b|n_f|n_b] (6H lanes)."""
    parts = []
    for g in range(3):
        parts.append(wf[..., g * h:(g + 1) * h])
        parts.append(wb[..., g * h:(g + 1) * h])
    return jnp.concatenate(parts, axis=-1)


def _round_up(v, m):
    return ((v + m - 1) // m) * m


def _pick_row_tile(rows):
    if rows <= 8:
        return rows
    # >=2 tiles so the 'parallel' axis can shard across v7x's two TensorCores,
    # capped at 512 rows so long sequences stream through VMEM.
    return min(512, _round_up(pl.cdiv(rows, 2), 8))


def _pick_time_chunk(seq_len, batch, lanes):
    # Two double-buffered f32 gate-slab chunks must stay well under the scoped-VMEM budget.
    per_step = max(batch, 8) * lanes * 4 * 4       # 2 gi inputs x 2 buffers, f32
    budget = 8 * 1024 * 1024
    if seq_len * per_step <= budget:
        return seq_len
    max_tc = max(1, budget // per_step)
    for cand in range(min(seq_len, max_tc), 0, -1):
        if seq_len % cand == 0:                    # keep chunks dividing T (exact reversal maps)
            return cand
    return 1


def _pick_unroll(tc):
    if tc <= 32:
        return tc                                  # full unroll for small chunks
    for u in (4, 2):
        if tc % u == 0:
            return u
    return 1


# --------------------------------------------------------------------------- kernels
def _proj_single_kernel(x_ref, w_ref, b_ref, o_ref):
    """Time-parallel input projection, both directions fused into one 384-lane matmul."""
    o_ref[...] = (jnp.dot(x_ref[...], w_ref[...], preferred_element_type=jnp.float32)
                  + b_ref[...])


def _proj_pair_kernel(xf_ref, xb_ref, wt_ref, wb_ref, b_ref, o_ref):
    """Same as above for layers >= 1: previous layer's fwd/bwd slabs feed a split-K matmul."""
    o_ref[...] = (jnp.dot(xf_ref[...], wt_ref[...], preferred_element_type=jnp.float32)
                  + jnp.dot(xb_ref[...], wb_ref[...], preferred_element_type=jnp.float32)
                  + b_ref[...])


def _gru_fused_cell(gi, gh, h, hidden):
    """Both directions at once; lanes [r_f|r_b|z_f|z_b|n_f|n_b], h = [hf|hb]."""
    h2, h4 = 2 * hidden, 4 * hidden
    rz = _sigmoid(gi[:, :h4] + gh[:, :h4])          # one 256-lane sigmoid (EUP single-issue)
    r = rz[:, :h2]
    z = rz[:, h2:]
    n = jnp.tanh(gi[:, h4:] + r * gh[:, h4:])
    return (1.0 - z) * n + z * h


def _recurrent_kernel(gi_f_ref, gi_b_ref, whh_ref, bhh_ref, of_ref, ob_ref, h_ref,
                      *, hidden, tc, unroll):
    """Sequential bidirectional GRU recurrence over one T-chunk (fwd chunk c, bwd chunk nc-1-c)."""
    hdim = hidden
    lanes = 6 * hdim

    @pl.when(pl.program_id(0) == 0)
    def _init():
        h_ref[...] = jnp.zeros_like(h_ref)

    whh = whh_ref[...]                              # (2H, 6H) bf16, resident in vregs
    bhh = bhh_ref[...]                              # (1, 6H) f32
    bsz = gi_f_ref.shape[1]
    lane = jax.lax.broadcasted_iota(jnp.int32, (bsz, lanes), 1)
    fwd_mask = (lane % (2 * hdim)) < hdim           # fwd-direction gate lanes

    def body(t, h):
        # forward gates from local time t, backward gates from local time tc-1-t
        gi = jnp.where(fwd_mask, gi_f_ref[t], gi_b_ref[tc - 1 - t])
        gh = jnp.dot(h.astype(jnp.bfloat16), whh,
                     preferred_element_type=jnp.float32) + bhh
        h_new = _gru_fused_cell(gi, gh, h, hdim)
        of_ref[t] = h_new[:, :hdim].astype(of_ref.dtype)
        ob_ref[tc - 1 - t] = h_new[:, hdim:].astype(ob_ref.dtype)
        return h_new

    h_ref[...] = jax.lax.fori_loop(0, tc, body, h_ref[...], unroll=unroll)


def _recurrent_final_kernel(gi_f_ref, gi_b_ref, whh_ref, bhh_ref, wfc_ref, bfc_ref,
                            o_ref, h_ref, acc_ref, *, hidden, tc, unroll, inv_len):
    """Last layer: recurrence + fused temporal-mean accumulation + Linear head (no seq writeback)."""
    hdim = hidden
    lanes = 6 * hdim

    @pl.when(pl.program_id(0) == 0)
    def _init():
        h_ref[...] = jnp.zeros_like(h_ref)
        acc_ref[...] = jnp.zeros_like(acc_ref)

    whh = whh_ref[...]
    bhh = bhh_ref[...]
    bsz = gi_f_ref.shape[1]
    lane = jax.lax.broadcasted_iota(jnp.int32, (bsz, lanes), 1)
    fwd_mask = (lane % (2 * hdim)) < hdim

    def body(t, carry):
        h, acc = carry
        gi = jnp.where(fwd_mask, gi_f_ref[t], gi_b_ref[tc - 1 - t])
        gh = jnp.dot(h.astype(jnp.bfloat16), whh,
                     preferred_element_type=jnp.float32) + bhh
        h_new = _gru_fused_cell(gi, gh, h, hdim)
        return h_new, acc + h_new                   # pooled sum stays f32

    h_fin, acc_fin = jax.lax.fori_loop(0, tc, body, (h_ref[...], acc_ref[...]),
                                       unroll=unroll)
    h_ref[...] = h_fin
    acc_ref[...] = acc_fin

    @pl.when(pl.program_id(0) == pl.num_programs(0) - 1)
    def _finish():
        pooled = (acc_ref[...] * inv_len).astype(jnp.bfloat16)      # (B, 2H)
        o_ref[...] = (jnp.dot(pooled, wfc_ref[...],
                              preferred_element_type=jnp.float32) + bfc_ref[...])


# --------------------------------------------------------------------------- pallas_call wrappers
def _input_proj_single(x2d, w, b):
    rows, in_dim = x2d.shape
    lanes = w.shape[1]
    row_tile = _pick_row_tile(rows)
    return pl.pallas_call(
        _proj_single_kernel,
        out_shape=jax.ShapeDtypeStruct((rows, lanes), jnp.float32),
        grid_spec=pltpu.PrefetchScalarGridSpec(
            num_scalar_prefetch=0,
            grid=(pl.cdiv(rows, row_tile),),
            in_specs=[
                pl.BlockSpec((row_tile, in_dim), lambda i: (i, 0)),
                pl.BlockSpec((in_dim, lanes), lambda i: (0, 0)),
                pl.BlockSpec((1, lanes), lambda i: (0, 0)),
            ],
            out_specs=pl.BlockSpec((row_tile, lanes), lambda i: (i, 0)),
        ),
        compiler_params=pltpu.CompilerParams(
            dimension_semantics=("parallel",), vmem_limit_bytes=_VMEM_LIMIT),
    )(x2d, w, b)


def _input_proj_pair(xf2d, xb2d, w_top, w_bot, b):
    rows, hdim = xf2d.shape
    lanes = w_top.shape[1]
    row_tile = _pick_row_tile(rows)
    return pl.pallas_call(
        _proj_pair_kernel,
        out_shape=jax.ShapeDtypeStruct((rows, lanes), jnp.float32),
        grid_spec=pltpu.PrefetchScalarGridSpec(
            num_scalar_prefetch=0,
            grid=(pl.cdiv(rows, row_tile),),
            in_specs=[
                pl.BlockSpec((row_tile, hdim), lambda i: (i, 0)),
                pl.BlockSpec((row_tile, hdim), lambda i: (i, 0)),
                pl.BlockSpec((hdim, lanes), lambda i: (0, 0)),
                pl.BlockSpec((hdim, lanes), lambda i: (0, 0)),
                pl.BlockSpec((1, lanes), lambda i: (0, 0)),
            ],
            out_specs=pl.BlockSpec((row_tile, lanes), lambda i: (i, 0)),
        ),
        compiler_params=pltpu.CompilerParams(
            dimension_semantics=("parallel",), vmem_limit_bytes=_VMEM_LIMIT),
    )(xf2d, xb2d, w_top, w_bot, b)


def _bigru_layer(gi, w_blk, b_hh, *, hidden):
    T, B, lanes = gi.shape
    tc = _pick_time_chunk(T, B, lanes)
    nc = T // tc
    unroll = _pick_unroll(tc)
    kernel = functools.partial(_recurrent_kernel, hidden=hidden, tc=tc, unroll=unroll)
    return pl.pallas_call(
        kernel,
        out_shape=(jax.ShapeDtypeStruct((T, B, hidden), jnp.bfloat16),
                   jax.ShapeDtypeStruct((T, B, hidden), jnp.bfloat16)),
        grid_spec=pltpu.PrefetchScalarGridSpec(
            num_scalar_prefetch=0,
            grid=(nc,),
            in_specs=[
                pl.BlockSpec((tc, B, lanes), lambda c: (c, 0, 0)),            # fwd chunk
                pl.BlockSpec((tc, B, lanes), lambda c: (nc - 1 - c, 0, 0)),   # bwd chunk
                pl.BlockSpec((2 * hidden, lanes), lambda c: (0, 0)),
                pl.BlockSpec((1, lanes), lambda c: (0, 0)),
            ],
            out_specs=(pl.BlockSpec((tc, B, hidden), lambda c: (c, 0, 0)),
                       pl.BlockSpec((tc, B, hidden), lambda c: (nc - 1 - c, 0, 0))),
            scratch_shapes=[pltpu.VMEM((B, 2 * hidden), jnp.float32)]),       # carried [hf|hb]
        compiler_params=pltpu.CompilerParams(
            dimension_semantics=("arbitrary",), vmem_limit_bytes=_VMEM_LIMIT),
    )(gi, gi, w_blk, b_hh)


def _bigru_final_layer(gi, w_blk, b_hh, w_fc, b_fc, *, hidden):
    T, B, lanes = gi.shape
    C = w_fc.shape[1]
    tc = _pick_time_chunk(T, B, lanes)
    nc = T // tc
    unroll = _pick_unroll(tc)
    kernel = functools.partial(_recurrent_final_kernel, hidden=hidden, tc=tc,
                               unroll=unroll, inv_len=1.0 / T)
    return pl.pallas_call(
        kernel,
        out_shape=jax.ShapeDtypeStruct((B, C), jnp.float32),
        grid_spec=pltpu.PrefetchScalarGridSpec(
            num_scalar_prefetch=0,
            grid=(nc,),
            in_specs=[
                pl.BlockSpec((tc, B, lanes), lambda c: (c, 0, 0)),
                pl.BlockSpec((tc, B, lanes), lambda c: (nc - 1 - c, 0, 0)),
                pl.BlockSpec((2 * hidden, lanes), lambda c: (0, 0)),
                pl.BlockSpec((1, lanes), lambda c: (0, 0)),
                pl.BlockSpec((2 * hidden, C), lambda c: (0, 0)),
                pl.BlockSpec((1, C), lambda c: (0, 0)),
            ],
            out_specs=pl.BlockSpec((B, C), lambda c: (0, 0)),
            scratch_shapes=[pltpu.VMEM((B, 2 * hidden), jnp.float32),         # carried [hf|hb]
                            pltpu.VMEM((B, 2 * hidden), jnp.float32)]),       # pooled sum
        compiler_params=pltpu.CompilerParams(
            dimension_semantics=("arbitrary",), vmem_limit_bytes=_VMEM_LIMIT),
    )(gi, gi, w_blk, b_hh, w_fc, b_fc)


# --------------------------------------------------------------------------- model forward
def bigru_forward(x, params, *, hidden_size=64, num_layers=2):
    """Eval-mode forward of BiGRU.  x: (B, T, input_size) f32 -> (B, num_classes) f32."""
    B, T, _ = x.shape
    H = hidden_size
    x_tb = jnp.swapaxes(x, 0, 1).astype(jnp.bfloat16)          # (T, B, In) bf16 MXU operand
    seq_f = seq_b = None
    logits = None
    for l in range(num_layers):
        wif = jnp.transpose(params[f"weight_ih_l{l}"]).astype(jnp.float32)            # (In, 3H)
        wib = jnp.transpose(params[f"weight_ih_l{l}_reverse"]).astype(jnp.float32)
        bif = params[f"bias_ih_l{l}"].reshape(1, -1).astype(jnp.float32)
        bib = params[f"bias_ih_l{l}_reverse"].reshape(1, -1).astype(jnp.float32)
        b_ih = _interleave_gates(bif, bib, H)                                          # (1, 6H)

        # TODO(synk): for very long T the gate slab could be fused into the recurrent kernel
        #             (emit_pipeline over T-chunks) to drop the f32 gi HBM round trip entirely.
        if l == 0:
            w_in = _interleave_gates(wif, wib, H).astype(jnp.bfloat16)                 # (In, 6H)
            gi2d = _input_proj_single(x_tb.reshape(T * B, -1), w_in, b_ih)
        else:
            w_full = _interleave_gates(wif, wib, H)                                    # (2H, 6H)
            gi2d = _input_proj_pair(seq_f.reshape(T * B, H), seq_b.reshape(T * B, H),
                                    w_full[:H].astype(jnp.bfloat16),
                                    w_full[H:].astype(jnp.bfloat16), b_ih)
        gi = gi2d.reshape(T, B, 6 * H)

        whf = jnp.transpose(params[f"weight_hh_l{l}"]).astype(jnp.float32)             # (H, 3H)
        whb = jnp.transpose(params[f"weight_hh_l{l}_reverse"]).astype(jnp.float32)
        zeros = jnp.zeros_like(whf)
        w_blk = jnp.concatenate([_interleave_gates(whf, zeros, H),                     # block-diag
                                 _interleave_gates(zeros, whb, H)],
                                axis=0).astype(jnp.bfloat16)                           # (2H, 6H)
        bhf = params[f"bias_hh_l{l}"].reshape(1, -1).astype(jnp.float32)
        bhb = params[f"bias_hh_l{l}_reverse"].reshape(1, -1).astype(jnp.float32)
        b_hh = _interleave_gates(bhf, bhb, H)                                          # (1, 6H)

        if l < num_layers - 1:
            # TODO(synk): training-mode inter-layer dropout not implemented (eval: identity).
            seq_f, seq_b = _bigru_layer(gi, w_blk, b_hh, hidden=H)                     # 2x(T,B,H) bf16
        else:
            w_fc = jnp.transpose(params["fc_w"]).astype(jnp.bfloat16)                  # (2H, C)
            b_fc = params["fc_b"].reshape(1, -1).astype(jnp.float32)
            # TODO(synk): self.drop before the mean is also eval-mode identity.
            logits = _bigru_final_layer(gi, w_blk, b_hh, w_fc, b_fc, hidden=H)
    return logits


# --------------------------------------------------------------------------- reference
def _reference(x, params, *, hidden_size=64, num_layers=2):
    """Independent pure-JAX eval-mode reference (lax.scan GRU); bf16 matmul operands with
    f32 accumulation to match the kernel's MXU precision."""
    B, T, _ = x.shape
    H = hidden_size

    def dot(a, b):
        return jnp.dot(a.astype(jnp.bfloat16), b.astype(jnp.bfloat16),
                       preferred_element_type=jnp.float32)

    def run_dir(xs_tbi, wih, whh, bih, bhh, reverse):
        seq = xs_tbi[::-1] if reverse else xs_tbi

        def step(h, x_t):
            gi = dot(x_t, wih.T) + bih
            gh = dot(h, whh.T) + bhh
            r = 1.0 / (1.0 + jnp.exp(-(gi[:, :H] + gh[:, :H])))
            z = 1.0 / (1.0 + jnp.exp(-(gi[:, H:2 * H] + gh[:, H:2 * H])))
            n = jnp.tanh(gi[:, 2 * H:] + r * gh[:, 2 * H:])
            h_new = (1.0 - z) * n + z * h
            return h_new, h_new

        h0 = jnp.zeros((B, H), jnp.float32)
        _, ys = jax.lax.scan(step, h0, seq)
        return ys[::-1] if reverse else ys

    seq = jnp.swapaxes(x, 0, 1).astype(jnp.float32)
    for l in range(num_layers):
        f = run_dir(seq, params[f"weight_ih_l{l}"], params[f"weight_hh_l{l}"],
                    params[f"bias_ih_l{l}"], params[f"bias_hh_l{l}"], False)
        b = run_dir(seq, params[f"weight_ih_l{l}_reverse"],
                    params[f"weight_hh_l{l}_reverse"],
                    params[f"bias_ih_l{l}_reverse"],
                    params[f"bias_hh_l{l}_reverse"], True)
        seq = jnp.concatenate([f, b], axis=-1)
    pooled = jnp.mean(seq, axis=0)
    return dot(pooled, params["fc_w"].T) + params["fc_b"][None, :]


if __name__ == "__main__":
    B, T = 2, 16
    input_size, hidden, num_classes, num_layers = 12, 64, 2, 2
    G = 3 * hidden

    keys = iter(jax.random.split(jax.random.PRNGKey(0), 40))

    def rnd(shape, scale=0.1):
        return scale * jax.random.normal(next(keys), shape, jnp.float32)

    params = {}
    in_sizes = [input_size] + [2 * hidden] * (num_layers - 1)
    for l in range(num_layers):
        for suffix in ("", "_reverse"):
            params[f"weight_ih_l{l}{suffix}"] = rnd((G, in_sizes[l]))
            params[f"weight_hh_l{l}{suffix}"] = rnd((G, hidden))
            params[f"bias_ih_l{l}{suffix}"] = rnd((G,))
            params[f"bias_hh_l{l}{suffix}"] = rnd((G,))
    params["fc_w"] = rnd((num_classes, 2 * hidden))
    params["fc_b"] = rnd((num_classes,))

    x = rnd((B, T, input_size), scale=1.0)                     # (batch, seq, 12-lead ECG)

    fwd = jax.jit(functools.partial(bigru_forward, hidden_size=hidden,
                                    num_layers=num_layers))
    out = jax.block_until_ready(fwd(x, params))

    ref = _reference(x, params, hidden_size=hidden, num_layers=num_layers)
    assert out.shape == (B, num_classes)
    assert jnp.allclose(out, ref, atol=1e-3, rtol=1e-3), "mismatch vs reference"

    print("KERNEL_OK")
</pallas_src>

<mosaic_0001>
module attributes {stable_mosaic.version = 11 : i64} {
  func.func @_proj_single_kernel(%arg0: i32, %arg1: memref<16x12xbf16, #tpu.memory_space<vmem>>, %arg2: memref<12x384xbf16, #tpu.memory_space<vmem>>, %arg3: memref<1x384xf32, #tpu.memory_space<vmem>>, %arg4: memref<16x384xf32, #tpu.memory_space<vmem>>) attributes {dimension_semantics = [#tpu.dimension_semantics<parallel>], iteration_bounds = array<i64: 2>, scalar_prefetch = 0 : i64, scratch_operands = 0 : i64, tpu.core_type = #tpu.core_type<tc>, window_params = [{transform_indices = @transform_0, window_bounds = array<i64: 16, 12>}, {pipeline_mode = #tpu.pipeline_mode<synchronous>, transform_indices = @transform_1, window_bounds = array<i64: 12, 384>}, {pipeline_mode = #tpu.pipeline_mode<synchronous>, transform_indices = @transform_2, window_bounds = array<i64: 1, 384>}, {transform_indices = @transform_3, window_bounds = array<i64: 16, 384>}]} {
    %c0 = arith.constant 0 : index
    %c0_0 = arith.constant 0 : index
    %0 = vector.load %arg1[%c0, %c0_0] : memref<16x12xbf16, #tpu.memory_space<vmem>>, vector<16x12xbf16>
    %c0_1 = arith.constant 0 : index
    %c0_2 = arith.constant 0 : index
    %1 = vector.load %arg2[%c0_1, %c0_2] : memref<12x384xbf16, #tpu.memory_space<vmem>>, vector<12x384xbf16>
    %cst = arith.constant dense<0.000000e+00> : vector<16x384xf32>
    %2 = tpu.matmul %0, %1, %cst {dimension_numbers = #tpu.dot_dimension_numbers<[1], [0], [0], [1], [0, 0, 1, 1], [], []>} : vector<16x12xbf16>, vector<12x384xbf16>, vector<16x384xf32> -> vector<16x384xf32>
    %c0_3 = arith.constant 0 : index
    %c0_4 = arith.constant 0 : index
    %3 = vector.load %arg3[%c0_3, %c0_4] : memref<1x384xf32, #tpu.memory_space<vmem>>, vector<1x384xf32>
    %4 = vector.broadcast %3 : vector<1x384xf32> to vector<16x384xf32>
    %5 = arith.addf %2, %4 : vector<16x384xf32>
    %c0_5 = arith.constant 0 : index
    %c0_6 = arith.constant 0 : index
    %6 = vector.load %arg4[%c0_5, %c0_6] : memref<16x384xf32, #tpu.memory_space<vmem>>, vector<16x384xf32>
    tpu.vector_store %arg4[%c0_5, %c0_6], %5 {strides = array<i32>} : memref<16x384xf32, #tpu.memory_space<vmem>>, vector<16x384xf32>,
    return
  }
  func.func @transform_0(%arg0: i32) -> (i32, i32) {
    %c0_i32 = arith.constant 0 : i32
    %c0_i32_0 = arith.constant 0 : i32
    return %arg0, %c0_i32 : i32, i32
  }
  func.func @transform_1(%arg0: i32) -> (i32, i32) {
    %c0_i32 = arith.constant 0 : i32
    %c0_i32_0 = arith.constant 0 : i32
    %c0_i32_1 = arith.constant 0 : i32
    return %c0_i32, %c0_i32_0 : i32, i32
  }
  func.func @transform_2(%arg0: i32) -> (i32, i32) {
    %c0_i32 = arith.constant 0 : i32
    %c0_i32_0 = arith.constant 0 : i32
    %c0_i32_1 = arith.constant 0 : i32
    return %c0_i32, %c0_i32_0 : i32, i32
  }
  func.func @transform_3(%arg0: i32) -> (i32, i32) {
    %c0_i32 = arith.constant 0 : i32
    %c0_i32_0 = arith.constant 0 : i32
    return %arg0, %c0_i32 : i32, i32
  }
}

module attributes {stable_mosaic.version = 11 : i64} {
  func.func @_recurrent_kernel(%arg0: i32, %arg1: memref<16x2x384xf32, #tpu.memory_space<vmem>>, %arg2: memref<16x2x384xf32, #tpu.memory_space<vmem>>, %arg3: memref<128x384xbf16, #tpu.memory_space<vmem>>, %arg4: memref<1x384xf32, #tpu.memory_space<vmem>>, %arg5: memref<16x2x64xbf16, #tpu.memory_space<vmem>>, %arg6: memref<16x2x64xbf16, #tpu.memory_space<vmem>>, %arg7: memref<2x128xf32, #tpu.memory_space<vmem>>) attributes {dimension_semantics = [#tpu.dimension_semantics<arbitrary>], iteration_bounds = array<i64: 1>, scalar_prefetch = 0 : i64, scratch_operands = 1 : i64, tpu.core_type = #tpu.core_type<tc>, window_params = [{transform_indices = @transform_0, window_bounds = array<i64: 16, 2, 384>}, {transform_indices = @transform_1, window_bounds = array<i64: 16, 2, 384>}, {pipeline_mode = #tpu.pipeline_mode<synchronous>, transform_indices = @transform_2, window_bounds = array<i64: 128, 384>}, {pipeline_mode = #tpu.pipeline_mode<synchronous>, transform_indices = @transform_3, window_bounds = array<i64: 1, 384>}, {transform_indices = @transform_4, window_bounds = array<i64: 16, 2, 64>}, {transform_indices = @transform_5, window_bounds = array<i64: 16, 2, 64>}]} {
    %c0_i32 = arith.constant 0 : i32
    %0 = arith.cmpi eq, %arg0, %c0_i32 : i32
    %1 = arith.extui %0 : i1 to i32
    %c0_i32_0 = arith.constant 0 : i32
    %2 = arith.cmpi ne, %1, %c0_i32_0 : i32
    scf.if %2 {
      %cst_253 = arith.constant 0.000000e+00 : f32
      %778 = vector.broadcast %cst_253 : f32 to vector<2x128xf32>
      %c0_254 = arith.constant 0 : index
      %c0_255 = arith.constant 0 : index
      %779 = vector.load %arg7[%c0_254, %c0_255] : memref<2x128xf32, #tpu.memory_space<vmem>>, vector<2x128xf32>
      tpu.vector_store %arg7[%c0_254, %c0_255], %778 {strides = array<i32>} : memref<2x128xf32, #tpu.memory_space<vmem>>, vector<2x128xf32>,
    } else {
    }
    %c0 = arith.constant 0 : index
    %c0_1 = arith.constant 0 : index
    %3 = vector.load %arg3[%c0, %c0_1] : memref<128x384xbf16, #tpu.memory_space<vmem>>, vector<128x384xbf16>
    %c0_2 = arith.constant 0 : index
    %c0_3 = arith.constant 0 : index
    %4 = vector.load %arg4[%c0_2, %c0_3] : memref<1x384xf32, #tpu.memory_space<vmem>>, vector<1x384xf32>
    %5 = tpu.iota {dimensions = array<i32: 1>} : vector<2x384xi32>
    %c128_i32 = arith.constant 128 : i32
    %c0_i32_4 = arith.constant 0 : i32
    %6 = arith.cmpi eq, %c128_i32, %c0_i32_4 : i32
    %c1_i32 = arith.constant 1 : i32
    %7 = arith.select %6, %c1_i32, %c128_i32 : i32
    %8 = vector.broadcast %7 : i32 to vector<2x384xi32>
    %9 = arith.remsi %5, %8 : vector<2x384xi32>
    %c0_i32_5 = arith.constant 0 : i32
    %10 = vector.broadcast %c0_i32_5 : i32 to vector<2x384xi32>
    %11 = arith.cmpi ne, %9, %10 : vector<2x384xi32>
    %c0_i32_6 = arith.constant 0 : i32
    %12 = vector.broadcast %c0_i32_6 : i32 to vector<2x384xi32>
    %13 = arith.cmpi slt, %9, %12 : vector<2x384xi32>
    %c0_i32_7 = arith.constant 0 : i32
    %14 = arith.cmpi slt, %7, %c0_i32_7 : i32
    %15 = vector.broadcast %14 : i1 to vector<2x384xi1>
    %16 = vector.broadcast %15 : vector<2x384xi1> to vector<2x384xi1>
    %17 = arith.xori %13, %16 : vector<2x384xi1>
    %18 = arith.andi %17, %11 : vector<2x384xi1>
    %19 = vector.broadcast %7 : i32 to vector<2x384xi32>
    %20 = arith.addi %9, %19 : vector<2x384xi32>
    %21 = arith.select %18, %20, %9 : vector<2x384xi1>, vector<2x384xi32>
    %c64_i32 = arith.constant 64 : i32
    %22 = vector.broadcast %c64_i32 : i32 to vector<2x384xi32>
    %23 = arith.cmpi slt, %21, %22 : vector<2x384xi32>
    %c0_8 = arith.constant 0 : index
    %c0_9 = arith.constant 0 : index
    %24 = vector.load %arg7[%c0_8, %c0_9] : memref<2x128xf32, #tpu.memory_space<vmem>>, vector<2x128xf32>
    %c0_i32_10 = arith.constant 0 : i32
    %25 = arith.index_cast %c0_i32_10 : i32 to index
    %c0_11 = arith.constant 0 : index
    %c0_12 = arith.constant 0 : index
    %26 = vector.load %arg1[%25, %c0_11, %c0_12] : memref<16x2x384xf32, #tpu.memory_space<vmem>>, vector<1x2x384xf32>
    %27 = vector.shape_cast %26 : vector<1x2x384xf32> to vector<2x384xf32>
    %c15_i32 = arith.constant 15 : i32
    %28 = arith.subi %c15_i32, %c0_i32_10 : i32
    %29 = arith.index_cast %28 : i32 to index
    %c0_13 = arith.constant 0 : index
    %c0_14 = arith.constant 0 : index
    %30 = vector.load %arg2[%29, %c0_13, %c0_14] : memref<16x2x384xf32, #tpu.memory_space<vmem>>, vector<1x2x384xf32>
    %31 = vector.shape_cast %30 : vector<1x2x384xf32> to vector<2x384xf32>
    %32 = arith.select %23, %27, %31 : vector<2x384xi1>, vector<2x384xf32>
    %33 = arith.truncf %24 : vector<2x128xf32> to vector<2x128xbf16>
    %cst = arith.constant dense<0.000000e+00> : vector<2x384xf32>
    %34 = tpu.matmul %33, %3, %cst {dimension_numbers = #tpu.dot_dimension_numbers<[1], [0], [0], [1], [0, 0, 1, 1], [], []>} : vector<2x128xbf16>, vector<128x384xbf16>, vector<2x384xf32> -> vector<2x384xf32>
    %35 = vector.broadcast %4 : vector<1x384xf32> to vector<2x384xf32>
    %36 = arith.addf %34, %35 : vector<2x384xf32>
    %37 = vector.extract_strided_slice %32 {offsets = [0, 0], sizes = [2, 256], strides = [1, 1]} : vector<2x384xf32> to vector<2x256xf32>
    %38 = vector.extract_strided_slice %36 {offsets = [0, 0], sizes = [2, 256], strides = [1, 1]} : vector<2x384xf32> to vector<2x256xf32>
    %39 = arith.addf %37, %38 : vector<2x256xf32>
    %cst_15 = arith.constant 0.000000e+00 : f32
    %40 = vector.broadcast %cst_15 : f32 to vector<2x256xf32>
    %41 = arith.subf %40, %39 : vector<2x256xf32>
    %42 = math.exp %41 : vector<2x256xf32>
    %cst_16 = arith.constant 1.000000e+00 : f32
    %43 = vector.broadcast %cst_16 : f32 to vector<2x256xf32>
    %44 = arith.addf %43, %42 : vector<2x256xf32>
    %cst_17 = arith.constant 1.000000e+00 : f32
    %45 = vector.broadcast %cst_17 : f32 to vector<2x256xf32>
    %46 = arith.divf %45, %44 : vector<2x256xf32>
    %47 = vector.extract_strided_slice %46 {offsets = [0, 0], sizes = [2, 128], strides = [1, 1]} : vector<2x256xf32> to vector<2x128xf32>
    %48 = vector.extract_strided_slice %46 {offsets = [0, 128], sizes = [2, 128], strides = [1, 1]} : vector<2x256xf32> to vector<2x128xf32>
    %49 = vector.extract_strided_slice %32 {offsets = [0, 256], sizes = [2, 128], strides = [1, 1]} : vector<2x384xf32> to vector<2x128xf32>
    %50 = vector.extract_strided_slice %36 {offsets = [0, 256], sizes = [2, 128], strides = [1, 1]} : vector<2x384xf32> to vector<2x128xf32>
    %51 = arith.mulf %47, %50 : vector<2x128xf32>
    %52 = arith.addf %49, %51 : vector<2x128xf32>
    %53 = math.tanh %52 : vector<2x128xf32>
    %cst_18 = arith.constant 1.000000e+00 : f32
    %54 = vector.broadcast %cst_18 : f32 to vector<2x128xf32>
    %55 = arith.subf %54, %48 : vector<2x128xf32>
    %56 = arith.mulf %55, %53 : vector<2x128xf32>
    %57 = arith.mulf %48, %24 : vector<2x128xf32>
    %58 = arith.addf %56, %57 : vector<2x128xf32>
    %59 = vector.extract_strided_slice %58 {offsets = [0, 0], sizes = [2, 64], strides = [1, 1]} : vector<2x128xf32> to vector<2x64xf32>
    %60 = arith.truncf %59 : vector<2x64xf32> to vector<2x64xbf16>
    %61 = arith.index_cast %c0_i32_10 : i32 to index
    %c0_19 = arith.constant 0 : index
    %c0_20 = arith.constant 0 : index
    %62 = vector.load %arg5[%61, %c0_19, %c0_20] : memref<16x2x64xbf16, #tpu.memory_space<vmem>>, vector<1x2x64xbf16>
    %63 = vector.shape_cast %62 : vector<1x2x64xbf16> to vector<2x64xbf16>
    %64 = vector.shape_cast %60 : vector<2x64xbf16> to vector<1x2x64xbf16>
    tpu.vector_store %arg5[%61, %c0_19, %c0_20], %64 {strides = array<i32>} : memref<16x2x64xbf16, #tpu.memory_space<vmem>>, vector<1x2x64xbf16>,
    %65 = vector.extract_strided_slice %58 {offsets = [0, 64], sizes = [2, 64], strides = [1, 1]} : vector<2x128xf32> to vector<2x64xf32>
    %66 = arith.truncf %65 : vector<2x64xf32> to vector<2x64xbf16>
    %c15_i32_21 = arith.constant 15 : i32
    %67 = arith.subi %c15_i32_21, %c0_i32_10 : i32
    %68 = arith.index_cast %67 : i32 to index
    %c0_22 = arith.constant 0 : index
    %c0_23 = arith.constant 0 : index
    %69 = vector.load %arg6[%68, %c0_22, %c0_23] : memref<16x2x64xbf16, #tpu.memory_space<vmem>>, vector<1x2x64xbf16>
    %70 = vector.shape_cast %69 : vector<1x2x64xbf16> to vector<2x64xbf16>
    %71 = vector.shape_cast %66 : vector<2x64xbf16> to vector<1x2x64xbf16>
    tpu.vector_store %arg6[%68, %c0_22, %c0_23], %71 {strides = array<i32>} : memref<16x2x64xbf16, #tpu.memory_space<vmem>>, vector<1x2x64xbf16>,
    %c1_i32_24 = arith.constant 1 : i32
    %72 = arith.index_cast %c1_i32_24 : i32 to index
    %c0_25 = arith.constant 0 : index
    %c0_26 = arith.constant 0 : index
    %73 = vector.load %arg1[%72, %c0_25, %c0_26] : memref<16x2x384xf32, #tpu.memory_space<vmem>>, vector<1x2x384xf32>
    %74 = vector.shape_cast %73 : vector<1x2x384xf32> to vector<2x384xf32>
    %c15_i32_27 = arith.constant 15 : i32
    %75 = arith.subi %c15_i32_27, %c1_i32_24 : i32
    %76 = arith.index_cast %75 : i32 to index
    %c0_28 = arith.constant 0 : index
    %c0_29 = arith.constant 0 : index
    %77 = vector.load %arg2[%76, %c0_28, %c0_29] : memref<16x2x384xf32, #tpu.memory_space<vmem>>, vector<1x2x384xf32>
    %78 = vector.shape_cast %77 : vector<1x2x384xf32> to vector<2x384xf32>
    %79 = arith.select %23, %74, %78 : vector<2x384xi1>, vector<2x384xf32>
    %80 = arith.truncf %58 : vector<2x128xf32> to vector<2x128xbf16>
    %cst_30 = arith.constant dense<0.000000e+00> : vector<2x384xf32>
    %81 = tpu.matmul %80, %3, %cst_30 {dimension_numbers = #tpu.dot_dimension_numbers<[1], [0], [0], [1], [0, 0, 1, 1], [], []>} : vector<2x128xbf16>, vector<128x384xbf16>, vector<2x384xf32> -> vector<2x384xf32>
    %82 = vector.broadcast %4 : vector<1x384xf32> to vector<2x384xf32>
    %83 = arith.addf %81, %82 : vector<2x384xf32>
    %84 = vector.extract_strided_slice %79 {offsets = [0, 0], sizes = [2, 256], strides = [1, 1]} : vector<2x384xf32> to vector<2x256xf32>
    %85 = vector.extract_strided_slice %83 {offsets = [0, 0], sizes = [2, 256], strides = [1, 1]} : vector<2x384xf32> to vector<2x256xf32>
    %86 = arith.addf %84, %85 : vector<2x256xf32>
    %cst_31 = arith.constant 0.000000e+00 : f32
    %87 = vector.broadcast %cst_31 : f32 to vector<2x256xf32>
    %88 = arith.subf %87, %86 : vector<2x256xf32>
    %89 = math.exp %88 : vector<2x256xf32>
    %cst_32 = arith.constant 1.000000e+00 : f32
    %90 = vector.broadcast %cst_32 : f32 to vector<2x256xf32>
    %91 = arith.addf %90, %89 : vector<2x256xf32>
    %cst_33 = arith.constant 1.000000e+00 : f32
    %92 = vector.broadcast %cst_33 : f32 to vector<2x256xf32>
    %93 = arith.divf %92, %91 : vector<2x256xf32>
    %94 = vector.extract_strided_slice %93 {offsets = [0, 0], sizes = [2, 128], strides = [1, 1]} : vector<2x256xf32> to vector<2x128xf32>
    %95 = vector.extract_strided_slice %93 {offsets = [0, 128], sizes = [2, 128], strides = [1, 1]} : vector<2x256xf32> to vector<2x128xf32>
    %96 = vector.extract_strided_slice %79 {offsets = [0, 256], sizes = [2, 128], strides = [1, 1]} : vector<2x384xf32> to vector<2x128xf32>
    %97 = vector.extract_strided_slice %83 {offsets = [0, 256], sizes = [2, 128], strides = [1, 1]} : vector<2x384xf32> to vector<2x128xf32>
    %98 = arith.mulf %94, %97 : vector<2x128xf32>
    %99 = arith.addf %96, %98 : vector<2x128xf32>
    %100 = math.tanh %99 : vector<2x128xf32>
    %cst_34 = arith.constant 1.000000e+00 : f32
    %101 = vector.broadcast %cst_34 : f32 to vector<2x128xf32>
    %102 = arith.subf %101, %95 : vector<2x128xf32>
    %103 = arith.mulf %102, %100 : vector<2x128xf32>
    %104 = arith.mulf %95, %58 : vector<2x128xf32>
    %105 = arith.addf %103, %104 : vector<2x128xf32>
    %106 = vector.extract_strided_slice %105 {offsets = [0, 0], sizes = [2, 64], strides = [1, 1]} : vector<2x128xf32> to vector<2x64xf32>
    %107 = arith.truncf %106 : vector<2x64xf32> to vector<2x64xbf16>
    %108 = arith.index_cast %c1_i32_24 : i32 to index
    %c0_35 = arith.constant 0 : index
    %c0_36 = arith.constant 0 : index
    %109 = vector.load %arg5[%108, %c0_35, %c0_36] : memref<16x2x64xbf16, #tpu.memory_space<vmem>>, vector<1x2x64xbf16>
    %110 = vector.shape_cast %109 : vector<1x2x64xbf16> to vector<2x64xbf16>
    %111 = vector.shape_cast %107 : vector<2x64xbf16> to vector<1x2x64xbf16>
    tpu.vector_store %arg5[%108, %c0_35, %c0_36], %111 {strides = array<i32>} : memref<16x2x64xbf16, #tpu.memory_space<vmem>>, vector<1x2x64xbf16>,
    %112 = vector.extract_strided_slice %105 {offsets = [0, 64], sizes = [2, 64], strides = [1, 1]} : vector<2x128xf32> to vector<2x64xf32>
    %113 = arith.truncf %112 : vector<2x64xf32> to vector<2x64xbf16>
    %c15_i32_37 = arith.constant 15 : i32
    %114 = arith.subi %c15_i32_37, %c1_i32_24 : i32
    %115 = arith.index_cast %114 : i32 to index
    %c0_38 = arith.constant 0 : index
    %c0_39 = arith.constant 0 : index
    %116 = vector.load %arg6[%115, %c0_38, %c0_39] : memref<16x2x64xbf16, #tpu.memory_space<vmem>>, vector<1x2x64xbf16>
    %117 = vector.shape_cast %116 : vector<1x2x64xbf16> to vector<2x64xbf16>
    %118 = vector.shape_cast %113 : vector<2x64xbf16> to vector<1x2x64xbf16>
    tpu.vector_store %arg6[%115, %c0_38, %c0_39], %118 {strides = array<i32>} : memref<16x2x64xbf16, #tpu.memory_space<vmem>>, vector<1x2x64xbf16>,
    %c2_i32 = arith.constant 2 : i32
    %119 = arith.index_cast %c2_i32 : i32 to index
    %c0_40 = arith.constant 0 : index
    %c0_41 = arith.constant 0 : index
    %120 = vector.load %arg1[%119, %c0_40, %c0_41] : memref<16x2x384xf32, #tpu.memory_space<vmem>>, vector<1x2x384xf32>
    %121 = vector.shape_cast %120 : vector<1x2x384xf32> to vector<2x384xf32>
    %c15_i32_42 = arith.constant 15 : i32
    %122 = arith.subi %c15_i32_42, %c2_i32 : i32
    %123 = arith.index_cast %122 : i32 to index
    %c0_43 = arith.constant 0 : index
    %c0_44 = arith.constant 0 : index
    %124 = vector.load %arg2[%123, %c0_43, %c0_44] : memref<16x2x384xf32, #tpu.memory_space<vmem>>, vector<1x2x384xf32>
    %125 = vector.shape_cast %124 : vector<1x2x384xf32> to vector<2x384xf32>
    %126 = arith.select %23, %121, %125 : vector<2x384xi1>, vector<2x384xf32>
    %127 = arith.truncf %105 : vector<2x128xf32> to vector<2x128xbf16>
    %cst_45 = arith.constant dense<0.000000e+00> : vector<2x384xf32>
    %128 = tpu.matmul %127, %3, %cst_45 {dimension_numbers = #tpu.dot_dimension_numbers<[1], [0], [0], [1], [0, 0, 1, 1], [], []>} : vector<2x128xbf16>, vector<128x384xbf16>, vector<2x384xf32> -> vector<2x384xf32>
    %129 = vector.broadcast %4 : vector<1x384xf32> to vector<2x384xf32>
    %130 = arith.addf %128, %129 : vector<2x384xf32>
    %131 = vector.extract_strided_slice %126 {offsets = [0, 0], sizes = [2, 256], strides = [1, 1]} : vector<2x384xf32> to vector<2x256xf32>
    %132 = vector.extract_strided_slice %130 {offsets = [0, 0], sizes = [2, 256], strides = [1, 1]} : vector<2x384xf32> to vector<2x256xf32>
    %133 = arith.addf %131, %132 : vector<2x256xf32>
    %cst_46 = arith.constant 0.000000e+00 : f32
    %134 = vector.broadcast %cst_46 : f32 to vector<2x256xf32>
    %135 = arith.subf %134, %133 : vector<2x256xf32>
    %136 = math.exp %135 : vector<2x256xf32>
    %cst_47 = arith.constant 1.000000e+00 : f32
    %137 = vector.broadcast %cst_47 : f32 to vector<2x256xf32>
    %138 = arith.addf %137, %136 : vector<2x256xf32>
    %cst_48 = arith.constant 1.000000e+00 : f32
    %139 = vector.broadcast %cst_48 : f32 to vector<2x256xf32>
    %140 = arith.divf %139, %138 : vector<2x256xf32>
    %141 = vector.extract_strided_slice %140 {offsets = [0, 0], sizes = [2, 128], strides = [1, 1]} : vector<2x256xf32> to vector<2x128xf32>
    %142 = vector.extract_strided_slice %140 {offsets = [0, 128], sizes = [2, 128], strides = [1, 1]} : vector<2x256xf32> to vector<2x128xf32>
    %143 = vector.extract_strided_slice %126 {offsets = [0, 256], sizes = [2, 128], strides = [1, 1]} : vector<2x384xf32> to vector<2x128xf32>
    %144 = vector.extract_strided_slice %130 {offsets = [0, 256], sizes = [2, 128], strides = [1, 1]} : vector<2x384xf32> to vector<2x128xf32>
    %145 = arith.mulf %141, %144 : vector<2x128xf32>
    %146 = arith.addf %143, %145 : vector<2x128xf32>
    %147 = math.tanh %146 : vector<2x128xf32>
    %cst_49 = arith.constant 1.000000e+00 : f32
    %148 = vector.broadcast %cst_49 : f32 to vector<2x128xf32>
    %149 = arith.subf %148, %142 : vector<2x128xf32>
    %150 = arith.mulf %149, %147 : vector<2x128xf32>
    %151 = arith.mulf %142, %105 : vector<2x128xf32>
    %152 = arith.addf %150, %151 : vector<2x128xf32>
    %153 = vector.extract_strided_slice %152 {offsets = [0, 0], sizes = [2, 64], strides = [1, 1]} : vector<2x128xf32> to vector<2x64xf32>
    %154 = arith.truncf %153 : vector<2x64xf32> to vector<2x64xbf16>
    %155 = arith.index_cast %c2_i32 : i32 to index
    %c0_50 = arith.constant 0 : index
    %c0_51 = arith.constant 0 : index
    %156 = vector.load %arg5[%155, %c0_50, %c0_51] : memref<16x2x64xbf16, #tpu.memory_space<vmem>>, vector<1x2x64xbf16>
    %157 = vector.shape_cast %156 : vector<1x2x64xbf16> to vector<2x64xbf16>
    %158 = vector.shape_cast %154 : vector<2x64xbf16> to vector<1x2x64xbf16>
    tpu.vector_store %arg5[%155, %c0_50, %c0_51], %158 {strides = array<i32>} : memref<16x2x64xbf16, #tpu.memory_space<vmem>>, vector<1x2x64xbf16>,
    %159 = vector.extract_strided_slice %152 {offsets = [0, 64], sizes = [2, 64], strides = [1, 1]} : vector<2x128xf32> to vector<2x64xf32>
    %160 = arith.truncf %159 : vector<2x64xf32> to vector<2x64xbf16>
    %c15_i32_52 = arith.constant 15 : i32
    %161 = arith.subi %c15_i32_52, %c2_i32 : i32
    %162 = arith.index_cast %161 : i32 to index
    %c0_53 = arith.constant 0 : index
    %c0_54 = arith.constant 0 : index
    %163 = vector.load %arg6[%162, %c0_53, %c0_54] : memref<16x2x64xbf16, #tpu.memory_space<vmem>>, vector<1x2x64xbf16>
    %164 = vector.shape_cast %163 : vector<1x2x64xbf16> to vector<2x64xbf16>
    %165 = vector.shape_cast %160 : vector<2x64xbf16> to vector<1x2x64xbf16>
    tpu.vector_store %arg6[%162, %c0_53, %c0_54], %165 {strides = array<i32>} : memref<16x2x64xbf16, #tpu.memory_space<vmem>>, vector<1x2x64xbf16>,
    %c3_i32 = arith.constant 3 : i32
    %166 = arith.index_cast %c3_i32 : i32 to index
    %c0_55 = arith.constant 0 : index
    %c0_56 = arith.constant 0 : index
    %167 = vector.load %arg1[%166, %c0_55, %c0_56] : memref<16x2x384xf32, #tpu.memory_space<vmem>>, vector<1x2x384xf32>
    %168 = vector.shape_cast %167 : vector<1x2x384xf32> to vector<2x384xf32>
    %c15_i32_57 = arith.constant 15 : i32
    %169 = arith.subi %c15_i32_57, %c3_i32 : i32
    %170 = arith.index_cast %169 : i32 to index
    %c0_58 = arith.constant 0 : index
    %c0_59 = arith.constant 0 : index
    %171 = vector.load %arg2[%170, %c0_58, %c0_59] : memref<16x2x384xf32, #tpu.memory_space<vmem>>, vector<1x2x384xf32>
    %172 = vector.shape_cast %171 : vector<1x2x384xf32> to vector<2x384xf32>
    %173 = arith.select %23, %168, %172 : vector<2x384xi1>, vector<2x384xf32>
    %174 = arith.truncf %152 : vector<2x128xf32> to vector<2x128xbf16>
    %cst_60 = arith.constant dense<0.000000e+00> : vector<2x384xf32>
    %175 = tpu.matmul %174, %3, %cst_60 {dimension_numbers = #tpu.dot_dimension_numbers<[1], [0], [0], [1], [0, 0, 1, 1], [], []>} : vector<2x128xbf16>, vector<128x384xbf16>, vector<2x384xf32> -> vector<2x384xf32>
    %176 = vector.broadcast %4 : vector<1x384xf32> to vector<2x384xf32>
    %177 = arith.addf %175, %176 : vector<2x384xf32>
    %178 = vector.extract_strided_slice %173 {offsets = [0, 0], sizes = [2, 256], strides = [1, 1]} : vector<2x384xf32> to vector<2x256xf32>
    %179 = vector.extract_strided_slice %177 {offsets = [0, 0], sizes = [2, 256], strides = [1, 1]} : vector<2x384xf32> to vector<2x256xf32>
    %180 = arith.addf %178, %179 : vector<2x256xf32>
    %cst_61 = arith.constant 0.000000e+00 : f32
    %181 = vector.broadcast %cst_61 : f32 to vector<2x256xf32>
    %182 = arith.subf %181, %180 : vector<2x256xf32>
    %183 = math.exp %182 : vector<2x256xf32>
    %cst_62 = arith.constant 1.000000e+00 : f32
    %184 = vector.broadcast %cst_62 : f32 to vector<2x256xf32>
    %185 = arith.addf %184, %183 : vector<2x256xf32>
    %cst_63 = arith.constant 1.000000e+00 : f32
    %186 = vector.broadcast %cst_63 : f32 to vector<2x256xf32>
    %187 = arith.divf %186, %185 : vector<2x256xf32>
    %188 = vector.extract_strided_slice %187 {offsets = [0, 0], sizes = [2, 128], strides = [1, 1]} : vector<2x256xf32> to vector<2x128xf32>
    %189 = vector.extract_strided_slice %187 {offsets = [0, 128], sizes = [2, 128], strides = [1, 1]} : vector<2x256xf32> to vector<2x128xf32>
    %190 = vector.extract_strided_slice %173 {offsets = [0, 256], sizes = [2, 128], strides = [1, 1]} : vector<2x384xf32> to vector<2x128xf32>
    %191 = vector.extract_strided_slice %177 {offsets = [0, 256], sizes = [2, 128], strides = [1, 1]} : vector<2x384xf32> to vector<2x128xf32>
    %192 = arith.mulf %188, %191 : vector<2x128xf32>
    %193 = arith.addf %190, %192 : vector<2x128xf32>
    %194 = math.tanh %193 : vector<2x128xf32>
    %cst_64 = arith.constant 1.000000e+00 : f32
    %195 = vector.broadcast %cst_64 : f32 to vector<2x128xf32>
    %196 = arith.subf %195, %189 : vector<2x128xf32>
    %197 = arith.mulf %196, %194 : vector<2x128xf32>
    %198 = arith.mulf %189, %152 : vector<2x128xf32>
    %199 = arith.addf %197, %198 : vector<2x128xf32>
    %200 = vector.extract_strided_slice %199 {offsets = [0, 0], sizes = [2, 64], strides = [1, 1]} : vector<2x128xf32> to vector<2x64xf32>
    %201 = arith.truncf %200 : vector<2x64xf32> to vector<2x64xbf16>
    %202 = arith.index_cast %c3_i32 : i32 to index
    %c0_65 = arith.constant 0 : index
    %c0_66 = arith.constant 0 : index
    %203 = vector.load %arg5[%202, %c0_65, %c0_66] : memref<16x2x64xbf16, #tpu.memory_space<vmem>>, vector<1x2x64xbf16>
    %204 = vector.shape_cast %203 : vector<1x2x64xbf16> to vector<2x64xbf16>
    %205 = vector.shape_cast %201 : vector<2x64xbf16> to vector<1x2x64xbf16>
    tpu.vector_store %arg5[%202, %c0_65, %c0_66], %205 {strides = array<i32>} : memref<16x2x64xbf16, #tpu.memory_space<vmem>>, vector<1x2x64xbf16>,
    %206 = vector.extract_strided_slice %199 {offsets = [0, 64], sizes = [2, 64], strides = [1, 1]} : vector<2x128xf32> to vector<2x64xf32>
    %207 = arith.truncf %206 : vector<2x64xf32> to vector<2x64xbf16>
    %c15_i32_67 = arith.constant 15 : i32
    %208 = arith.subi %c15_i32_67, %c3_i32 : i32
    %209 = arith.index_cast %208 : i32 to index
    %c0_68 = arith.constant 0 : index
    %c0_69 = arith.constant 0 : index
    %210 = vector.load %arg6[%209, %c0_68, %c0_69] : memref<16x2x64xbf16, #tpu.memory_space<vmem>>, vector<1x2x64xbf16>
    %211 = vector.shape_cast %210 : vector<1x2x64xbf16> to vector<2x64xbf16>
    %212 = vector.shape_cast %207 : vector<2x64xbf16> to vector<1x2x64xbf16>
    tpu.vector_store %arg6[%209, %c0_68, %c0_69], %212 {strides = array<i32>} : memref<16x2x64xbf16, #tpu.memory_space<vmem>>, vector<1x2x64xbf16>,
    %c4_i32 = arith.constant 4 : i32
    %213 = arith.index_cast %c4_i32 : i32 to index
    %c0_70 = arith.constant 0 : index
    %c0_71 = arith.constant 0 : index
    %214 = vector.load %arg1[%213, %c0_70, %c0_71] : memref<16x2x384xf32, #tpu.memory_space<vmem>>, vector<1x2x384xf32>
    %215 = vector.shape_cast %214 : vector<1x2x384xf32> to vector<2x384xf32>
    %c15_i32_72 = arith.constant 15 : i32
    %216 = arith.subi %c15_i32_72, %c4_i32 : i32
    %217 = arith.index_cast %216 : i32 to index
    %c0_73 = arith.constant 0 : index
    %c0_74 = arith.constant 0 : index
    %218 = vector.load %arg2[%217, %c0_73, %c0_74] : memref<16x2x384xf32, #tpu.memory_space<vmem>>, vector<1x2x384xf32>
    %219 = vector.shape_cast %218 : vector<1x2x384xf32> to vector<2x384xf32>
    %220 = arith.select %23, %215, %219 : vector<2x384xi1>, vector<2x384xf32>
    %221 = arith.truncf %199 : vector<2x128xf32> to vector<2x128xbf16>
    %cst_75 = arith.constant dense<0.000000e+00> : vector<2x384xf32>
    %222 = tpu.matmul %221, %3, %cst_75 {dimension_numbers = #tpu.dot_dimension_numbers<[1], [0], [0], [1], [0, 0, 1, 1], [], []>} : vector<2x128xbf16>, vector<128x384xbf16>, vector<2x384xf32> -> vector<2x384xf32>
    %223 = vector.broadcast %4 : vector<1x384xf32> to vector<2x384xf32>
    %224 = arith.addf %222, %223 : vector<2x384xf32>
    %225 = vector.extract_strided_slice %220 {offsets = [0, 0], sizes = [2, 256], strides = [1, 1]} : vector<2x384xf32> to vector<2x256xf32>
    %226 = vector.extract_strided_slice %224 {offsets = [0, 0], sizes = [2, 256], strides = [1, 1]} : vector<2x384xf32> to vector<2x256xf32>
    %227 = arith.addf %225, %226 : vector<2x256xf32>
    %cst_76 = arith.constant 0.000000e+00 : f32
    %228 = vector.broadcast %cst_76 : f32 to vector<2x256xf32>
    %229 = arith.subf %228, %227 : vector<2x256xf32>
    %230 = math.exp %229 : vector<2x256xf32>
    %cst_77 = arith.constant 1.000000e+00 : f32
    %231 = vector.broadcast %cst_77 : f32 to vector<2x256xf32>
    %232 = arith.addf %231, %230 : vector<2x256xf32>
    %cst_78 = arith.constant 1.000000e+00 : f32
    %233 = vector.broadcast %cst_78 : f32 to vector<2x256xf32>
    %234 = arith.divf %233, %232 : vector<2x256xf32>
    %235 = vector.extract_strided_slice %234 {offsets = [0, 0], sizes = [2, 128], strides = [1, 1]} : vector<2x256xf32> to vector<2x128xf32>
    %236 = vector.extract_strided_slice %234 {offsets = [0, 128], sizes = [2, 128], strides = [1, 1]} : vector<2x256xf32> to vector<2x128xf32>
    %237 = vector.extract_strided_slice %220 {offsets = [0, 256], sizes = [2, 128], strides = [1, 1]} : vector<2x384xf32> to vector<2x128xf32>
    %238 = vector.extract_strided_slice %224 {offsets = [0, 256], sizes = [2, 128], strides = [1, 1]} : vector<2x384xf32> to vector<2x128xf32>
    %239 = arith.mulf %235, %238 : vector<2x128xf32>
    %240 = arith.addf %237, %239 : vector<2x128xf32>
    %241 = math.tanh %240 : vector<2x128xf32>
    %cst_79 = arith.constant 1.000000e+00 : f32
    %242 = vector.broadcast %cst_79 : f32 to vector<2x128xf32>
    %243 = arith.subf %242, %236 : vector<2x128xf32>
    %244 = arith.mulf %243, %241 : vector<2x128xf32>
    %245 = arith.mulf %236, %199 : vector<2x128xf32>
    %246 = arith.addf %244, %245 : vector<2x128xf32>
    %247 = vector.extract_strided_slice %246 {offsets = [0, 0], sizes = [2, 64], strides = [1, 1]} : vector<2x128xf32> to vector<2x64xf32>
    %248 = arith.truncf %247 : vector<2x64xf32> to vector<2x64xbf16>
    %249 = arith.index_cast %c4_i32 : i32 to index
    %c0_80 = arith.constant 0 : index
    %c0_81 = arith.constant 0 : index
    %250 = vector.load %arg5[%249, %c0_80, %c0_81] : memref<16x2x64xbf16, #tpu.memory_space<vmem>>, vector<1x2x64xbf16>
    %251 = vector.shape_cast %250 : vector<1x2x64xbf16> to vector<2x64xbf16>
    %252 = vector.shape_cast %248 : vector<2x64xbf16> to vector<1x2x64xbf16>
    tpu.vector_store %arg5[%249, %c0_80, %c0_81], %252 {strides = array<i32>} : memref<16x2x64xbf16, #tpu.memory_space<vmem>>, vector<1x2x64xbf16>,
    %253 = vector.extract_strided_slice %246 {offsets = [0, 64], sizes = [2, 64], strides = [1, 1]} : vector<2x128xf32> to vector<2x64xf32>
    %254 = arith.truncf %253 : vector<2x64xf32> to vector<2x64xbf16>
    %c15_i32_82 = arith.constant 15 : i32
    %255 = arith.subi %c15_i32_82, %c4_i32 : i32
    %256 = arith.index_cast %255 : i32 to index
    %c0_83 = arith.constant 0 : index
    %c0_84 = arith.constant 0 : index
    %257 = vector.load %arg6[%256, %c0_83, %c0_84] : memref<16x2x64xbf16, #tpu.memory_space<vmem>>, vector<1x2x64xbf16>
    %258 = vector.shape_cast %257 : vector<1x2x64xbf16> to vector<2x64xbf16>
    %259 = vector.shape_cast %254 : vector<2x64xbf16> to vector<1x2x64xbf16>
    tpu.vector_store %arg6[%256, %c0_83, %c0_84], %259 {strides = array<i32>} : memref<16x2x64xbf16, #tpu.memory_space<vmem>>, vector<1x2x64xbf16>,
    %c5_i32 = arith.constant 5 : i32
    %260 = arith.index_cast %c5_i32 : i32 to index
    %c0_85 = arith.constant 0 : index
    %c0_86 = arith.constant 0 : index
    %261 = vector.load %arg1[%260, %c0_85, %c0_86] : memref<16x2x384xf32, #tpu.memory_space<vmem>>, vector<1x2x384xf32>
    %262 = vector.shape_cast %261 : vector<1x2x384xf32> to vector<2x384xf32>
    %c15_i32_87 = arith.constant 15 : i32
    %263 = arith.subi %c15_i32_87, %c5_i32 : i32
    %264 = arith.index_cast %263 : i32 to index
    %c0_88 = arith.constant 0 : index
    %c0_89 = arith.constant 0 : index
    %265 = vector.load %arg2[%264, %c0_88, %c0_89] : memref<16x2x384xf32, #tpu.memory_space<vmem>>, vector<1x2x384xf32>
    %266 = vector.shape_cast %265 : vector<1x2x384xf32> to vector<2x384xf32>
    %267 = arith.select %23, %262, %266 : vector<2x384xi1>, vector<2x384xf32>
    %268 = arith.truncf %246 : vector<2x128xf32> to vector<2x128xbf16>
    %cst_90 = arith.constant dense<0.000000e+00> : vector<2x384xf32>
    %269 = tpu.matmul %268, %3, %cst_90 {dimension_numbers = #tpu.dot_dimension_numbers<[1], [0], [0], [1], [0, 0, 1, 1], [], []>} : vector<2x128xbf16>, vector<128x384xbf16>, vector<2x384xf32> -> vector<2x384xf32>
    %270 = vector.broadcast %4 : vector<1x384xf32> to vector<2x384xf32>
    %271 = arith.addf %269, %270 : vector<2x384xf32>
    %272 = vector.extract_strided_slice %267 {offsets = [0, 0], sizes = [2, 256], strides = [1, 1]} : vector<2x384xf32> to vector<2x256xf32>
    %273 = vector.extract_strided_slice %271 {offsets = [0, 0], sizes = [2, 256], strides = [1, 1]} : vector<2x384xf32> to vector<2x256xf32>
    %274 = arith.addf %272, %273 : vector<2x256xf32>
    %cst_91 = arith.constant 0.000000e+00 : f32
    %275 = vector.broadcast %cst_91 : f32 to vector<2x256xf32>
    %276 = arith.subf %275, %274 : vector<2x256xf32>
    %277 = math.exp %276 : vector<2x256xf32>
    %cst_92 = arith.constant 1.000000e+00 : f32
    %278 = vector.broadcast %cst_92 : f32 to vector<2x256xf32>
    %279 = arith.addf %278, %277 : vector<2x256xf32>
    %cst_93 = arith.constant 1.000000e+00 : f32
    %280 = vector.broadcast %cst_93 : f32 to vector<2x256xf32>
    %281 = arith.divf %280, %279 : vector<2x256xf32>
    %282 = vector.extract_strided_slice %281 {offsets = [0, 0], sizes = [2, 128], strides = [1, 1]} : vector<2x256xf32> to vector<2x128xf32>
    %283 = vector.extract_strided_slice %281 {offsets = [0, 128], sizes = [2, 128], strides = [1, 1]} : vector<2x256xf32> to vector<2x128xf32>
    %284 = vector.extract_strided_slice %267 {offsets = [0, 256], sizes = [2, 128], strides = [1, 1]} : vector<2x384xf32> to vector<2x128xf32>
    %285 = vector.extract_strided_slice %271 {offsets = [0, 256], sizes = [2, 128], strides = [1, 1]} : vector<2x384xf32> to vector<2x128xf32>
    %286 = arith.mulf %282, %285 : vector<2x128xf32>
    %287 = arith.addf %284, %286 : vector<2x128xf32>
    %288 = math.tanh %287 : vector<2x128xf32>
    %cst_94 = arith.constant 1.000000e+00 : f32
    %289 = vector.broadcast %cst_94 : f32 to vector<2x128xf32>
    %290 = arith.subf %289, %283 : vector<2x128xf32>
    %291 = arith.mulf %290, %288 : vector<2x128xf32>
    %292 = arith.mulf %283, %246 : vector<2x128xf32>
    %293 = arith.addf %291, %292 : vector<2x128xf32>
    %294 = vector.extract_strided_slice %293 {offsets = [0, 0], sizes = [2, 64], strides = [1, 1]} : vector<2x128xf32> to vector<2x64xf32>
    %295 = arith.truncf %294 : vector<2x64xf32> to vector<2x64xbf16>
    %296 = arith.index_cast %c5_i32 : i32 to index
    %c0_95 = arith.constant 0 : index
    %c0_96 = arith.constant 0 : index
    %297 = vector.load %arg5[%296, %c0_95, %c0_96] : memref<16x2x64xbf16, #tpu.memory_space<vmem>>, vector<1x2x64xbf16>
    %298 = vector.shape_cast %297 : vector<1x2x64xbf16> to vector<2x64xbf16>
    %299 = vector.shape_cast %295 : vector<2x64xbf16> to vector<1x2x64xbf16>
    tpu.vector_store %arg5[%296, %c0_95, %c0_96], %299 {strides = array<i32>} : memref<16x2x64xbf16, #tpu.memory_space<vmem>>, vector<1x2x64xbf16>,
    %300 = vector.extract_strided_slice %293 {offsets = [0, 64], sizes = [2, 64], strides = [1, 1]} : vector<2x128xf32> to vector<2x64xf32>
    %301 = arith.truncf %300 : vector<2x64xf32> to vector<2x64xbf16>
    %c15_i32_97 = arith.constant 15 : i32
    %302 = arith.subi %c15_i32_97, %c5_i32 : i32
    %303 = arith.index_cast %302 : i32 to index
    %c0_98 = arith.constant 0 : index
    %c0_99 = arith.constant 0 : index
    %304 = vector.load %arg6[%303, %c0_98, %c0_99] : memref<16x2x64xbf16, #tpu.memory_space<vmem>>, vector<1x2x64xbf16>
    %305 = vector.shape_cast %304 : vector<1x2x64xbf16> to vector<2x64xbf16>
    %306 = vector.shape_cast %301 : vector<2x64xbf16> to vector<1x2x64xbf16>
    tpu.vector_store %arg6[%303, %c0_98, %c0_99], %306 {strides = array<i32>} : memref<16x2x64xbf16, #tpu.memory_space<vmem>>, vector<1x2x64xbf16>,
    %c6_i32 = arith.constant 6 : i32
    %307 = arith.index_cast %c6_i32 : i32 to index
    %c0_100 = arith.constant 0 : index
    %c0_101 = arith.constant 0 : index
    %308 = vector.load %arg1[%307, %c0_100, %c0_101] : memref<16x2x384xf32, #tpu.memory_space<vmem>>, vector<1x2x384xf32>
    %309 = vector.shape_cast %308 : vector<1x2x384xf32> to vector<2x384xf32>
    %c15_i32_102 = arith.constant 15 : i32
    %310 = arith.subi %c15_i32_102, %c6_i32 : i32
    %311 = arith.index_cast %310 : i32 to index
    %c0_103 = arith.constant 0 : index
    %c0_104 = arith.constant 0 : index
    %312 = vector.load %arg2[%311, %c0_103, %c0_104] : memref<16x2x384xf32, #tpu.memory_space<vmem>>, vector<1x2x384xf32>
    %313 = vector.shape_cast %312 : vector<1x2x384xf32> to vector<2x384xf32>
    %314 = arith.select %23, %309, %313 : vector<2x384xi1>, vector<2x384xf32>
    %315 = arith.truncf %293 : vector<2x128xf32> to vector<2x128xbf16>
    %cst_105 = arith.constant dense<0.000000e+00> : vector<2x384xf32>
    %316 = tpu.matmul %315, %3, %cst_105 {dimension_numbers = #tpu.dot_dimension_numbers<[1], [0], [0], [1], [0, 0, 1, 1], [], []>} : vector<2x128xbf16>, vector<128x384xbf16>, vector<2x384xf32> -> vector<2x384xf32>
    %317 = vector.broadcast %4 : vector<1x384xf32> to vector<2x384xf32>
    %318 = arith.addf %316, %317 : vector<2x384xf32>
    %319 = vector.extract_strided_slice %314 {offsets = [0, 0], sizes = [2, 256], strides = [1, 1]} : vector<2x384xf32> to vector<2x256xf32>
    %320 = vector.extract_strided_slice %318 {offsets = [0, 0], sizes = [2, 256], strides = [1, 1]} : vector<2x384xf32> to vector<2x256xf32>
    %321 = arith.addf %319, %320 : vector<2x256xf32>
    %cst_106 = arith.constant 0.000000e+00 : f32
    %322 = vector.broadcast %cst_106 : f32 to vector<2x256xf32>
    %323 = arith.subf %322, %321 : vector<2x256xf32>
    %324 = math.exp %323 : vector<2x256xf32>
    %cst_107 = arith.constant 1.000000e+00 : f32
    %325 = vector.broadcast %cst_107 : f32 to vector<2x256xf32>
    %326 = arith.addf %325, %324 : vector<2x256xf32>
    %cst_108 = arith.constant 1.000000e+00 : f32
    %327 = vector.broadcast %cst_108 : f32 to vector<2x256xf32>
    %328 = arith.divf %327, %326 : vector<2x256xf32>
    %329 = vector.extract_strided_slice %328 {offsets = [0, 0], sizes = [2, 128], strides = [1, 1]} : vector<2x256xf32> to vector<2x128xf32>
    %330 = vector.extract_strided_slice %328 {offsets = [0, 128], sizes = [2, 128], strides = [1, 1]} : vector<2x256xf32> to vector<2x128xf32>
    %331 = vector.extract_strided_slice %314 {offsets = [0, 256], sizes = [2, 128], strides = [1, 1]} : vector<2x384xf32> to vector<2x128xf32>
    %332 = vector.extract_strided_slice %318 {offsets = [0, 256], sizes = [2, 128], strides = [1, 1]} : vector<2x384xf32> to vector<2x128xf32>
    %333 = arith.mulf %329, %332 : vector<2x128xf32>
    %334 = arith.addf %331, %333 : vector<2x128xf32>
    %335 = math.tanh %334 : vector<2x128xf32>
    %cst_109 = arith.constant 1.000000e+00 : f32
    %336 = vector.broadcast %cst_109 : f32 to vector<2x128xf32>
    %337 = arith.subf %336, %330 : vector<2x128xf32>
    %338 = arith.mulf %337, %335 : vector<2x128xf32>
    %339 = arith.mulf %330, %293 : vector<2x128xf32>
    %340 = arith.addf %338, %339 : vector<2x128xf32>
    %341 = vector.extract_strided_slice %340 {offsets = [0, 0], sizes = [2, 64], strides = [1, 1]} : vector<2x128xf32> to vector<2x64xf32>
    %342 = arith.truncf %341 : vector<2x64xf32> to vector<2x64xbf16>
    %343 = arith.index_cast %c6_i32 : i32 to index
    %c0_110 = arith.constant 0 : index
    %c0_111 = arith.constant 0 : index
    %344 = vector.load %arg5[%343, %c0_110, %c0_111] : memref<16x2x64xbf16, #tpu.memory_space<vmem>>, vector<1x2x64xbf16>
    %345 = vector.shape_cast %344 : vector<1x2x64xbf16> to vector<2x64xbf16>
    %346 = vector.shape_cast %342 : vector<2x64xbf16> to vector<1x2x64xbf16>
    tpu.vector_store %arg5[%343, %c0_110, %c0_111], %346 {strides = array<i32>} : memref<16x2x64xbf16, #tpu.memory_space<vmem>>, vector<1x2x64xbf16>,
    %347 = vector.extract_strided_slice %340 {offsets = [0, 64], sizes = [2, 64], strides = [1, 1]} : vector<2x128xf32> to vector<2x64xf32>
    %348 = arith.truncf %347 : vector<2x64xf32> to vector<2x64xbf16>
    %c15_i32_112 = arith.constant 15 : i32
    %349 = arith.subi %c15_i32_112, %c6_i32 : i32
    %350 = arith.index_cast %349 : i32 to index
    %c0_113 = arith.constant 0 : index
    %c0_114 = arith.constant 0 : index
    %351 = vector.load %arg6[%350, %c0_113, %c0_114] : memref<16x2x64xbf16, #tpu.memory_space<vmem>>, vector<1x2x64xbf16>
    %352 = vector.shape_cast %351 : vector<1x2x64xbf16> to vector<2x64xbf16>
    %353 = vector.shape_cast %348 : vector<2x64xbf16> to vector<1x2x64xbf16>
    tpu.vector_store %arg6[%350, %c0_113, %c0_114], %353 {strides = array<i32>} : memref<16x2x64xbf16, #tpu.memory_space<vmem>>, vector<1x2x64xbf16>,
    %c7_i32 = arith.constant 7 : i32
    %354 = arith.index_cast %c7_i32 : i32 to index
    %c0_115 = arith.constant 0 : index
    %c0_116 = arith.constant 0 : index
    %355 = vector.load %arg1[%354, %c0_115, %c0_116] : memref<16x2x384xf32, #tpu.memory_space<vmem>>, vector<1x2x384xf32>
    %356 = vector.shape_cast %355 : vector<1x2x384xf32> to vector<2x384xf32>
    %c15_i32_117 = arith.constant 15 : i32
    %357 = arith.subi %c15_i32_117, %c7_i32 : i32
    %358 = arith.index_cast %357 : i32 to index
    %c0_118 = arith.constant 0 : index
    %c0_119 = arith.constant 0 : index
    %359 = vector.load %arg2[%358, %c0_118, %c0_119] : memref<16x2x384xf32, #tpu.memory_space<vmem>>, vector<1x2x384xf32>
    %360 = vector.shape_cast %359 : vector<1x2x384xf32> to vector<2x384xf32>
    %361 = arith.select %23, %356, %360 : vector<2x384xi1>, vector<2x384xf32>
    %362 = arith.truncf %340 : vector<2x128xf32> to vector<2x128xbf16>
    %cst_120 = arith.constant dense<0.000000e+00> : vector<2x384xf32>
    %363 = tpu.matmul %362, %3, %cst_120 {dimension_numbers = #tpu.dot_dimension_numbers<[1], [0], [0], [1], [0, 0, 1, 1], [], []>} : vector<2x128xbf16>, vector<128x384xbf16>, vector<2x384xf32> -> vector<2x384xf32>
    %364 = vector.broadcast %4 : vector<1x384xf32> to vector<2x384xf32>
    %365 = arith.addf %363, %364 : vector<2x384xf32>
    %366 = vector.extract_strided_slice %361 {offsets = [0, 0], sizes = [2, 256], strides = [1, 1]} : vector<2x384xf32> to vector<2x256xf32>
    %367 = vector.extract_strided_slice %365 {offsets = [0, 0], sizes = [2, 256], strides = [1, 1]} : vector<2x384xf32> to vector<2x256xf32>
    %368 = arith.addf %366, %367 : vector<2x256xf32>
    %cst_121 = arith.constant 0.000000e+00 : f32
    %369 = vector.broadcast %cst_121 : f32 to vector<2x256xf32>
    %370 = arith.subf %369, %368 : vector<2x256xf32>
    %371 = math.exp %370 : vector<2x256xf32>
    %cst_122 = arith.constant 1.000000e+00 : f32
    %372 = vector.broadcast %cst_122 : f32 to vector<2x256xf32>
    %373 = arith.addf %372, %371 : vector<2x256xf32>
    %cst_123 = arith.constant 1.000000e+00 : f32
    %374 = vector.broadcast %cst_123 : f32 to vector<2x256xf32>
    %375 = arith.divf %374, %373 : vector<2x256xf32>
    %376 = vector.extract_strided_slice %375 {offsets = [0, 0], sizes = [2, 128], strides = [1, 1]} : vector<2x256xf32> to vector<2x128xf32>
    %377 = vector.extract_strided_slice %375 {offsets = [0, 128], sizes = [2, 128], strides = [1, 1]} : vector<2x256xf32> to vector<2x128xf32>
    %378 = vector.extract_strided_slice %361 {offsets = [0, 256], sizes = [2, 128], strides = [1, 1]} : vector<2x384xf32> to vector<2x128xf32>
    %379 = vector.extract_strided_slice %365 {offsets = [0, 256], sizes = [2, 128], strides = [1, 1]} : vector<2x384xf32> to vector<2x128xf32>
    %380 = arith.mulf %376, %379 : vector<2x128xf32>
    %381 = arith.addf %378, %380 : vector<2x128xf32>
    %382 = math.tanh %381 : vector<2x128xf32>
    %cst_124 = arith.constant 1.000000e+00 : f32
    %383 = vector.broadcast %cst_124 : f32 to vector<2x128xf32>
    %384 = arith.subf %383, %377 : vector<2x128xf32>
    %385 = arith.mulf %384, %382 : vector<2x128xf32>
    %386 = arith.mulf %377, %340 : vector<2x128xf32>
    %387 = arith.addf %385, %386 : vector<2x128xf32>
    %388 = vector.extract_strided_slice %387 {offsets = [0, 0], sizes = [2, 64], strides = [1, 1]} : vector<2x128xf32> to vector<2x64xf32>
    %389 = arith.truncf %388 : vector<2x64xf32> to vector<2x64xbf16>
    %390 = arith.index_cast %c7_i32 : i32 to index
    %c0_125 = arith.constant 0 : index
    %c0_126 = arith.constant 0 : index
    %391 = vector.load %arg5[%390, %c0_125, %c0_126] : memref<16x2x64xbf16, #tpu.memory_space<vmem>>, vector<1x2x64xbf16>
    %392 = vector.shape_cast %391 : vector<1x2x64xbf16> to vector<2x64xbf16>
    %393 = vector.shape_cast %389 : vector<2x64xbf16> to vector<1x2x64xbf16>
    tpu.vector_store %arg5[%390, %c0_125, %c0_126], %393 {strides = array<i32>} : memref<16x2x64xbf16, #tpu.memory_space<vmem>>, vector<1x2x64xbf16>,
    %394 = vector.extract_strided_slice %387 {offsets = [0, 64], sizes = [2, 64], strides = [1, 1]} : vector<2x128xf32> to vector<2x64xf32>
    %395 = arith.truncf %394 : vector<2x64xf32> to vector<2x64xbf16>
    %c15_i32_127 = arith.constant 15 : i32
    %396 = arith.subi %c15_i32_127, %c7_i32 : i32
    %397 = arith.index_cast %396 : i32 to index
    %c0_128 = arith.constant 0 : index
    %c0_129 = arith.constant 0 : index
    %398 = vector.load %arg6[%397, %c0_128, %c0_129] : memref<16x2x64xbf16, #tpu.memory_space<vmem>>, vector<1x2x64xbf16>
    %399 = vector.shape_cast %398 : vector<1x2x64xbf16> to vector<2x64xbf16>
    %400 = vector.shape_cast %395 : vector<2x64xbf16> to vector<1x2x64xbf16>
    tpu.vector_store %arg6[%397, %c0_128, %c0_129], %400 {strides = array<i32>} : memref<16x2x64xbf16, #tpu.memory_space<vmem>>, vector<1x2x64xbf16>,
    %c8_i32 = arith.constant 8 : i32
    %401 = arith.index_cast %c8_i32 : i32 to index
    %c0_130 = arith.constant 0 : index
    %c0_131 = arith.constant 0 : index
    %402 = vector.load %arg1[%401, %c0_130, %c0_131] : memref<16x2x384xf32, #tpu.memory_space<vmem>>, vector<1x2x384xf32>
    %403 = vector.shape_cast %402 : vector<1x2x384xf32> to vector<2x384xf32>
    %c15_i32_132 = arith.constant 15 : i32
    %404 = arith.subi %c15_i32_132, %c8_i32 : i32
    %405 = arith.index_cast %404 : i32 to index
    %c0_133 = arith.constant 0 : index
    %c0_134 = arith.constant 0 : index
    %406 = vector.load %arg2[%405, %c0_133, %c0_134] : memref<16x2x384xf32, #tpu.memory_space<vmem>>, vector<1x2x384xf32>
    %407 = vector.shape_cast %406 : vector<1x2x384xf32> to vector<2x384xf32>
    %408 = arith.select %23, %403, %407 : vector<2x384xi1>, vector<2x384xf32>
    %409 = arith.truncf %387 : vector<2x128xf32> to vector<2x128xbf16>
    %cst_135 = arith.constant dense<0.000000e+00> : vector<2x384xf32>
    %410 = tpu.matmul %409, %3, %cst_135 {dimension_numbers = #tpu.dot_dimension_numbers<[1], [0], [0], [1], [0, 0, 1, 1], [], []>} : vector<2x128xbf16>, vector<128x384xbf16>, vector<2x384xf32> -> vector<2x384xf32>
    %411 = vector.broadcast %4 : vector<1x384xf32> to vector<2x384xf32>
    %412 = arith.addf %410, %411 : vector<2x384xf32>
    %413 = vector.extract_strided_slice %408 {offsets = [0, 0], sizes = [2, 256], strides = [1, 1]} : vector<2x384xf32> to vector<2x256xf32>
    %414 = vector.extract_strided_slice %412 {offsets = [0, 0], sizes = [2, 256], strides = [1, 1]} : vector<2x384xf32> to vector<2x256xf32>
    %415 = arith.addf %413, %414 : vector<2x256xf32>
    %cst_136 = arith.constant 0.000000e+00 : f32
    %416 = vector.broadcast %cst_136 : f32 to vector<2x256xf32>
    %417 = arith.subf %416, %415 : vector<2x256xf32>
    %418 = math.exp %417 : vector<2x256xf32>
    %cst_137 = arith.constant 1.000000e+00 : f32
    %419 = vector.broadcast %cst_137 : f32 to vector<2x256xf32>
    %420 = arith.addf %419, %418 : vector<2x256xf32>
    %cst_138 = arith.constant 1.000000e+00 : f32
    %421 = vector.broadcast %cst_138 : f32 to vector<2x256xf32>
    %422 = arith.divf %421, %420 : vector<2x256xf32>
    %423 = vector.extract_strided_slice %422 {offsets = [0, 0], sizes = [2, 128], strides = [1, 1]} : vector<2x256xf32> to vector<2x128xf32>
    %424 = vector.extract_strided_slice %422 {offsets = [0, 128], sizes = [2, 128], strides = [1, 1]} : vector<2x256xf32> to vector<2x128xf32>
    %425 = vector.extract_strided_slice %408 {offsets = [0, 256], sizes = [2, 128], strides = [1, 1]} : vector<2x384xf32> to vector<2x128xf32>
    %426 = vector.extract_strided_slice %412 {offsets = [0, 256], sizes = [2, 128], strides = [1, 1]} : vector<2x384xf32> to vector<2x128xf32>
    %427 = arith.mulf %423, %426 : vector<2x128xf32>
    %428 = arith.addf %425, %427 : vector<2x128xf32>
    %429 = math.tanh %428 : vector<2x128xf32>
    %cst_139 = arith.constant 1.000000e+00 : f32
    %430 = vector.broadcast %cst_139 : f32 to vector<2x128xf32>
    %431 = arith.subf %430, %424 : vector<2x128xf32>
    %432 = arith.mulf %431, %429 : vector<2x128xf32>
    %433 = arith.mulf %424, %387 : vector<2x128xf32>
    %434 = arith.addf %432, %433 : vector<2x128xf32>
    %435 = vector.extract_strided_slice %434 {offsets = [0, 0], sizes = [2, 64], strides = [1, 1]} : vector<2x128xf32> to vector<2x64xf32>
    %436 = arith.truncf %435 : vector<2x64xf32> to vector<2x64xbf16>
    %437 = arith.index_cast %c8_i32 : i32 to index
    %c0_140 = arith.constant 0 : index
    %c0_141 = arith.constant 0 : index
    %438 = vector.load %arg5[%437, %c0_140, %c0_141] : memref<16x2x64xbf16, #tpu.memory_space<vmem>>, vector<1x2x64xbf16>
    %439 = vector.shape_cast %438 : vector<1x2x64xbf16> to vector<2x64xbf16>
    %440 = vector.shape_cast %436 : vector<2x64xbf16> to vector<1x2x64xbf16>
    tpu.vector_store %arg5[%437, %c0_140, %c0_141], %440 {strides = array<i32>} : memref<16x2x64xbf16, #tpu.memory_space<vmem>>, vector<1x2x64xbf16>,
    %441 = vector.extract_strided_slice %434 {offsets = [0, 64], sizes = [2, 64], strides = [1, 1]} : vector<2x128xf32> to vector<2x64xf32>
    %442 = arith.truncf %441 : vector<2x64xf32> to vector<2x64xbf16>
    %c15_i32_142 = arith.constant 15 : i32
    %443 = arith.subi %c15_i32_142, %c8_i32 : i32
    %444 = arith.index_cast %443 : i32 to index
    %c0_143 = arith.constant 0 : index
    %c0_144 = arith.constant 0 : index
    %445 = vector.load %arg6[%444, %c0_143, %c0_144] : memref<16x2x64xbf16, #tpu.memory_space<vmem>>, vector<1x2x64xbf16>
    %446 = vector.shape_cast %445 : vector<1x2x64xbf16> to vector<2x64xbf16>
    %447 = vector.shape_cast %442 : vector<2x64xbf16> to vector<1x2x64xbf16>
    tpu.vector_store %arg6[%444, %c0_143, %c0_144], %447 {strides = array<i32>} : memref<16x2x64xbf16, #tpu.memory_space<vmem>>, vector<1x2x64xbf16>,
    %c9_i32 = arith.constant 9 : i32
    %448 = arith.index_cast %c9_i32 : i32 to index
    %c0_145 = arith.constant 0 : index
    %c0_146 = arith.constant 0 : index
    %449 = vector.load %arg1[%448, %c0_145, %c0_146] : memref<16x2x384xf32, #tpu.memory_space<vmem>>, vector<1x2x384xf32>
    %450 = vector.shape_cast %449 : vector<1x2x384xf32> to vector<2x384xf32>
    %c15_i32_147 = arith.constant 15 : i32
    %451 = arith.subi %c15_i32_147, %c9_i32 : i32
    %452 = arith.index_cast %451 : i32 to index
    %c0_148 = arith.constant 0 : index
    %c0_149 = arith.constant 0 : index
    %453 = vector.load %arg2[%452, %c0_148, %c0_149] : memref<16x2x384xf32, #tpu.memory_space<vmem>>, vector<1x2x384xf32>
    %454 = vector.shape_cast %453 : vector<1x2x384xf32> to vector<2x384xf32>
    %455 = arith.select %23, %450, %454 : vector<2x384xi1>, vector<2x384xf32>
    %456 = arith.truncf %434 : vector<2x128xf32> to vector<2x128xbf16>
    %cst_150 = arith.constant dense<0.000000e+00> : vector<2x384xf32>
    %457 = tpu.matmul %456, %3, %cst_150 {dimension_numbers = #tpu.dot_dimension_numbers<[1], [0], [0], [1], [0, 0, 1, 1], [], []>} : vector<2x128xbf16>, vector<128x384xbf16>, vector<2x384xf32> -> vector<2x384xf32>
    %458 = vector.broadcast %4 : vector<1x384xf32> to vector<2x384xf32>
    %459 = arith.addf %457, %458 : vector<2x384xf32>
    %460 = vector.extract_strided_slice %455 {offsets = [0, 0], sizes = [2, 256], strides = [1, 1]} : vector<2x384xf32> to vector<2x256xf32>
    %461 = vector.extract_strided_slice %459 {offsets = [0, 0], sizes = [2, 256], strides = [1, 1]} : vector<2x384xf32> to vector<2x256xf32>
    %462 = arith.addf %460, %461 : vector<2x256xf32>
    %cst_151 = arith.constant 0.000000e+00 : f32
    %463 = vector.broadcast %cst_151 : f32 to vector<2x256xf32>
    %464 = arith.subf %463, %462 : vector<2x256xf32>
    %465 = math.exp %464 : vector<2x256xf32>
    %cst_152 = arith.constant 1.000000e+00 : f32
    %466 = vector.broadcast %cst_152 : f32 to vector<2x256xf32>
    %467 = arith.addf %466, %465 : vector<2x256xf32>
    %cst_153 = arith.constant 1.000000e+00 : f32
    %468 = vector.broadcast %cst_153 : f32 to vector<2x256xf32>
    %469 = arith.divf %468, %467 : vector<2x256xf32>
    %470 = vector.extract_strided_slice %469 {offsets = [0, 0], sizes = [2, 128], strides = [1, 1]} : vector<2x256xf32> to vector<2x128xf32>
    %471 = vector.extract_strided_slice %469 {offsets = [0, 128], sizes = [2, 128], strides = [1, 1]} : vector<2x256xf32> to vector<2x128xf32>
    %472 = vector.extract_strided_slice %455 {offsets = [0, 256], sizes = [2, 128], strides = [1, 1]} : vector<2x384xf32> to vector<2x128xf32>
    %473 = vector.extract_strided_slice %459 {offsets = [0, 256], sizes = [2, 128], strides = [1, 1]} : vector<2x384xf32> to vector<2x128xf32>
    %474 = arith.mulf %470, %473 : vector<2x128xf32>
    %475 = arith.addf %472, %474 : vector<2x128xf32>
    %476 = math.tanh %475 : vector<2x128xf32>
    %cst_154 = arith.constant 1.000000e+00 : f32
    %477 = vector.broadcast %cst_154 : f32 to vector<2x128xf32>
    %478 = arith.subf %477, %471 : vector<2x128xf32>
    %479 = arith.mulf %478, %476 : vector<2x128xf32>
    %480 = arith.mulf %471, %434 : vector<2x128xf32>
    %481 = arith.addf %479, %480 : vector<2x128xf32>
    %482 = vector.extract_strided_slice %481 {offsets = [0, 0], sizes = [2, 64], strides = [1, 1]} : vector<2x128xf32> to vector<2x64xf32>
    %483 = arith.truncf %482 : vector<2x64xf32> to vector<2x64xbf16>
    %484 = arith.index_cast %c9_i32 : i32 to index
    %c0_155 = arith.constant 0 : index
    %c0_156 = arith.constant 0 : index
    %485 = vector.load %arg5[%484, %c0_155, %c0_156] : memref<16x2x64xbf16, #tpu.memory_space<vmem>>, vector<1x2x64xbf16>
    %486 = vector.shape_cast %485 : vector<1x2x64xbf16> to vector<2x64xbf16>
    %487 = vector.shape_cast %483 : vector<2x64xbf16> to vector<1x2x64xbf16>
    tpu.vector_store %arg5[%484, %c0_155, %c0_156], %487 {strides = array<i32>} : memref<16x2x64xbf16, #tpu.memory_space<vmem>>, vector<1x2x64xbf16>,
    %488 = vector.extract_strided_slice %481 {offsets = [0, 64], sizes = [2, 64], strides = [1, 1]} : vector<2x128xf32> to vector<2x64xf32>
    %489 = arith.truncf %488 : vector<2x64xf32> to vector<2x64xbf16>
    %c15_i32_157 = arith.constant 15 : i32
    %490 = arith.subi %c15_i32_157, %c9_i32 : i32
    %491 = arith.index_cast %490 : i32 to index
    %c0_158 = arith.constant 0 : index
    %c0_159 = arith.constant 0 : index
    %492 = vector.load %arg6[%491, %c0_158, %c0_159] : memref<16x2x64xbf16, #tpu.memory_space<vmem>>, vector<1x2x64xbf16>
    %493 = vector.shape_cast %492 : vector<1x2x64xbf16> to vector<2x64xbf16>
    %494 = vector.shape_cast %489 : vector<2x64xbf16> to vector<1x2x64xbf16>
    tpu.vector_store %arg6[%491, %c0_158, %c0_159], %494 {strides = array<i32>} : memref<16x2x64xbf16, #tpu.memory_space<vmem>>, vector<1x2x64xbf16>,
    %c10_i32 = arith.constant 10 : i32
    %495 = arith.index_cast %c10_i32 : i32 to index
    %c0_160 = arith.constant 0 : index
    %c0_161 = arith.constant 0 : index
    %496 = vector.load %arg1[%495, %c0_160, %c0_161] : memref<16x2x384xf32, #tpu.memory_space<vmem>>, vector<1x2x384xf32>
    %497 = vector.shape_cast %496 : vector<1x2x384xf32> to vector<2x384xf32>
    %c15_i32_162 = arith.constant 15 : i32
    %498 = arith.subi %c15_i32_162, %c10_i32 : i32
    %499 = arith.index_cast %498 : i32 to index
    %c0_163 = arith.constant 0 : index
    %c0_164 = arith.constant 0 : index
    %500 = vector.load %arg2[%499, %c0_163, %c0_164] : memref<16x2x384xf32, #tpu.memory_space<vmem>>, vector<1x2x384xf32>
    %501 = vector.shape_cast %500 : vector<1x2x384xf32> to vector<2x384xf32>
    %502 = arith.select %23, %497, %501 : vector<2x384xi1>, vector<2x384xf32>
    %503 = arith.truncf %481 : vector<2x128xf32> to vector<2x128xbf16>
    %cst_165 = arith.constant dense<0.000000e+00> : vector<2x384xf32>
    %504 = tpu.matmul %503, %3, %cst_165 {dimension_numbers = #tpu.dot_dimension_numbers<[1], [0], [0], [1], [0, 0, 1, 1], [], []>} : vector<2x128xbf16>, vector<128x384xbf16>, vector<2x384xf32> -> vector<2x384xf32>
    %505 = vector.broadcast %4 : vector<1x384xf32> to vector<2x384xf32>
    %506 = arith.addf %504, %505 : vector<2x384xf32>
    %507 = vector.extract_strided_slice %502 {offsets = [0, 0], sizes = [2, 256], strides = [1, 1]} : vector<2x384xf32> to vector<2x256xf32>
    %508 = vector.extract_strided_slice %506 {offsets = [0, 0], sizes = [2, 256], strides = [1, 1]} : vector<2x384xf32> to vector<2x256xf32>
    %509 = arith.addf %507, %508 : vector<2x256xf32>
    %cst_166 = arith.constant 0.000000e+00 : f32
    %510 = vector.broadcast %cst_166 : f32 to vector<2x256xf32>
    %511 = arith.subf %510, %509 : vector<2x256xf32>
    %512 = math.exp %511 : vector<2x256xf32>
    %cst_167 = arith.constant 1.000000e+00 : f32
    %513 = vector.broadcast %cst_167 : f32 to vector<2x256xf32>
    %514 = arith.addf %513, %512 : vector<2x256xf32>
    %cst_168 = arith.constant 1.000000e+00 : f32
    %515 = vector.broadcast %cst_168 : f32 to vector<2x256xf32>
    %516 = arith.divf %515, %514 : vector<2x256xf32>
    %517 = vector.extract_strided_slice %516 {offsets = [0, 0], sizes = [2, 128], strides = [1, 1]} : vector<2x256xf32> to vector<2x128xf32>
    %518 = vector.extract_strided_slice %516 {offsets = [0, 128], sizes = [2, 128], strides = [1, 1]} : vector<2x256xf32> to vector<2x128xf32>
    %519 = vector.extract_strided_slice %502 {offsets = [0, 256], sizes = [2, 128], strides = [1, 1]} : vector<2x384xf32> to vector<2x128xf32>
    %520 = vector.extract_strided_slice %506 {offsets = [0, 256], sizes = [2, 128], strides = [1, 1]} : vector<2x384xf32> to vector<2x128xf32>
    %521 = arith.mulf %517, %520 : vector<2x128xf32>
    %522 = arith.addf %519, %521 : vector<2x128xf32>
    %523 = math.tanh %522 : vector<2x128xf32>
    %cst_169 = arith.constant 1.000000e+00 : f32
    %524 = vector.broadcast %cst_169 : f32 to vector<2x128xf32>
    %525 = arith.subf %524, %518 : vector<2x128xf32>
    %526 = arith.mulf %525, %523 : vector<2x128xf32>
    %527 = arith.mulf %518, %481 : vector<2x128xf32>
    %528 = arith.addf %526, %527 : vector<2x128xf32>
    %529 = vector.extract_strided_slice %528 {offsets = [0, 0], sizes = [2, 64], strides = [1, 1]} : vector<2x128xf32> to vector<2x64xf32>
    %530 = arith.truncf %529 : vector<2x64xf32> to vector<2x64xbf16>
    %531 = arith.index_cast %c10_i32 : i32 to index
    %c0_170 = arith.constant 0 : index
    %c0_171 = arith.constant 0 : index
    %532 = vector.load %arg5[%531, %c0_170, %c0_171] : memref<16x2x64xbf16, #tpu.memory_space<vmem>>, vector<1x2x64xbf16>
    %533 = vector.shape_cast %532 : vector<1x2x64xbf16> to vector<2x64xbf16>
    %534 = vector.shape_cast %530 : vector<2x64xbf16> to vector<1x2x64xbf16>
    tpu.vector_store %arg5[%531, %c0_170, %c0_171], %534 {strides = array<i32>} : memref<16x2x64xbf16, #tpu.memory_space<vmem>>, vector<1x2x64xbf16>,
    %535 = vector.extract_strided_slice %528 {offsets = [0, 64], sizes = [2, 64], strides = [1, 1]} : vector<2x128xf32> to vector<2x64xf32>
    %536 = arith.truncf %535 : vector<2x64xf32> to vector<2x64xbf16>
    %c15_i32_172 = arith.constant 15 : i32
    %537 = arith.subi %c15_i32_172, %c10_i32 : i32
    %538 = arith.index_cast %537 : i32 to index
    %c0_173 = arith.constant 0 : index
    %c0_174 = arith.constant 0 : index
    %539 = vector.load %arg6[%538, %c0_173, %c0_174] : memref<16x2x64xbf16, #tpu.memory_space<vmem>>, vector<1x2x64xbf16>
    %540 = vector.shape_cast %539 : vector<1x2x64xbf16> to vector<2x64xbf16>
    %541 = vector.shape_cast %536 : vector<2x64xbf16> to vector<1x2x64xbf16>
    tpu.vector_store %arg6[%538, %c0_173, %c0_174], %541 {strides = array<i32>} : memref<16x2x64xbf16, #tpu.memory_space<vmem>>, vector<1x2x64xbf16>,
    %c11_i32 = arith.constant 11 : i32
    %542 = arith.index_cast %c11_i32 : i32 to index
    %c0_175 = arith.constant 0 : index
    %c0_176 = arith.constant 0 : index
    %543 = vector.load %arg1[%542, %c0_175, %c0_176] : memref<16x2x384xf32, #tpu.memory_space<vmem>>, vector<1x2x384xf32>
    %544 = vector.shape_cast %543 : vector<1x2x384xf32> to vector<2x384xf32>
    %c15_i32_177 = arith.constant 15 : i32
    %545 = arith.subi %c15_i32_177, %c11_i32 : i32
    %546 = arith.index_cast %545 : i32 to index
    %c0_178 = arith.constant 0 : index
    %c0_179 = arith.constant 0 : index
    %547 = vector.load %arg2[%546, %c0_178, %c0_179] : memref<16x2x384xf32, #tpu.memory_space<vmem>>, vector<1x2x384xf32>
    %548 = vector.shape_cast %547 : vector<1x2x384xf32> to vector<2x384xf32>
    %549 = arith.select %23, %544, %548 : vector<2x384xi1>, vector<2x384xf32>
    %550 = arith.truncf %528 : vector<2x128xf32> to vector<2x128xbf16>
    %cst_180 = arith.constant dense<0.000000e+00> : vector<2x384xf32>
    %551 = tpu.matmul %550, %3, %cst_180 {dimension_numbers = #tpu.dot_dimension_numbers<[1], [0], [0], [1], [0, 0, 1, 1], [], []>} : vector<2x128xbf16>, vector<128x384xbf16>, vector<2x384xf32> -> vector<2x384xf32>
    %552 = vector.broadcast %4 : vector<1x384xf32> to vector<2x384xf32>
    %553 = arith.addf %551, %552 : vector<2x384xf32>
    %554 = vector.extract_strided_slice %549 {offsets = [0, 0], sizes = [2, 256], strides = [1, 1]} : vector<2x384xf32> to vector<2x256xf32>
    %555 = vector.extract_strided_slice %553 {offsets = [0, 0], sizes = [2, 256], strides = [1, 1]} : vector<2x384xf32> to vector<2x256xf32>
    %556 = arith.addf %554, %555 : vector<2x256xf32>
    %cst_181 = arith.constant 0.000000e+00 : f32
    %557 = vector.broadcast %cst_181 : f32 to vector<2x256xf32>
    %558 = arith.subf %557, %556 : vector<2x256xf32>
    %559 = math.exp %558 : vector<2x256xf32>
    %cst_182 = arith.constant 1.000000e+00 : f32
    %560 = vector.broadcast %cst_182 : f32 to vector<2x256xf32>
    %561 = arith.addf %560, %559 : vector<2x256xf32>
    %cst_183 = arith.constant 1.000000e+00 : f32
    %562 = vector.broadcast %cst_183 : f32 to vector<2x256xf32>
    %563 = arith.divf %562, %561 : vector<2x256xf32>
    %564 = vector.extract_strided_slice %563 {offsets = [0, 0], sizes = [2, 128], strides = [1, 1]} : vector<2x256xf32> to vector<2x128xf32>
    %565 = vector.extract_strided_slice %563 {offsets = [0, 128], sizes = [2, 128], strides = [1, 1]} : vector<2x256xf32> to vector<2x128xf32>
    %566 = vector.extract_strided_slice %549 {offsets = [0, 256], sizes = [2, 128], strides = [1, 1]} : vector<2x384xf32> to vector<2x128xf32>
    %567 = vector.extract_strided_slice %553 {offsets = [0, 256], sizes = [2, 128], strides = [1, 1]} : vector<2x384xf32> to vector<2x128xf32>
    %568 = arith.mulf %564, %567 : vector<2x128xf32>
    %569 = arith.addf %566, %568 : vector<2x128xf32>
    %570 = math.tanh %569 : vector<2x128xf32>
    %cst_184 = arith.constant 1.000000e+00 : f32
    %571 = vector.broadcast %cst_184 : f32 to vector<2x128xf32>
    %572 = arith.subf %571, %565 : vector<2x128xf32>
    %573 = arith.mulf %572, %570 : vector<2x128xf32>
    %574 = arith.mulf %565, %528 : vector<2x128xf32>
    %575 = arith.addf %573, %574 : vector<2x128xf32>
    %576 = vector.extract_strided_slice %575 {offsets = [0, 0], sizes = [2, 64], strides = [1, 1]} : vector<2x128xf32> to vector<2x64xf32>
    %577 = arith.truncf %576 : vector<2x64xf32> to vector<2x64xbf16>
    %578 = arith.index_cast %c11_i32 : i32 to index
    %c0_185 = arith.constant 0 : index
    %c0_186 = arith.constant 0 : index
    %579 = vector.load %arg5[%578, %c0_185, %c0_186] : memref<16x2x64xbf16, #tpu.memory_space<vmem>>, vector<1x2x64xbf16>
    %580 = vector.shape_cast %579 : vector<1x2x64xbf16> to vector<2x64xbf16>
    %581 = vector.shape_cast %577 : vector<2x64xbf16> to vector<1x2x64xbf16>
    tpu.vector_store %arg5[%578, %c0_185, %c0_186], %581 {strides = array<i32>} : memref<16x2x64xbf16, #tpu.memory_space<vmem>>, vector<1x2x64xbf16>,
    %582 = vector.extract_strided_slice %575 {offsets = [0, 64], sizes = [2, 64], strides = [1, 1]} : vector<2x128xf32> to vector<2x64xf32>
    %583 = arith.truncf %582 : vector<2x64xf32> to vector<2x64xbf16>
    %c15_i32_187 = arith.constant 15 : i32
    %584 = arith.subi %c15_i32_187, %c11_i32 : i32
    %585 = arith.index_cast %584 : i32 to index
    %c0_188 = arith.constant 0 : index
    %c0_189 = arith.constant 0 : index
    %586 = vector.load %arg6[%585, %c0_188, %c0_189] : memref<16x2x64xbf16, #tpu.memory_space<vmem>>, vector<1x2x64xbf16>
    %587 = vector.shape_cast %586 : vector<1x2x64xbf16> to vector<2x64xbf16>
    %588 = vector.shape_cast %583 : vector<2x64xbf16> to vector<1x2x64xbf16>
    tpu.vector_store %arg6[%585, %c0_188, %c0_189], %588 {strides = array<i32>} : memref<16x2x64xbf16, #tpu.memory_space<vmem>>, vector<1x2x64xbf16>,
    %c12_i32 = arith.constant 12 : i32
    %589 = arith.index_cast %c12_i32 : i32 to index
    %c0_190 = arith.constant 0 : index
    %c0_191 = arith.constant 0 : index
    %590 = vector.load %arg1[%589, %c0_190, %c0_191] : memref<16x2x384xf32, #tpu.memory_space<vmem>>, vector<1x2x384xf32>
    %591 = vector.shape_cast %590 : vector<1x2x384xf32> to vector<2x384xf32>
    %c15_i32_192 = arith.constant 15 : i32
    %592 = arith.subi %c15_i32_192, %c12_i32 : i32
    %593 = arith.index_cast %592 : i32 to index
    %c0_193 = arith.constant 0 : index
    %c0_194 = arith.constant 0 : index
    %594 = vector.load %arg2[%593, %c0_193, %c0_194] : memref<16x2x384xf32, #tpu.memory_space<vmem>>, vector<1x2x384xf32>
    %595 = vector.shape_cast %594 : vector<1x2x384xf32> to vector<2x384xf32>
    %596 = arith.select %23, %591, %595 : vector<2x384xi1>, vector<2x384xf32>
    %597 = arith.truncf %575 : vector<2x128xf32> to vector<2x128xbf16>
    %cst_195 = arith.constant dense<0.000000e+00> : vector<2x384xf32>
    %598 = tpu.matmul %597, %3, %cst_195 {dimension_numbers = #tpu.dot_dimension_numbers<[1], [0], [0], [1], [0, 0, 1, 1], [], []>} : vector<2x128xbf16>, vector<128x384xbf16>, vector<2x384xf32> -> vector<2x384xf32>
    %599 = vector.broadcast %4 : vector<1x384xf32> to vector<2x384xf32>
    %600 = arith.addf %598, %599 : vector<2x384xf32>
    %601 = vector.extract_strided_slice %596 {offsets = [0, 0], sizes = [2, 256], strides = [1, 1]} : vector<2x384xf32> to vector<2x256xf32>
    %602 = vector.extract_strided_slice %600 {offsets = [0, 0], sizes = [2, 256], strides = [1, 1]} : vector<2x384xf32> to vector<2x256xf32>
    %603 = arith.addf %601, %602 : vector<2x256xf32>
    %cst_196 = arith.constant 0.000000e+00 : f32
    %604 = vector.broadcast %cst_196 : f32 to vector<2x256xf32>
    %605 = arith.subf %604, %603 : vector<2x256xf32>
    %606 = math.exp %605 : vector<2x256xf32>
    %cst_197 = arith.constant 1.000000e+00 : f32
    %607 = vector.broadcast %cst_197 : f32 to vector<2x256xf32>
    %608 = arith.addf %607, %606 : vector<2x256xf32>
    %cst_198 = arith.constant 1.000000e+00 : f32
    %609 = vector.broadcast %cst_198 : f32 to vector<2x256xf32>
    %610 = arith.divf %609, %608 : vector<2x256xf32>
    %611 = vector.extract_strided_slice %610 {offsets = [0, 0], sizes = [2, 128], strides = [1, 1]} : vector<2x256xf32> to vector<2x128xf32>
    %612 = vector.extract_strided_slice %610 {offsets = [0, 128], sizes = [2, 128], strides = [1, 1]} : vector<2x256xf32> to vector<2x128xf32>
    %613 = vector.extract_strided_slice %596 {offsets = [0, 256], sizes = [2, 128], strides = [1, 1]} : vector<2x384xf32> to vector<2x128xf32>
    %614 = vector.extract_strided_slice %600 {offsets = [0, 256], sizes = [2, 128], strides = [1, 1]} : vector<2x384xf32> to vector<2x128xf32>
    %615 = arith.mulf %611, %614 : vector<2x128xf32>
    %616 = arith.addf %613, %615 : vector<2x128xf32>
    %617 = math.tanh %616 : vector<2x128xf32>
    %cst_199 = arith.constant 1.000000e+00 : f32
    %618 = vector.broadcast %cst_199 : f32 to vector<2x128xf32>
    %619 = arith.subf %618, %612 : vector<2x128xf32>
    %620 = arith.mulf %619, %617 : vector<2x128xf32>
    %621 = arith.mulf %612, %575 : vector<2x128xf32>
    %622 = arith.addf %620, %621 : vector<2x128xf32>
    %623 = vector.extract_strided_slice %622 {offsets = [0, 0], sizes = [2, 64], strides = [1, 1]} : vector<2x128xf32> to vector<2x64xf32>
    %624 = arith.truncf %623 : vector<2x64xf32> to vector<2x64xbf16>
    %625 = arith.index_cast %c12_i32 : i32 to index
    %c0_200 = arith.constant 0 : index
    %c0_201 = arith.constant 0 : index
    %626 = vector.load %arg5[%625, %c0_200, %c0_201] : memref<16x2x64xbf16, #tpu.memory_space<vmem>>, vector<1x2x64xbf16>
    %627 = vector.shape_cast %626 : vector<1x2x64xbf16> to vector<2x64xbf16>
    %628 = vector.shape_cast %624 : vector<2x64xbf16> to vector<1x2x64xbf16>
    tpu.vector_store %arg5[%625, %c0_200, %c0_201], %628 {strides = array<i32>} : memref<16x2x64xbf16, #tpu.memory_space<vmem>>, vector<1x2x64xbf16>,
    %629 = vector.extract_strided_slice %622 {offsets = [0, 64], sizes = [2, 64], strides = [1, 1]} : vector<2x128xf32> to vector<2x64xf32>
    %630 = arith.truncf %629 : vector<2x64xf32> to vector<2x64xbf16>
    %c15_i32_202 = arith.constant 15 : i32
    %631 = arith.subi %c15_i32_202, %c12_i32 : i32
    %632 = arith.index_cast %631 : i32 to index
    %c0_203 = arith.constant 0 : index
    %c0_204 = arith.constant 0 : index
    %633 = vector.load %arg6[%632, %c0_203, %c0_204] : memref<16x2x64xbf16, #tpu.memory_space<vmem>>, vector<1x2x64xbf16>
    %634 = vector.shape_cast %633 : vector<1x2x64xbf16> to vector<2x64xbf16>
    %635 = vector.shape_cast %630 : vector<2x64xbf16> to vector<1x2x64xbf16>
    tpu.vector_store %arg6[%632, %c0_203, %c0_204], %635 {strides = array<i32>} : memref<16x2x64xbf16, #tpu.memory_space<vmem>>, vector<1x2x64xbf16>,
    %c13_i32 = arith.constant 13 : i32
    %636 = arith.index_cast %c13_i32 : i32 to index
    %c0_205 = arith.constant 0 : index
    %c0_206 = arith.constant 0 : index
    %637 = vector.load %arg1[%636, %c0_205, %c0_206] : memref<16x2x384xf32, #tpu.memory_space<vmem>>, vector<1x2x384xf32>
    %638 = vector.shape_cast %637 : vector<1x2x384xf32> to vector<2x384xf32>
    %c15_i32_207 = arith.constant 15 : i32
    %639 = arith.subi %c15_i32_207, %c13_i32 : i32
    %640 = arith.index_cast %639 : i32 to index
    %c0_208 = arith.constant 0 : index
    %c0_209 = arith.constant 0 : index
    %641 = vector.load %arg2[%640, %c0_208, %c0_209] : memref<16x2x384xf32, #tpu.memory_space<vmem>>, vector<1x2x384xf32>
    %642 = vector.shape_cast %641 : vector<1x2x384xf32> to vector<2x384xf32>
    %643 = arith.select %23, %638, %642 : vector<2x384xi1>, vector<2x384xf32>
    %644 = arith.truncf %622 : vector<2x128xf32> to vector<2x128xbf16>
    %cst_210 = arith.constant dense<0.000000e+00> : vector<2x384xf32>
    %645 = tpu.matmul %644, %3, %cst_210 {dimension_numbers = #tpu.dot_dimension_numbers<[1], [0], [0], [1], [0, 0, 1, 1], [], []>} : vector<2x128xbf16>, vector<128x384xbf16>, vector<2x384xf32> -> vector<2x384xf32>
    %646 = vector.broadcast %4 : vector<1x384xf32> to vector<2x384xf32>
    %647 = arith.addf %645, %646 : vector<2x384xf32>
    %648 = vector.extract_strided_slice %643 {offsets = [0, 0], sizes = [2, 256], strides = [1, 1]} : vector<2x384xf32> to vector<2x256xf32>
    %649 = vector.extract_strided_slice %647 {offsets = [0, 0], sizes = [2, 256], strides = [1, 1]} : vector<2x384xf32> to vector<2x256xf32>
    %650 = arith.addf %648, %649 : vector<2x256xf32>
    %cst_211 = arith.constant 0.000000e+00 : f32
    %651 = vector.broadcast %cst_211 : f32 to vector<2x256xf32>
    %652 = arith.subf %651, %650 : vector<2x256xf32>
    %653 = math.exp %652 : vector<2x256xf32>
    %cst_212 = arith.constant 1.000000e+00 : f32
    %654 = vector.broadcast %cst_212 : f32 to vector<2x256xf32>
    %655 = arith.addf %654, %653 : vector<2x256xf32>
    %cst_213 = arith.constant 1.000000e+00 : f32
    %656 = vector.broadcast %cst_213 : f32 to vector<2x256xf32>
    %657 = arith.divf %656, %655 : vector<2x256xf32>
    %658 = vector.extract_strided_slice %657 {offsets = [0, 0], sizes = [2, 128], strides = [1, 1]} : vector<2x256xf32> to vector<2x128xf32>
    %659 = vector.extract_strided_slice %657 {offsets = [0, 128], sizes = [2, 128], strides = [1, 1]} : vector<2x256xf32> to vector<2x128xf32>
    %660 = vector.extract_strided_slice %643 {offsets = [0, 256], sizes = [2, 128], strides = [1, 1]} : vector<2x384xf32> to vector<2x128xf32>
    %661 = vector.extract_strided_slice %647 {offsets = [0, 256], sizes = [2, 128], strides = [1, 1]} : vector<2x384xf32> to vector<2x128xf32>
    %662 = arith.mulf %658, %661 : vector<2x128xf32>
    %663 = arith.addf %660, %662 : vector<2x128xf32>
    %664 = math.tanh %663 : vector<2x128xf32>
    %cst_214 = arith.constant 1.000000e+00 : f32
    %665 = vector.broadcast %cst_214 : f32 to vector<2x128xf32>
    %666 = arith.subf %665, %659 : vector<2x128xf32>
    %667 = arith.mulf %666, %664 : vector<2x128xf32>
    %668 = arith.mulf %659, %622 : vector<2x128xf32>
    %669 = arith.addf %667, %668 : vector<2x128xf32>
    %670 = vector.extract_strided_slice %669 {offsets = [0, 0], sizes = [2, 64], strides = [1, 1]} : vector<2x128xf32> to vector<2x64xf32>
    %671 = arith.truncf %670 : vector<2x64xf32> to vector<2x64xbf16>
    %672 = arith.index_cast %c13_i32 : i32 to index
    %c0_215 = arith.constant 0 : index
    %c0_216 = arith.constant 0 : index
    %673 = vector.load %arg5[%672, %c0_215, %c0_216] : memref<16x2x64xbf16, #tpu.memory_space<vmem>>, vector<1x2x64xbf16>
    %674 = vector.shape_cast %673 : vector<1x2x64xbf16> to vector<2x64xbf16>
    %675 = vector.shape_cast %671 : vector<2x64xbf16> to vector<1x2x64xbf16>
    tpu.vector_store %arg5[%672, %c0_215, %c0_216], %675 {strides = array<i32>} : memref<16x2x64xbf16, #tpu.memory_space<vmem>>, vector<1x2x64xbf16>,
    %676 = vector.extract_strided_slice %669 {offsets = [0, 64], sizes = [2, 64], strides = [1, 1]} : vector<2x128xf32> to vector<2x64xf32>
    %677 = arith.truncf %676 : vector<2x64xf32> to vector<2x64xbf16>
    %c15_i32_217 = arith.constant 15 : i32
    %678 = arith.subi %c15_i32_217, %c13_i32 : i32
    %679 = arith.index_cast %678 : i32 to index
    %c0_218 = arith.constant 0 : index
    %c0_219 = arith.constant 0 : index
    %680 = vector.load %arg6[%679, %c0_218, %c0_219] : memref<16x2x64xbf16, #tpu.memory_space<vmem>>, vector<1x2x64xbf16>
    %681 = vector.shape_cast %680 : vector<1x2x64xbf16> to vector<2x64xbf16>
    %682 = vector.shape_cast %677 : vector<2x64xbf16> to vector<1x2x64xbf16>
    tpu.vector_store %arg6[%679, %c0_218, %c0_219], %682 {strides = array<i32>} : memref<16x2x64xbf16, #tpu.memory_space<vmem>>, vector<1x2x64xbf16>,
    %c14_i32 = arith.constant 14 : i32
    %683 = arith.index_cast %c14_i32 : i32 to index
    %c0_220 = arith.constant 0 : index
    %c0_221 = arith.constant 0 : index
    %684 = vector.load %arg1[%683, %c0_220, %c0_221] : memref<16x2x384xf32, #tpu.memory_space<vmem>>, vector<1x2x384xf32>
    %685 = vector.shape_cast %684 : vector<1x2x384xf32> to vector<2x384xf32>
    %c15_i32_222 = arith.constant 15 : i32
    %686 = arith.subi %c15_i32_222, %c14_i32 : i32
    %687 = arith.index_cast %686 : i32 to index
    %c0_223 = arith.constant 0 : index
    %c0_224 = arith.constant 0 : index
    %688 = vector.load %arg2[%687, %c0_223, %c0_224] : memref<16x2x384xf32, #tpu.memory_space<vmem>>, vector<1x2x384xf32>
    %689 = vector.shape_cast %688 : vector<1x2x384xf32> to vector<2x384xf32>
    %690 = arith.select %23, %685, %689 : vector<2x384xi1>, vector<2x384xf32>
    %691 = arith.truncf %669 : vector<2x128xf32> to vector<2x128xbf16>
    %cst_225 = arith.constant dense<0.000000e+00> : vector<2x384xf32>
    %692 = tpu.matmul %691, %3, %cst_225 {dimension_numbers = #tpu.dot_dimension_numbers<[1], [0], [0], [1], [0, 0, 1, 1], [], []>} : vector<2x128xbf16>, vector<128x384xbf16>, vector<2x384xf32> -> vector<2x384xf32>
    %693 = vector.broadcast %4 : vector<1x384xf32> to vector<2x384xf32>
    %694 = arith.addf %692, %693 : vector<2x384xf32>
    %695 = vector.extract_strided_slice %690 {offsets = [0, 0], sizes = [2, 256], strides = [1, 1]} : vector<2x384xf32> to vector<2x256xf32>
    %696 = vector.extract_strided_slice %694 {offsets = [0, 0], sizes = [2, 256], strides = [1, 1]} : vector<2x384xf32> to vector<2x256xf32>
    %697 = arith.addf %695, %696 : vector<2x256xf32>
    %cst_226 = arith.constant 0.000000e+00 : f32
    %698 = vector.broadcast %cst_226 : f32 to vector<2x256xf32>
    %699 = arith.subf %698, %697 : vector<2x256xf32>
    %700 = math.exp %699 : vector<2x256xf32>
    %cst_227 = arith.constant 1.000000e+00 : f32
    %701 = vector.broadcast %cst_227 : f32 to vector<2x256xf32>
    %702 = arith.addf %701, %700 : vector<2x256xf32>
    %cst_228 = arith.constant 1.000000e+00 : f32
    %703 = vector.broadcast %cst_228 : f32 to vector<2x256xf32>
    %704 = arith.divf %703, %702 : vector<2x256xf32>
    %705 = vector.extract_strided_slice %704 {offsets = [0, 0], sizes = [2, 128], strides = [1, 1]} : vector<2x256xf32> to vector<2x128xf32>
    %706 = vector.extract_strided_slice %704 {offsets = [0, 128], sizes = [2, 128], strides = [1, 1]} : vector<2x256xf32> to vector<2x128xf32>
    %707 = vector.extract_strided_slice %690 {offsets = [0, 256], sizes = [2, 128], strides = [1, 1]} : vector<2x384xf32> to vector<2x128xf32>
    %708 = vector.extract_strided_slice %694 {offsets = [0, 256], sizes = [2, 128], strides = [1, 1]} : vector<2x384xf32> to vector<2x128xf32>
    %709 = arith.mulf %705, %708 : vector<2x128xf32>
    %710 = arith.addf %707, %709 : vector<2x128xf32>
    %711 = math.tanh %710 : vector<2x128xf32>
    %cst_229 = arith.constant 1.000000e+00 : f32
    %712 = vector.broadcast %cst_229 : f32 to vector<2x128xf32>
    %713 = arith.subf %712, %706 : vector<2x128xf32>
    %714 = arith.mulf %713, %711 : vector<2x128xf32>
    %715 = arith.mulf %706, %669 : vector<2x128xf32>
    %716 = arith.addf %714, %715 : vector<2x128xf32>
    %717 = vector.extract_strided_slice %716 {offsets = [0, 0], sizes = [2, 64], strides = [1, 1]} : vector<2x128xf32> to vector<2x64xf32>
    %718 = arith.truncf %717 : vector<2x64xf32> to vector<2x64xbf16>
    %719 = arith.index_cast %c14_i32 : i32 to index
    %c0_230 = arith.constant 0 : index
    %c0_231 = arith.constant 0 : index
    %720 = vector.load %arg5[%719, %c0_230, %c0_231] : memref<16x2x64xbf16, #tpu.memory_space<vmem>>, vector<1x2x64xbf16>
    %721 = vector.shape_cast %720 : vector<1x2x64xbf16> to vector<2x64xbf16>
    %722 = vector.shape_cast %718 : vector<2x64xbf16> to vector<1x2x64xbf16>
    tpu.vector_store %arg5[%719, %c0_230, %c0_231], %722 {strides = array<i32>} : memref<16x2x64xbf16, #tpu.memory_space<vmem>>, vector<1x2x64xbf16>,
    %723 = vector.extract_strided_slice %716 {offsets = [0, 64], sizes = [2, 64], strides = [1, 1]} : vector<2x128xf32> to vector<2x64xf32>
    %724 = arith.truncf %723 : vector<2x64xf32> to vector<2x64xbf16>
    %c15_i32_232 = arith.constant 15 : i32
    %725 = arith.subi %c15_i32_232, %c14_i32 : i32
    %726 = arith.index_cast %725 : i32 to index
    %c0_233 = arith.constant 0 : index
    %c0_234 = arith.constant 0 : index
    %727 = vector.load %arg6[%726, %c0_233, %c0_234] : memref<16x2x64xbf16, #tpu.memory_space<vmem>>, vector<1x2x64xbf16>
    %728 = vector.shape_cast %727 : vector<1x2x64xbf16> to vector<2x64xbf16>
    %729 = vector.shape_cast %724 : vector<2x64xbf16> to vector<1x2x64xbf16>
    tpu.vector_store %arg6[%726, %c0_233, %c0_234], %729 {strides = array<i32>} : memref<16x2x64xbf16, #tpu.memory_space<vmem>>, vector<1x2x64xbf16>,
    %c15_i32_235 = arith.constant 15 : i32
    %730 = arith.index_cast %c15_i32_235 : i32 to index
    %c0_236 = arith.constant 0 : index
    %c0_237 = arith.constant 0 : index
    %731 = vector.load %arg1[%730, %c0_236, %c0_237] : memref<16x2x384xf32, #tpu.memory_space<vmem>>, vector<1x2x384xf32>
    %732 = vector.shape_cast %731 : vector<1x2x384xf32> to vector<2x384xf32>
    %c15_i32_238 = arith.constant 15 : i32
    %733 = arith.subi %c15_i32_238, %c15_i32_235 : i32
    %734 = arith.index_cast %733 : i32 to index
    %c0_239 = arith.constant 0 : index
    %c0_240 = arith.constant 0 : index
    %735 = vector.load %arg2[%734, %c0_239, %c0_240] : memref<16x2x384xf32, #tpu.memory_space<vmem>>, vector<1x2x384xf32>
    %736 = vector.shape_cast %735 : vector<1x2x384xf32> to vector<2x384xf32>
    %737 = arith.select %23, %732, %736 : vector<2x384xi1>, vector<2x384xf32>
    %738 = arith.truncf %716 : vector<2x128xf32> to vector<2x128xbf16>
    %cst_241 = arith.constant dense<0.000000e+00> : vector<2x384xf32>
    %739 = tpu.matmul %738, %3, %cst_241 {dimension_numbers = #tpu.dot_dimension_numbers<[1], [0], [0], [1], [0, 0, 1, 1], [], []>} : vector<2x128xbf16>, vector<128x384xbf16>, vector<2x384xf32> -> vector<2x384xf32>
    %740 = vector.broadcast %4 : vector<1x384xf32> to vector<2x384xf32>
    %741 = arith.addf %739, %740 : vector<2x384xf32>
    %742 = vector.extract_strided_slice %737 {offsets = [0, 0], sizes = [2, 256], strides = [1, 1]} : vector<2x384xf32> to vector<2x256xf32>
    %743 = vector.extract_strided_slice %741 {offsets = [0, 0], sizes = [2, 256], strides = [1, 1]} : vector<2x384xf32> to vector<2x256xf32>
    %744 = arith.addf %742, %743 : vector<2x256xf32>
    %cst_242 = arith.constant 0.000000e+00 : f32
    %745 = vector.broadcast %cst_242 : f32 to vector<2x256xf32>
    %746 = arith.subf %745, %744 : vector<2x256xf32>
    %747 = math.exp %746 : vector<2x256xf32>
    %cst_243 = arith.constant 1.000000e+00 : f32
    %748 = vector.broadcast %cst_243 : f32 to vector<2x256xf32>
    %749 = arith.addf %748, %747 : vector<2x256xf32>
    %cst_244 = arith.constant 1.000000e+00 : f32
    %750 = vector.broadcast %cst_244 : f32 to vector<2x256xf32>
    %751 = arith.divf %750, %749 : vector<2x256xf32>
    %752 = vector.extract_strided_slice %751 {offsets = [0, 0], sizes = [2, 128], strides = [1, 1]} : vector<2x256xf32> to vector<2x128xf32>
    %753 = vector.extract_strided_slice %751 {offsets = [0, 128], sizes = [2, 128], strides = [1, 1]} : vector<2x256xf32> to vector<2x128xf32>
    %754 = vector.extract_strided_slice %737 {offsets = [0, 256], sizes = [2, 128], strides = [1, 1]} : vector<2x384xf32> to vector<2x128xf32>
    %755 = vector.extract_strided_slice %741 {offsets = [0, 256], sizes = [2, 128], strides = [1, 1]} : vector<2x384xf32> to vector<2x128xf32>
    %756 = arith.mulf %752, %755 : vector<2x128xf32>
    %757 = arith.addf %754, %756 : vector<2x128xf32>
    %758 = math.tanh %757 : vector<2x128xf32>
    %cst_245 = arith.constant 1.000000e+00 : f32
    %759 = vector.broadcast %cst_245 : f32 to vector<2x128xf32>
    %760 = arith.subf %759, %753 : vector<2x128xf32>
    %761 = arith.mulf %760, %758 : vector<2x128xf32>
    %762 = arith.mulf %753, %716 : vector<2x128xf32>
    %763 = arith.addf %761, %762 : vector<2x128xf32>
    %764 = vector.extract_strided_slice %763 {offsets = [0, 0], sizes = [2, 64], strides = [1, 1]} : vector<2x128xf32> to vector<2x64xf32>
    %765 = arith.truncf %764 : vector<2x64xf32> to vector<2x64xbf16>
    %766 = arith.index_cast %c15_i32_235 : i32 to index
    %c0_246 = arith.constant 0 : index
    %c0_247 = arith.constant 0 : index
    %767 = vector.load %arg5[%766, %c0_246, %c0_247] : memref<16x2x64xbf16, #tpu.memory_space<vmem>>, vector<1x2x64xbf16>
    %768 = vector.shape_cast %767 : vector<1x2x64xbf16> to vector<2x64xbf16>
    %769 = vector.shape_cast %765 : vector<2x64xbf16> to vector<1x2x64xbf16>
    tpu.vector_store %arg5[%766, %c0_246, %c0_247], %769 {strides = array<i32>} : memref<16x2x64xbf16, #tpu.memory_space<vmem>>, vector<1x2x64xbf16>,
    %770 = vector.extract_strided_slice %763 {offsets = [0, 64], sizes = [2, 64], strides = [1, 1]} : vector<2x128xf32> to vector<2x64xf32>
    %771 = arith.truncf %770 : vector<2x64xf32> to vector<2x64xbf16>
    %c15_i32_248 = arith.constant 15 : i32
    %772 = arith.subi %c15_i32_248, %c15_i32_235 : i32
    %773 = arith.index_cast %772 : i32 to index
    %c0_249 = arith.constant 0 : index
    %c0_250 = arith.constant 0 : index
    %774 = vector.load %arg6[%773, %c0_249, %c0_250] : memref<16x2x64xbf16, #tpu.memory_space<vmem>>, vector<1x2x64xbf16>
    %775 = vector.shape_cast %774 : vector<1x2x64xbf16> to vector<2x64xbf16>
    %776 = vector.shape_cast %771 : vector<2x64xbf16> to vector<1x2x64xbf16>
    tpu.vector_store %arg6[%773, %c0_249, %c0_250], %776 {strides = array<i32>} : memref<16x2x64xbf16, #tpu.memory_space<vmem>>, vector<1x2x64xbf16>,
    %c16_i32 = arith.constant 16 : i32
    %c0_251 = arith.constant 0 : index
    %c0_252 = arith.constant 0 : index
    %777 = vector.load %arg7[%c0_251, %c0_252] : memref<2x128xf32, #tpu.memory_space<vmem>>, vector<2x128xf32>
    tpu.vector_store %arg7[%c0_251, %c0_252], %763 {strides = array<i32>} : memref<2x128xf32, #tpu.memory_space<vmem>>, vector<2x128xf32>,
    return
  }
  func.func @transform_0(%arg0: i32) -> (i32, i32, i32) {
    %c0_i32 = arith.constant 0 : i32
    %c0_i32_0 = arith.constant 0 : i32
    %c0_i32_1 = arith.constant 0 : i32
    return %arg0, %c0_i32, %c0_i32_0 : i32, i32, i32
  }
  func.func @transform_1(%arg0: i32) -> (i32, i32, i32) {
    %c0_i32 = arith.constant 0 : i32
    %0 = arith.subi %c0_i32, %arg0 : i32
    %c0_i32_0 = arith.constant 0 : i32
    %c0_i32_1 = arith.constant 0 : i32
    %c0_i32_2 = arith.constant 0 : i32
    return %0, %c0_i32_0, %c0_i32_1 : i32, i32, i32
  }
  func.func @transform_2(%arg0: i32) -> (i32, i32) {
    %c0_i32 = arith.constant 0 : i32
    %c0_i32_0 = arith.constant 0 : i32
    %c0_i32_1 = arith.constant 0 : i32
    return %c0_i32, %c0_i32_0 : i32, i32
  }
  func.func @transform_3(%arg0: i32) -> (i32, i32) {
    %c0_i32 = arith.constant 0 : i32
    %c0_i32_0 = arith.constant 0 : i32
    %c0_i32_1 = arith.constant 0 : i32
    return %c0_i32, %c0_i32_0 : i32, i32
  }
  func.func @transform_4(%arg0: i32) -> (i32, i32, i32) {
    %c0_i32 = arith.constant 0 : i32
    %c0_i32_0 = arith.constant 0 : i32
    %c0_i32_1 = arith.constant 0 : i32
    return %arg0, %c0_i32, %c0_i32_0 : i32, i32, i32
  }
  func.func @transform_5(%arg0: i32) -> (i32, i32, i32) {
    %c0_i32 = arith.constant 0 : i32
    %0 = arith.subi %c0_i32, %arg0 : i32
    %c0_i32_0 = arith.constant 0 : i32
    %c0_i32_1 = arith.constant 0 : i32
    %c0_i32_2 = arith.constant 0 : i32
    return %0, %c0_i32_0, %c0_i32_1 : i32, i32, i32
  }
}

module attributes {stable_mosaic.version = 11 : i64} {
  func.func @_proj_pair_kernel(%arg0: i32, %arg1: memref<16x64xbf16, #tpu.memory_space<vmem>>, %arg2: memref<16x64xbf16, #tpu.memory_space<vmem>>, %arg3: memref<64x384xbf16, #tpu.memory_space<vmem>>, %arg4: memref<64x384xbf16, #tpu.memory_space<vmem>>, %arg5: memref<1x384xf32, #tpu.memory_space<vmem>>, %arg6: memref<16x384xf32, #tpu.memory_space<vmem>>) attributes {dimension_semantics = [#tpu.dimension_semantics<parallel>], iteration_bounds = array<i64: 2>, scalar_prefetch = 0 : i64, scratch_operands = 0 : i64, tpu.core_type = #tpu.core_type<tc>, window_params = [{transform_indices = @transform_0, window_bounds = array<i64: 16, 64>}, {transform_indices = @transform_1, window_bounds = array<i64: 16, 64>}, {pipeline_mode = #tpu.pipeline_mode<synchronous>, transform_indices = @transform_2, window_bounds = array<i64: 64, 384>}, {pipeline_mode = #tpu.pipeline_mode<synchronous>, transform_indices = @transform_3, window_bounds = array<i64: 64, 384>}, {pipeline_mode = #tpu.pipeline_mode<synchronous>, transform_indices = @transform_4, window_bounds = array<i64: 1, 384>}, {transform_indices = @transform_5, window_bounds = array<i64: 16, 384>}]} {
    %c0 = arith.constant 0 : index
    %c0_0 = arith.constant 0 : index
    %0 = vector.load %arg1[%c0, %c0_0] : memref<16x64xbf16, #tpu.memory_space<vmem>>, vector<16x64xbf16>
    %c0_1 = arith.constant 0 : index
    %c0_2 = arith.constant 0 : index
    %1 = vector.load %arg3[%c0_1, %c0_2] : memref<64x384xbf16, #tpu.memory_space<vmem>>, vector<64x384xbf16>
    %cst = arith.constant dense<0.000000e+00> : vector<16x384xf32>
    %2 = tpu.matmul %0, %1, %cst {dimension_numbers = #tpu.dot_dimension_numbers<[1], [0], [0], [1], [0, 0, 1, 1], [], []>} : vector<16x64xbf16>, vector<64x384xbf16>, vector<16x384xf32> -> vector<16x384xf32>
    %c0_3 = arith.constant 0 : index
    %c0_4 = arith.constant 0 : index
    %3 = vector.load %arg2[%c0_3, %c0_4] : memref<16x64xbf16, #tpu.memory_space<vmem>>, vector<16x64xbf16>
    %c0_5 = arith.constant 0 : index
    %c0_6 = arith.constant 0 : index
    %4 = vector.load %arg4[%c0_5, %c0_6] : memref<64x384xbf16, #tpu.memory_space<vmem>>, vector<64x384xbf16>
    %cst_7 = arith.constant dense<0.000000e+00> : vector<16x384xf32>
    %5 = tpu.matmul %3, %4, %cst_7 {dimension_numbers = #tpu.dot_dimension_numbers<[1], [0], [0], [1], [0, 0, 1, 1], [], []>} : vector<16x64xbf16>, vector<64x384xbf16>, vector<16x384xf32> -> vector<16x384xf32>
    %6 = arith.addf %2, %5 : vector<16x384xf32>
    %c0_8 = arith.constant 0 : index
    %c0_9 = arith.constant 0 : index
    %7 = vector.load %arg5[%c0_8, %c0_9] : memref<1x384xf32, #tpu.memory_space<vmem>>, vector<1x384xf32>
    %8 = vector.broadcast %7 : vector<1x384xf32> to vector<16x384xf32>
    %9 = arith.addf %6, %8 : vector<16x384xf32>
    %c0_10 = arith.constant 0 : index
    %c0_11 = arith.constant 0 : index
    %10 = vector.load %arg6[%c0_10, %c0_11] : memref<16x384xf32, #tpu.memory_space<vmem>>, vector<16x384xf32>
    tpu.vector_store %arg6[%c0_10, %c0_11], %9 {strides = array<i32>} : memref<16x384xf32, #tpu.memory_space<vmem>>, vector<16x384xf32>,
    return
  }
  func.func @transform_0(%arg0: i32) -> (i32, i32) {
    %c0_i32 = arith.constant 0 : i32
    %c0_i32_0 = arith.constant 0 : i32
    return %arg0, %c0_i32 : i32, i32
  }
  func.func @transform_1(%arg0: i32) -> (i32, i32) {
    %c0_i32 = arith.constant 0 : i32
    %c0_i32_0 = arith.constant 0 : i32
    return %arg0, %c0_i32 : i32, i32
  }
  func.func @transform_2(%arg0: i32) -> (i32, i32) {
    %c0_i32 = arith.constant 0 : i32
    %c0_i32_0 = arith.constant 0 : i32
    %c0_i32_1 = arith.constant 0 : i32
    return %c0_i32, %c0_i32_0 : i32, i32
  }
  func.func @transform_3(%arg0: i32) -> (i32, i32) {
    %c0_i32 = arith.constant 0 : i32
    %c0_i32_0 = arith.constant 0 : i32
    %c0_i32_1 = arith.constant 0 : i32
    return %c0_i32, %c0_i32_0 : i32, i32
  }
  func.func @transform_4(%arg0: i32) -> (i32, i32) {
    %c0_i32 = arith.constant 0 : i32
    %c0_i32_0 = arith.constant 0 : i32
    %c0_i32_1 = arith.constant 0 : i32
    return %c0_i32, %c0_i32_0 : i32, i32
  }
  func.func @transform_5(%arg0: i32) -> (i32, i32) {
    %c0_i32 = arith.constant 0 : i32
    %c0_i32_0 = arith.constant 0 : i32
    return %arg0, %c0_i32 : i32, i32
  }
}

module attributes {stable_mosaic.version = 11 : i64} {
  func.func @_recurrent_final_kernel(%arg0: i32, %arg1: memref<16x2x384xf32, #tpu.memory_space<vmem>>, %arg2: memref<16x2x384xf32, #tpu.memory_space<vmem>>, %arg3: memref<128x384xbf16, #tpu.memory_space<vmem>>, %arg4: memref<1x384xf32, #tpu.memory_space<vmem>>, %arg5: memref<128x2xbf16, #tpu.memory_space<vmem>>, %arg6: memref<1x2xf32, #tpu.memory_space<vmem>>, %arg7: memref<2x2xf32, #tpu.memory_space<vmem>>, %arg8: memref<2x128xf32, #tpu.memory_space<vmem>>, %arg9: memref<2x128xf32, #tpu.memory_space<vmem>>) attributes {dimension_semantics = [#tpu.dimension_semantics<arbitrary>], iteration_bounds = array<i64: 1>, scalar_prefetch = 0 : i64, scratch_operands = 2 : i64, tpu.core_type = #tpu.core_type<tc>, window_params = [{transform_indices = @transform_0, window_bounds = array<i64: 16, 2, 384>}, {transform_indices = @transform_1, window_bounds = array<i64: 16, 2, 384>}, {pipeline_mode = #tpu.pipeline_mode<synchronous>, transform_indices = @transform_2, window_bounds = array<i64: 128, 384>}, {pipeline_mode = #tpu.pipeline_mode<synchronous>, transform_indices = @transform_3, window_bounds = array<i64: 1, 384>}, {pipeline_mode = #tpu.pipeline_mode<synchronous>, transform_indices = @transform_4, window_bounds = array<i64: 128, 2>}, {pipeline_mode = #tpu.pipeline_mode<synchronous>, transform_indices = @transform_5, window_bounds = array<i64: 1, 2>}, {pipeline_mode = #tpu.pipeline_mode<synchronous>, transform_indices = @transform_6, window_bounds = array<i64: 2, 2>}]} {
    %c0_i32 = arith.constant 0 : i32
    %0 = arith.cmpi eq, %arg0, %c0_i32 : i32
    %1 = arith.extui %0 : i1 to i32
    %c0_i32_0 = arith.constant 0 : i32
    %2 = arith.cmpi ne, %1, %c0_i32_0 : i32
    scf.if %2 {
      %cst_179 = arith.constant 0.000000e+00 : f32
      %591 = vector.broadcast %cst_179 : f32 to vector<2x128xf32>
      %c0_180 = arith.constant 0 : index
      %c0_181 = arith.constant 0 : index
      %592 = vector.load %arg8[%c0_180, %c0_181] : memref<2x128xf32, #tpu.memory_space<vmem>>, vector<2x128xf32>
      tpu.vector_store %arg8[%c0_180, %c0_181], %591 {strides = array<i32>} : memref<2x128xf32, #tpu.memory_space<vmem>>, vector<2x128xf32>,
      %cst_182 = arith.constant 0.000000e+00 : f32
      %593 = vector.broadcast %cst_182 : f32 to vector<2x128xf32>
      %c0_183 = arith.constant 0 : index
      %c0_184 = arith.constant 0 : index
      %594 = vector.load %arg9[%c0_183, %c0_184] : memref<2x128xf32, #tpu.memory_space<vmem>>, vector<2x128xf32>
      tpu.vector_store %arg9[%c0_183, %c0_184], %593 {strides = array<i32>} : memref<2x128xf32, #tpu.memory_space<vmem>>, vector<2x128xf32>,
    } else {
    }
    %c0 = arith.constant 0 : index
    %c0_1 = arith.constant 0 : index
    %3 = vector.load %arg3[%c0, %c0_1] : memref<128x384xbf16, #tpu.memory_space<vmem>>, vector<128x384xbf16>
    %c0_2 = arith.constant 0 : index
    %c0_3 = arith.constant 0 : index
    %4 = vector.load %arg4[%c0_2, %c0_3] : memref<1x384xf32, #tpu.memory_space<vmem>>, vector<1x384xf32>
    %5 = tpu.iota {dimensions = array<i32: 1>} : vector<2x384xi32>
    %c128_i32 = arith.constant 128 : i32
    %c0_i32_4 = arith.constant 0 : i32
    %6 = arith.cmpi eq, %c128_i32, %c0_i32_4 : i32
    %c1_i32 = arith.constant 1 : i32
    %7 = arith.select %6, %c1_i32, %c128_i32 : i32
    %8 = vector.broadcast %7 : i32 to vector<2x384xi32>
    %9 = arith.remsi %5, %8 : vector<2x384xi32>
    %c0_i32_5 = arith.constant 0 : i32
    %10 = vector.broadcast %c0_i32_5 : i32 to vector<2x384xi32>
    %11 = arith.cmpi ne, %9, %10 : vector<2x384xi32>
    %c0_i32_6 = arith.constant 0 : i32
    %12 = vector.broadcast %c0_i32_6 : i32 to vector<2x384xi32>
    %13 = arith.cmpi slt, %9, %12 : vector<2x384xi32>
    %c0_i32_7 = arith.constant 0 : i32
    %14 = arith.cmpi slt, %7, %c0_i32_7 : i32
    %15 = vector.broadcast %14 : i1 to vector<2x384xi1>
    %16 = vector.broadcast %15 : vector<2x384xi1> to vector<2x384xi1>
    %17 = arith.xori %13, %16 : vector<2x384xi1>
    %18 = arith.andi %17, %11 : vector<2x384xi1>
    %19 = vector.broadcast %7 : i32 to vector<2x384xi32>
    %20 = arith.addi %9, %19 : vector<2x384xi32>
    %21 = arith.select %18, %20, %9 : vector<2x384xi1>, vector<2x384xi32>
    %c64_i32 = arith.constant 64 : i32
    %22 = vector.broadcast %c64_i32 : i32 to vector<2x384xi32>
    %23 = arith.cmpi slt, %21, %22 : vector<2x384xi32>
    %c0_8 = arith.constant 0 : index
    %c0_9 = arith.constant 0 : index
    %24 = vector.load %arg8[%c0_8, %c0_9] : memref<2x128xf32, #tpu.memory_space<vmem>>, vector<2x128xf32>
    %c0_10 = arith.constant 0 : index
    %c0_11 = arith.constant 0 : index
    %25 = vector.load %arg9[%c0_10, %c0_11] : memref<2x128xf32, #tpu.memory_space<vmem>>, vector<2x128xf32>
    %c0_i32_12 = arith.constant 0 : i32
    %26 = arith.index_cast %c0_i32_12 : i32 to index
    %c0_13 = arith.constant 0 : index
    %c0_14 = arith.constant 0 : index
    %27 = vector.load %arg1[%26, %c0_13, %c0_14] : memref<16x2x384xf32, #tpu.memory_space<vmem>>, vector<1x2x384xf32>
    %28 = vector.shape_cast %27 : vector<1x2x384xf32> to vector<2x384xf32>
    %c15_i32 = arith.constant 15 : i32
    %29 = arith.subi %c15_i32, %c0_i32_12 : i32
    %30 = arith.index_cast %29 : i32 to index
    %c0_15 = arith.constant 0 : index
    %c0_16 = arith.constant 0 : index
    %31 = vector.load %arg2[%30, %c0_15, %c0_16] : memref<16x2x384xf32, #tpu.memory_space<vmem>>, vector<1x2x384xf32>
    %32 = vector.shape_cast %31 : vector<1x2x384xf32> to vector<2x384xf32>
    %33 = arith.select %23, %28, %32 : vector<2x384xi1>, vector<2x384xf32>
    %34 = arith.truncf %24 : vector<2x128xf32> to vector<2x128xbf16>
    %cst = arith.constant dense<0.000000e+00> : vector<2x384xf32>
    %35 = tpu.matmul %34, %3, %cst {dimension_numbers = #tpu.dot_dimension_numbers<[1], [0], [0], [1], [0, 0, 1, 1], [], []>} : vector<2x128xbf16>, vector<128x384xbf16>, vector<2x384xf32> -> vector<2x384xf32>
    %36 = vector.broadcast %4 : vector<1x384xf32> to vector<2x384xf32>
    %37 = arith.addf %35, %36 : vector<2x384xf32>
    %38 = vector.extract_strided_slice %33 {offsets = [0, 0], sizes = [2, 256], strides = [1, 1]} : vector<2x384xf32> to vector<2x256xf32>
    %39 = vector.extract_strided_slice %37 {offsets = [0, 0], sizes = [2, 256], strides = [1, 1]} : vector<2x384xf32> to vector<2x256xf32>
    %40 = arith.addf %38, %39 : vector<2x256xf32>
    %cst_17 = arith.constant 0.000000e+00 : f32
    %41 = vector.broadcast %cst_17 : f32 to vector<2x256xf32>
    %42 = arith.subf %41, %40 : vector<2x256xf32>
    %43 = math.exp %42 : vector<2x256xf32>
    %cst_18 = arith.constant 1.000000e+00 : f32
    %44 = vector.broadcast %cst_18 : f32 to vector<2x256xf32>
    %45 = arith.addf %44, %43 : vector<2x256xf32>
    %cst_19 = arith.constant 1.000000e+00 : f32
    %46 = vector.broadcast %cst_19 : f32 to vector<2x256xf32>
    %47 = arith.divf %46, %45 : vector<2x256xf32>
    %48 = vector.extract_strided_slice %47 {offsets = [0, 0], sizes = [2, 128], strides = [1, 1]} : vector<2x256xf32> to vector<2x128xf32>
    %49 = vector.extract_strided_slice %47 {offsets = [0, 128], sizes = [2, 128], strides = [1, 1]} : vector<2x256xf32> to vector<2x128xf32>
    %50 = vector.extract_strided_slice %33 {offsets = [0, 256], sizes = [2, 128], strides = [1, 1]} : vector<2x384xf32> to vector<2x128xf32>
    %51 = vector.extract_strided_slice %37 {offsets = [0, 256], sizes = [2, 128], strides = [1, 1]} : vector<2x384xf32> to vector<2x128xf32>
    %52 = arith.mulf %48, %51 : vector<2x128xf32>
    %53 = arith.addf %50, %52 : vector<2x128xf32>
    %54 = math.tanh %53 : vector<2x128xf32>
    %cst_20 = arith.constant 1.000000e+00 : f32
    %55 = vector.broadcast %cst_20 : f32 to vector<2x128xf32>
    %56 = arith.subf %55, %49 : vector<2x128xf32>
    %57 = arith.mulf %56, %54 : vector<2x128xf32>
    %58 = arith.mulf %49, %24 : vector<2x128xf32>
    %59 = arith.addf %57, %58 : vector<2x128xf32>
    %60 = arith.addf %25, %59 : vector<2x128xf32>
    %c1_i32_21 = arith.constant 1 : i32
    %61 = arith.index_cast %c1_i32_21 : i32 to index
    %c0_22 = arith.constant 0 : index
    %c0_23 = arith.constant 0 : index
    %62 = vector.load %arg1[%61, %c0_22, %c0_23] : memref<16x2x384xf32, #tpu.memory_space<vmem>>, vector<1x2x384xf32>
    %63 = vector.shape_cast %62 : vector<1x2x384xf32> to vector<2x384xf32>
    %c15_i32_24 = arith.constant 15 : i32
    %64 = arith.subi %c15_i32_24, %c1_i32_21 : i32
    %65 = arith.index_cast %64 : i32 to index
    %c0_25 = arith.constant 0 : index
    %c0_26 = arith.constant 0 : index
    %66 = vector.load %arg2[%65, %c0_25, %c0_26] : memref<16x2x384xf32, #tpu.memory_space<vmem>>, vector<1x2x384xf32>
    %67 = vector.shape_cast %66 : vector<1x2x384xf32> to vector<2x384xf32>
    %68 = arith.select %23, %63, %67 : vector<2x384xi1>, vector<2x384xf32>
    %69 = arith.truncf %59 : vector<2x128xf32> to vector<2x128xbf16>
    %cst_27 = arith.constant dense<0.000000e+00> : vector<2x384xf32>
    %70 = tpu.matmul %69, %3, %cst_27 {dimension_numbers = #tpu.dot_dimension_numbers<[1], [0], [0], [1], [0, 0, 1, 1], [], []>} : vector<2x128xbf16>, vector<128x384xbf16>, vector<2x384xf32> -> vector<2x384xf32>
    %71 = vector.broadcast %4 : vector<1x384xf32> to vector<2x384xf32>
    %72 = arith.addf %70, %71 : vector<2x384xf32>
    %73 = vector.extract_strided_slice %68 {offsets = [0, 0], sizes = [2, 256], strides = [1, 1]} : vector<2x384xf32> to vector<2x256xf32>
    %74 = vector.extract_strided_slice %72 {offsets = [0, 0], sizes = [2, 256], strides = [1, 1]} : vector<2x384xf32> to vector<2x256xf32>
    %75 = arith.addf %73, %74 : vector<2x256xf32>
    %cst_28 = arith.constant 0.000000e+00 : f32
    %76 = vector.broadcast %cst_28 : f32 to vector<2x256xf32>
    %77 = arith.subf %76, %75 : vector<2x256xf32>
    %78 = math.exp %77 : vector<2x256xf32>
    %cst_29 = arith.constant 1.000000e+00 : f32
    %79 = vector.broadcast %cst_29 : f32 to vector<2x256xf32>
    %80 = arith.addf %79, %78 : vector<2x256xf32>
    %cst_30 = arith.constant 1.000000e+00 : f32
    %81 = vector.broadcast %cst_30 : f32 to vector<2x256xf32>
    %82 = arith.divf %81, %80 : vector<2x256xf32>
    %83 = vector.extract_strided_slice %82 {offsets = [0, 0], sizes = [2, 128], strides = [1, 1]} : vector<2x256xf32> to vector<2x128xf32>
    %84 = vector.extract_strided_slice %82 {offsets = [0, 128], sizes = [2, 128], strides = [1, 1]} : vector<2x256xf32> to vector<2x128xf32>
    %85 = vector.extract_strided_slice %68 {offsets = [0, 256], sizes = [2, 128], strides = [1, 1]} : vector<2x384xf32> to vector<2x128xf32>
    %86 = vector.extract_strided_slice %72 {offsets = [0, 256], sizes = [2, 128], strides = [1, 1]} : vector<2x384xf32> to vector<2x128xf32>
    %87 = arith.mulf %83, %86 : vector<2x128xf32>
    %88 = arith.addf %85, %87 : vector<2x128xf32>
    %89 = math.tanh %88 : vector<2x128xf32>
    %cst_31 = arith.constant 1.000000e+00 : f32
    %90 = vector.broadcast %cst_31 : f32 to vector<2x128xf32>
    %91 = arith.subf %90, %84 : vector<2x128xf32>
    %92 = arith.mulf %91, %89 : vector<2x128xf32>
    %93 = arith.mulf %84, %59 : vector<2x128xf32>
    %94 = arith.addf %92, %93 : vector<2x128xf32>
    %95 = arith.addf %60, %94 : vector<2x128xf32>
    %c2_i32 = arith.constant 2 : i32
    %96 = arith.index_cast %c2_i32 : i32 to index
    %c0_32 = arith.constant 0 : index
    %c0_33 = arith.constant 0 : index
    %97 = vector.load %arg1[%96, %c0_32, %c0_33] : memref<16x2x384xf32, #tpu.memory_space<vmem>>, vector<1x2x384xf32>
    %98 = vector.shape_cast %97 : vector<1x2x384xf32> to vector<2x384xf32>
    %c15_i32_34 = arith.constant 15 : i32
    %99 = arith.subi %c15_i32_34, %c2_i32 : i32
    %100 = arith.index_cast %99 : i32 to index
    %c0_35 = arith.constant 0 : index
    %c0_36 = arith.constant 0 : index
    %101 = vector.load %arg2[%100, %c0_35, %c0_36] : memref<16x2x384xf32, #tpu.memory_space<vmem>>, vector<1x2x384xf32>
    %102 = vector.shape_cast %101 : vector<1x2x384xf32> to vector<2x384xf32>
    %103 = arith.select %23, %98, %102 : vector<2x384xi1>, vector<2x384xf32>
    %104 = arith.truncf %94 : vector<2x128xf32> to vector<2x128xbf16>
    %cst_37 = arith.constant dense<0.000000e+00> : vector<2x384xf32>
    %105 = tpu.matmul %104, %3, %cst_37 {dimension_numbers = #tpu.dot_dimension_numbers<[1], [0], [0], [1], [0, 0, 1, 1], [], []>} : vector<2x128xbf16>, vector<128x384xbf16>, vector<2x384xf32> -> vector<2x384xf32>
    %106 = vector.broadcast %4 : vector<1x384xf32> to vector<2x384xf32>
    %107 = arith.addf %105, %106 : vector<2x384xf32>
    %108 = vector.extract_strided_slice %103 {offsets = [0, 0], sizes = [2, 256], strides = [1, 1]} : vector<2x384xf32> to vector<2x256xf32>
    %109 = vector.extract_strided_slice %107 {offsets = [0, 0], sizes = [2, 256], strides = [1, 1]} : vector<2x384xf32> to vector<2x256xf32>
    %110 = arith.addf %108, %109 : vector<2x256xf32>
    %cst_38 = arith.constant 0.000000e+00 : f32
    %111 = vector.broadcast %cst_38 : f32 to vector<2x256xf32>
    %112 = arith.subf %111, %110 : vector<2x256xf32>
    %113 = math.exp %112 : vector<2x256xf32>
    %cst_39 = arith.constant 1.000000e+00 : f32
    %114 = vector.broadcast %cst_39 : f32 to vector<2x256xf32>
    %115 = arith.addf %114, %113 : vector<2x256xf32>
    %cst_40 = arith.constant 1.000000e+00 : f32
    %116 = vector.broadcast %cst_40 : f32 to vector<2x256xf32>
    %117 = arith.divf %116, %115 : vector<2x256xf32>
    %118 = vector.extract_strided_slice %117 {offsets = [0, 0], sizes = [2, 128], strides = [1, 1]} : vector<2x256xf32> to vector<2x128xf32>
    %119 = vector.extract_strided_slice %117 {offsets = [0, 128], sizes = [2, 128], strides = [1, 1]} : vector<2x256xf32> to vector<2x128xf32>
    %120 = vector.extract_strided_slice %103 {offsets = [0, 256], sizes = [2, 128], strides = [1, 1]} : vector<2x384xf32> to vector<2x128xf32>
    %121 = vector.extract_strided_slice %107 {offsets = [0, 256], sizes = [2, 128], strides = [1, 1]} : vector<2x384xf32> to vector<2x128xf32>
    %122 = arith.mulf %118, %121 : vector<2x128xf32>
    %123 = arith.addf %120, %122 : vector<2x128xf32>
    %124 = math.tanh %123 : vector<2x128xf32>
    %cst_41 = arith.constant 1.000000e+00 : f32
    %125 = vector.broadcast %cst_41 : f32 to vector<2x128xf32>
    %126 = arith.subf %125, %119 : vector<2x128xf32>
    %127 = arith.mulf %126, %124 : vector<2x128xf32>
    %128 = arith.mulf %119, %94 : vector<2x128xf32>
    %129 = arith.addf %127, %128 : vector<2x128xf32>
    %130 = arith.addf %95, %129 : vector<2x128xf32>
    %c3_i32 = arith.constant 3 : i32
    %131 = arith.index_cast %c3_i32 : i32 to index
    %c0_42 = arith.constant 0 : index
    %c0_43 = arith.constant 0 : index
    %132 = vector.load %arg1[%131, %c0_42, %c0_43] : memref<16x2x384xf32, #tpu.memory_space<vmem>>, vector<1x2x384xf32>
    %133 = vector.shape_cast %132 : vector<1x2x384xf32> to vector<2x384xf32>
    %c15_i32_44 = arith.constant 15 : i32
    %134 = arith.subi %c15_i32_44, %c3_i32 : i32
    %135 = arith.index_cast %134 : i32 to index
    %c0_45 = arith.constant 0 : index
    %c0_46 = arith.constant 0 : index
    %136 = vector.load %arg2[%135, %c0_45, %c0_46] : memref<16x2x384xf32, #tpu.memory_space<vmem>>, vector<1x2x384xf32>
    %137 = vector.shape_cast %136 : vector<1x2x384xf32> to vector<2x384xf32>
    %138 = arith.select %23, %133, %137 : vector<2x384xi1>, vector<2x384xf32>
    %139 = arith.truncf %129 : vector<2x128xf32> to vector<2x128xbf16>
    %cst_47 = arith.constant dense<0.000000e+00> : vector<2x384xf32>
    %140 = tpu.matmul %139, %3, %cst_47 {dimension_numbers = #tpu.dot_dimension_numbers<[1], [0], [0], [1], [0, 0, 1, 1], [], []>} : vector<2x128xbf16>, vector<128x384xbf16>, vector<2x384xf32> -> vector<2x384xf32>
    %141 = vector.broadcast %4 : vector<1x384xf32> to vector<2x384xf32>
    %142 = arith.addf %140, %141 : vector<2x384xf32>
    %143 = vector.extract_strided_slice %138 {offsets = [0, 0], sizes = [2, 256], strides = [1, 1]} : vector<2x384xf32> to vector<2x256xf32>
    %144 = vector.extract_strided_slice %142 {offsets = [0, 0], sizes = [2, 256], strides = [1, 1]} : vector<2x384xf32> to vector<2x256xf32>
    %145 = arith.addf %143, %144 : vector<2x256xf32>
    %cst_48 = arith.constant 0.000000e+00 : f32
    %146 = vector.broadcast %cst_48 : f32 to vector<2x256xf32>
    %147 = arith.subf %146, %145 : vector<2x256xf32>
    %148 = math.exp %147 : vector<2x256xf32>
    %cst_49 = arith.constant 1.000000e+00 : f32
    %149 = vector.broadcast %cst_49 : f32 to vector<2x256xf32>
    %150 = arith.addf %149, %148 : vector<2x256xf32>
    %cst_50 = arith.constant 1.000000e+00 : f32
    %151 = vector.broadcast %cst_50 : f32 to vector<2x256xf32>
    %152 = arith.divf %151, %150 : vector<2x256xf32>
    %153 = vector.extract_strided_slice %152 {offsets = [0, 0], sizes = [2, 128], strides = [1, 1]} : vector<2x256xf32> to vector<2x128xf32>
    %154 = vector.extract_strided_slice %152 {offsets = [0, 128], sizes = [2, 128], strides = [1, 1]} : vector<2x256xf32> to vector<2x128xf32>
    %155 = vector.extract_strided_slice %138 {offsets = [0, 256], sizes = [2, 128], strides = [1, 1]} : vector<2x384xf32> to vector<2x128xf32>
    %156 = vector.extract_strided_slice %142 {offsets = [0, 256], sizes = [2, 128], strides = [1, 1]} : vector<2x384xf32> to vector<2x128xf32>
    %157 = arith.mulf %153, %156 : vector<2x128xf32>
    %158 = arith.addf %155, %157 : vector<2x128xf32>
    %159 = math.tanh %158 : vector<2x128xf32>
    %cst_51 = arith.constant 1.000000e+00 : f32
    %160 = vector.broadcast %cst_51 : f32 to vector<2x128xf32>
    %161 = arith.subf %160, %154 : vector<2x128xf32>
    %162 = arith.mulf %161, %159 : vector<2x128xf32>
    %163 = arith.mulf %154, %129 : vector<2x128xf32>
    %164 = arith.addf %162, %163 : vector<2x128xf32>
    %165 = arith.addf %130, %164 : vector<2x128xf32>
    %c4_i32 = arith.constant 4 : i32
    %166 = arith.index_cast %c4_i32 : i32 to index
    %c0_52 = arith.constant 0 : index
    %c0_53 = arith.constant 0 : index
    %167 = vector.load %arg1[%166, %c0_52, %c0_53] : memref<16x2x384xf32, #tpu.memory_space<vmem>>, vector<1x2x384xf32>
    %168 = vector.shape_cast %167 : vector<1x2x384xf32> to vector<2x384xf32>
    %c15_i32_54 = arith.constant 15 : i32
    %169 = arith.subi %c15_i32_54, %c4_i32 : i32
    %170 = arith.index_cast %169 : i32 to index
    %c0_55 = arith.constant 0 : index
    %c0_56 = arith.constant 0 : index
    %171 = vector.load %arg2[%170, %c0_55, %c0_56] : memref<16x2x384xf32, #tpu.memory_space<vmem>>, vector<1x2x384xf32>
    %172 = vector.shape_cast %171 : vector<1x2x384xf32> to vector<2x384xf32>
    %173 = arith.select %23, %168, %172 : vector<2x384xi1>, vector<2x384xf32>
    %174 = arith.truncf %164 : vector<2x128xf32> to vector<2x128xbf16>
    %cst_57 = arith.constant dense<0.000000e+00> : vector<2x384xf32>
    %175 = tpu.matmul %174, %3, %cst_57 {dimension_numbers = #tpu.dot_dimension_numbers<[1], [0], [0], [1], [0, 0, 1, 1], [], []>} : vector<2x128xbf16>, vector<128x384xbf16>, vector<2x384xf32> -> vector<2x384xf32>
    %176 = vector.broadcast %4 : vector<1x384xf32> to vector<2x384xf32>
    %177 = arith.addf %175, %176 : vector<2x384xf32>
    %178 = vector.extract_strided_slice %173 {offsets = [0, 0], sizes = [2, 256], strides = [1, 1]} : vector<2x384xf32> to vector<2x256xf32>
    %179 = vector.extract_strided_slice %177 {offsets = [0, 0], sizes = [2, 256], strides = [1, 1]} : vector<2x384xf32> to vector<2x256xf32>
    %180 = arith.addf %178, %179 : vector<2x256xf32>
    %cst_58 = arith.constant 0.000000e+00 : f32
    %181 = vector.broadcast %cst_58 : f32 to vector<2x256xf32>
    %182 = arith.subf %181, %180 : vector<2x256xf32>
    %183 = math.exp %182 : vector<2x256xf32>
    %cst_59 = arith.constant 1.000000e+00 : f32
    %184 = vector.broadcast %cst_59 : f32 to vector<2x256xf32>
    %185 = arith.addf %184, %183 : vector<2x256xf32>
    %cst_60 = arith.constant 1.000000e+00 : f32
    %186 = vector.broadcast %cst_60 : f32 to vector<2x256xf32>
    %187 = arith.divf %186, %185 : vector<2x256xf32>
    %188 = vector.extract_strided_slice %187 {offsets = [0, 0], sizes = [2, 128], strides = [1, 1]} : vector<2x256xf32> to vector<2x128xf32>
    %189 = vector.extract_strided_slice %187 {offsets = [0, 128], sizes = [2, 128], strides = [1, 1]} : vector<2x256xf32> to vector<2x128xf32>
    %190 = vector.extract_strided_slice %173 {offsets = [0, 256], sizes = [2, 128], strides = [1, 1]} : vector<2x384xf32> to vector<2x128xf32>
    %191 = vector.extract_strided_slice %177 {offsets = [0, 256], sizes = [2, 128], strides = [1, 1]} : vector<2x384xf32> to vector<2x128xf32>
    %192 = arith.mulf %188, %191 : vector<2x128xf32>
    %193 = arith.addf %190, %192 : vector<2x128xf32>
    %194 = math.tanh %193 : vector<2x128xf32>
    %cst_61 = arith.constant 1.000000e+00 : f32
    %195 = vector.broadcast %cst_61 : f32 to vector<2x128xf32>
    %196 = arith.subf %195, %189 : vector<2x128xf32>
    %197 = arith.mulf %196, %194 : vector<2x128xf32>
    %198 = arith.mulf %189, %164 : vector<2x128xf32>
    %199 = arith.addf %197, %198 : vector<2x128xf32>
    %200 = arith.addf %165, %199 : vector<2x128xf32>
    %c5_i32 = arith.constant 5 : i32
    %201 = arith.index_cast %c5_i32 : i32 to index
    %c0_62 = arith.constant 0 : index
    %c0_63 = arith.constant 0 : index
    %202 = vector.load %arg1[%201, %c0_62, %c0_63] : memref<16x2x384xf32, #tpu.memory_space<vmem>>, vector<1x2x384xf32>
    %203 = vector.shape_cast %202 : vector<1x2x384xf32> to vector<2x384xf32>
    %c15_i32_64 = arith.constant 15 : i32
    %204 = arith.subi %c15_i32_64, %c5_i32 : i32
    %205 = arith.index_cast %204 : i32 to index
    %c0_65 = arith.constant 0 : index
    %c0_66 = arith.constant 0 : index
    %206 = vector.load %arg2[%205, %c0_65, %c0_66] : memref<16x2x384xf32, #tpu.memory_space<vmem>>, vector<1x2x384xf32>
    %207 = vector.shape_cast %206 : vector<1x2x384xf32> to vector<2x384xf32>
    %208 = arith.select %23, %203, %207 : vector<2x384xi1>, vector<2x384xf32>
    %209 = arith.truncf %199 : vector<2x128xf32> to vector<2x128xbf16>
    %cst_67 = arith.constant dense<0.000000e+00> : vector<2x384xf32>
    %210 = tpu.matmul %209, %3, %cst_67 {dimension_numbers = #tpu.dot_dimension_numbers<[1], [0], [0], [1], [0, 0, 1, 1], [], []>} : vector<2x128xbf16>, vector<128x384xbf16>, vector<2x384xf32> -> vector<2x384xf32>
    %211 = vector.broadcast %4 : vector<1x384xf32> to vector<2x384xf32>
    %212 = arith.addf %210, %211 : vector<2x384xf32>
    %213 = vector.extract_strided_slice %208 {offsets = [0, 0], sizes = [2, 256], strides = [1, 1]} : vector<2x384xf32> to vector<2x256xf32>
    %214 = vector.extract_strided_slice %212 {offsets = [0, 0], sizes = [2, 256], strides = [1, 1]} : vector<2x384xf32> to vector<2x256xf32>
    %215 = arith.addf %213, %214 : vector<2x256xf32>
    %cst_68 = arith.constant 0.000000e+00 : f32
    %216 = vector.broadcast %cst_68 : f32 to vector<2x256xf32>
    %217 = arith.subf %216, %215 : vector<2x256xf32>
    %218 = math.exp %217 : vector<2x256xf32>
    %cst_69 = arith.constant 1.000000e+00 : f32
    %219 = vector.broadcast %cst_69 : f32 to vector<2x256xf32>
    %220 = arith.addf %219, %218 : vector<2x256xf32>
    %cst_70 = arith.constant 1.000000e+00 : f32
    %221 = vector.broadcast %cst_70 : f32 to vector<2x256xf32>
    %222 = arith.divf %221, %220 : vector<2x256xf32>
    %223 = vector.extract_strided_slice %222 {offsets = [0, 0], sizes = [2, 128], strides = [1, 1]} : vector<2x256xf32> to vector<2x128xf32>
    %224 = vector.extract_strided_slice %222 {offsets = [0, 128], sizes = [2, 128], strides = [1, 1]} : vector<2x256xf32> to vector<2x128xf32>
    %225 = vector.extract_strided_slice %208 {offsets = [0, 256], sizes = [2, 128], strides = [1, 1]} : vector<2x384xf32> to vector<2x128xf32>
    %226 = vector.extract_strided_slice %212 {offsets = [0, 256], sizes = [2, 128], strides = [1, 1]} : vector<2x384xf32> to vector<2x128xf32>
    %227 = arith.mulf %223, %226 : vector<2x128xf32>
    %228 = arith.addf %225, %227 : vector<2x128xf32>
    %229 = math.tanh %228 : vector<2x128xf32>
    %cst_71 = arith.constant 1.000000e+00 : f32
    %230 = vector.broadcast %cst_71 : f32 to vector<2x128xf32>
    %231 = arith.subf %230, %224 : vector<2x128xf32>
    %232 = arith.mulf %231, %229 : vector<2x128xf32>
    %233 = arith.mulf %224, %199 : vector<2x128xf32>
    %234 = arith.addf %232, %233 : vector<2x128xf32>
    %235 = arith.addf %200, %234 : vector<2x128xf32>
    %c6_i32 = arith.constant 6 : i32
    %236 = arith.index_cast %c6_i32 : i32 to index
    %c0_72 = arith.constant 0 : index
    %c0_73 = arith.constant 0 : index
    %237 = vector.load %arg1[%236, %c0_72, %c0_73] : memref<16x2x384xf32, #tpu.memory_space<vmem>>, vector<1x2x384xf32>
    %238 = vector.shape_cast %237 : vector<1x2x384xf32> to vector<2x384xf32>
    %c15_i32_74 = arith.constant 15 : i32
    %239 = arith.subi %c15_i32_74, %c6_i32 : i32
    %240 = arith.index_cast %239 : i32 to index
    %c0_75 = arith.constant 0 : index
    %c0_76 = arith.constant 0 : index
    %241 = vector.load %arg2[%240, %c0_75, %c0_76] : memref<16x2x384xf32, #tpu.memory_space<vmem>>, vector<1x2x384xf32>
    %242 = vector.shape_cast %241 : vector<1x2x384xf32> to vector<2x384xf32>
    %243 = arith.select %23, %238, %242 : vector<2x384xi1>, vector<2x384xf32>
    %244 = arith.truncf %234 : vector<2x128xf32> to vector<2x128xbf16>
    %cst_77 = arith.constant dense<0.000000e+00> : vector<2x384xf32>
    %245 = tpu.matmul %244, %3, %cst_77 {dimension_numbers = #tpu.dot_dimension_numbers<[1], [0], [0], [1], [0, 0, 1, 1], [], []>} : vector<2x128xbf16>, vector<128x384xbf16>, vector<2x384xf32> -> vector<2x384xf32>
    %246 = vector.broadcast %4 : vector<1x384xf32> to vector<2x384xf32>
    %247 = arith.addf %245, %246 : vector<2x384xf32>
    %248 = vector.extract_strided_slice %243 {offsets = [0, 0], sizes = [2, 256], strides = [1, 1]} : vector<2x384xf32> to vector<2x256xf32>
    %249 = vector.extract_strided_slice %247 {offsets = [0, 0], sizes = [2, 256], strides = [1, 1]} : vector<2x384xf32> to vector<2x256xf32>
    %250 = arith.addf %248, %249 : vector<2x256xf32>
    %cst_78 = arith.constant 0.000000e+00 : f32
    %251 = vector.broadcast %cst_78 : f32 to vector<2x256xf32>
    %252 = arith.subf %251, %250 : vector<2x256xf32>
    %253 = math.exp %252 : vector<2x256xf32>
    %cst_79 = arith.constant 1.000000e+00 : f32
    %254 = vector.broadcast %cst_79 : f32 to vector<2x256xf32>
    %255 = arith.addf %254, %253 : vector<2x256xf32>
    %cst_80 = arith.constant 1.000000e+00 : f32
    %256 = vector.broadcast %cst_80 : f32 to vector<2x256xf32>
    %257 = arith.divf %256, %255 : vector<2x256xf32>
    %258 = vector.extract_strided_slice %257 {offsets = [0, 0], sizes = [2, 128], strides = [1, 1]} : vector<2x256xf32> to vector<2x128xf32>
    %259 = vector.extract_strided_slice %257 {offsets = [0, 128], sizes = [2, 128], strides = [1, 1]} : vector<2x256xf32> to vector<2x128xf32>
    %260 = vector.extract_strided_slice %243 {offsets = [0, 256], sizes = [2, 128], strides = [1, 1]} : vector<2x384xf32> to vector<2x128xf32>
    %261 = vector.extract_strided_slice %247 {offsets = [0, 256], sizes = [2, 128], strides = [1, 1]} : vector<2x384xf32> to vector<2x128xf32>
    %262 = arith.mulf %258, %261 : vector<2x128xf32>
    %263 = arith.addf %260, %262 : vector<2x128xf32>
    %264 = math.tanh %263 : vector<2x128xf32>
    %cst_81 = arith.constant 1.000000e+00 : f32
    %265 = vector.broadcast %cst_81 : f32 to vector<2x128xf32>
    %266 = arith.subf %265, %259 : vector<2x128xf32>
    %267 = arith.mulf %266, %264 : vector<2x128xf32>
    %268 = arith.mulf %259, %234 : vector<2x128xf32>
    %269 = arith.addf %267, %268 : vector<2x128xf32>
    %270 = arith.addf %235, %269 : vector<2x128xf32>
    %c7_i32 = arith.constant 7 : i32
    %271 = arith.index_cast %c7_i32 : i32 to index
    %c0_82 = arith.constant 0 : index
    %c0_83 = arith.constant 0 : index
    %272 = vector.load %arg1[%271, %c0_82, %c0_83] : memref<16x2x384xf32, #tpu.memory_space<vmem>>, vector<1x2x384xf32>
    %273 = vector.shape_cast %272 : vector<1x2x384xf32> to vector<2x384xf32>
    %c15_i32_84 = arith.constant 15 : i32
    %274 = arith.subi %c15_i32_84, %c7_i32 : i32
    %275 = arith.index_cast %274 : i32 to index
    %c0_85 = arith.constant 0 : index
    %c0_86 = arith.constant 0 : index
    %276 = vector.load %arg2[%275, %c0_85, %c0_86] : memref<16x2x384xf32, #tpu.memory_space<vmem>>, vector<1x2x384xf32>
    %277 = vector.shape_cast %276 : vector<1x2x384xf32> to vector<2x384xf32>
    %278 = arith.select %23, %273, %277 : vector<2x384xi1>, vector<2x384xf32>
    %279 = arith.truncf %269 : vector<2x128xf32> to vector<2x128xbf16>
    %cst_87 = arith.constant dense<0.000000e+00> : vector<2x384xf32>
    %280 = tpu.matmul %279, %3, %cst_87 {dimension_numbers = #tpu.dot_dimension_numbers<[1], [0], [0], [1], [0, 0, 1, 1], [], []>} : vector<2x128xbf16>, vector<128x384xbf16>, vector<2x384xf32> -> vector<2x384xf32>
    %281 = vector.broadcast %4 : vector<1x384xf32> to vector<2x384xf32>
    %282 = arith.addf %280, %281 : vector<2x384xf32>
    %283 = vector.extract_strided_slice %278 {offsets = [0, 0], sizes = [2, 256], strides = [1, 1]} : vector<2x384xf32> to vector<2x256xf32>
    %284 = vector.extract_strided_slice %282 {offsets = [0, 0], sizes = [2, 256], strides = [1, 1]} : vector<2x384xf32> to vector<2x256xf32>
    %285 = arith.addf %283, %284 : vector<2x256xf32>
    %cst_88 = arith.constant 0.000000e+00 : f32
    %286 = vector.broadcast %cst_88 : f32 to vector<2x256xf32>
    %287 = arith.subf %286, %285 : vector<2x256xf32>
    %288 = math.exp %287 : vector<2x256xf32>
    %cst_89 = arith.constant 1.000000e+00 : f32
    %289 = vector.broadcast %cst_89 : f32 to vector<2x256xf32>
    %290 = arith.addf %289, %288 : vector<2x256xf32>
    %cst_90 = arith.constant 1.000000e+00 : f32
    %291 = vector.broadcast %cst_90 : f32 to vector<2x256xf32>
    %292 = arith.divf %291, %290 : vector<2x256xf32>
    %293 = vector.extract_strided_slice %292 {offsets = [0, 0], sizes = [2, 128], strides = [1, 1]} : vector<2x256xf32> to vector<2x128xf32>
    %294 = vector.extract_strided_slice %292 {offsets = [0, 128], sizes = [2, 128], strides = [1, 1]} : vector<2x256xf32> to vector<2x128xf32>
    %295 = vector.extract_strided_slice %278 {offsets = [0, 256], sizes = [2, 128], strides = [1, 1]} : vector<2x384xf32> to vector<2x128xf32>
    %296 = vector.extract_strided_slice %282 {offsets = [0, 256], sizes = [2, 128], strides = [1, 1]} : vector<2x384xf32> to vector<2x128xf32>
    %297 = arith.mulf %293, %296 : vector<2x128xf32>
    %298 = arith.addf %295, %297 : vector<2x128xf32>
    %299 = math.tanh %298 : vector<2x128xf32>
    %cst_91 = arith.constant 1.000000e+00 : f32
    %300 = vector.broadcast %cst_91 : f32 to vector<2x128xf32>
    %301 = arith.subf %300, %294 : vector<2x128xf32>
    %302 = arith.mulf %301, %299 : vector<2x128xf32>
    %303 = arith.mulf %294, %269 : vector<2x128xf32>
    %304 = arith.addf %302, %303 : vector<2x128xf32>
    %305 = arith.addf %270, %304 : vector<2x128xf32>
    %c8_i32 = arith.constant 8 : i32
    %306 = arith.index_cast %c8_i32 : i32 to index
    %c0_92 = arith.constant 0 : index
    %c0_93 = arith.constant 0 : index
    %307 = vector.load %arg1[%306, %c0_92, %c0_93] : memref<16x2x384xf32, #tpu.memory_space<vmem>>, vector<1x2x384xf32>
    %308 = vector.shape_cast %307 : vector<1x2x384xf32> to vector<2x384xf32>
    %c15_i32_94 = arith.constant 15 : i32
    %309 = arith.subi %c15_i32_94, %c8_i32 : i32
    %310 = arith.index_cast %309 : i32 to index
    %c0_95 = arith.constant 0 : index
    %c0_96 = arith.constant 0 : index
    %311 = vector.load %arg2[%310, %c0_95, %c0_96] : memref<16x2x384xf32, #tpu.memory_space<vmem>>, vector<1x2x384xf32>
    %312 = vector.shape_cast %311 : vector<1x2x384xf32> to vector<2x384xf32>
    %313 = arith.select %23, %308, %312 : vector<2x384xi1>, vector<2x384xf32>
    %314 = arith.truncf %304 : vector<2x128xf32> to vector<2x128xbf16>
    %cst_97 = arith.constant dense<0.000000e+00> : vector<2x384xf32>
    %315 = tpu.matmul %314, %3, %cst_97 {dimension_numbers = #tpu.dot_dimension_numbers<[1], [0], [0], [1], [0, 0, 1, 1], [], []>} : vector<2x128xbf16>, vector<128x384xbf16>, vector<2x384xf32> -> vector<2x384xf32>
    %316 = vector.broadcast %4 : vector<1x384xf32> to vector<2x384xf32>
    %317 = arith.addf %315, %316 : vector<2x384xf32>
    %318 = vector.extract_strided_slice %313 {offsets = [0, 0], sizes = [2, 256], strides = [1, 1]} : vector<2x384xf32> to vector<2x256xf32>
    %319 = vector.extract_strided_slice %317 {offsets = [0, 0], sizes = [2, 256], strides = [1, 1]} : vector<2x384xf32> to vector<2x256xf32>
    %320 = arith.addf %318, %319 : vector<2x256xf32>
    %cst_98 = arith.constant 0.000000e+00 : f32
    %321 = vector.broadcast %cst_98 : f32 to vector<2x256xf32>
    %322 = arith.subf %321, %320 : vector<2x256xf32>
    %323 = math.exp %322 : vector<2x256xf32>
    %cst_99 = arith.constant 1.000000e+00 : f32
    %324 = vector.broadcast %cst_99 : f32 to vector<2x256xf32>
    %325 = arith.addf %324, %323 : vector<2x256xf32>
    %cst_100 = arith.constant 1.000000e+00 : f32
    %326 = vector.broadcast %cst_100 : f32 to vector<2x256xf32>
    %327 = arith.divf %326, %325 : vector<2x256xf32>
    %328 = vector.extract_strided_slice %327 {offsets = [0, 0], sizes = [2, 128], strides = [1, 1]} : vector<2x256xf32> to vector<2x128xf32>
    %329 = vector.extract_strided_slice %327 {offsets = [0, 128], sizes = [2, 128], strides = [1, 1]} : vector<2x256xf32> to vector<2x128xf32>
    %330 = vector.extract_strided_slice %313 {offsets = [0, 256], sizes = [2, 128], strides = [1, 1]} : vector<2x384xf32> to vector<2x128xf32>
    %331 = vector.extract_strided_slice %317 {offsets = [0, 256], sizes = [2, 128], strides = [1, 1]} : vector<2x384xf32> to vector<2x128xf32>
    %332 = arith.mulf %328, %331 : vector<2x128xf32>
    %333 = arith.addf %330, %332 : vector<2x128xf32>
    %334 = math.tanh %333 : vector<2x128xf32>
    %cst_101 = arith.constant 1.000000e+00 : f32
    %335 = vector.broadcast %cst_101 : f32 to vector<2x128xf32>
    %336 = arith.subf %335, %329 : vector<2x128xf32>
    %337 = arith.mulf %336, %334 : vector<2x128xf32>
    %338 = arith.mulf %329, %304 : vector<2x128xf32>
    %339 = arith.addf %337, %338 : vector<2x128xf32>
    %340 = arith.addf %305, %339 : vector<2x128xf32>
    %c9_i32 = arith.constant 9 : i32
    %341 = arith.index_cast %c9_i32 : i32 to index
    %c0_102 = arith.constant 0 : index
    %c0_103 = arith.constant 0 : index
    %342 = vector.load %arg1[%341, %c0_102, %c0_103] : memref<16x2x384xf32, #tpu.memory_space<vmem>>, vector<1x2x384xf32>
    %343 = vector.shape_cast %342 : vector<1x2x384xf32> to vector<2x384xf32>
    %c15_i32_104 = arith.constant 15 : i32
    %344 = arith.subi %c15_i32_104, %c9_i32 : i32
    %345 = arith.index_cast %344 : i32 to index
    %c0_105 = arith.constant 0 : index
    %c0_106 = arith.constant 0 : index
    %346 = vector.load %arg2[%345, %c0_105, %c0_106] : memref<16x2x384xf32, #tpu.memory_space<vmem>>, vector<1x2x384xf32>
    %347 = vector.shape_cast %346 : vector<1x2x384xf32> to vector<2x384xf32>
    %348 = arith.select %23, %343, %347 : vector<2x384xi1>, vector<2x384xf32>
    %349 = arith.truncf %339 : vector<2x128xf32> to vector<2x128xbf16>
    %cst_107 = arith.constant dense<0.000000e+00> : vector<2x384xf32>
    %350 = tpu.matmul %349, %3, %cst_107 {dimension_numbers = #tpu.dot_dimension_numbers<[1], [0], [0], [1], [0, 0, 1, 1], [], []>} : vector<2x128xbf16>, vector<128x384xbf16>, vector<2x384xf32> -> vector<2x384xf32>
    %351 = vector.broadcast %4 : vector<1x384xf32> to vector<2x384xf32>
    %352 = arith.addf %350, %351 : vector<2x384xf32>
    %353 = vector.extract_strided_slice %348 {offsets = [0, 0], sizes = [2, 256], strides = [1, 1]} : vector<2x384xf32> to vector<2x256xf32>
    %354 = vector.extract_strided_slice %352 {offsets = [0, 0], sizes = [2, 256], strides = [1, 1]} : vector<2x384xf32> to vector<2x256xf32>
    %355 = arith.addf %353, %354 : vector<2x256xf32>
    %cst_108 = arith.constant 0.000000e+00 : f32
    %356 = vector.broadcast %cst_108 : f32 to vector<2x256xf32>
    %357 = arith.subf %356, %355 : vector<2x256xf32>
    %358 = math.exp %357 : vector<2x256xf32>
    %cst_109 = arith.constant 1.000000e+00 : f32
    %359 = vector.broadcast %cst_109 : f32 to vector<2x256xf32>
    %360 = arith.addf %359, %358 : vector<2x256xf32>
    %cst_110 = arith.constant 1.000000e+00 : f32
    %361 = vector.broadcast %cst_110 : f32 to vector<2x256xf32>
    %362 = arith.divf %361, %360 : vector<2x256xf32>
    %363 = vector.extract_strided_slice %362 {offsets = [0, 0], sizes = [2, 128], strides = [1, 1]} : vector<2x256xf32> to vector<2x128xf32>
    %364 = vector.extract_strided_slice %362 {offsets = [0, 128], sizes = [2, 128], strides = [1, 1]} : vector<2x256xf32> to vector<2x128xf32>
    %365 = vector.extract_strided_slice %348 {offsets = [0, 256], sizes = [2, 128], strides = [1, 1]} : vector<2x384xf32> to vector<2x128xf32>
    %366 = vector.extract_strided_slice %352 {offsets = [0, 256], sizes = [2, 128], strides = [1, 1]} : vector<2x384xf32> to vector<2x128xf32>
    %367 = arith.mulf %363, %366 : vector<2x128xf32>
    %368 = arith.addf %365, %367 : vector<2x128xf32>
    %369 = math.tanh %368 : vector<2x128xf32>
    %cst_111 = arith.constant 1.000000e+00 : f32
    %370 = vector.broadcast %cst_111 : f32 to vector<2x128xf32>
    %371 = arith.subf %370, %364 : vector<2x128xf32>
    %372 = arith.mulf %371, %369 : vector<2x128xf32>
    %373 = arith.mulf %364, %339 : vector<2x128xf32>
    %374 = arith.addf %372, %373 : vector<2x128xf32>
    %375 = arith.addf %340, %374 : vector<2x128xf32>
    %c10_i32 = arith.constant 10 : i32
    %376 = arith.index_cast %c10_i32 : i32 to index
    %c0_112 = arith.constant 0 : index
    %c0_113 = arith.constant 0 : index
    %377 = vector.load %arg1[%376, %c0_112, %c0_113] : memref<16x2x384xf32, #tpu.memory_space<vmem>>, vector<1x2x384xf32>
    %378 = vector.shape_cast %377 : vector<1x2x384xf32> to vector<2x384xf32>
    %c15_i32_114 = arith.constant 15 : i32
    %379 = arith.subi %c15_i32_114, %c10_i32 : i32
    %380 = arith.index_cast %379 : i32 to index
    %c0_115 = arith.constant 0 : index
    %c0_116 = arith.constant 0 : index
    %381 = vector.load %arg2[%380, %c0_115, %c0_116] : memref<16x2x384xf32, #tpu.memory_space<vmem>>, vector<1x2x384xf32>
    %382 = vector.shape_cast %381 : vector<1x2x384xf32> to vector<2x384xf32>
    %383 = arith.select %23, %378, %382 : vector<2x384xi1>, vector<2x384xf32>
    %384 = arith.truncf %374 : vector<2x128xf32> to vector<2x128xbf16>
    %cst_117 = arith.constant dense<0.000000e+00> : vector<2x384xf32>
    %385 = tpu.matmul %384, %3, %cst_117 {dimension_numbers = #tpu.dot_dimension_numbers<[1], [0], [0], [1], [0, 0, 1, 1], [], []>} : vector<2x128xbf16>, vector<128x384xbf16>, vector<2x384xf32> -> vector<2x384xf32>
    %386 = vector.broadcast %4 : vector<1x384xf32> to vector<2x384xf32>
    %387 = arith.addf %385, %386 : vector<2x384xf32>
    %388 = vector.extract_strided_slice %383 {offsets = [0, 0], sizes = [2, 256], strides = [1, 1]} : vector<2x384xf32> to vector<2x256xf32>
    %389 = vector.extract_strided_slice %387 {offsets = [0, 0], sizes = [2, 256], strides = [1, 1]} : vector<2x384xf32> to vector<2x256xf32>
    %390 = arith.addf %388, %389 : vector<2x256xf32>
    %cst_118 = arith.constant 0.000000e+00 : f32
    %391 = vector.broadcast %cst_118 : f32 to vector<2x256xf32>
    %392 = arith.subf %391, %390 : vector<2x256xf32>
    %393 = math.exp %392 : vector<2x256xf32>
    %cst_119 = arith.constant 1.000000e+00 : f32
    %394 = vector.broadcast %cst_119 : f32 to vector<2x256xf32>
    %395 = arith.addf %394, %393 : vector<2x256xf32>
    %cst_120 = arith.constant 1.000000e+00 : f32
    %396 = vector.broadcast %cst_120 : f32 to vector<2x256xf32>
    %397 = arith.divf %396, %395 : vector<2x256xf32>
    %398 = vector.extract_strided_slice %397 {offsets = [0, 0], sizes = [2, 128], strides = [1, 1]} : vector<2x256xf32> to vector<2x128xf32>
    %399 = vector.extract_strided_slice %397 {offsets = [0, 128], sizes = [2, 128], strides = [1, 1]} : vector<2x256xf32> to vector<2x128xf32>
    %400 = vector.extract_strided_slice %383 {offsets = [0, 256], sizes = [2, 128], strides = [1, 1]} : vector<2x384xf32> to vector<2x128xf32>
    %401 = vector.extract_strided_slice %387 {offsets = [0, 256], sizes = [2, 128], strides = [1, 1]} : vector<2x384xf32> to vector<2x128xf32>
    %402 = arith.mulf %398, %401 : vector<2x128xf32>
    %403 = arith.addf %400, %402 : vector<2x128xf32>
    %404 = math.tanh %403 : vector<2x128xf32>
    %cst_121 = arith.constant 1.000000e+00 : f32
    %405 = vector.broadcast %cst_121 : f32 to vector<2x128xf32>
    %406 = arith.subf %405, %399 : vector<2x128xf32>
    %407 = arith.mulf %406, %404 : vector<2x128xf32>
    %408 = arith.mulf %399, %374 : vector<2x128xf32>
    %409 = arith.addf %407, %408 : vector<2x128xf32>
    %410 = arith.addf %375, %409 : vector<2x128xf32>
    %c11_i32 = arith.constant 11 : i32
    %411 = arith.index_cast %c11_i32 : i32 to index
    %c0_122 = arith.constant 0 : index
    %c0_123 = arith.constant 0 : index
    %412 = vector.load %arg1[%411, %c0_122, %c0_123] : memref<16x2x384xf32, #tpu.memory_space<vmem>>, vector<1x2x384xf32>
    %413 = vector.shape_cast %412 : vector<1x2x384xf32> to vector<2x384xf32>
    %c15_i32_124 = arith.constant 15 : i32
    %414 = arith.subi %c15_i32_124, %c11_i32 : i32
    %415 = arith.index_cast %414 : i32 to index
    %c0_125 = arith.constant 0 : index
    %c0_126 = arith.constant 0 : index
    %416 = vector.load %arg2[%415, %c0_125, %c0_126] : memref<16x2x384xf32, #tpu.memory_space<vmem>>, vector<1x2x384xf32>
    %417 = vector.shape_cast %416 : vector<1x2x384xf32> to vector<2x384xf32>
    %418 = arith.select %23, %413, %417 : vector<2x384xi1>, vector<2x384xf32>
    %419 = arith.truncf %409 : vector<2x128xf32> to vector<2x128xbf16>
    %cst_127 = arith.constant dense<0.000000e+00> : vector<2x384xf32>
    %420 = tpu.matmul %419, %3, %cst_127 {dimension_numbers = #tpu.dot_dimension_numbers<[1], [0], [0], [1], [0, 0, 1, 1], [], []>} : vector<2x128xbf16>, vector<128x384xbf16>, vector<2x384xf32> -> vector<2x384xf32>
    %421 = vector.broadcast %4 : vector<1x384xf32> to vector<2x384xf32>
    %422 = arith.addf %420, %421 : vector<2x384xf32>
    %423 = vector.extract_strided_slice %418 {offsets = [0, 0], sizes = [2, 256], strides = [1, 1]} : vector<2x384xf32> to vector<2x256xf32>
    %424 = vector.extract_strided_slice %422 {offsets = [0, 0], sizes = [2, 256], strides = [1, 1]} : vector<2x384xf32> to vector<2x256xf32>
    %425 = arith.addf %423, %424 : vector<2x256xf32>
    %cst_128 = arith.constant 0.000000e+00 : f32
    %426 = vector.broadcast %cst_128 : f32 to vector<2x256xf32>
    %427 = arith.subf %426, %425 : vector<2x256xf32>
    %428 = math.exp %427 : vector<2x256xf32>
    %cst_129 = arith.constant 1.000000e+00 : f32
    %429 = vector.broadcast %cst_129 : f32 to vector<2x256xf32>
    %430 = arith.addf %429, %428 : vector<2x256xf32>
    %cst_130 = arith.constant 1.000000e+00 : f32
    %431 = vector.broadcast %cst_130 : f32 to vector<2x256xf32>
    %432 = arith.divf %431, %430 : vector<2x256xf32>
    %433 = vector.extract_strided_slice %432 {offsets = [0, 0], sizes = [2, 128], strides = [1, 1]} : vector<2x256xf32> to vector<2x128xf32>
    %434 = vector.extract_strided_slice %432 {offsets = [0, 128], sizes = [2, 128], strides = [1, 1]} : vector<2x256xf32> to vector<2x128xf32>
    %435 = vector.extract_strided_slice %418 {offsets = [0, 256], sizes = [2, 128], strides = [1, 1]} : vector<2x384xf32> to vector<2x128xf32>
    %436 = vector.extract_strided_slice %422 {offsets = [0, 256], sizes = [2, 128], strides = [1, 1]} : vector<2x384xf32> to vector<2x128xf32>
    %437 = arith.mulf %433, %436 : vector<2x128xf32>
    %438 = arith.addf %435, %437 : vector<2x128xf32>
    %439 = math.tanh %438 : vector<2x128xf32>
    %cst_131 = arith.constant 1.000000e+00 : f32
    %440 = vector.broadcast %cst_131 : f32 to vector<2x128xf32>
    %441 = arith.subf %440, %434 : vector<2x128xf32>
    %442 = arith.mulf %441, %439 : vector<2x128xf32>
    %443 = arith.mulf %434, %409 : vector<2x128xf32>
    %444 = arith.addf %442, %443 : vector<2x128xf32>
    %445 = arith.addf %410, %444 : vector<2x128xf32>
    %c12_i32 = arith.constant 12 : i32
    %446 = arith.index_cast %c12_i32 : i32 to index
    %c0_132 = arith.constant 0 : index
    %c0_133 = arith.constant 0 : index
    %447 = vector.load %arg1[%446, %c0_132, %c0_133] : memref<16x2x384xf32, #tpu.memory_space<vmem>>, vector<1x2x384xf32>
    %448 = vector.shape_cast %447 : vector<1x2x384xf32> to vector<2x384xf32>
    %c15_i32_134 = arith.constant 15 : i32
    %449 = arith.subi %c15_i32_134, %c12_i32 : i32
    %450 = arith.index_cast %449 : i32 to index
    %c0_135 = arith.constant 0 : index
    %c0_136 = arith.constant 0 : index
    %451 = vector.load %arg2[%450, %c0_135, %c0_136] : memref<16x2x384xf32, #tpu.memory_space<vmem>>, vector<1x2x384xf32>
    %452 = vector.shape_cast %451 : vector<1x2x384xf32> to vector<2x384xf32>
    %453 = arith.select %23, %448, %452 : vector<2x384xi1>, vector<2x384xf32>
    %454 = arith.truncf %444 : vector<2x128xf32> to vector<2x128xbf16>
    %cst_137 = arith.constant dense<0.000000e+00> : vector<2x384xf32>
    %455 = tpu.matmul %454, %3, %cst_137 {dimension_numbers = #tpu.dot_dimension_numbers<[1], [0], [0], [1], [0, 0, 1, 1], [], []>} : vector<2x128xbf16>, vector<128x384xbf16>, vector<2x384xf32> -> vector<2x384xf32>
    %456 = vector.broadcast %4 : vector<1x384xf32> to vector<2x384xf32>
    %457 = arith.addf %455, %456 : vector<2x384xf32>
    %458 = vector.extract_strided_slice %453 {offsets = [0, 0], sizes = [2, 256], strides = [1, 1]} : vector<2x384xf32> to vector<2x256xf32>
    %459 = vector.extract_strided_slice %457 {offsets = [0, 0], sizes = [2, 256], strides = [1, 1]} : vector<2x384xf32> to vector<2x256xf32>
    %460 = arith.addf %458, %459 : vector<2x256xf32>
    %cst_138 = arith.constant 0.000000e+00 : f32
    %461 = vector.broadcast %cst_138 : f32 to vector<2x256xf32>
    %462 = arith.subf %461, %460 : vector<2x256xf32>
    %463 = math.exp %462 : vector<2x256xf32>
    %cst_139 = arith.constant 1.000000e+00 : f32
    %464 = vector.broadcast %cst_139 : f32 to vector<2x256xf32>
    %465 = arith.addf %464, %463 : vector<2x256xf32>
    %cst_140 = arith.constant 1.000000e+00 : f32
    %466 = vector.broadcast %cst_140 : f32 to vector<2x256xf32>
    %467 = arith.divf %466, %465 : vector<2x256xf32>
    %468 = vector.extract_strided_slice %467 {offsets = [0, 0], sizes = [2, 128], strides = [1, 1]} : vector<2x256xf32> to vector<2x128xf32>
    %469 = vector.extract_strided_slice %467 {offsets = [0, 128], sizes = [2, 128], strides = [1, 1]} : vector<2x256xf32> to vector<2x128xf32>
    %470 = vector.extract_strided_slice %453 {offsets = [0, 256], sizes = [2, 128], strides = [1, 1]} : vector<2x384xf32> to vector<2x128xf32>
    %471 = vector.extract_strided_slice %457 {offsets = [0, 256], sizes = [2, 128], strides = [1, 1]} : vector<2x384xf32> to vector<2x128xf32>
    %472 = arith.mulf %468, %471 : vector<2x128xf32>
    %473 = arith.addf %470, %472 : vector<2x128xf32>
    %474 = math.tanh %473 : vector<2x128xf32>
    %cst_141 = arith.constant 1.000000e+00 : f32
    %475 = vector.broadcast %cst_141 : f32 to vector<2x128xf32>
    %476 = arith.subf %475, %469 : vector<2x128xf32>
    %477 = arith.mulf %476, %474 : vector<2x128xf32>
    %478 = arith.mulf %469, %444 : vector<2x128xf32>
    %479 = arith.addf %477, %478 : vector<2x128xf32>
    %480 = arith.addf %445, %479 : vector<2x128xf32>
    %c13_i32 = arith.constant 13 : i32
    %481 = arith.index_cast %c13_i32 : i32 to index
    %c0_142 = arith.constant 0 : index
    %c0_143 = arith.constant 0 : index
    %482 = vector.load %arg1[%481, %c0_142, %c0_143] : memref<16x2x384xf32, #tpu.memory_space<vmem>>, vector<1x2x384xf32>
    %483 = vector.shape_cast %482 : vector<1x2x384xf32> to vector<2x384xf32>
    %c15_i32_144 = arith.constant 15 : i32
    %484 = arith.subi %c15_i32_144, %c13_i32 : i32
    %485 = arith.index_cast %484 : i32 to index
    %c0_145 = arith.constant 0 : index
    %c0_146 = arith.constant 0 : index
    %486 = vector.load %arg2[%485, %c0_145, %c0_146] : memref<16x2x384xf32, #tpu.memory_space<vmem>>, vector<1x2x384xf32>
    %487 = vector.shape_cast %486 : vector<1x2x384xf32> to vector<2x384xf32>
    %488 = arith.select %23, %483, %487 : vector<2x384xi1>, vector<2x384xf32>
    %489 = arith.truncf %479 : vector<2x128xf32> to vector<2x128xbf16>
    %cst_147 = arith.constant dense<0.000000e+00> : vector<2x384xf32>
    %490 = tpu.matmul %489, %3, %cst_147 {dimension_numbers = #tpu.dot_dimension_numbers<[1], [0], [0], [1], [0, 0, 1, 1], [], []>} : vector<2x128xbf16>, vector<128x384xbf16>, vector<2x384xf32> -> vector<2x384xf32>
    %491 = vector.broadcast %4 : vector<1x384xf32> to vector<2x384xf32>
    %492 = arith.addf %490, %491 : vector<2x384xf32>
    %493 = vector.extract_strided_slice %488 {offsets = [0, 0], sizes = [2, 256], strides = [1, 1]} : vector<2x384xf32> to vector<2x256xf32>
    %494 = vector.extract_strided_slice %492 {offsets = [0, 0], sizes = [2, 256], strides = [1, 1]} : vector<2x384xf32> to vector<2x256xf32>
    %495 = arith.addf %493, %494 : vector<2x256xf32>
    %cst_148 = arith.constant 0.000000e+00 : f32
    %496 = vector.broadcast %cst_148 : f32 to vector<2x256xf32>
    %497 = arith.subf %496, %495 : vector<2x256xf32>
    %498 = math.exp %497 : vector<2x256xf32>
    %cst_149 = arith.constant 1.000000e+00 : f32
    %499 = vector.broadcast %cst_149 : f32 to vector<2x256xf32>
    %500 = arith.addf %499, %498 : vector<2x256xf32>
    %cst_150 = arith.constant 1.000000e+00 : f32
    %501 = vector.broadcast %cst_150 : f32 to vector<2x256xf32>
    %502 = arith.divf %501, %500 : vector<2x256xf32>
    %503 = vector.extract_strided_slice %502 {offsets = [0, 0], sizes = [2, 128], strides = [1, 1]} : vector<2x256xf32> to vector<2x128xf32>
    %504 = vector.extract_strided_slice %502 {offsets = [0, 128], sizes = [2, 128], strides = [1, 1]} : vector<2x256xf32> to vector<2x128xf32>
    %505 = vector.extract_strided_slice %488 {offsets = [0, 256], sizes = [2, 128], strides = [1, 1]} : vector<2x384xf32> to vector<2x128xf32>
    %506 = vector.extract_strided_slice %492 {offsets = [0, 256], sizes = [2, 128], strides = [1, 1]} : vector<2x384xf32> to vector<2x128xf32>
    %507 = arith.mulf %503, %506 : vector<2x128xf32>
    %508 = arith.addf %505, %507 : vector<2x128xf32>
    %509 = math.tanh %508 : vector<2x128xf32>
    %cst_151 = arith.constant 1.000000e+00 : f32
    %510 = vector.broadcast %cst_151 : f32 to vector<2x128xf32>
    %511 = arith.subf %510, %504 : vector<2x128xf32>
    %512 = arith.mulf %511, %509 : vector<2x128xf32>
    %513 = arith.mulf %504, %479 : vector<2x128xf32>
    %514 = arith.addf %512, %513 : vector<2x128xf32>
    %515 = arith.addf %480, %514 : vector<2x128xf32>
    %c14_i32 = arith.constant 14 : i32
    %516 = arith.index_cast %c14_i32 : i32 to index
    %c0_152 = arith.constant 0 : index
    %c0_153 = arith.constant 0 : index
    %517 = vector.load %arg1[%516, %c0_152, %c0_153] : memref<16x2x384xf32, #tpu.memory_space<vmem>>, vector<1x2x384xf32>
    %518 = vector.shape_cast %517 : vector<1x2x384xf32> to vector<2x384xf32>
    %c15_i32_154 = arith.constant 15 : i32
    %519 = arith.subi %c15_i32_154, %c14_i32 : i32
    %520 = arith.index_cast %519 : i32 to index
    %c0_155 = arith.constant 0 : index
    %c0_156 = arith.constant 0 : index
    %521 = vector.load %arg2[%520, %c0_155, %c0_156] : memref<16x2x384xf32, #tpu.memory_space<vmem>>, vector<1x2x384xf32>
    %522 = vector.shape_cast %521 : vector<1x2x384xf32> to vector<2x384xf32>
    %523 = arith.select %23, %518, %522 : vector<2x384xi1>, vector<2x384xf32>
    %524 = arith.truncf %514 : vector<2x128xf32> to vector<2x128xbf16>
    %cst_157 = arith.constant dense<0.000000e+00> : vector<2x384xf32>
    %525 = tpu.matmul %524, %3, %cst_157 {dimension_numbers = #tpu.dot_dimension_numbers<[1], [0], [0], [1], [0, 0, 1, 1], [], []>} : vector<2x128xbf16>, vector<128x384xbf16>, vector<2x384xf32> -> vector<2x384xf32>
    %526 = vector.broadcast %4 : vector<1x384xf32> to vector<2x384xf32>
    %527 = arith.addf %525, %526 : vector<2x384xf32>
    %528 = vector.extract_strided_slice %523 {offsets = [0, 0], sizes = [2, 256], strides = [1, 1]} : vector<2x384xf32> to vector<2x256xf32>
    %529 = vector.extract_strided_slice %527 {offsets = [0, 0], sizes = [2, 256], strides = [1, 1]} : vector<2x384xf32> to vector<2x256xf32>
    %530 = arith.addf %528, %529 : vector<2x256xf32>
    %cst_158 = arith.constant 0.000000e+00 : f32
    %531 = vector.broadcast %cst_158 : f32 to vector<2x256xf32>
    %532 = arith.subf %531, %530 : vector<2x256xf32>
    %533 = math.exp %532 : vector<2x256xf32>
    %cst_159 = arith.constant 1.000000e+00 : f32
    %534 = vector.broadcast %cst_159 : f32 to vector<2x256xf32>
    %535 = arith.addf %534, %533 : vector<2x256xf32>
    %cst_160 = arith.constant 1.000000e+00 : f32
    %536 = vector.broadcast %cst_160 : f32 to vector<2x256xf32>
    %537 = arith.divf %536, %535 : vector<2x256xf32>
    %538 = vector.extract_strided_slice %537 {offsets = [0, 0], sizes = [2, 128], strides = [1, 1]} : vector<2x256xf32> to vector<2x128xf32>
    %539 = vector.extract_strided_slice %537 {offsets = [0, 128], sizes = [2, 128], strides = [1, 1]} : vector<2x256xf32> to vector<2x128xf32>
    %540 = vector.extract_strided_slice %523 {offsets = [0, 256], sizes = [2, 128], strides = [1, 1]} : vector<2x384xf32> to vector<2x128xf32>
    %541 = vector.extract_strided_slice %527 {offsets = [0, 256], sizes = [2, 128], strides = [1, 1]} : vector<2x384xf32> to vector<2x128xf32>
    %542 = arith.mulf %538, %541 : vector<2x128xf32>
    %543 = arith.addf %540, %542 : vector<2x128xf32>
    %544 = math.tanh %543 : vector<2x128xf32>
    %cst_161 = arith.constant 1.000000e+00 : f32
    %545 = vector.broadcast %cst_161 : f32 to vector<2x128xf32>
    %546 = arith.subf %545, %539 : vector<2x128xf32>
    %547 = arith.mulf %546, %544 : vector<2x128xf32>
    %548 = arith.mulf %539, %514 : vector<2x128xf32>
    %549 = arith.addf %547, %548 : vector<2x128xf32>
    %550 = arith.addf %515, %549 : vector<2x128xf32>
    %c15_i32_162 = arith.constant 15 : i32
    %551 = arith.index_cast %c15_i32_162 : i32 to index
    %c0_163 = arith.constant 0 : index
    %c0_164 = arith.constant 0 : index
    %552 = vector.load %arg1[%551, %c0_163, %c0_164] : memref<16x2x384xf32, #tpu.memory_space<vmem>>, vector<1x2x384xf32>
    %553 = vector.shape_cast %552 : vector<1x2x384xf32> to vector<2x384xf32>
    %c15_i32_165 = arith.constant 15 : i32
    %554 = arith.subi %c15_i32_165, %c15_i32_162 : i32
    %555 = arith.index_cast %554 : i32 to index
    %c0_166 = arith.constant 0 : index
    %c0_167 = arith.constant 0 : index
    %556 = vector.load %arg2[%555, %c0_166, %c0_167] : memref<16x2x384xf32, #tpu.memory_space<vmem>>, vector<1x2x384xf32>
    %557 = vector.shape_cast %556 : vector<1x2x384xf32> to vector<2x384xf32>
    %558 = arith.select %23, %553, %557 : vector<2x384xi1>, vector<2x384xf32>
    %559 = arith.truncf %549 : vector<2x128xf32> to vector<2x128xbf16>
    %cst_168 = arith.constant dense<0.000000e+00> : vector<2x384xf32>
    %560 = tpu.matmul %559, %3, %cst_168 {dimension_numbers = #tpu.dot_dimension_numbers<[1], [0], [0], [1], [0, 0, 1, 1], [], []>} : vector<2x128xbf16>, vector<128x384xbf16>, vector<2x384xf32> -> vector<2x384xf32>
    %561 = vector.broadcast %4 : vector<1x384xf32> to vector<2x384xf32>
    %562 = arith.addf %560, %561 : vector<2x384xf32>
    %563 = vector.extract_strided_slice %558 {offsets = [0, 0], sizes = [2, 256], strides = [1, 1]} : vector<2x384xf32> to vector<2x256xf32>
    %564 = vector.extract_strided_slice %562 {offsets = [0, 0], sizes = [2, 256], strides = [1, 1]} : vector<2x384xf32> to vector<2x256xf32>
    %565 = arith.addf %563, %564 : vector<2x256xf32>
    %cst_169 = arith.constant 0.000000e+00 : f32
    %566 = vector.broadcast %cst_169 : f32 to vector<2x256xf32>
    %567 = arith.subf %566, %565 : vector<2x256xf32>
    %568 = math.exp %567 : vector<2x256xf32>
    %cst_170 = arith.constant 1.000000e+00 : f32
    %569 = vector.broadcast %cst_170 : f32 to vector<2x256xf32>
    %570 = arith.addf %569, %568 : vector<2x256xf32>
    %cst_171 = arith.constant 1.000000e+00 : f32
    %571 = vector.broadcast %cst_171 : f32 to vector<2x256xf32>
    %572 = arith.divf %571, %570 : vector<2x256xf32>
    %573 = vector.extract_strided_slice %572 {offsets = [0, 0], sizes = [2, 128], strides = [1, 1]} : vector<2x256xf32> to vector<2x128xf32>
    %574 = vector.extract_strided_slice %572 {offsets = [0, 128], sizes = [2, 128], strides = [1, 1]} : vector<2x256xf32> to vector<2x128xf32>
    %575 = vector.extract_strided_slice %558 {offsets = [0, 256], sizes = [2, 128], strides = [1, 1]} : vector<2x384xf32> to vector<2x128xf32>
    %576 = vector.extract_strided_slice %562 {offsets = [0, 256], sizes = [2, 128], strides = [1, 1]} : vector<2x384xf32> to vector<2x128xf32>
    %577 = arith.mulf %573, %576 : vector<2x128xf32>
    %578 = arith.addf %575, %577 : vector<2x128xf32>
    %579 = math.tanh %578 : vector<2x128xf32>
    %cst_172 = arith.constant 1.000000e+00 : f32
    %580 = vector.broadcast %cst_172 : f32 to vector<2x128xf32>
    %581 = arith.subf %580, %574 : vector<2x128xf32>
    %582 = arith.mulf %581, %579 : vector<2x128xf32>
    %583 = arith.mulf %574, %549 : vector<2x128xf32>
    %584 = arith.addf %582, %583 : vector<2x128xf32>
    %585 = arith.addf %550, %584 : vector<2x128xf32>
    %c16_i32 = arith.constant 16 : i32
    %c0_173 = arith.constant 0 : index
    %c0_174 = arith.constant 0 : index
    %586 = vector.load %arg8[%c0_173, %c0_174] : memref<2x128xf32, #tpu.memory_space<vmem>>, vector<2x128xf32>
    tpu.vector_store %arg8[%c0_173, %c0_174], %584 {strides = array<i32>} : memref<2x128xf32, #tpu.memory_space<vmem>>, vector<2x128xf32>,
    %c0_175 = arith.constant 0 : index
    %c0_176 = arith.constant 0 : index
    %587 = vector.load %arg9[%c0_175, %c0_176] : memref<2x128xf32, #tpu.memory_space<vmem>>, vector<2x128xf32>
    tpu.vector_store %arg9[%c0_175, %c0_176], %585 {strides = array<i32>} : memref<2x128xf32, #tpu.memory_space<vmem>>, vector<2x128xf32>,
    %c0_i32_177 = arith.constant 0 : i32
    %588 = arith.cmpi eq, %arg0, %c0_i32_177 : i32
    %589 = arith.extui %588 : i1 to i32
    %c0_i32_178 = arith.constant 0 : i32
    %590 = arith.cmpi ne, %589, %c0_i32_178 : i32
    scf.if %590 {
      %c0_179 = arith.constant 0 : index
      %c0_180 = arith.constant 0 : index
      %591 = vector.load %arg9[%c0_179, %c0_180] : memref<2x128xf32, #tpu.memory_space<vmem>>, vector<2x128xf32>
      %cst_181 = arith.constant 6.250000e-02 : f32
      %592 = vector.broadcast %cst_181 : f32 to vector<2x128xf32>
      %593 = arith.mulf %591, %592 : vector<2x128xf32>
      %594 = arith.truncf %593 : vector<2x128xf32> to vector<2x128xbf16>
      %c0_182 = arith.constant 0 : index
      %c0_183 = arith.constant 0 : index
      %595 = vector.load %arg5[%c0_182, %c0_183] : memref<128x2xbf16, #tpu.memory_space<vmem>>, vector<128x2xbf16>
      %cst_184 = arith.constant dense<0.000000e+00> : vector<2x2xf32>
      %596 = tpu.matmul %594, %595, %cst_184 {dimension_numbers = #tpu.dot_dimension_numbers<[1], [0], [0], [1], [0, 0, 1, 1], [], []>} : vector<2x128xbf16>, vector<128x2xbf16>, vector<2x2xf32> -> vector<2x2xf32>
      %c0_185 = arith.constant 0 : index
      %c0_186 = arith.constant 0 : index
      %597 = vector.load %arg6[%c0_185, %c0_186] : memref<1x2xf32, #tpu.memory_space<vmem>>, vector<1x2xf32>
      %598 = vector.broadcast %597 : vector<1x2xf32> to vector<2x2xf32>
      %599 = arith.addf %596, %598 : vector<2x2xf32>
      %c0_187 = arith.constant 0 : index
      %c0_188 = arith.constant 0 : index
      %600 = vector.load %arg7[%c0_187, %c0_188] : memref<2x2xf32, #tpu.memory_space<vmem>>, vector<2x2xf32>
      tpu.vector_store %arg7[%c0_187, %c0_188], %599 {strides = array<i32>} : memref<2x2xf32, #tpu.memory_space<vmem>>, vector<2x2xf32>,
    } else {
    }
    return
  }
  func.func @transform_0(%arg0: i32) -> (i32, i32, i32) {
    %c0_i32 = arith.constant 0 : i32
    %c0_i32_0 = arith.constant 0 : i32
    %c0_i32_1 = arith.constant 0 : i32
    return %arg0, %c0_i32, %c0_i32_0 : i32, i32, i32
  }
  func.func @transform_1(%arg0: i32) -> (i32, i32, i32) {
    %c0_i32 = arith.constant 0 : i32
    %0 = arith.subi %c0_i32, %arg0 : i32
    %c0_i32_0 = arith.constant 0 : i32
    %c0_i32_1 = arith.constant 0 : i32
    %c0_i32_2 = arith.constant 0 : i32
    return %0, %c0_i32_0, %c0_i32_1 : i32, i32, i32
  }
  func.func @transform_2(%arg0: i32) -> (i32, i32) {
    %c0_i32 = arith.constant 0 : i32
    %c0_i32_0 = arith.constant 0 : i32
    %c0_i32_1 = arith.constant 0 : i32
    return %c0_i32, %c0_i32_0 : i32, i32
  }
  func.func @transform_3(%arg0: i32) -> (i32, i32) {
    %c0_i32 = arith.constant 0 : i32
    %c0_i32_0 = arith.constant 0 : i32
    %c0_i32_1 = arith.constant 0 : i32
    return %c0_i32, %c0_i32_0 : i32, i32
  }
  func.func @transform_4(%arg0: i32) -> (i32, i32) {
    %c0_i32 = arith.constant 0 : i32
    %c0_i32_0 = arith.constant 0 : i32
    %c0_i32_1 = arith.constant 0 : i32
    return %c0_i32, %c0_i32_0 : i32, i32
  }
  func.func @transform_5(%arg0: i32) -> (i32, i32) {
    %c0_i32 = arith.constant 0 : i32
    %c0_i32_0 = arith.constant 0 : i32
    %c0_i32_1 = arith.constant 0 : i32
    return %c0_i32, %c0_i32_0 : i32, i32
  }
  func.func @transform_6(%arg0: i32) -> (i32, i32) {
    %c0_i32 = arith.constant 0 : i32
    %c0_i32_0 = arith.constant 0 : i32
    %c0_i32_1 = arith.constant 0 : i32
    return %c0_i32, %c0_i32_0 : i32, i32
  }
}

</mosaic_0001>

<llo_original>
// kernel: bigru_forward.4
$region0: #{bigru_forward.4}
  #allocation0 [shape = 'u32[]', space=smem, size = 0x4, offset = 0x4, fixed_abs, tag = 'smem constant byte address 0x4 - core index']
  #allocation1 [shape = 'u32[144,128]{1,0:T(1,128)}', space=vmem, size = 0x12000, scoped, tag = 'internal scratch']
  %s0 = inlined_call_operand.vmem [shape: bf16[32,12], index: 0, kind: input, shape index: {}]
  %s1 = inlined_call_operand.vmem [shape: bf16[12,384], index: 1, kind: input, shape index: {}]
  %s2 = inlined_call_operand.vmem [shape: f32[1,384], index: 2, kind: input, shape index: {}]
  %s3 = inlined_call_operand.vmem [shape: f32[32,384], index: 3, kind: output, shape index: {}]
  %s4 = sld [smem:[#allocation0]]
  $region45: #{bigru_forward.4} parent=0
    _
  %s6 = ssub.s32 1, %s4
  %s7 = scalar_select 0, %s6, %s4
  loop: start=0, step=1, limit=4
  $region2: #{bigru_forward.4} parent=0 // loop_pre_header
    _
  $region3: #{bigru_forward.4} parent=0 // loop_header
    %s9 = sphi 0, %s13
    %p10 = scmp.ge.s32.totalorder %s9, 4
    %s19 = sphi 0, %s21
    %s22 = sphi 0, %s19
    %s23 = sphi 0, %s22
    %s39 = sphi 0, %s23
    %s43 = sphi 0, %s43
    %s45 = sphi 0, %s43
    %s46 = sphi 0, %s45
    %s60 = sphi 0, %s46
    %s64 = sphi 0, %s64
    %s66 = sphi 0, %s64
    %s67 = sphi 0, %s66
    %s81 = sphi 0, %s67
    %s87 = sphi 0, %s89
    %s90 = sphi 0, %s87
    %s91 = sphi 0, %s90
    %s107 = sphi 0, %s91
  $region4: #{bigru_forward.4} parent=0 // loop_header_branch
    %12 = sbr.rel (%p10) target = $region8
  $region5: #{bigru_forward.4} parent=0 // loop_body
    %s14 = ssub.s32 %s9, 1
    %s15 = ssub.s32 %s9, 2
    %s16 = sadd.s32 %s9, 1
    %s17 = ssub.s32 %s9, %s16
    %p18 = scmp.eq.s32.totalorder %s17, 0
    %s20 = sadd.s32 %s19, 1
    %s21 = scalar_select %p18, %s19, %s20
    %p24 = pneg %p18
    %p25 = scmp.eq.s32.totalorder %s9, 1
    %p26 = por %p24, %p25
    %p27 = scmp.ne.s32.totalorder %s19, %s22
    %p28 = scmp.eq.s32.totalorder %s9, 0
    %p29 = por %p27, %p28
    %p30 = scmp.ne.s32.totalorder %s19, %s22
    %p31 = scmp.eq.s32.totalorder %s14, 1
    %p32 = por %p30, %p31
    %p33 = scmp.ne.s32.totalorder %s22, %s23
    %p34 = scmp.eq.s32.totalorder %s14, 0
    %p35 = por %p33, %p34
    %p36 = scmp.ne.s32.totalorder %s22, %s23
    %p37 = scmp.eq.s32.totalorder %s15, 1
    %p38 = por %p36, %p37
    %p40 = scmp.ne.s32.totalorder %s23, %s39
    %p41 = scmp.eq.s32.totalorder %s15, 0
    %p42 = por %p40, %p41
    %s44 = sadd.s32 %s43, 1
    %p47 = scmp.eq.s32.totalorder %s9, 1
    %p48 = scmp.ne.s32.totalorder %s43, %s45
    %p49 = scmp.eq.s32.totalorder %s9, 0
    %p50 = por %p48, %p49
    %p51 = scmp.ne.s32.totalorder %s43, %s45
    %p52 = scmp.eq.s32.totalorder %s14, 1
    %p53 = por %p51, %p52
    %p54 = scmp.ne.s32.totalorder %s45, %s46
    %p55 = scmp.eq.s32.totalorder %s14, 0
    %p56 = por %p54, %p55
    %p57 = scmp.ne.s32.totalorder %s45, %s46
    %p58 = scmp.eq.s32.totalorder %s15, 1
    %p59 = por %p57, %p58
    %p61 = scmp.ne.s32.totalorder %s46, %s60
    %p62 = scmp.eq.s32.totalorder %s15, 0
    %p63 = por %p61, %p62
    %s65 = sadd.s32 %s64, 1
    %p68 = scmp.eq.s32.totalorder %s9, 1
    %p69 = scmp.ne.s32.totalorder %s64, %s66
    %p70 = scmp.eq.s32.totalorder %s9, 0
    %p71 = por %p69, %p70
    %p72 = scmp.ne.s32.totalorder %s64, %s66
    %p73 = scmp.eq.s32.totalorder %s14, 1
    %p74 = por %p72, %p73
    %p75 = scmp.ne.s32.totalorder %s66, %s67
    %p76 = scmp.eq.s32.totalorder %s14, 0
    %p77 = por %p75, %p76
    %p78 = scmp.ne.s32.totalorder %s66, %s67
    %p79 = scmp.eq.s32.totalorder %s15, 1
    %p80 = por %p78, %p79
    %p82 = scmp.ne.s32.totalorder %s67, %s81
    %p83 = scmp.eq.s32.totalorder %s15, 0
    %p84 = por %p82, %p83
    %s85 = ssub.s32 %s9, %s16
    %p86 = scmp.eq.s32.totalorder %s85, 0
    %s88 = sadd.s32 %s87, 1
    %s89 = scalar_select %p86, %s87, %s88
    %p92 = pneg %p86
    %p93 = scmp.eq.s32.totalorder %s9, 1
    %p94 = por %p92, %p93
    %p95 = scmp.ne.s32.totalorder %s87, %s90
    %p96 = scmp.eq.s32.totalorder %s9, 0
    %p97 = por %p95, %p96
    %p98 = scmp.ne.s32.totalorder %s87, %s90
    %p99 = scmp.eq.s32.totalorder %s14, 1
    %p100 = por %p98, %p99
    %p101 = scmp.ne.s32.totalorder %s90, %s91
    %p102 = scmp.eq.s32.totalorder %s14, 0
    %p103 = por %p101, %p102
    %p104 = scmp.ne.s32.totalorder %s90, %s91
    %p105 = scmp.eq.s32.totalorder %s15, 1
    %p106 = por %p104, %p105
    %p108 = scmp.ne.s32.totalorder %s91, %s107
    %p109 = scmp.eq.s32.totalorder %s15, 0
    %p110 = por %p108, %p109
    %p111 = scmp.le.s32.totalorder 1, %s9
    %p112 = scmp.lt.s32.totalorder %s9, 3
    %p113 = pnand %p111, %p112
    %p114 = pneg %p113
    // Predicated region
    $region9: #{bigru_forward.4} parent=5 // pred_check
      _
    $region10: #{bigru_forward.4} parent=5 // pred_check_branch
      %116 = sbr.rel (%p113) target = $region12
    $region11: #{bigru_forward.4} parent=5 // pred_region
      %s117 = ssub.s32 %s9, 1
      // Predicated region
      $region13: #{bigru_forward.4} parent=11 // pred_check
        %p118 = pneg %p56
      $region14: #{bigru_forward.4} parent=11 // pred_check_branch
        %120 = sbr.rel (%p118) target = $region16
      $region15: #{bigru_forward.4} parent=11 // pred_region
        _
      $region16: #{bigru_forward.4} parent=11 // pred_fallthru
        _
      // Predicated region
      $region17: #{bigru_forward.4} parent=11 // pred_check
        %p121 = pneg %p77
      $region18: #{bigru_forward.4} parent=11 // pred_check_branch
        %123 = sbr.rel (%p121) target = $region20
      $region19: #{bigru_forward.4} parent=11 // pred_region
        _
      $region20: #{bigru_forward.4} parent=11 // pred_fallthru
        _
    $region12: #{bigru_forward.4} parent=5 // pred_fallthru
      _
    %p124 = scmp.lt.s32.totalorder %s9, 2
    // Predicated region
    $region21: #{bigru_forward.4} parent=5 // pred_check
      %p125 = pneg %p124
    $region22: #{bigru_forward.4} parent=5 // pred_check_branch
      %127 = sbr.rel (%p125) target = $region24
    $region23: #{bigru_forward.4} parent=5 // pred_region
      // Predicated region
      $region25: #{bigru_forward.4} parent=23 // pred_check
        %p128 = pneg %p29
      $region26: #{bigru_forward.4} parent=23 // pred_check_branch
        %130 = sbr.rel (%p128) target = $region28
      $region27: #{bigru_forward.4} parent=23 // pred_region
        %s131 = smul.u32 2, %s9
        %p132 = scmp.lt.s32.totalorder %s131, 3
        %s133 = scalar_select %p132, %s131, 3
        %s134 = smul.addr %s133, 4
        %s135 = scalar_lea.vmem %s0, %s134
        %s136 = smul.u32 2, %s9
      $region28: #{bigru_forward.4} parent=23 // pred_fallthru
        _
    $region24: #{bigru_forward.4} parent=5 // pred_fallthru
      _
    %p137 = scmp.le.s32.totalorder 1, %s9
    %p138 = scmp.lt.s32.totalorder %s9, 3
    %p139 = pnand %p137, %p138
    %p140 = pneg %p139
    // Predicated region
    $region29: #{bigru_forward.4} parent=5 // pred_check
      _
    $region30: #{bigru_forward.4} parent=5 // pred_check_branch
      %142 = sbr.rel (%p139) target = $region32
    $region31: #{bigru_forward.4} parent=5 // pred_region
      %s143 = ssub.s32 %s9, 1
      %s144 = smul.u32 2, %s14
      %p145 = scmp.lt.s32.totalorder %s144, 3
      %s146 = scalar_select %p145, %s144, 3
      %s147 = smul.addr %s146, 4
      %s148 = scalar_lea.vmem %s0, %s147
      %p149 = pneg %p35
      %p150 = pneg %p32
      %p151 = pneg %p56
      %p152 = pneg %p53
      %p153 = pneg %p77
      %p154 = pneg %p74
      %p155 = pneg %p103
      %p156 = pneg %p100
      %s157 = smul.u32 2, %s14
      %p158 = scmp.lt.s32.totalorder %s157, 3
      %s159 = scalar_select %p158, %s157, 3
      %s160 = smul.addr %s159, 3
      %s161 = smul.addr %s160, 8
      %s162 = scalar_lea.vmem %s3, %s161
      %s163 = smul.u32 2, %s14
      %p164 = scmp.lt.s32.totalorder %s163, 3
      %s165 = scalar_select %p164, %s163, 3
      %s166 = smul.addr %s165, 4
      %s167 = scalar_lea.vmem %s0, %s166
      %s168 = smul.u32 2, %s14
      %s169 = smul.u32 2, %s14
      %p170 = scmp.lt.s32.totalorder %s169, 3
      %s171 = scalar_select %p170, %s169, 3
      %s172 = smul.addr %s171, 3
      %s173 = smul.addr %s172, 8
      %s174 = scalar_lea.vmem %s3, %s173
      %s175 = smul.u32 2, %s14
      %v177 = vld [vmem:[%s167] sm:$0xf]
      %v178 = vld [vmem:[%s167 + $0x4] sm:$0xf]
      %v179 = vld [vmem:[%s1] sm:$0xff]
      %v180 = vld [vmem:[%s1 + $0x8] sm:$0xf]
      %v181 = vld [vmem:[%s1 + $0xc] sm:$0x33]
      %v182 = vld [vmem:[%s1 + $0x14] sm:$0x3]
      %v183 = vld [vmem:[%s2] sm:$0x7]
      %v185 = vlaneseq
      %v186 = vshrl.u32 %v185, 7
      %v187 = vsub.s32 0, %v186
      %v188 = vrot.slane %v183, %v187
      %v189 = vlaneseq
      %v190 = vshrl.u32 %v189, 7
      %v191 = vsub.s32 1, %v190
      %v192 = vrot.slane %v183, %v191
      %v193 = vlaneseq
      %v194 = vshrl.u32 %v193, 7
      %v195 = vsub.s32 2, %v194
      %v196 = vrot.slane %v183, %v195
      %v202 = vunpack.c.l.b16 %v177
      %v203 = vunpack.c.l.b16 %v178
      %v204 = vpack.c.b16 %v203, %v202
      %v209 = vunpack.c.l.b16 %v179
      %v210 = vunpack.c.h.b16 %v179
      %v211 = vunpack.c.l.b16 %v180
      %v212 = vunpack.c.l.b16 %v181
      %v213 = vunpack.c.h.b16 %v181
      %v214 = vunpack.c.l.b16 %v182
      %v215 = vpack.c.b16 %v212, %v209
      %v216 = vpack.c.b16 %v213, %v210
      %v217 = vpack.c.b16 %v214, %v211
      %vm218 = vcmask 97280
      %v220 = vsel %vm218, %v204, 0
      %vm222 = vcmask 1045504
      %v224 = vsel %vm222, %v215, 0
      %v227 = vsel %vm222, %v216, 0
      %v230 = vsel %vm222, %v217, 0
      %232 = vmatprep.subr.bf16.mxu0 %v227
      %233 = vmatpush1.bf16.msra.mxu0 %v224
      %234 = vmatprep.subr.bf16.mxu0 0
      %235 = vmatpush1.bf16.msra.mxu0 0
      %236 = vmatprep.subr.bf16.mxu0 0
      %237 = vmatpush1.bf16.msra.mxu0 0
      %238 = vmatprep.subr.bf16.mxu0 0
      %239 = vmatpush1.bf16.msra.mxu0 0
      %240 = vmatprep.subr.bf16.mxu0 0
      %241 = vmatpush1.bf16.msra.mxu0 0
      %242 = vmatprep.subr.bf16.mxu0 0
      %243 = vmatpush1.bf16.msra.mxu0 0
      %244 = vmatprep.subr.bf16.mxu0 0
      %245 = vmatpush1.bf16.msra.mxu0 0
      %246 = vmatprep.subr.bf16.mxu0 0
      %247 = vmatpush1.bf16.msra.mxu0 0
      %248 = vmatprep.subr.bf16.mxu0 0
      %249 = vmatpush1.bf16.msra.mxu0 0
      %250 = vmatprep.subr.bf16.mxu0 0
      %251 = vmatpush1.bf16.msra.mxu0 0
      %252 = vmatprep.subr.bf16.mxu0 0
      %253 = vmatpush1.bf16.msra.mxu0 0
      %254 = vmatprep.subr.bf16.mxu0 0
      %255 = vmatpush1.bf16.msra.mxu0 0
      %256 = vmatprep.subr.bf16.mxu0 0
      %257 = vmatpush1.bf16.msra.mxu0 0
      %258 = vmatprep.subr.bf16.mxu0 0
      %259 = vmatpush1.bf16.msra.mxu0 0
      %260 = vmatprep.subr.bf16.mxu0 0
      %261 = vmatpush1.bf16.msra.mxu0 0
      %262 = vmatprep.subr.bf16.mxu0 0
      %263 = vmatpush1.bf16.msra.mxu0 0
      %264 = vmatprep.mubr.bf16.mxu0 0
      %265 = vmatmul.mubr.bf16.gmra.mrb[0].mxu0 %v220
      %v266 = vpop.f32.mrb[0].mxu0
      %v267 = vadd.f32 %v188, %v266
      %v268 = vpop.f32.mrb[0].mxu0
      %v269 = vadd.f32 %v192, %v268
      %v270 = vpop.f32.mrb[0].mxu0
      %v271 = vadd.f32 %v188, %v270
      %v272 = vpop.f32.mrb[0].mxu0
      %v273 = vadd.f32 %v192, %v272
      %274 = vdwg.mxu0
      %275 = vmatprep.subr.bf16.mxu0 0
      %276 = vmatpush1.bf16.msra.mxu0 %v230
      %277 = vmatprep.subr.bf16.mxu0 0
      %278 = vmatpush1.bf16.msra.mxu0 0
      %279 = vmatprep.subr.bf16.mxu0 0
      %280 = vmatpush1.bf16.msra.mxu0 0
      %281 = vmatprep.subr.bf16.mxu0 0
      %282 = vmatpush1.bf16.msra.mxu0 0
      %283 = vmatprep.subr.bf16.mxu0 0
      %284 = vmatpush1.bf16.msra.mxu0 0
      %285 = vmatprep.subr.bf16.mxu0 0
      %286 = vmatpush1.bf16.msra.mxu0 0
      %287 = vmatprep.subr.bf16.mxu0 0
      %288 = vmatpush1.bf16.msra.mxu0 0
      %289 = vmatprep.subr.bf16.mxu0 0
      %290 = vmatpush1.bf16.msra.mxu0 0
      %291 = vmatprep.subr.bf16.mxu0 0
      %292 = vmatpush1.bf16.msra.mxu0 0
      %293 = vmatprep.subr.bf16.mxu0 0
      %294 = vmatpush1.bf16.msra.mxu0 0
      %295 = vmatprep.subr.bf16.mxu0 0
      %296 = vmatpush1.bf16.msra.mxu0 0
      %297 = vmatprep.subr.bf16.mxu0 0
      %298 = vmatpush1.bf16.msra.mxu0 0
      %299 = vmatprep.subr.bf16.mxu0 0
      %300 = vmatpush1.bf16.msra.mxu0 0
      %301 = vmatprep.subr.bf16.mxu0 0
      %302 = vmatpush1.bf16.msra.mxu0 0
      %303 = vmatprep.subr.bf16.mxu0 0
      %304 = vmatpush1.bf16.msra.mxu0 0
      %305 = vmatprep.subr.bf16.mxu0 0
      %306 = vmatpush1.bf16.msra.mxu0 0
      %307 = vmatprep.mubr.bf16.mxu0 0
      %308 = vmatmul.mubr.bf16.gmra.mrb[0].mxu0 %v220
      %v309 = vpop.f32.mrb[0].mxu0
      %v310 = vadd.f32 %v196, %v309
      %v311 = vpop.f32.mrb[0].mxu0
      %v312 = vpop.f32.mrb[0].mxu0
      %v313 = vadd.f32 %v196, %v312
      %v314 = vpop.f32.mrb[0].mxu0
      %315 = vdwg.mxu0
      %316 = vst [vmem:[%s174] sm:$0xff] %v267
      %317 = vst [vmem:[%s174 + $0x8] sm:$0xff] %v269
      %318 = vst [vmem:[%s174 + $0x10] sm:$0xff] %v310
      %319 = vst [vmem:[%s174 + $0x18] sm:$0xff] %v271
      %320 = vst [vmem:[%s174 + $0x20] sm:$0xff] %v273
      %321 = vst [vmem:[%s174 + $0x28] sm:$0xff] %v313
      %s322 = smul.u32 2, %s14
      %p323 = scmp.lt.s32.totalorder %s322, 3
      %s324 = scalar_select %p323, %s322, 3
      %s325 = smul.addr %s324, 3
      %s326 = smul.addr %s325, 8
      %s327 = scalar_lea.vmem %s3, %s326
      // Predicated region
      $region33: #{bigru_forward.4} parent=31 // pred_check
        %p328 = pneg %p100
      $region34: #{bigru_forward.4} parent=31 // pred_check_branch
        %330 = sbr.rel (%p328) target = $region36
      $region35: #{bigru_forward.4} parent=31 // pred_region
        %s331 = smul.u32 2, %s14
      $region36: #{bigru_forward.4} parent=31 // pred_fallthru
        _
    $region32: #{bigru_forward.4} parent=5 // pred_fallthru
      _
    %p332 = scmp.le.s32.totalorder 2, %s9
    // Predicated region
    $region37: #{bigru_forward.4} parent=5 // pred_check
      %p333 = pneg %p332
    $region38: #{bigru_forward.4} parent=5 // pred_check_branch
      %335 = sbr.rel (%p333) target = $region40
    $region39: #{bigru_forward.4} parent=5 // pred_region
      %s336 = ssub.s32 %s9, 2
      // Predicated region
      $region41: #{bigru_forward.4} parent=39 // pred_check
        %p337 = pneg %p106
      $region42: #{bigru_forward.4} parent=39 // pred_check_branch
        %339 = sbr.rel (%p337) target = $region44
      $region43: #{bigru_forward.4} parent=39 // pred_region
        %s340 = smul.u32 2, %s15
        %p341 = scmp.lt.s32.totalorder %s340, 3
        %s342 = scalar_select %p341, %s340, 3
        %s343 = smul.addr %s342, 3
        %s344 = smul.addr %s343, 8
        %s345 = scalar_lea.vmem %s3, %s344
      $region44: #{bigru_forward.4} parent=39 // pred_fallthru
        _
    $region40: #{bigru_forward.4} parent=5 // pred_fallthru
      _
  $region6: #{bigru_forward.4} parent=0 // loop_footer
    %s13 = sadd.s32 1, %s9
  $region7: #{bigru_forward.4} parent=0 // loop_footer_branch
    %8 = sbr.rel target = $region3
  $region8: #{bigru_forward.4} parent=0 // loop_exit
    _

// kernel: bigru_forward.6
$region0: #{bigru_forward.6}
  #allocation0 [shape = 'u32[]', space=smem, size = 0x4, offset = 0x4, fixed_abs, tag = 'smem constant byte address 0x4 - core index']
  #allocation1 [shape = 'u32[144,128]{1,0:T(1,128)}', space=vmem, size = 0x12000, scoped, tag = 'internal scratch']
  %s0 = inlined_call_operand.vmem [shape: bf16[32,64], index: 0, kind: input, shape index: {}]
  %s1 = inlined_call_operand.vmem [shape: bf16[32,64], index: 1, kind: input, shape index: {}]
  %s2 = inlined_call_operand.vmem [shape: bf16[64,384], index: 2, kind: input, shape index: {}]
  %s3 = inlined_call_operand.vmem [shape: bf16[64,384], index: 3, kind: input, shape index: {}]
  %s4 = inlined_call_operand.vmem [shape: f32[1,384], index: 4, kind: input, shape index: {}]
  %s5 = inlined_call_operand.vmem [shape: f32[32,384], index: 5, kind: output, shape index: {}]
  %s6 = sld [smem:[#allocation0]]
  $region53: #{bigru_forward.6} parent=0
    _
  %s8 = ssub.s32 1, %s6
  %s9 = scalar_select 0, %s8, %s6
  loop: start=0, step=1, limit=4
  $region2: #{bigru_forward.6} parent=0 // loop_pre_header
    _
  $region3: #{bigru_forward.6} parent=0 // loop_header
    %s11 = sphi 0, %s15
    %p12 = scmp.ge.s32.totalorder %s11, 4
    %s21 = sphi 0, %s23
    %s24 = sphi 0, %s21
    %s25 = sphi 0, %s24
    %s41 = sphi 0, %s25
    %s47 = sphi 0, %s49
    %s50 = sphi 0, %s47
    %s51 = sphi 0, %s50
    %s67 = sphi 0, %s51
    %s71 = sphi 0, %s71
    %s73 = sphi 0, %s71
    %s74 = sphi 0, %s73
    %s88 = sphi 0, %s74
    %s92 = sphi 0, %s92
    %s94 = sphi 0, %s92
    %s95 = sphi 0, %s94
    %s109 = sphi 0, %s95
    %s113 = sphi 0, %s113
    %s115 = sphi 0, %s113
    %s116 = sphi 0, %s115
    %s130 = sphi 0, %s116
    %s136 = sphi 0, %s138
    %s139 = sphi 0, %s136
    %s140 = sphi 0, %s139
    %s156 = sphi 0, %s140
  $region4: #{bigru_forward.6} parent=0 // loop_header_branch
    %14 = sbr.rel (%p12) target = $region8
  $region5: #{bigru_forward.6} parent=0 // loop_body
    %s16 = ssub.s32 %s11, 1
    %s17 = ssub.s32 %s11, 2
    %s18 = sadd.s32 %s11, 1
    %s19 = ssub.s32 %s11, %s18
    %p20 = scmp.eq.s32.totalorder %s19, 0
    %s22 = sadd.s32 %s21, 1
    %s23 = scalar_select %p20, %s21, %s22
    %p26 = pneg %p20
    %p27 = scmp.eq.s32.totalorder %s11, 1
    %p28 = por %p26, %p27
    %p29 = scmp.ne.s32.totalorder %s21, %s24
    %p30 = scmp.eq.s32.totalorder %s11, 0
    %p31 = por %p29, %p30
    %p32 = scmp.ne.s32.totalorder %s21, %s24
    %p33 = scmp.eq.s32.totalorder %s16, 1
    %p34 = por %p32, %p33
    %p35 = scmp.ne.s32.totalorder %s24, %s25
    %p36 = scmp.eq.s32.totalorder %s16, 0
    %p37 = por %p35, %p36
    %p38 = scmp.ne.s32.totalorder %s24, %s25
    %p39 = scmp.eq.s32.totalorder %s17, 1
    %p40 = por %p38, %p39
    %p42 = scmp.ne.s32.totalorder %s25, %s41
    %p43 = scmp.eq.s32.totalorder %s17, 0
    %p44 = por %p42, %p43
    %s45 = ssub.s32 %s11, %s18
    %p46 = scmp.eq.s32.totalorder %s45, 0
    %s48 = sadd.s32 %s47, 1
    %s49 = scalar_select %p46, %s47, %s48
    %p52 = pneg %p46
    %p53 = scmp.eq.s32.totalorder %s11, 1
    %p54 = por %p52, %p53
    %p55 = scmp.ne.s32.totalorder %s47, %s50
    %p56 = scmp.eq.s32.totalorder %s11, 0
    %p57 = por %p55, %p56
    %p58 = scmp.ne.s32.totalorder %s47, %s50
    %p59 = scmp.eq.s32.totalorder %s16, 1
    %p60 = por %p58, %p59
    %p61 = scmp.ne.s32.totalorder %s50, %s51
    %p62 = scmp.eq.s32.totalorder %s16, 0
    %p63 = por %p61, %p62
    %p64 = scmp.ne.s32.totalorder %s50, %s51
    %p65 = scmp.eq.s32.totalorder %s17, 1
    %p66 = por %p64, %p65
    %p68 = scmp.ne.s32.totalorder %s51, %s67
    %p69 = scmp.eq.s32.totalorder %s17, 0
    %p70 = por %p68, %p69
    %s72 = sadd.s32 %s71, 1
    %p75 = scmp.eq.s32.totalorder %s11, 1
    %p76 = scmp.ne.s32.totalorder %s71, %s73
    %p77 = scmp.eq.s32.totalorder %s11, 0
    %p78 = por %p76, %p77
    %p79 = scmp.ne.s32.totalorder %s71, %s73
    %p80 = scmp.eq.s32.totalorder %s16, 1
    %p81 = por %p79, %p80
    %p82 = scmp.ne.s32.totalorder %s73, %s74
    %p83 = scmp.eq.s32.totalorder %s16, 0
    %p84 = por %p82, %p83
    %p85 = scmp.ne.s32.totalorder %s73, %s74
    %p86 = scmp.eq.s32.totalorder %s17, 1
    %p87 = por %p85, %p86
    %p89 = scmp.ne.s32.totalorder %s74, %s88
    %p90 = scmp.eq.s32.totalorder %s17, 0
    %p91 = por %p89, %p90
    %s93 = sadd.s32 %s92, 1
    %p96 = scmp.eq.s32.totalorder %s11, 1
    %p97 = scmp.ne.s32.totalorder %s92, %s94
    %p98 = scmp.eq.s32.totalorder %s11, 0
    %p99 = por %p97, %p98
    %p100 = scmp.ne.s32.totalorder %s92, %s94
    %p101 = scmp.eq.s32.totalorder %s16, 1
    %p102 = por %p100, %p101
    %p103 = scmp.ne.s32.totalorder %s94, %s95
    %p104 = scmp.eq.s32.totalorder %s16, 0
    %p105 = por %p103, %p104
    %p106 = scmp.ne.s32.totalorder %s94, %s95
    %p107 = scmp.eq.s32.totalorder %s17, 1
    %p108 = por %p106, %p107
    %p110 = scmp.ne.s32.totalorder %s95, %s109
    %p111 = scmp.eq.s32.totalorder %s17, 0
    %p112 = por %p110, %p111
    %s114 = sadd.s32 %s113, 1
    %p117 = scmp.eq.s32.totalorder %s11, 1
    %p118 = scmp.ne.s32.totalorder %s113, %s115
    %p119 = scmp.eq.s32.totalorder %s11, 0
    %p120 = por %p118, %p119
    %p121 = scmp.ne.s32.totalorder %s113, %s115
    %p122 = scmp.eq.s32.totalorder %s16, 1
    %p123 = por %p121, %p122
    %p124 = scmp.ne.s32.totalorder %s115, %s116
    %p125 = scmp.eq.s32.totalorder %s16, 0
    %p126 = por %p124, %p125
    %p127 = scmp.ne.s32.totalorder %s115, %s116
    %p128 = scmp.eq.s32.totalorder %s17, 1
    %p129 = por %p127, %p128
    %p131 = scmp.ne.s32.totalorder %s116, %s130
    %p132 = scmp.eq.s32.totalorder %s17, 0
    %p133 = por %p131, %p132
    %s134 = ssub.s32 %s11, %s18
    %p135 = scmp.eq.s32.totalorder %s134, 0
    %s137 = sadd.s32 %s136, 1
    %s138 = scalar_select %p135, %s136, %s137
    %p141 = pneg %p135
    %p142 = scmp.eq.s32.totalorder %s11, 1
    %p143 = por %p141, %p142
    %p144 = scmp.ne.s32.totalorder %s136, %s139
    %p145 = scmp.eq.s32.totalorder %s11, 0
    %p146 = por %p144, %p145
    %p147 = scmp.ne.s32.totalorder %s136, %s139
    %p148 = scmp.eq.s32.totalorder %s16, 1
    %p149 = por %p147, %p148
    %p150 = scmp.ne.s32.totalorder %s139, %s140
    %p151 = scmp.eq.s32.totalorder %s16, 0
    %p152 = por %p150, %p151
    %p153 = scmp.ne.s32.totalorder %s139, %s140
    %p154 = scmp.eq.s32.totalorder %s17, 1
    %p155 = por %p153, %p154
    %p157 = scmp.ne.s32.totalorder %s140, %s156
    %p158 = scmp.eq.s32.totalorder %s17, 0
    %p159 = por %p157, %p158
    %p160 = scmp.le.s32.totalorder 1, %s11
    %p161 = scmp.lt.s32.totalorder %s11, 3
    %p162 = pnand %p160, %p161
    %p163 = pneg %p162
    // Predicated region
    $region9: #{bigru_forward.6} parent=5 // pred_check
      _
    $region10: #{bigru_forward.6} parent=5 // pred_check_branch
      %165 = sbr.rel (%p162) target = $region12
    $region11: #{bigru_forward.6} parent=5 // pred_region
      %s166 = ssub.s32 %s11, 1
      // Predicated region
      $region13: #{bigru_forward.6} parent=11 // pred_check
        %p167 = pneg %p84
      $region14: #{bigru_forward.6} parent=11 // pred_check_branch
        %169 = sbr.rel (%p167) target = $region16
      $region15: #{bigru_forward.6} parent=11 // pred_region
        _
      $region16: #{bigru_forward.6} parent=11 // pred_fallthru
        _
      // Predicated region
      $region17: #{bigru_forward.6} parent=11 // pred_check
        %p170 = pneg %p105
      $region18: #{bigru_forward.6} parent=11 // pred_check_branch
        %172 = sbr.rel (%p170) target = $region20
      $region19: #{bigru_forward.6} parent=11 // pred_region
        _
      $region20: #{bigru_forward.6} parent=11 // pred_fallthru
        _
      // Predicated region
      $region21: #{bigru_forward.6} parent=11 // pred_check
        %p173 = pneg %p126
      $region22: #{bigru_forward.6} parent=11 // pred_check_branch
        %175 = sbr.rel (%p173) target = $region24
      $region23: #{bigru_forward.6} parent=11 // pred_region
        _
      $region24: #{bigru_forward.6} parent=11 // pred_fallthru
        _
    $region12: #{bigru_forward.6} parent=5 // pred_fallthru
      _
    %p176 = scmp.lt.s32.totalorder %s11, 2
    // Predicated region
    $region25: #{bigru_forward.6} parent=5 // pred_check
      %p177 = pneg %p176
    $region26: #{bigru_forward.6} parent=5 // pred_check_branch
      %179 = sbr.rel (%p177) target = $region28
    $region27: #{bigru_forward.6} parent=5 // pred_region
      // Predicated region
      $region29: #{bigru_forward.6} parent=27 // pred_check
        %p180 = pneg %p31
      $region30: #{bigru_forward.6} parent=27 // pred_check_branch
        %182 = sbr.rel (%p180) target = $region32
      $region31: #{bigru_forward.6} parent=27 // pred_region
        %s183 = smul.u32 2, %s11
        %p184 = scmp.lt.s32.totalorder %s183, 3
        %s185 = scalar_select %p184, %s183, 3
        %s186 = smul.addr %s185, 4
        %s187 = scalar_lea.vmem %s0, %s186
        %s188 = smul.u32 2, %s11
      $region32: #{bigru_forward.6} parent=27 // pred_fallthru
        _
      // Predicated region
      $region33: #{bigru_forward.6} parent=27 // pred_check
        %p189 = pneg %p57
      $region34: #{bigru_forward.6} parent=27 // pred_check_branch
        %191 = sbr.rel (%p189) target = $region36
      $region35: #{bigru_forward.6} parent=27 // pred_region
        %s192 = smul.u32 2, %s11
        %p193 = scmp.lt.s32.totalorder %s192, 3
        %s194 = scalar_select %p193, %s192, 3
        %s195 = smul.addr %s194, 4
        %s196 = scalar_lea.vmem %s1, %s195
        %s197 = smul.u32 2, %s11
      $region36: #{bigru_forward.6} parent=27 // pred_fallthru
        _
    $region28: #{bigru_forward.6} parent=5 // pred_fallthru
      _
    %p198 = scmp.le.s32.totalorder 1, %s11
    %p199 = scmp.lt.s32.totalorder %s11, 3
    %p200 = pnand %p198, %p199
    %p201 = pneg %p200
    // Predicated region
    $region37: #{bigru_forward.6} parent=5 // pred_check
      _
    $region38: #{bigru_forward.6} parent=5 // pred_check_branch
      %203 = sbr.rel (%p200) target = $region40
    $region39: #{bigru_forward.6} parent=5 // pred_region
      %s204 = ssub.s32 %s11, 1
      %s205 = smul.u32 2, %s16
      %p206 = scmp.lt.s32.totalorder %s205, 3
      %s207 = scalar_select %p206, %s205, 3
      %s208 = smul.addr %s207, 4
      %s209 = scalar_lea.vmem %s0, %s208
      %p210 = pneg %p37
      %p211 = pneg %p34
      %s212 = smul.u32 2, %s16
      %p213 = scmp.lt.s32.totalorder %s212, 3
      %s214 = scalar_select %p213, %s212, 3
      %s215 = smul.addr %s214, 4
      %s216 = scalar_lea.vmem %s1, %s215
      %p217 = pneg %p63
      %p218 = pneg %p60
      %p219 = pneg %p84
      %p220 = pneg %p81
      %p221 = pneg %p105
      %p222 = pneg %p102
      %p223 = pneg %p126
      %p224 = pneg %p123
      %p225 = pneg %p152
      %p226 = pneg %p149
      %s227 = smul.u32 2, %s16
      %p228 = scmp.lt.s32.totalorder %s227, 3
      %s229 = scalar_select %p228, %s227, 3
      %s230 = smul.addr %s229, 3
      %s231 = smul.addr %s230, 8
      %s232 = scalar_lea.vmem %s5, %s231
      %s233 = smul.u32 2, %s16
      %p234 = scmp.lt.s32.totalorder %s233, 3
      %s235 = scalar_select %p234, %s233, 3
      %s236 = smul.addr %s235, 4
      %s237 = scalar_lea.vmem %s0, %s236
      %s238 = smul.u32 2, %s16
      %s239 = smul.u32 2, %s16
      %p240 = scmp.lt.s32.totalorder %s239, 3
      %s241 = scalar_select %p240, %s239, 3
      %s242 = smul.addr %s241, 4
      %s243 = scalar_lea.vmem %s1, %s242
      %s244 = smul.u32 2, %s16
      %s245 = smul.u32 2, %s16
      %p246 = scmp.lt.s32.totalorder %s245, 3
      %s247 = scalar_select %p246, %s245, 3
      %s248 = smul.addr %s247, 3
      %s249 = smul.addr %s248, 8
      %s250 = scalar_lea.vmem %s5, %s249
      %s251 = smul.u32 2, %s16
      %v253 = vld [vmem:[%s237] sm:$0xf]
      %v254 = vld [vmem:[%s237 + $0x4] sm:$0xf]
      %v255 = vld [vmem:[%s2] sm:$0xff]
      %v256 = vld [vmem:[%s2 + $0x8] sm:$0xf]
      %v257 = vld [vmem:[%s2 + $0xc] sm:$0xff]
      %v258 = vld [vmem:[%s2 + $0x14] sm:$0xf]
      %v259 = vld [vmem:[%s2 + $0x18] sm:$0xff]
      %v260 = vld [vmem:[%s2 + $0x20] sm:$0xf]
      %v261 = vld [vmem:[%s2 + $0x24] sm:$0xff]
      %v262 = vld [vmem:[%s2 + $0x2c] sm:$0xf]
      %v263 = vld [vmem:[%s2 + $0x30] sm:$0xff]
      %v264 = vld [vmem:[%s2 + $0x38] sm:$0xf]
      %v265 = vld [vmem:[%s2 + $0x3c] sm:$0xff]
      %v266 = vld [vmem:[%s2 + $0x44] sm:$0xf]
      %v267 = vld [vmem:[%s2 + $0x48] sm:$0xff]
      %v268 = vld [vmem:[%s2 + $0x50] sm:$0xf]
      %v269 = vld [vmem:[%s2 + $0x54] sm:$0xff]
      %v270 = vld [vmem:[%s2 + $0x5c] sm:$0xf]
      %v271 = vld [vmem:[%s243] sm:$0xf]
      %v272 = vld [vmem:[%s243 + $0x4] sm:$0xf]
      %v273 = vld [vmem:[%s3] sm:$0xff]
      %v274 = vld [vmem:[%s3 + $0x8] sm:$0xf]
      %v275 = vld [vmem:[%s3 + $0xc] sm:$0xff]
      %v276 = vld [vmem:[%s3 + $0x14] sm:$0xf]
      %v277 = vld [vmem:[%s3 + $0x18] sm:$0xff]
      %v278 = vld [vmem:[%s3 + $0x20] sm:$0xf]
      %v279 = vld [vmem:[%s3 + $0x24] sm:$0xff]
      %v280 = vld [vmem:[%s3 + $0x2c] sm:$0xf]
      %v281 = vld [vmem:[%s3 + $0x30] sm:$0xff]
      %v282 = vld [vmem:[%s3 + $0x38] sm:$0xf]
      %v283 = vld [vmem:[%s3 + $0x3c] sm:$0xff]
      %v284 = vld [vmem:[%s3 + $0x44] sm:$0xf]
      %v285 = vld [vmem:[%s3 + $0x48] sm:$0xff]
      %v286 = vld [vmem:[%s3 + $0x50] sm:$0xf]
      %v287 = vld [vmem:[%s3 + $0x54] sm:$0xff]
      %v288 = vld [vmem:[%s3 + $0x5c] sm:$0xf]
      %v291 = vunpack.c.l.b16 %v271
      %v292 = vunpack.c.l.b16 %v272
      %v293 = vpack.c.b16 %v292, %v291
      %v310 = vunpack.c.l.b16 %v273
      %v311 = vunpack.c.h.b16 %v273
      %v312 = vunpack.c.l.b16 %v274
      %v313 = vunpack.c.l.b16 %v275
      %v314 = vunpack.c.h.b16 %v275
      %v315 = vunpack.c.l.b16 %v276
      %v316 = vunpack.c.l.b16 %v277
      %v317 = vunpack.c.h.b16 %v277
      %v318 = vunpack.c.l.b16 %v278
      %v319 = vunpack.c.l.b16 %v279
      %v320 = vunpack.c.h.b16 %v279
      %v321 = vunpack.c.l.b16 %v280
      %v322 = vunpack.c.l.b16 %v281
      %v323 = vunpack.c.h.b16 %v281
      %v324 = vunpack.c.l.b16 %v282
      %v325 = vunpack.c.l.b16 %v283
      %v326 = vunpack.c.h.b16 %v283
      %v327 = vunpack.c.l.b16 %v284
      %v328 = vunpack.c.l.b16 %v285
      %v329 = vunpack.c.h.b16 %v285
      %v330 = vunpack.c.l.b16 %v286
      %v331 = vunpack.c.l.b16 %v287
      %v332 = vunpack.c.h.b16 %v287
      %v333 = vunpack.c.l.b16 %v288
      %v334 = vpack.c.b16 %v313, %v310
      %v335 = vpack.c.b16 %v314, %v311
      %v336 = vpack.c.b16 %v315, %v312
      %v337 = vpack.c.b16 %v319, %v316
      %v338 = vpack.c.b16 %v320, %v317
      %v339 = vpack.c.b16 %v321, %v318
      %v340 = vpack.c.b16 %v325, %v322
      %v341 = vpack.c.b16 %v326, %v323
      %v342 = vpack.c.b16 %v327, %v324
      %v343 = vpack.c.b16 %v331, %v328
      %v344 = vpack.c.b16 %v332, %v329
      %v345 = vpack.c.b16 %v333, %v330
      %vm358 = vcmask 523264
      %v360 = vsel %vm358, %v293, 0
      %362 = vmatprep.subr.bf16.mxu0 %v335
      %363 = vmatpush1.bf16.msra.mxu0 %v334
      %364 = vmatprep.subr.bf16.mxu0 %v338
      %365 = vmatpush1.bf16.msra.mxu0 %v337
      %366 = vmatprep.subr.bf16.mxu0 %v341
      %367 = vmatpush1.bf16.msra.mxu0 %v340
      %368 = vmatprep.subr.bf16.mxu0 %v344
      %369 = vmatpush1.bf16.msra.mxu0 %v343
      %370 = vmatprep.subr.bf16.mxu0 0
      %371 = vmatpush1.bf16.msra.mxu0 0
      %372 = vmatprep.subr.bf16.mxu0 0
      %373 = vmatpush1.bf16.msra.mxu0 0
      %374 = vmatprep.subr.bf16.mxu0 0
      %375 = vmatpush1.bf16.msra.mxu0 0
      %376 = vmatprep.subr.bf16.mxu0 0
      %377 = vmatpush1.bf16.msra.mxu0 0
      %378 = vmatprep.subr.bf16.mxu0 0
      %379 = vmatpush1.bf16.msra.mxu0 0
      %380 = vmatprep.subr.bf16.mxu0 0
      %381 = vmatpush1.bf16.msra.mxu0 0
      %382 = vmatprep.subr.bf16.mxu0 0
      %383 = vmatpush1.bf16.msra.mxu0 0
      %384 = vmatprep.subr.bf16.mxu0 0
      %385 = vmatpush1.bf16.msra.mxu0 0
      %386 = vmatprep.subr.bf16.mxu0 0
      %387 = vmatpush1.bf16.msra.mxu0 0
      %388 = vmatprep.subr.bf16.mxu0 0
      %389 = vmatpush1.bf16.msra.mxu0 0
      %390 = vmatprep.subr.bf16.mxu0 0
      %391 = vmatpush1.bf16.msra.mxu0 0
      %392 = vmatprep.subr.bf16.mxu0 0
      %393 = vmatpush1.bf16.msra.mxu0 0
      %394 = vmatprep.mubr.bf16.mxu0 0
      %395 = vmatmul.mubr.bf16.gmra.mrb[0].mxu0 %v360
      %v396 = vpop.f32.mrb[0].mxu0
      %v397 = vadd.f32 0.0, %v396
      %v398 = vpop.f32.mrb[0].mxu0
      %v399 = vadd.f32 0.0, %v398
      %v400 = vpop.f32.mrb[0].mxu0
      %v401 = vadd.f32 0.0, %v400
      %v402 = vpop.f32.mrb[0].mxu0
      %v403 = vadd.f32 0.0, %v402
      %404 = vdwg.mxu0
      %405 = vmatprep.subr.bf16.mxu0 0
      %406 = vmatpush1.bf16.msra.mxu0 %v336
      %407 = vmatprep.subr.bf16.mxu0 0
      %408 = vmatpush1.bf16.msra.mxu0 %v339
      %409 = vmatprep.subr.bf16.mxu0 0
      %410 = vmatpush1.bf16.msra.mxu0 %v342
      %411 = vmatprep.subr.bf16.mxu0 0
      %412 = vmatpush1.bf16.msra.mxu0 %v345
      %413 = vmatprep.subr.bf16.mxu0 0
      %414 = vmatpush1.bf16.msra.mxu0 0
      %415 = vmatprep.subr.bf16.mxu0 0
      %416 = vmatpush1.bf16.msra.mxu0 0
      %417 = vmatprep.subr.bf16.mxu0 0
      %418 = vmatpush1.bf16.msra.mxu0 0
      %419 = vmatprep.subr.bf16.mxu0 0
      %420 = vmatpush1.bf16.msra.mxu0 0
      %421 = vmatprep.subr.bf16.mxu0 0
      %422 = vmatpush1.bf16.msra.mxu0 0
      %423 = vmatprep.subr.bf16.mxu0 0
      %424 = vmatpush1.bf16.msra.mxu0 0
      %425 = vmatprep.subr.bf16.mxu0 0
      %426 = vmatpush1.bf16.msra.mxu0 0
      %427 = vmatprep.subr.bf16.mxu0 0
      %428 = vmatpush1.bf16.msra.mxu0 0
      %429 = vmatprep.subr.bf16.mxu0 0
      %430 = vmatpush1.bf16.msra.mxu0 0
      %431 = vmatprep.subr.bf16.mxu0 0
      %432 = vmatpush1.bf16.msra.mxu0 0
      %433 = vmatprep.subr.bf16.mxu0 0
      %434 = vmatpush1.bf16.msra.mxu0 0
      %435 = vmatprep.subr.bf16.mxu0 0
      %436 = vmatpush1.bf16.msra.mxu0 0
      %437 = vmatprep.mubr.bf16.mxu0 0
      %438 = vmatmul.mubr.bf16.gmra.mrb[0].mxu0 %v360
      %v439 = vpop.f32.mrb[0].mxu0
      %v440 = vadd.f32 0.0, %v439
      %v441 = vpop.f32.mrb[0].mxu0
      %v442 = vpop.f32.mrb[0].mxu0
      %v443 = vadd.f32 0.0, %v442
      %v444 = vpop.f32.mrb[0].mxu0
      %445 = vdwg.mxu0
      %v448 = vunpack.c.l.b16 %v253
      %v449 = vunpack.c.l.b16 %v254
      %v450 = vpack.c.b16 %v449, %v448
      %v467 = vunpack.c.l.b16 %v255
      %v468 = vunpack.c.h.b16 %v255
      %v469 = vunpack.c.l.b16 %v256
      %v470 = vunpack.c.l.b16 %v257
      %v471 = vunpack.c.h.b16 %v257
      %v472 = vunpack.c.l.b16 %v258
      %v473 = vunpack.c.l.b16 %v259
      %v474 = vunpack.c.h.b16 %v259
      %v475 = vunpack.c.l.b16 %v260
      %v476 = vunpack.c.l.b16 %v261
      %v477 = vunpack.c.h.b16 %v261
      %v478 = vunpack.c.l.b16 %v262
      %v479 = vunpack.c.l.b16 %v263
      %v480 = vunpack.c.h.b16 %v263
      %v481 = vunpack.c.l.b16 %v264
      %v482 = vunpack.c.l.b16 %v265
      %v483 = vunpack.c.h.b16 %v265
      %v484 = vunpack.c.l.b16 %v266
      %v485 = vunpack.c.l.b16 %v267
      %v486 = vunpack.c.h.b16 %v267
      %v487 = vunpack.c.l.b16 %v268
      %v488 = vunpack.c.l.b16 %v269
      %v489 = vunpack.c.h.b16 %v269
      %v490 = vunpack.c.l.b16 %v270
      %v491 = vpack.c.b16 %v470, %v467
      %v492 = vpack.c.b16 %v471, %v468
      %v493 = vpack.c.b16 %v472, %v469
      %v494 = vpack.c.b16 %v476, %v473
      %v495 = vpack.c.b16 %v477, %v474
      %v496 = vpack.c.b16 %v478, %v475
      %v497 = vpack.c.b16 %v482, %v479
      %v498 = vpack.c.b16 %v483, %v480
      %v499 = vpack.c.b16 %v484, %v481
      %v500 = vpack.c.b16 %v488, %v485
      %v501 = vpack.c.b16 %v489, %v486
      %v502 = vpack.c.b16 %v490, %v487
      %v516 = vsel %vm358, %v450, 0
      %518 = vmatprep.subr.bf16.mxu0 %v492
      %519 = vmatpush1.bf16.msra.mxu0 %v491
      %520 = vmatprep.subr.bf16.mxu0 %v495
      %521 = vmatpush1.bf16.msra.mxu0 %v494
      %522 = vmatprep.subr.bf16.mxu0 %v498
      %523 = vmatpush1.bf16.msra.mxu0 %v497
      %524 = vmatprep.subr.bf16.mxu0 %v501
      %525 = vmatpush1.bf16.msra.mxu0 %v500
      %526 = vmatprep.subr.bf16.mxu0 0
      %527 = vmatpush1.bf16.msra.mxu0 0
      %528 = vmatprep.subr.bf16.mxu0 0
      %529 = vmatpush1.bf16.msra.mxu0 0
      %530 = vmatprep.subr.bf16.mxu0 0
      %531 = vmatpush1.bf16.msra.mxu0 0
      %532 = vmatprep.subr.bf16.mxu0 0
      %533 = vmatpush1.bf16.msra.mxu0 0
      %534 = vmatprep.subr.bf16.mxu0 0
      %535 = vmatpush1.bf16.msra.mxu0 0
      %536 = vmatprep.subr.bf16.mxu0 0
      %537 = vmatpush1.bf16.msra.mxu0 0
      %538 = vmatprep.subr.bf16.mxu0 0
      %539 = vmatpush1.bf16.msra.mxu0 0
      %540 = vmatprep.subr.bf16.mxu0 0
      %541 = vmatpush1.bf16.msra.mxu0 0
      %542 = vmatprep.subr.bf16.mxu0 0
      %543 = vmatpush1.bf16.msra.mxu0 0
      %544 = vmatprep.subr.bf16.mxu0 0
      %545 = vmatpush1.bf16.msra.mxu0 0
      %546 = vmatprep.subr.bf16.mxu0 0
      %547 = vmatpush1.bf16.msra.mxu0 0
      %548 = vmatprep.subr.bf16.mxu0 0
      %549 = vmatpush1.bf16.msra.mxu0 0
      %550 = vmatprep.mubr.bf16.mxu0 0
      %551 = vmatmul.mubr.bf16.gmra.mrb[0].mxu0 %v516
      %v552 = vpop.f32.mrb[0].mxu0
      %v553 = vadd.f32 %v397, %v552
      %v554 = vpop.f32.mrb[0].mxu0
      %v555 = vadd.f32 %v399, %v554
      %v556 = vpop.f32.mrb[0].mxu0
      %v557 = vadd.f32 %v401, %v556
      %v558 = vpop.f32.mrb[0].mxu0
      %v559 = vadd.f32 %v403, %v558
      %560 = vdwg.mxu0
      %561 = vmatprep.subr.bf16.mxu0 0
      %562 = vmatpush1.bf16.msra.mxu0 %v493
      %563 = vmatprep.subr.bf16.mxu0 0
      %564 = vmatpush1.bf16.msra.mxu0 %v496
      %565 = vmatprep.subr.bf16.mxu0 0
      %566 = vmatpush1.bf16.msra.mxu0 %v499
      %567 = vmatprep.subr.bf16.mxu0 0
      %568 = vmatpush1.bf16.msra.mxu0 %v502
      %569 = vmatprep.subr.bf16.mxu0 0
      %570 = vmatpush1.bf16.msra.mxu0 0
      %571 = vmatprep.subr.bf16.mxu0 0
      %572 = vmatpush1.bf16.msra.mxu0 0
      %573 = vmatprep.subr.bf16.mxu0 0
      %574 = vmatpush1.bf16.msra.mxu0 0
      %575 = vmatprep.subr.bf16.mxu0 0
      %576 = vmatpush1.bf16.msra.mxu0 0
      %577 = vmatprep.subr.bf16.mxu0 0
      %578 = vmatpush1.bf16.msra.mxu0 0
      %579 = vmatprep.subr.bf16.mxu0 0
      %580 = vmatpush1.bf16.msra.mxu0 0
      %581 = vmatprep.subr.bf16.mxu0 0
      %582 = vmatpush1.bf16.msra.mxu0 0
      %583 = vmatprep.subr.bf16.mxu0 0
      %584 = vmatpush1.bf16.msra.mxu0 0
      %585 = vmatprep.subr.bf16.mxu0 0
      %586 = vmatpush1.bf16.msra.mxu0 0
      %587 = vmatprep.subr.bf16.mxu0 0
      %588 = vmatpush1.bf16.msra.mxu0 0
      %589 = vmatprep.subr.bf16.mxu0 0
      %590 = vmatpush1.bf16.msra.mxu0 0
      %591 = vmatprep.subr.bf16.mxu0 0
      %592 = vmatpush1.bf16.msra.mxu0 0
      %593 = vmatprep.mubr.bf16.mxu0 0
      %594 = vmatmul.mubr.bf16.gmra.mrb[0].mxu0 %v516
      %v595 = vpop.f32.mrb[0].mxu0
      %v596 = vadd.f32 %v440, %v595
      %v597 = vpop.f32.mrb[0].mxu0
      %v598 = vpop.f32.mrb[0].mxu0
      %v599 = vadd.f32 %v443, %v598
      %v600 = vpop.f32.mrb[0].mxu0
      %601 = vdwg.mxu0
      %v602 = vld [vmem:[%s4] sm:$0x7]
      %v604 = vlaneseq
      %v605 = vshrl.u32 %v604, 7
      %v606 = vsub.s32 0, %v605
      %v607 = vrot.slane %v602, %v606
      %v608 = vlaneseq
      %v609 = vshrl.u32 %v608, 7
      %v610 = vsub.s32 1, %v609
      %v611 = vrot.slane %v602, %v610
      %v612 = vlaneseq
      %v613 = vshrl.u32 %v612, 7
      %v614 = vsub.s32 2, %v613
      %v615 = vrot.slane %v602, %v614
      %v619 = vadd.f32 %v553, %v607
      %v620 = vadd.f32 %v555, %v611
      %v621 = vadd.f32 %v596, %v615
      %v622 = vadd.f32 %v557, %v607
      %v623 = vadd.f32 %v559, %v611
      %v624 = vadd.f32 %v599, %v615
      %625 = vst [vmem:[%s250] sm:$0xff] %v619
      %626 = vst [vmem:[%s250 + $0x8] sm:$0xff] %v620
      %627 = vst [vmem:[%s250 + $0x10] sm:$0xff] %v621
      %628 = vst [vmem:[%s250 + $0x18] sm:$0xff] %v622
      %629 = vst [vmem:[%s250 + $0x20] sm:$0xff] %v623
      %630 = vst [vmem:[%s250 + $0x28] sm:$0xff] %v624
      %s631 = smul.u32 2, %s16
      %p632 = scmp.lt.s32.totalorder %s631, 3
      %s633 = scalar_select %p632, %s631, 3
      %s634 = smul.addr %s633, 3
      %s635 = smul.addr %s634, 8
      %s636 = scalar_lea.vmem %s5, %s635
      // Predicated region
      $region41: #{bigru_forward.6} parent=39 // pred_check
        %p637 = pneg %p149
      $region42: #{bigru_forward.6} parent=39 // pred_check_branch
        %639 = sbr.rel (%p637) target = $region44
      $region43: #{bigru_forward.6} parent=39 // pred_region
        %s640 = smul.u32 2, %s16
      $region44: #{bigru_forward.6} parent=39 // pred_fallthru
        _
    $region40: #{bigru_forward.6} parent=5 // pred_fallthru
      _
    %p641 = scmp.le.s32.totalorder 2, %s11
    // Predicated region
    $region45: #{bigru_forward.6} parent=5 // pred_check
      %p642 = pneg %p641
    $region46: #{bigru_forward.6} parent=5 // pred_check_branch
      %644 = sbr.rel (%p642) target = $region48
    $region47: #{bigru_forward.6} parent=5 // pred_region
      %s645 = ssub.s32 %s11, 2
      // Predicated region
      $region49: #{bigru_forward.6} parent=47 // pred_check
        %p646 = pneg %p155
      $region50: #{bigru_forward.6} parent=47 // pred_check_branch
        %648 = sbr.rel (%p646) target = $region52
      $region51: #{bigru_forward.6} parent=47 // pred_region
        %s649 = smul.u32 2, %s17
        %p650 = scmp.lt.s32.totalorder %s649, 3
        %s651 = scalar_select %p650, %s649, 3
        %s652 = smul.addr %s651, 3
        %s653 = smul.addr %s652, 8
        %s654 = scalar_lea.vmem %s5, %s653
      $region52: #{bigru_forward.6} parent=47 // pred_fallthru
        _
    $region48: #{bigru_forward.6} parent=5 // pred_fallthru
      _
  $region6: #{bigru_forward.6} parent=0 // loop_footer
    %s15 = sadd.s32 1, %s11
  $region7: #{bigru_forward.6} parent=0 // loop_footer_branch
    %10 = sbr.rel target = $region3
  $region8: #{bigru_forward.6} parent=0 // loop_exit
    _

// kernel: bigru_forward.5
$region0: #{bigru_forward.5}
  #allocation0 [shape = 'u32[]', space=smem, size = 0x4, offset = 0x4, fixed_abs, tag = 'smem constant byte address 0x4 - core index']
  #allocation1 [shape = 'u32[144,128]{1,0:T(1,128)}', space=vmem, size = 0x12000, scoped, tag = 'internal scratch']
  #allocation2 [shape = 'f32[2,128]{1,0:T(2,128)}', space=vmem, size = 0x400, scoped, tag = 'scratch operand']
  %s0 = inlined_call_operand.vmem [shape: f32[16,2,384], index: 0, kind: input, shape index: {}, may-alias: {0,1}]
  %s1 = inlined_call_operand.vmem [shape: f32[16,2,384], index: 1, kind: input, shape index: {}, may-alias: {0,1}]
  %s2 = inlined_call_operand.vmem [shape: bf16[128,384], index: 2, kind: input, shape index: {}]
  %s3 = inlined_call_operand.vmem [shape: f32[1,384], index: 3, kind: input, shape index: {}]
  %s4 = inlined_call_operand.vmem [shape: bf16[16,2,64], index: 4, kind: output, shape index: {0}]
  %s5 = inlined_call_operand.vmem [shape: bf16[16,2,64], index: 5, kind: output, shape index: {1}]
  %6 = xla_tuple %s4, %s5
  %s7 = sld [smem:[#allocation0]]
  $region38: #{bigru_forward.5} parent=0
    _
  %s9 = ssub.s32 1, %s7
  %s10 = scalar_select 0, %s9, %s7
  // Predicated region
  $region2: #{bigru_forward.5} parent=0 // pred_check
    _
  $region3: #{bigru_forward.5} parent=0 // pred_check_branch
    %12 = sbr.rel (0) target = $region5
  $region4: #{bigru_forward.5} parent=0 // pred_region
    _
  $region5: #{bigru_forward.5} parent=0 // pred_fallthru
    _
  // Predicated region
  $region6: #{bigru_forward.5} parent=0 // pred_check
    _
  $region7: #{bigru_forward.5} parent=0 // pred_check_branch
    %14 = sbr.rel (0) target = $region9
  $region8: #{bigru_forward.5} parent=0 // pred_region
    %s15 = ssub.s32 0, 0
    %s16 = smul.u32 16, %s15
    %p17 = scmp.lt.s32.totalorder %s16, 15
    %s18 = scalar_select %p17, %s16, 15
    %s19 = smul.addr %s18, 3
    %s20 = smul.addr %s19, 2
    %s21 = scalar_lea.vmem %s1, %s20
    %s22 = ssub.s32 0, 0
    %s23 = smul.u32 16, %s22
  $region9: #{bigru_forward.5} parent=0 // pred_fallthru
    _
  // Predicated region
  $region10: #{bigru_forward.5} parent=0 // pred_check
    _
  $region11: #{bigru_forward.5} parent=0 // pred_check_branch
    %25 = sbr.rel (0) target = $region13
  $region12: #{bigru_forward.5} parent=0 // pred_region
    _
  $region13: #{bigru_forward.5} parent=0 // pred_fallthru
    _
  // Predicated region
  $region14: #{bigru_forward.5} parent=0 // pred_check
    _
  $region15: #{bigru_forward.5} parent=0 // pred_check_branch
    %27 = sbr.rel (0) target = $region17
  $region16: #{bigru_forward.5} parent=0 // pred_region
    _
  $region17: #{bigru_forward.5} parent=0 // pred_fallthru
    _
  %s28 = ssub.s32 0, 0
  %s29 = smul.u32 16, %s28
  %p30 = scmp.lt.s32.totalorder %s29, 15
  %s31 = scalar_select %p30, %s29, 15
  %s32 = smul.addr %s31, 3
  %s33 = smul.addr %s32, 2
  %s34 = scalar_lea.vmem %s1, %s33
  %s35 = ssub.s32 0, 0
  %s36 = smul.u32 16, %s35
  %p37 = scmp.lt.s32.totalorder %s36, 15
  %s38 = scalar_select %p37, %s36, 15
  %s39 = scalar_lea.vmem %s5, %s38
  %s40 = ssub.s32 0, 0
  %s41 = smul.u32 16, %s40
  %p42 = scmp.lt.s32.totalorder %s41, 15
  %s43 = scalar_select %p42, %s41, 15
  %s44 = smul.addr %s43, 3
  %s45 = smul.addr %s44, 2
  %s46 = scalar_lea.vmem %s1, %s45
  %s47 = ssub.s32 0, 0
  %s48 = smul.u32 16, %s47
  %s49 = ssub.s32 0, 0
  %s50 = smul.u32 16, %s49
  %p51 = scmp.lt.s32.totalorder %s50, 15
  %s52 = scalar_select %p51, %s50, 15
  %s53 = scalar_lea.vmem %s5, %s52
  %s54 = ssub.s32 0, 0
  %s55 = smul.u32 16, %s54
  %p57 = scmp.eq.s32.totalorder 0, 0
  // Predicated region
  $region18: #{bigru_forward.5} parent=0 // pred_check
    %p58 = pneg %p57
  $region19: #{bigru_forward.5} parent=0 // pred_check_branch
    %60 = sbr.rel (%p58) target = $region21
  $region20: #{bigru_forward.5} parent=0 // pred_region
    %61 = vst [vmem:[#allocation2] sm:$0x3] 0.0
  $region21: #{bigru_forward.5} parent=0 // pred_fallthru
    _
  %v62 = vld [vmem:[%s2] sm:$0xff]
  %v63 = vld [vmem:[%s2 + $0x8] sm:$0xf]
  %v64 = vld [vmem:[%s2 + $0xc] sm:$0xff]
  %v65 = vld [vmem:[%s2 + $0x14] sm:$0xf]
  %v66 = vld [vmem:[%s2 + $0x18] sm:$0xff]
  %v67 = vld [vmem:[%s2 + $0x20] sm:$0xf]
  %v68 = vld [vmem:[%s2 + $0x24] sm:$0xff]
  %v69 = vld [vmem:[%s2 + $0x2c] sm:$0xf]
  %v70 = vld [vmem:[%s2 + $0x30] sm:$0xff]
  %v71 = vld [vmem:[%s2 + $0x38] sm:$0xf]
  %v72 = vld [vmem:[%s2 + $0x3c] sm:$0xff]
  %v73 = vld [vmem:[%s2 + $0x44] sm:$0xf]
  %v74 = vld [vmem:[%s2 + $0x48] sm:$0xff]
  %v75 = vld [vmem:[%s2 + $0x50] sm:$0xf]
  %v76 = vld [vmem:[%s2 + $0x54] sm:$0xff]
  %v77 = vld [vmem:[%s2 + $0x5c] sm:$0xf]
  %v78 = vld [vmem:[%s2 + $0x60] sm:$0xff]
  %v79 = vld [vmem:[%s2 + $0x68] sm:$0xf]
  %v80 = vld [vmem:[%s2 + $0x6c] sm:$0xff]
  %v81 = vld [vmem:[%s2 + $0x74] sm:$0xf]
  %v82 = vld [vmem:[%s2 + $0x78] sm:$0xff]
  %v83 = vld [vmem:[%s2 + $0x80] sm:$0xf]
  %v84 = vld [vmem:[%s2 + $0x84] sm:$0xff]
  %v85 = vld [vmem:[%s2 + $0x8c] sm:$0xf]
  %v86 = vld [vmem:[%s2 + $0x90] sm:$0xff]
  %v87 = vld [vmem:[%s2 + $0x98] sm:$0xf]
  %v88 = vld [vmem:[%s2 + $0x9c] sm:$0xff]
  %v89 = vld [vmem:[%s2 + $0xa4] sm:$0xf]
  %v90 = vld [vmem:[%s2 + $0xa8] sm:$0xff]
  %v91 = vld [vmem:[%s2 + $0xb0] sm:$0xf]
  %v92 = vld [vmem:[%s2 + $0xb4] sm:$0xff]
  %v93 = vld [vmem:[%s2 + $0xbc] sm:$0xf]
  %v94 = vld [vmem:[%s3] sm:$0x7]
  %v95 = vlaneseq
  %v96 = vand.u32 %v95, 127
  %v97 = vadd.s32 %v96, 128
  %v98 = vadd.s32 %v96, 256
  %vm99 = vcmp.lt.s32.totalorder %v96, 0
  %v100 = vsub.s32 0, %v96
  %v101 = vsel %vm99, %v100, %v96
  %v102 = vshrl.u32 %v101, 7
  %v103 = vand.u32 %v101, 127
  %v104 = vsub.s32 0, %v103
  %v105 = vsel %vm99, %v104, %v103
  %vm106 = vcmp.lt.s32.totalorder %v97, 0
  %v107 = vsub.s32 0, %v97
  %v108 = vsel %vm106, %v107, %v97
  %v109 = vshrl.u32 %v108, 7
  %v110 = vand.u32 %v108, 127
  %v111 = vsub.s32 0, %v110
  %v112 = vsel %vm106, %v111, %v110
  %vm113 = vcmp.lt.s32.totalorder %v98, 0
  %v114 = vsub.s32 0, %v98
  %v115 = vsel %vm113, %v114, %v98
  %v116 = vshrl.u32 %v115, 7
  %v117 = vand.u32 %v115, 127
  %v118 = vsub.s32 0, %v117
  %v119 = vsel %vm113, %v118, %v117
  %vm120 = vcmp.ne.s32.totalorder %v105, 0
  %vm121 = vcmp.ne.s32.totalorder %v112, 0
  %vm122 = vcmp.ne.s32.totalorder %v119, 0
  %vm123 = vcmp.lt.s32.totalorder %v105, 0
  %vm124 = vcmp.lt.s32.totalorder %v112, 0
  %vm125 = vcmp.lt.s32.totalorder %v119, 0
  %vm126 = vmand %vm123, %vm120
  %vm127 = vmand %vm124, %vm121
  %vm128 = vmand %vm125, %vm122
  %v129 = vadd.s32 %v105, 128
  %v130 = vadd.s32 %v112, 128
  %v131 = vadd.s32 %v119, 128
  %v132 = vsel %vm126, %v129, %v105
  %v133 = vsel %vm127, %v130, %v112
  %v134 = vsel %vm128, %v131, %v119
  %vm135 = vcmp.lt.s32.totalorder %v132, 64
  %vm136 = vcmp.lt.s32.totalorder %v133, 64
  %vm137 = vcmp.lt.s32.totalorder %v134, 64
  %v138 = vld [vmem:[#allocation2] sm:$0x3]
  %v139 = vld [vmem:[%s0] sm:$0x3f]
  %s140 = scalar_lea.vmem %s46, 90
  %v141 = vld [vmem:[%s140] sm:$0x3f]
  %v143 = vcombine.high %v139, %v139
  %v145 = vunpack.c.l.s4 1983009808
  %v146 = vunpack.c.0.s8 %v145
  %v147 = vlaneseq
  %v148 = vshrl.u32 %v147, 7
  %v149 = vsub.s32 %v146, %v148
  %v150 = vrot.slane %v139, %v149
  %v152 = vunpack.c.l.s4 1983009808
  %v153 = vunpack.c.0.s8 %v152
  %v154 = vlaneseq
  %v155 = vshrl.u32 %v154, 7
  %v156 = vsub.s32 %v153, %v155
  %v157 = vrot.slane %v143, %v156
  %v158 = vcombine.high %v150, %v150
  %v163 = vcombine.high %v141, %v141
  %v165 = vunpack.c.l.s4 1983009808
  %v166 = vunpack.c.0.s8 %v165
  %v167 = vlaneseq
  %v168 = vshrl.u32 %v167, 7
  %v169 = vsub.s32 %v166, %v168
  %v170 = vrot.slane %v141, %v169
  %v172 = vunpack.c.l.s4 1983009808
  %v173 = vunpack.c.0.s8 %v172
  %v174 = vlaneseq
  %v175 = vshrl.u32 %v174, 7
  %v176 = vsub.s32 %v173, %v175
  %v177 = vrot.slane %v163, %v176
  %v178 = vcombine.high %v170, %v170
  %v182 = vsel %vm135, %v150, %v170
  %v183 = vsel %vm136, %v158, %v178
  %v184 = vsel %vm137, %v157, %v177
  %v185 = vpack.c.bf16 %v138, %v138
  %v187 = vlaneseq
  %v188 = vshrl.u32 %v187, 7
  %v189 = vsub.s32 0, %v188
  %v190 = vrot.slane %v94, %v189
  %v191 = vlaneseq
  %v192 = vshrl.u32 %v191, 7
  %v193 = vsub.s32 1, %v192
  %v194 = vrot.slane %v94, %v193
  %v195 = vlaneseq
  %v196 = vshrl.u32 %v195, 7
  %v197 = vsub.s32 2, %v196
  %v198 = vrot.slane %v94, %v197
  %v234 = vunpack.c.l.b16 %v62
  %v235 = vunpack.c.h.b16 %v62
  %v236 = vunpack.c.l.b16 %v63
  %v237 = vunpack.c.l.b16 %v64
  %v238 = vunpack.c.h.b16 %v64
  %v239 = vunpack.c.l.b16 %v65
  %v240 = vunpack.c.l.b16 %v66
  %v241 = vunpack.c.h.b16 %v66
  %v242 = vunpack.c.l.b16 %v67
  %v243 = vunpack.c.l.b16 %v68
  %v244 = vunpack.c.h.b16 %v68
  %v245 = vunpack.c.l.b16 %v69
  %v246 = vunpack.c.l.b16 %v70
  %v247 = vunpack.c.h.b16 %v70
  %v248 = vunpack.c.l.b16 %v71
  %v249 = vunpack.c.l.b16 %v72
  %v250 = vunpack.c.h.b16 %v72
  %v251 = vunpack.c.l.b16 %v73
  %v252 = vunpack.c.l.b16 %v74
  %v253 = vunpack.c.h.b16 %v74
  %v254 = vunpack.c.l.b16 %v75
  %v255 = vunpack.c.l.b16 %v76
  %v256 = vunpack.c.h.b16 %v76
  %v257 = vunpack.c.l.b16 %v77
  %v258 = vunpack.c.l.b16 %v78
  %v259 = vunpack.c.h.b16 %v78
  %v260 = vunpack.c.l.b16 %v79
  %v261 = vunpack.c.l.b16 %v80
  %v262 = vunpack.c.h.b16 %v80
  %v263 = vunpack.c.l.b16 %v81
  %v264 = vunpack.c.l.b16 %v82
  %v265 = vunpack.c.h.b16 %v82
  %v266 = vunpack.c.l.b16 %v83
  %v267 = vunpack.c.l.b16 %v84
  %v268 = vunpack.c.h.b16 %v84
  %v269 = vunpack.c.l.b16 %v85
  %v270 = vunpack.c.l.b16 %v86
  %v271 = vunpack.c.h.b16 %v86
  %v272 = vunpack.c.l.b16 %v87
  %v273 = vunpack.c.l.b16 %v88
  %v274 = vunpack.c.h.b16 %v88
  %v275 = vunpack.c.l.b16 %v89
  %v276 = vunpack.c.l.b16 %v90
  %v277 = vunpack.c.h.b16 %v90
  %v278 = vunpack.c.l.b16 %v91
  %v279 = vunpack.c.l.b16 %v92
  %v280 = vunpack.c.h.b16 %v92
  %v281 = vunpack.c.l.b16 %v93
  %v282 = vpack.c.b16 %v237, %v234
  %v283 = vpack.c.b16 %v238, %v235
  %v284 = vpack.c.b16 %v239, %v236
  %v285 = vpack.c.b16 %v243, %v240
  %v286 = vpack.c.b16 %v244, %v241
  %v287 = vpack.c.b16 %v245, %v242
  %v288 = vpack.c.b16 %v249, %v246
  %v289 = vpack.c.b16 %v250, %v247
  %v290 = vpack.c.b16 %v251, %v248
  %v291 = vpack.c.b16 %v255, %v252
  %v292 = vpack.c.b16 %v256, %v253
  %v293 = vpack.c.b16 %v257, %v254
  %v294 = vpack.c.b16 %v261, %v258
  %v295 = vpack.c.b16 %v262, %v259
  %v296 = vpack.c.b16 %v263, %v260
  %v297 = vpack.c.b16 %v267, %v264
  %v298 = vpack.c.b16 %v268, %v265
  %v299 = vpack.c.b16 %v269, %v266
  %v300 = vpack.c.b16 %v273, %v270
  %v301 = vpack.c.b16 %v274, %v271
  %v302 = vpack.c.b16 %v275, %v272
  %v303 = vpack.c.b16 %v279, %v276
  %v304 = vpack.c.b16 %v280, %v277
  %v305 = vpack.c.b16 %v281, %v278
  %330 = vmatprep.subr.bf16.mxu0 %v283
  %331 = vmatpush1.bf16.msra.mxu0 %v282
  %332 = vmatprep.subr.bf16.mxu0 %v286
  %333 = vmatpush1.bf16.msra.mxu0 %v285
  %334 = vmatprep.subr.bf16.mxu0 %v289
  %335 = vmatpush1.bf16.msra.mxu0 %v288
  %336 = vmatprep.subr.bf16.mxu0 %v292
  %337 = vmatpush1.bf16.msra.mxu0 %v291
  %338 = vmatprep.subr.bf16.mxu0 %v295
  %339 = vmatpush1.bf16.msra.mxu0 %v294
  %340 = vmatprep.subr.bf16.mxu0 %v298
  %341 = vmatpush1.bf16.msra.mxu0 %v297
  %342 = vmatprep.subr.bf16.mxu0 %v301
  %343 = vmatpush1.bf16.msra.mxu0 %v300
  %344 = vmatprep.subr.bf16.mxu0 %v304
  %345 = vmatpush1.bf16.msra.mxu0 %v303
  %346 = vmatprep.subr.bf16.mxu0 0
  %347 = vmatpush1.bf16.msra.mxu0 0
  %348 = vmatprep.subr.bf16.mxu0 0
  %349 = vmatpush1.bf16.msra.mxu0 0
  %350 = vmatprep.subr.bf16.mxu0 0
  %351 = vmatpush1.bf16.msra.mxu0 0
  %352 = vmatprep.subr.bf16.mxu0 0
  %353 = vmatpush1.bf16.msra.mxu0 0
  %354 = vmatprep.subr.bf16.mxu0 0
  %355 = vmatpush1.bf16.msra.mxu0 0
  %356 = vmatprep.subr.bf16.mxu0 0
  %357 = vmatpush1.bf16.msra.mxu0 0
  %358 = vmatprep.subr.bf16.mxu0 0
  %359 = vmatpush1.bf16.msra.mxu0 0
  %360 = vmatprep.subr.bf16.mxu0 0
  %361 = vmatpush1.bf16.msra.mxu0 0
  %362 = vmatprep.mubr.bf16.mxu0 0
  %363 = vmatmul.mubr.bf16.gmra.mrb[0].mxu0 %v185
  %v364 = vpop.f32.mrb[0].mxu0
  %v365 = vadd.f32 %v190, %v364
  %v366 = vpop.f32.mrb[0].mxu0
  %v367 = vadd.f32 %v194, %v366
  %v368 = vpop.f32.mrb[0].mxu0
  %v369 = vpop.f32.mrb[0].mxu0
  %370 = vdwg.mxu0
  %371 = vmatprep.subr.bf16.mxu0 0
  %372 = vmatpush1.bf16.msra.mxu0 %v284
  %373 = vmatprep.subr.bf16.mxu0 0
  %374 = vmatpush1.bf16.msra.mxu0 %v287
  %375 = vmatprep.subr.bf16.mxu0 0
  %376 = vmatpush1.bf16.msra.mxu0 %v290
  %377 = vmatprep.subr.bf16.mxu0 0
  %378 = vmatpush1.bf16.msra.mxu0 %v293
  %379 = vmatprep.subr.bf16.mxu0 0
  %380 = vmatpush1.bf16.msra.mxu0 %v296
  %381 = vmatprep.subr.bf16.mxu0 0
  %382 = vmatpush1.bf16.msra.mxu0 %v299
  %383 = vmatprep.subr.bf16.mxu0 0
  %384 = vmatpush1.bf16.msra.mxu0 %v302
  %385 = vmatprep.subr.bf16.mxu0 0
  %386 = vmatpush1.bf16.msra.mxu0 %v305
  %387 = vmatprep.subr.bf16.mxu0 0
  %388 = vmatpush1.bf16.msra.mxu0 0
  %389 = vmatprep.subr.bf16.mxu0 0
  %390 = vmatpush1.bf16.msra.mxu0 0
  %391 = vmatprep.subr.bf16.mxu0 0
  %392 = vmatpush1.bf16.msra.mxu0 0
  %393 = vmatprep.subr.bf16.mxu0 0
  %394 = vmatpush1.bf16.msra.mxu0 0
  %395 = vmatprep.subr.bf16.mxu0 0
  %396 = vmatpush1.bf16.msra.mxu0 0
  %397 = vmatprep.subr.bf16.mxu0 0
  %398 = vmatpush1.bf16.msra.mxu0 0
  %399 = vmatprep.subr.bf16.mxu0 0
  %400 = vmatpush1.bf16.msra.mxu0 0
  %401 = vmatprep.subr.bf16.mxu0 0
  %402 = vmatpush1.bf16.msra.mxu0 0
  %403 = vmatprep.mubr.bf16.mxu0 0
  %404 = vmatmul.mubr.bf16.gmra.mrb[0].mxu0 %v185
  %v405 = vpop.f32.mrb[0].mxu0
  %v406 = vadd.f32 %v198, %v405
  %v407 = vpop.f32.mrb[0].mxu0
  %v408 = vpop.f32.mrb[0].mxu0
  %v409 = vpop.f32.mrb[0].mxu0
  %410 = vdwg.mxu0
  %v411 = vadd.f32 %v182, %v365
  %v412 = vadd.f32 %v183, %v367
  %v413 = vsub.f32 0.0, %v411
  %v414 = vsub.f32 0.0, %v412
  %v415 = vmul.f32 %v413, 1.442695
  %v416 = vpow.pop %v415
  %v417 = vmul.f32 %v414, 1.442695
  %v418 = vpow.pop %v417
  %v419 = vadd.f32 %v416, 1.0
  %v420 = vadd.f32 %v418, 1.0
  %v421 = vrcp.pop %v419
  %v422 = vmul.f32 1.0, %v421
  %v423 = vrcp.pop %v420
  %v424 = vmul.f32 1.0, %v423
  %v425 = vmul.f32 %v422, %v406
  %v426 = vadd.f32 %v184, %v425
  %v427 = vtanh.pop %v426
  %v428 = vsub.f32 1.0, %v424
  %v429 = vmul.f32 %v428, %v427
  %v430 = vmul.f32 %v424, %v138
  %v431 = vadd.f32 %v429, %v430
  %v432 = vpack.c.bf16 %v431, %v431
  %vm433 = vcmask 516096
  %434 = vst.msk [vmem:[%s4] sm:$0x1] %vm433, %v432
  %v437 = vunpack.c.l.s4 1966171168
  %v438 = vunpack.c.0.s8 %v437
  %v439 = vlaneseq
  %v440 = vshrl.u32 %v439, 7
  %v441 = vsub.s32 %v438, %v440
  %v442 = vrot.slane %v432, %v441
  %v444 = vunpack.c.l.s4 1966171168
  %v445 = vunpack.c.0.s8 %v444
  %v446 = vlaneseq
  %v447 = vshrl.u32 %v446, 7
  %v448 = vsub.s32 %v445, %v447
  %v449 = vrot.slane %v442, %v448
  %450 = vrot.lane.b32.xlu0 %v449, 64
  %v451 = vpop.permute.xlu0 %450
  %s453 = scalar_lea.vmem %s53, 15
  %454 = vst.msk [vmem:[%s453] sm:$0x1] %vm433, %v451
  %s455 = scalar_lea.vmem %s0, 6
  %v456 = vld [vmem:[%s455] sm:$0x3f]
  %s457 = scalar_lea.vmem %s46, 84
  %v458 = vld [vmem:[%s457] sm:$0x3f]
  %v460 = vcombine.high %v456, %v456
  %v462 = vunpack.c.l.s4 1983009808
  %v463 = vunpack.c.0.s8 %v462
  %v464 = vlaneseq
  %v465 = vshrl.u32 %v464, 7
  %v466 = vsub.s32 %v463, %v465
  %v467 = vrot.slane %v456, %v466
  %v469 = vunpack.c.l.s4 1983009808
  %v470 = vunpack.c.0.s8 %v469
  %v471 = vlaneseq
  %v472 = vshrl.u32 %v471, 7
  %v473 = vsub.s32 %v470, %v472
  %v474 = vrot.slane %v460, %v473
  %v475 = vcombine.high %v467, %v467
  %v480 = vcombine.high %v458, %v458
  %v482 = vunpack.c.l.s4 1983009808
  %v483 = vunpack.c.0.s8 %v482
  %v484 = vlaneseq
  %v485 = vshrl.u32 %v484, 7
  %v486 = vsub.s32 %v483, %v485
  %v487 = vrot.slane %v458, %v486
  %v489 = vunpack.c.l.s4 1983009808
  %v490 = vunpack.c.0.s8 %v489
  %v491 = vlaneseq
  %v492 = vshrl.u32 %v491, 7
  %v493 = vsub.s32 %v490, %v492
  %v494 = vrot.slane %v480, %v493
  %v495 = vcombine.high %v487, %v487
  %v499 = vsel %vm135, %v467, %v487
  %v500 = vsel %vm136, %v475, %v495
  %v501 = vsel %vm137, %v474, %v494
  %502 = vmatprep.subr.bf16.mxu0 %v283
  %503 = vmatpush1.bf16.msra.mxu0 %v282
  %504 = vmatprep.subr.bf16.mxu0 %v286
  %505 = vmatpush1.bf16.msra.mxu0 %v285
  %506 = vmatprep.subr.bf16.mxu0 %v289
  %507 = vmatpush1.bf16.msra.mxu0 %v288
  %508 = vmatprep.subr.bf16.mxu0 %v292
  %509 = vmatpush1.bf16.msra.mxu0 %v291
  %510 = vmatprep.subr.bf16.mxu0 %v295
  %511 = vmatpush1.bf16.msra.mxu0 %v294
  %512 = vmatprep.subr.bf16.mxu0 %v298
  %513 = vmatpush1.bf16.msra.mxu0 %v297
  %514 = vmatprep.subr.bf16.mxu0 %v301
  %515 = vmatpush1.bf16.msra.mxu0 %v300
  %516 = vmatprep.subr.bf16.mxu0 %v304
  %517 = vmatpush1.bf16.msra.mxu0 %v303
  %518 = vmatprep.subr.bf16.mxu0 0
  %519 = vmatpush1.bf16.msra.mxu0 0
  %520 = vmatprep.subr.bf16.mxu0 0
  %521 = vmatpush1.bf16.msra.mxu0 0
  %522 = vmatprep.subr.bf16.mxu0 0
  %523 = vmatpush1.bf16.msra.mxu0 0
  %524 = vmatprep.subr.bf16.mxu0 0
  %525 = vmatpush1.bf16.msra.mxu0 0
  %526 = vmatprep.subr.bf16.mxu0 0
  %527 = vmatpush1.bf16.msra.mxu0 0
  %528 = vmatprep.subr.bf16.mxu0 0
  %529 = vmatpush1.bf16.msra.mxu0 0
  %530 = vmatprep.subr.bf16.mxu0 0
  %531 = vmatpush1.bf16.msra.mxu0 0
  %532 = vmatprep.subr.bf16.mxu0 0
  %533 = vmatpush1.bf16.msra.mxu0 0
  %534 = vmatprep.mubr.bf16.mxu0 0
  %535 = vmatmul.mubr.bf16.gmra.mrb[0].mxu0 %v432
  %v536 = vpop.f32.mrb[0].mxu0
  %v537 = vadd.f32 %v190, %v536
  %v538 = vpop.f32.mrb[0].mxu0
  %v539 = vadd.f32 %v194, %v538
  %v540 = vpop.f32.mrb[0].mxu0
  %v541 = vpop.f32.mrb[0].mxu0
  %542 = vdwg.mxu0
  %543 = vmatprep.subr.bf16.mxu0 0
  %544 = vmatpush1.bf16.msra.mxu0 %v284
  %545 = vmatprep.subr.bf16.mxu0 0
  %546 = vmatpush1.bf16.msra.mxu0 %v287
  %547 = vmatprep.subr.bf16.mxu0 0
  %548 = vmatpush1.bf16.msra.mxu0 %v290
  %549 = vmatprep.subr.bf16.mxu0 0
  %550 = vmatpush1.bf16.msra.mxu0 %v293
  %551 = vmatprep.subr.bf16.mxu0 0
  %552 = vmatpush1.bf16.msra.mxu0 %v296
  %553 = vmatprep.subr.bf16.mxu0 0
  %554 = vmatpush1.bf16.msra.mxu0 %v299
  %555 = vmatprep.subr.bf16.mxu0 0
  %556 = vmatpush1.bf16.msra.mxu0 %v302
  %557 = vmatprep.subr.bf16.mxu0 0
  %558 = vmatpush1.bf16.msra.mxu0 %v305
  %559 = vmatprep.subr.bf16.mxu0 0
  %560 = vmatpush1.bf16.msra.mxu0 0
  %561 = vmatprep.subr.bf16.mxu0 0
  %562 = vmatpush1.bf16.msra.mxu0 0
  %563 = vmatprep.subr.bf16.mxu0 0
  %564 = vmatpush1.bf16.msra.mxu0 0
  %565 = vmatprep.subr.bf16.mxu0 0
  %566 = vmatpush1.bf16.msra.mxu0 0
  %567 = vmatprep.subr.bf16.mxu0 0
  %568 = vmatpush1.bf16.msra.mxu0 0
  %569 = vmatprep.subr.bf16.mxu0 0
  %570 = vmatpush1.bf16.msra.mxu0 0
  %571 = vmatprep.subr.bf16.mxu0 0
  %572 = vmatpush1.bf16.msra.mxu0 0
  %573 = vmatprep.subr.bf16.mxu0 0
  %574 = vmatpush1.bf16.msra.mxu0 0
  %575 = vmatprep.mubr.bf16.mxu0 0
  %576 = vmatmul.mubr.bf16.gmra.mrb[0].mxu0 %v432
  %v577 = vpop.f32.mrb[0].mxu0
  %v578 = vadd.f32 %v198, %v577
  %v579 = vpop.f32.mrb[0].mxu0
  %v580 = vpop.f32.mrb[0].mxu0
  %v581 = vpop.f32.mrb[0].mxu0
  %582 = vdwg.mxu0
  %v583 = vadd.f32 %v499, %v537
  %v584 = vadd.f32 %v500, %v539
  %v585 = vsub.f32 0.0, %v583
  %v586 = vsub.f32 0.0, %v584
  %v587 = vmul.f32 %v585, 1.442695
  %v588 = vpow.pop %v587
  %v589 = vmul.f32 %v586, 1.442695
  %v590 = vpow.pop %v589
  %v591 = vadd.f32 %v588, 1.0
  %v592 = vadd.f32 %v590, 1.0
  %v593 = vrcp.pop %v591
  %v594 = vmul.f32 1.0, %v593
  %v595 = vrcp.pop %v592
  %v596 = vmul.f32 1.0, %v595
  %v597 = vmul.f32 %v594, %v578
  %v598 = vadd.f32 %v501, %v597
  %v599 = vtanh.pop %v598
  %v600 = vsub.f32 1.0, %v596
  %v601 = vmul.f32 %v600, %v599
  %v602 = vmul.f32 %v596, %v431
  %v603 = vadd.f32 %v601, %v602
  %v604 = vpack.c.bf16 %v603, %v603
  %s605 = scalar_lea.vmem %s4, 1
  %606 = vst.msk [vmem:[%s605] sm:$0x1] %vm433, %v604
  %v609 = vunpack.c.l.s4 1966171168
  %v610 = vunpack.c.0.s8 %v609
  %v611 = vlaneseq
  %v612 = vshrl.u32 %v611, 7
  %v613 = vsub.s32 %v610, %v612
  %v614 = vrot.slane %v604, %v613
  %v616 = vunpack.c.l.s4 1966171168
  %v617 = vunpack.c.0.s8 %v616
  %v618 = vlaneseq
  %v619 = vshrl.u32 %v618, 7
  %v620 = vsub.s32 %v617, %v619
  %v621 = vrot.slane %v614, %v620
  %622 = vrot.lane.b32.xlu0 %v621, 64
  %v623 = vpop.permute.xlu0 %622
  %s625 = scalar_lea.vmem %s53, 14
  %626 = vst.msk [vmem:[%s625] sm:$0x1] %vm433, %v623
  %s627 = scalar_lea.vmem %s0, 12
  %v628 = vld [vmem:[%s627] sm:$0x3f]
  %s629 = scalar_lea.vmem %s46, 78
  %v630 = vld [vmem:[%s629] sm:$0x3f]
  %v632 = vcombine.high %v628, %v628
  %v634 = vunpack.c.l.s4 1983009808
  %v635 = vunpack.c.0.s8 %v634
  %v636 = vlaneseq
  %v637 = vshrl.u32 %v636, 7
  %v638 = vsub.s32 %v635, %v637
  %v639 = vrot.slane %v628, %v638
  %v641 = vunpack.c.l.s4 1983009808
  %v642 = vunpack.c.0.s8 %v641
  %v643 = vlaneseq
  %v644 = vshrl.u32 %v643, 7
  %v645 = vsub.s32 %v642, %v644
  %v646 = vrot.slane %v632, %v645
  %v647 = vcombine.high %v639, %v639
  %v652 = vcombine.high %v630, %v630
  %v654 = vunpack.c.l.s4 1983009808
  %v655 = vunpack.c.0.s8 %v654
  %v656 = vlaneseq
  %v657 = vshrl.u32 %v656, 7
  %v658 = vsub.s32 %v655, %v657
  %v659 = vrot.slane %v630, %v658
  %v661 = vunpack.c.l.s4 1983009808
  %v662 = vunpack.c.0.s8 %v661
  %v663 = vlaneseq
  %v664 = vshrl.u32 %v663, 7
  %v665 = vsub.s32 %v662, %v664
  %v666 = vrot.slane %v652, %v665
  %v667 = vcombine.high %v659, %v659
  %v671 = vsel %vm135, %v639, %v659
  %v672 = vsel %vm136, %v647, %v667
  %v673 = vsel %vm137, %v646, %v666
  %674 = vmatprep.subr.bf16.mxu0 %v283
  %675 = vmatpush1.bf16.msra.mxu0 %v282
  %676 = vmatprep.subr.bf16.mxu0 %v286
  %677 = vmatpush1.bf16.msra.mxu0 %v285
  %678 = vmatprep.subr.bf16.mxu0 %v289
  %679 = vmatpush1.bf16.msra.mxu0 %v288
  %680 = vmatprep.subr.bf16.mxu0 %v292
  %681 = vmatpush1.bf16.msra.mxu0 %v291
  %682 = vmatprep.subr.bf16.mxu0 %v295
  %683 = vmatpush1.bf16.msra.mxu0 %v294
  %684 = vmatprep.subr.bf16.mxu0 %v298
  %685 = vmatpush1.bf16.msra.mxu0 %v297
  %686 = vmatprep.subr.bf16.mxu0 %v301
  %687 = vmatpush1.bf16.msra.mxu0 %v300
  %688 = vmatprep.subr.bf16.mxu0 %v304
  %689 = vmatpush1.bf16.msra.mxu0 %v303
  %690 = vmatprep.subr.bf16.mxu0 0
  %691 = vmatpush1.bf16.msra.mxu0 0
  %692 = vmatprep.subr.bf16.mxu0 0
  %693 = vmatpush1.bf16.msra.mxu0 0
  %694 = vmatprep.subr.bf16.mxu0 0
  %695 = vmatpush1.bf16.msra.mxu0 0
  %696 = vmatprep.subr.bf16.mxu0 0
  %697 = vmatpush1.bf16.msra.mxu0 0
  %698 = vmatprep.subr.bf16.mxu0 0
  %699 = vmatpush1.bf16.msra.mxu0 0
  %700 = vmatprep.subr.bf16.mxu0 0
  %701 = vmatpush1.bf16.msra.mxu0 0
  %702 = vmatprep.subr.bf16.mxu0 0
  %703 = vmatpush1.bf16.msra.mxu0 0
  %704 = vmatprep.subr.bf16.mxu0 0
  %705 = vmatpush1.bf16.msra.mxu0 0
  %706 = vmatprep.mubr.bf16.mxu0 0
  %707 = vmatmul.mubr.bf16.gmra.mrb[0].mxu0 %v604
  %v708 = vpop.f32.mrb[0].mxu0
  %v709 = vadd.f32 %v190, %v708
  %v710 = vpop.f32.mrb[0].mxu0
  %v711 = vadd.f32 %v194, %v710
  %v712 = vpop.f32.mrb[0].mxu0
  %v713 = vpop.f32.mrb[0].mxu0
  %714 = vdwg.mxu0
  %715 = vmatprep.subr.bf16.mxu0 0
  %716 = vmatpush1.bf16.msra.mxu0 %v284
  %717 = vmatprep.subr.bf16.mxu0 0
  %718 = vmatpush1.bf16.msra.mxu0 %v287
  %719 = vmatprep.subr.bf16.mxu0 0
  %720 = vmatpush1.bf16.msra.mxu0 %v290
  %721 = vmatprep.subr.bf16.mxu0 0
  %722 = vmatpush1.bf16.msra.mxu0 %v293
  %723 = vmatprep.subr.bf16.mxu0 0
  %724 = vmatpush1.bf16.msra.mxu0 %v296
  %725 = vmatprep.subr.bf16.mxu0 0
  %726 = vmatpush1.bf16.msra.mxu0 %v299
  %727 = vmatprep.subr.bf16.mxu0 0
  %728 = vmatpush1.bf16.msra.mxu0 %v302
  %729 = vmatprep.subr.bf16.mxu0 0
  %730 = vmatpush1.bf16.msra.mxu0 %v305
  %731 = vmatprep.subr.bf16.mxu0 0
  %732 = vmatpush1.bf16.msra.mxu0 0
  %733 = vmatprep.subr.bf16.mxu0 0
  %734 = vmatpush1.bf16.msra.mxu0 0
  %735 = vmatprep.subr.bf16.mxu0 0
  %736 = vmatpush1.bf16.msra.mxu0 0
  %737 = vmatprep.subr.bf16.mxu0 0
  %738 = vmatpush1.bf16.msra.mxu0 0
  %739 = vmatprep.subr.bf16.mxu0 0
  %740 = vmatpush1.bf16.msra.mxu0 0
  %741 = vmatprep.subr.bf16.mxu0 0
  %742 = vmatpush1.bf16.msra.mxu0 0
  %743 = vmatprep.subr.bf16.mxu0 0
  %744 = vmatpush1.bf16.msra.mxu0 0
  %745 = vmatprep.subr.bf16.mxu0 0
  %746 = vmatpush1.bf16.msra.mxu0 0
  %747 = vmatprep.mubr.bf16.mxu0 0
  %748 = vmatmul.mubr.bf16.gmra.mrb[0].mxu0 %v604
  %v749 = vpop.f32.mrb[0].mxu0
  %v750 = vadd.f32 %v198, %v749
  %v751 = vpop.f32.mrb[0].mxu0
  %v752 = vpop.f32.mrb[0].mxu0
  %v753 = vpop.f32.mrb[0].mxu0
  %754 = vdwg.mxu0
  %v755 = vadd.f32 %v671, %v709
  %v756 = vadd.f32 %v672, %v711
  %v757 = vsub.f32 0.0, %v755
  %v758 = vsub.f32 0.0, %v756
  %v759 = vmul.f32 %v757, 1.442695
  %v760 = vpow.pop %v759
  %v761 = vmul.f32 %v758, 1.442695
  %v762 = vpow.pop %v761
  %v763 = vadd.f32 %v760, 1.0
  %v764 = vadd.f32 %v762, 1.0
  %v765 = vrcp.pop %v763
  %v766 = vmul.f32 1.0, %v765
  %v767 = vrcp.pop %v764
  %v768 = vmul.f32 1.0, %v767
  %v769 = vmul.f32 %v766, %v750
  %v770 = vadd.f32 %v673, %v769
  %v771 = vtanh.pop %v770
  %v772 = vsub.f32 1.0, %v768
  %v773 = vmul.f32 %v772, %v771
  %v774 = vmul.f32 %v768, %v603
  %v775 = vadd.f32 %v773, %v774
  %v776 = vpack.c.bf16 %v775, %v775
  %s777 = scalar_lea.vmem %s4, 2
  %778 = vst.msk [vmem:[%s777] sm:$0x1] %vm433, %v776
  %v781 = vunpack.c.l.s4 1966171168
  %v782 = vunpack.c.0.s8 %v781
  %v783 = vlaneseq
  %v784 = vshrl.u32 %v783, 7
  %v785 = vsub.s32 %v782, %v784
  %v786 = vrot.slane %v776, %v785
  %v788 = vunpack.c.l.s4 1966171168
  %v789 = vunpack.c.0.s8 %v788
  %v790 = vlaneseq
  %v791 = vshrl.u32 %v790, 7
  %v792 = vsub.s32 %v789, %v791
  %v793 = vrot.slane %v786, %v792
  %794 = vrot.lane.b32.xlu0 %v793, 64
  %v795 = vpop.permute.xlu0 %794
  %s797 = scalar_lea.vmem %s53, 13
  %798 = vst.msk [vmem:[%s797] sm:$0x1] %vm433, %v795
  %s799 = scalar_lea.vmem %s0, 18
  %v800 = vld [vmem:[%s799] sm:$0x3f]
  %s801 = scalar_lea.vmem %s46, 72
  %v802 = vld [vmem:[%s801] sm:$0x3f]
  %v804 = vcombine.high %v800, %v800
  %v806 = vunpack.c.l.s4 1983009808
  %v807 = vunpack.c.0.s8 %v806
  %v808 = vlaneseq
  %v809 = vshrl.u32 %v808, 7
  %v810 = vsub.s32 %v807, %v809
  %v811 = vrot.slane %v800, %v810
  %v813 = vunpack.c.l.s4 1983009808
  %v814 = vunpack.c.0.s8 %v813
  %v815 = vlaneseq
  %v816 = vshrl.u32 %v815, 7
  %v817 = vsub.s32 %v814, %v816
  %v818 = vrot.slane %v804, %v817
  %v819 = vcombine.high %v811, %v811
  %v824 = vcombine.high %v802, %v802
  %v826 = vunpack.c.l.s4 1983009808
  %v827 = vunpack.c.0.s8 %v826
  %v828 = vlaneseq
  %v829 = vshrl.u32 %v828, 7
  %v830 = vsub.s32 %v827, %v829
  %v831 = vrot.slane %v802, %v830
  %v833 = vunpack.c.l.s4 1983009808
  %v834 = vunpack.c.0.s8 %v833
  %v835 = vlaneseq
  %v836 = vshrl.u32 %v835, 7
  %v837 = vsub.s32 %v834, %v836
  %v838 = vrot.slane %v824, %v837
  %v839 = vcombine.high %v831, %v831
  %v843 = vsel %vm135, %v811, %v831
  %v844 = vsel %vm136, %v819, %v839
  %v845 = vsel %vm137, %v818, %v838
  %846 = vmatprep.subr.bf16.mxu0 %v283
  %847 = vmatpush1.bf16.msra.mxu0 %v282
  %848 = vmatprep.subr.bf16.mxu0 %v286
  %849 = vmatpush1.bf16.msra.mxu0 %v285
  %850 = vmatprep.subr.bf16.mxu0 %v289
  %851 = vmatpush1.bf16.msra.mxu0 %v288
  %852 = vmatprep.subr.bf16.mxu0 %v292
  %853 = vmatpush1.bf16.msra.mxu0 %v291
  %854 = vmatprep.subr.bf16.mxu0 %v295
  %855 = vmatpush1.bf16.msra.mxu0 %v294
  %856 = vmatprep.subr.bf16.mxu0 %v298
  %857 = vmatpush1.bf16.msra.mxu0 %v297
  %858 = vmatprep.subr.bf16.mxu0 %v301
  %859 = vmatpush1.bf16.msra.mxu0 %v300
  %860 = vmatprep.subr.bf16.mxu0 %v304
  %861 = vmatpush1.bf16.msra.mxu0 %v303
  %862 = vmatprep.subr.bf16.mxu0 0
  %863 = vmatpush1.bf16.msra.mxu0 0
  %864 = vmatprep.subr.bf16.mxu0 0
  %865 = vmatpush1.bf16.msra.mxu0 0
  %866 = vmatprep.subr.bf16.mxu0 0
  %867 = vmatpush1.bf16.msra.mxu0 0
  %868 = vmatprep.subr.bf16.mxu0 0
  %869 = vmatpush1.bf16.msra.mxu0 0
  %870 = vmatprep.subr.bf16.mxu0 0
  %871 = vmatpush1.bf16.msra.mxu0 0
  %872 = vmatprep.subr.bf16.mxu0 0
  %873 = vmatpush1.bf16.msra.mxu0 0
  %874 = vmatprep.subr.bf16.mxu0 0
  %875 = vmatpush1.bf16.msra.mxu0 0
  %876 = vmatprep.subr.bf16.mxu0 0
  %877 = vmatpush1.bf16.msra.mxu0 0
  %878 = vmatprep.mubr.bf16.mxu0 0
  %879 = vmatmul.mubr.bf16.gmra.mrb[0].mxu0 %v776
  %v880 = vpop.f32.mrb[0].mxu0
  %v881 = vadd.f32 %v190, %v880
  %v882 = vpop.f32.mrb[0].mxu0
  %v883 = vadd.f32 %v194, %v882
  %v884 = vpop.f32.mrb[0].mxu0
  %v885 = vpop.f32.mrb[0].mxu0
  %886 = vdwg.mxu0
  %887 = vmatprep.subr.bf16.mxu0 0
  %888 = vmatpush1.bf16.msra.mxu0 %v284
  %889 = vmatprep.subr.bf16.mxu0 0
  %890 = vmatpush1.bf16.msra.mxu0 %v287
  %891 = vmatprep.subr.bf16.mxu0 0
  %892 = vmatpush1.bf16.msra.mxu0 %v290
  %893 = vmatprep.subr.bf16.mxu0 0
  %894 = vmatpush1.bf16.msra.mxu0 %v293
  %895 = vmatprep.subr.bf16.mxu0 0
  %896 = vmatpush1.bf16.msra.mxu0 %v296
  %897 = vmatprep.subr.bf16.mxu0 0
  %898 = vmatpush1.bf16.msra.mxu0 %v299
  %899 = vmatprep.subr.bf16.mxu0 0
  %900 = vmatpush1.bf16.msra.mxu0 %v302
  %901 = vmatprep.subr.bf16.mxu0 0
  %902 = vmatpush1.bf16.msra.mxu0 %v305
  %903 = vmatprep.subr.bf16.mxu0 0
  %904 = vmatpush1.bf16.msra.mxu0 0
  %905 = vmatprep.subr.bf16.mxu0 0
  %906 = vmatpush1.bf16.msra.mxu0 0
  %907 = vmatprep.subr.bf16.mxu0 0
  %908 = vmatpush1.bf16.msra.mxu0 0
  %909 = vmatprep.subr.bf16.mxu0 0
  %910 = vmatpush1.bf16.msra.mxu0 0
  %911 = vmatprep.subr.bf16.mxu0 0
  %912 = vmatpush1.bf16.msra.mxu0 0
  %913 = vmatprep.subr.bf16.mxu0 0
  %914 = vmatpush1.bf16.msra.mxu0 0
  %915 = vmatprep.subr.bf16.mxu0 0
  %916 = vmatpush1.bf16.msra.mxu0 0
  %917 = vmatprep.subr.bf16.mxu0 0
  %918 = vmatpush1.bf16.msra.mxu0 0
  %919 = vmatprep.mubr.bf16.mxu0 0
  %920 = vmatmul.mubr.bf16.gmra.mrb[0].mxu0 %v776
  %v921 = vpop.f32.mrb[0].mxu0
  %v922 = vadd.f32 %v198, %v921
  %v923 = vpop.f32.mrb[0].mxu0
  %v924 = vpop.f32.mrb[0].mxu0
  %v925 = vpop.f32.mrb[0].mxu0
  %926 = vdwg.mxu0
  %v927 = vadd.f32 %v843, %v881
  %v928 = vadd.f32 %v844, %v883
  %v929 = vsub.f32 0.0, %v927
  %v930 = vsub.f32 0.0, %v928
  %v931 = vmul.f32 %v929, 1.442695
  %v932 = vpow.pop %v931
  %v933 = vmul.f32 %v930, 1.442695
  %v934 = vpow.pop %v933
  %v935 = vadd.f32 %v932, 1.0
  %v936 = vadd.f32 %v934, 1.0
  %v937 = vrcp.pop %v935
  %v938 = vmul.f32 1.0, %v937
  %v939 = vrcp.pop %v936
  %v940 = vmul.f32 1.0, %v939
  %v941 = vmul.f32 %v938, %v922
  %v942 = vadd.f32 %v845, %v941
  %v943 = vtanh.pop %v942
  %v944 = vsub.f32 1.0, %v940
  %v945 = vmul.f32 %v944, %v943
  %v946 = vmul.f32 %v940, %v775
  %v947 = vadd.f32 %v945, %v946
  %v948 = vpack.c.bf16 %v947, %v947
  %s949 = scalar_lea.vmem %s4, 3
  %950 = vst.msk [vmem:[%s949] sm:$0x1] %vm433, %v948
  %v953 = vunpack.c.l.s4 1966171168
  %v954 = vunpack.c.0.s8 %v953
  %v955 = vlaneseq
  %v956 = vshrl.u32 %v955, 7
  %v957 = vsub.s32 %v954, %v956
  %v958 = vrot.slane %v948, %v957
  %v960 = vunpack.c.l.s4 1966171168
  %v961 = vunpack.c.0.s8 %v960
  %v962 = vlaneseq
  %v963 = vshrl.u32 %v962, 7
  %v964 = vsub.s32 %v961, %v963
  %v965 = vrot.slane %v958, %v964
  %966 = vrot.lane.b32.xlu0 %v965, 64
  %v967 = vpop.permute.xlu0 %966
  %s969 = scalar_lea.vmem %s53, 12
  %970 = vst.msk [vmem:[%s969] sm:$0x1] %vm433, %v967
  %s971 = scalar_lea.vmem %s0, 24
  %v972 = vld [vmem:[%s971] sm:$0x3f]
  %s973 = scalar_lea.vmem %s46, 66
  %v974 = vld [vmem:[%s973] sm:$0x3f]
  %v976 = vcombine.high %v972, %v972
  %v978 = vunpack.c.l.s4 1983009808
  %v979 = vunpack.c.0.s8 %v978
  %v980 = vlaneseq
  %v981 = vshrl.u32 %v980, 7
  %v982 = vsub.s32 %v979, %v981
  %v983 = vrot.slane %v972, %v982
  %v985 = vunpack.c.l.s4 1983009808
  %v986 = vunpack.c.0.s8 %v985
  %v987 = vlaneseq
  %v988 = vshrl.u32 %v987, 7
  %v989 = vsub.s32 %v986, %v988
  %v990 = vrot.slane %v976, %v989
  %v991 = vcombine.high %v983, %v983
  %v996 = vcombine.high %v974, %v974
  %v998 = vunpack.c.l.s4 1983009808
  %v999 = vunpack.c.0.s8 %v998
  %v1000 = vlaneseq
  %v1001 = vshrl.u32 %v1000, 7
  %v1002 = vsub.s32 %v999, %v1001
  %v1003 = vrot.slane %v974, %v1002
  %v1005 = vunpack.c.l.s4 1983009808
  %v1006 = vunpack.c.0.s8 %v1005
  %v1007 = vlaneseq
  %v1008 = vshrl.u32 %v1007, 7
  %v1009 = vsub.s32 %v1006, %v1008
  %v1010 = vrot.slane %v996, %v1009
  %v1011 = vcombine.high %v1003, %v1003
  %v1015 = vsel %vm135, %v983, %v1003
  %v1016 = vsel %vm136, %v991, %v1011
  %v1017 = vsel %vm137, %v990, %v1010
  %1018 = vmatprep.subr.bf16.mxu0 %v283
  %1019 = vmatpush1.bf16.msra.mxu0 %v282
  %1020 = vmatprep.subr.bf16.mxu0 %v286
  %1021 = vmatpush1.bf16.msra.mxu0 %v285
  %1022 = vmatprep.subr.bf16.mxu0 %v289
  %1023 = vmatpush1.bf16.msra.mxu0 %v288
  %1024 = vmatprep.subr.bf16.mxu0 %v292
  %1025 = vmatpush1.bf16.msra.mxu0 %v291
  %1026 = vmatprep.subr.bf16.mxu0 %v295
  %1027 = vmatpush1.bf16.msra.mxu0 %v294
  %1028 = vmatprep.subr.bf16.mxu0 %v298
  %1029 = vmatpush1.bf16.msra.mxu0 %v297
  %1030 = vmatprep.subr.bf16.mxu0 %v301
  %1031 = vmatpush1.bf16.msra.mxu0 %v300
  %1032 = vmatprep.subr.bf16.mxu0 %v304
  %1033 = vmatpush1.bf16.msra.mxu0 %v303
  %1034 = vmatprep.subr.bf16.mxu0 0
  %1035 = vmatpush1.bf16.msra.mxu0 0
  %1036 = vmatprep.subr.bf16.mxu0 0
  %1037 = vmatpush1.bf16.msra.mxu0 0
  %1038 = vmatprep.subr.bf16.mxu0 0
  %1039 = vmatpush1.bf16.msra.mxu0 0
  %1040 = vmatprep.subr.bf16.mxu0 0
  %1041 = vmatpush1.bf16.msra.mxu0 0
  %1042 = vmatprep.subr.bf16.mxu0 0
  %1043 = vmatpush1.bf16.msra.mxu0 0
  %1044 = vmatprep.subr.bf16.mxu0 0
  %1045 = vmatpush1.bf16.msra.mxu0 0
  %1046 = vmatprep.subr.bf16.mxu0 0
  %1047 = vmatpush1.bf16.msra.mxu0 0
  %1048 = vmatprep.subr.bf16.mxu0 0
  %1049 = vmatpush1.bf16.msra.mxu0 0
  %1050 = vmatprep.mubr.bf16.mxu0 0
  %1051 = vmatmul.mubr.bf16.gmra.mrb[0].mxu0 %v948
  %v1052 = vpop.f32.mrb[0].mxu0
  %v1053 = vadd.f32 %v190, %v1052
  %v1054 = vpop.f32.mrb[0].mxu0
  %v1055 = vadd.f32 %v194, %v1054
  %v1056 = vpop.f32.mrb[0].mxu0
  %v1057 = vpop.f32.mrb[0].mxu0
  %1058 = vdwg.mxu0
  %1059 = vmatprep.subr.bf16.mxu0 0
  %1060 = vmatpush1.bf16.msra.mxu0 %v284
  %1061 = vmatprep.subr.bf16.mxu0 0
  %1062 = vmatpush1.bf16.msra.mxu0 %v287
  %1063 = vmatprep.subr.bf16.mxu0 0
  %1064 = vmatpush1.bf16.msra.mxu0 %v290
  %1065 = vmatprep.subr.bf16.mxu0 0
  %1066 = vmatpush1.bf16.msra.mxu0 %v293
  %1067 = vmatprep.subr.bf16.mxu0 0
  %1068 = vmatpush1.bf16.msra.mxu0 %v296
  %1069 = vmatprep.subr.bf16.mxu0 0
  %1070 = vmatpush1.bf16.msra.mxu0 %v299
  %1071 = vmatprep.subr.bf16.mxu0 0
  %1072 = vmatpush1.bf16.msra.mxu0 %v302
  %1073 = vmatprep.subr.bf16.mxu0 0
  %1074 = vmatpush1.bf16.msra.mxu0 %v305
  %1075 = vmatprep.subr.bf16.mxu0 0
  %1076 = vmatpush1.bf16.msra.mxu0 0
  %1077 = vmatprep.subr.bf16.mxu0 0
  %1078 = vmatpush1.bf16.msra.mxu0 0
  %1079 = vmatprep.subr.bf16.mxu0 0
  %1080 = vmatpush1.bf16.msra.mxu0 0
  %1081 = vmatprep.subr.bf16.mxu0 0
  %1082 = vmatpush1.bf16.msra.mxu0 0
  %1083 = vmatprep.subr.bf16.mxu0 0
  %1084 = vmatpush1.bf16.msra.mxu0 0
  %1085 = vmatprep.subr.bf16.mxu0 0
  %1086 = vmatpush1.bf16.msra.mxu0 0
  %1087 = vmatprep.subr.bf16.mxu0 0
  %1088 = vmatpush1.bf16.msra.mxu0 0
  %1089 = vmatprep.subr.bf16.mxu0 0
  %1090 = vmatpush1.bf16.msra.mxu0 0
  %1091 = vmatprep.mubr.bf16.mxu0 0
  %1092 = vmatmul.mubr.bf16.gmra.mrb[0].mxu0 %v948
  %v1093 = vpop.f32.mrb[0].mxu0
  %v1094 = vadd.f32 %v198, %v1093
  %v1095 = vpop.f32.mrb[0].mxu0
  %v1096 = vpop.f32.mrb[0].mxu0
  %v1097 = vpop.f32.mrb[0].mxu0
  %1098 = vdwg.mxu0
  %v1099 = vadd.f32 %v1015, %v1053
  %v1100 = vadd.f32 %v1016, %v1055
  %v1101 = vsub.f32 0.0, %v1099
  %v1102 = vsub.f32 0.0, %v1100
  %v1103 = vmul.f32 %v1101, 1.442695
  %v1104 = vpow.pop %v1103
  %v1105 = vmul.f32 %v1102, 1.442695
  %v1106 = vpow.pop %v1105
  %v1107 = vadd.f32 %v1104, 1.0
  %v1108 = vadd.f32 %v1106, 1.0
  %v1109 = vrcp.pop %v1107
  %v1110 = vmul.f32 1.0, %v1109
  %v1111 = vrcp.pop %v1108
  %v1112 = vmul.f32 1.0, %v1111
  %v1113 = vmul.f32 %v1110, %v1094
  %v1114 = vadd.f32 %v1017, %v1113
  %v1115 = vtanh.pop %v1114
  %v1116 = vsub.f32 1.0, %v1112
  %v1117 = vmul.f32 %v1116, %v1115
  %v1118 = vmul.f32 %v1112, %v947
  %v1119 = vadd.f32 %v1117, %v1118
  %v1120 = vpack.c.bf16 %v1119, %v1119
  %s1121 = scalar_lea.vmem %s4, 4
  %1122 = vst.msk [vmem:[%s1121] sm:$0x1] %vm433, %v1120
  %v1125 = vunpack.c.l.s4 1966171168
  %v1126 = vunpack.c.0.s8 %v1125
  %v1127 = vlaneseq
  %v1128 = vshrl.u32 %v1127, 7
  %v1129 = vsub.s32 %v1126, %v1128
  %v1130 = vrot.slane %v1120, %v1129
  %v1132 = vunpack.c.l.s4 1966171168
  %v1133 = vunpack.c.0.s8 %v1132
  %v1134 = vlaneseq
  %v1135 = vshrl.u32 %v1134, 7
  %v1136 = vsub.s32 %v1133, %v1135
  %v1137 = vrot.slane %v1130, %v1136
  %1138 = vrot.lane.b32.xlu0 %v1137, 64
  %v1139 = vpop.permute.xlu0 %1138
  %s1141 = scalar_lea.vmem %s53, 11
  %1142 = vst.msk [vmem:[%s1141] sm:$0x1] %vm433, %v1139
  %s1143 = scalar_lea.vmem %s0, 30
  %v1144 = vld [vmem:[%s1143] sm:$0x3f]
  %s1145 = scalar_lea.vmem %s46, 60
  %v1146 = vld [vmem:[%s1145] sm:$0x3f]
  %v1148 = vcombine.high %v1144, %v1144
  %v1150 = vunpack.c.l.s4 1983009808
  %v1151 = vunpack.c.0.s8 %v1150
  %v1152 = vlaneseq
  %v1153 = vshrl.u32 %v1152, 7
  %v1154 = vsub.s32 %v1151, %v1153
  %v1155 = vrot.slane %v1144, %v1154
  %v1157 = vunpack.c.l.s4 1983009808
  %v1158 = vunpack.c.0.s8 %v1157
  %v1159 = vlaneseq
  %v1160 = vshrl.u32 %v1159, 7
  %v1161 = vsub.s32 %v1158, %v1160
  %v1162 = vrot.slane %v1148, %v1161
  %v1163 = vcombine.high %v1155, %v1155
  %v1168 = vcombine.high %v1146, %v1146
  %v1170 = vunpack.c.l.s4 1983009808
  %v1171 = vunpack.c.0.s8 %v1170
  %v1172 = vlaneseq
  %v1173 = vshrl.u32 %v1172, 7
  %v1174 = vsub.s32 %v1171, %v1173
  %v1175 = vrot.slane %v1146, %v1174
  %v1177 = vunpack.c.l.s4 1983009808
  %v1178 = vunpack.c.0.s8 %v1177
  %v1179 = vlaneseq
  %v1180 = vshrl.u32 %v1179, 7
  %v1181 = vsub.s32 %v1178, %v1180
  %v1182 = vrot.slane %v1168, %v1181
  %v1183 = vcombine.high %v1175, %v1175
  %v1187 = vsel %vm135, %v1155, %v1175
  %v1188 = vsel %vm136, %v1163, %v1183
  %v1189 = vsel %vm137, %v1162, %v1182
  %1190 = vmatprep.subr.bf16.mxu0 %v283
  %1191 = vmatpush1.bf16.msra.mxu0 %v282
  %1192 = vmatprep.subr.bf16.mxu0 %v286
  %1193 = vmatpush1.bf16.msra.mxu0 %v285
  %1194 = vmatprep.subr.bf16.mxu0 %v289
  %1195 = vmatpush1.bf16.msra.mxu0 %v288
  %1196 = vmatprep.subr.bf16.mxu0 %v292
  %1197 = vmatpush1.bf16.msra.mxu0 %v291
  %1198 = vmatprep.subr.bf16.mxu0 %v295
  %1199 = vmatpush1.bf16.msra.mxu0 %v294
  %1200 = vmatprep.subr.bf16.mxu0 %v298
  %1201 = vmatpush1.bf16.msra.mxu0 %v297
  %1202 = vmatprep.subr.bf16.mxu0 %v301
  %1203 = vmatpush1.bf16.msra.mxu0 %v300
  %1204 = vmatprep.subr.bf16.mxu0 %v304
  %1205 = vmatpush1.bf16.msra.mxu0 %v303
  %1206 = vmatprep.subr.bf16.mxu0 0
  %1207 = vmatpush1.bf16.msra.mxu0 0
  %1208 = vmatprep.subr.bf16.mxu0 0
  %1209 = vmatpush1.bf16.msra.mxu0 0
  %1210 = vmatprep.subr.bf16.mxu0 0
  %1211 = vmatpush1.bf16.msra.mxu0 0
  %1212 = vmatprep.subr.bf16.mxu0 0
  %1213 = vmatpush1.bf16.msra.mxu0 0
  %1214 = vmatprep.subr.bf16.mxu0 0
  %1215 = vmatpush1.bf16.msra.mxu0 0
  %1216 = vmatprep.subr.bf16.mxu0 0
  %1217 = vmatpush1.bf16.msra.mxu0 0
  %1218 = vmatprep.subr.bf16.mxu0 0
  %1219 = vmatpush1.bf16.msra.mxu0 0
  %1220 = vmatprep.subr.bf16.mxu0 0
  %1221 = vmatpush1.bf16.msra.mxu0 0
  %1222 = vmatprep.mubr.bf16.mxu0 0
  %1223 = vmatmul.mubr.bf16.gmra.mrb[0].mxu0 %v1120
  %v1224 = vpop.f32.mrb[0].mxu0
  %v1225 = vadd.f32 %v190, %v1224
  %v1226 = vpop.f32.mrb[0].mxu0
  %v1227 = vadd.f32 %v194, %v1226
  %v1228 = vpop.f32.mrb[0].mxu0
  %v1229 = vpop.f32.mrb[0].mxu0
  %1230 = vdwg.mxu0
  %1231 = vmatprep.subr.bf16.mxu0 0
  %1232 = vmatpush1.bf16.msra.mxu0 %v284
  %1233 = vmatprep.subr.bf16.mxu0 0
  %1234 = vmatpush1.bf16.msra.mxu0 %v287
  %1235 = vmatprep.subr.bf16.mxu0 0
  %1236 = vmatpush1.bf16.msra.mxu0 %v290
  %1237 = vmatprep.subr.bf16.mxu0 0
  %1238 = vmatpush1.bf16.msra.mxu0 %v293
  %1239 = vmatprep.subr.bf16.mxu0 0
  %1240 = vmatpush1.bf16.msra.mxu0 %v296
  %1241 = vmatprep.subr.bf16.mxu0 0
  %1242 = vmatpush1.bf16.msra.mxu0 %v299
  %1243 = vmatprep.subr.bf16.mxu0 0
  %1244 = vmatpush1.bf16.msra.mxu0 %v302
  %1245 = vmatprep.subr.bf16.mxu0 0
  %1246 = vmatpush1.bf16.msra.mxu0 %v305
  %1247 = vmatprep.subr.bf16.mxu0 0
  %1248 = vmatpush1.bf16.msra.mxu0 0
  %1249 = vmatprep.subr.bf16.mxu0 0
  %1250 = vmatpush1.bf16.msra.mxu0 0
  %1251 = vmatprep.subr.bf16.mxu0 0
  %1252 = vmatpush1.bf16.msra.mxu0 0
  %1253 = vmatprep.subr.bf16.mxu0 0
  %1254 = vmatpush1.bf16.msra.mxu0 0
  %1255 = vmatprep.subr.bf16.mxu0 0
  %1256 = vmatpush1.bf16.msra.mxu0 0
  %1257 = vmatprep.subr.bf16.mxu0 0
  %1258 = vmatpush1.bf16.msra.mxu0 0
  %1259 = vmatprep.subr.bf16.mxu0 0
  %1260 = vmatpush1.bf16.msra.mxu0 0
  %1261 = vmatprep.subr.bf16.mxu0 0
  %1262 = vmatpush1.bf16.msra.mxu0 0
  %1263 = vmatprep.mubr.bf16.mxu0 0
  %1264 = vmatmul.mubr.bf16.gmra.mrb[0].mxu0 %v1120
  %v1265 = vpop.f32.mrb[0].mxu0
  %v1266 = vadd.f32 %v198, %v1265
  %v1267 = vpop.f32.mrb[0].mxu0
  %v1268 = vpop.f32.mrb[0].mxu0
  %v1269 = vpop.f32.mrb[0].mxu0
  %1270 = vdwg.mxu0
  %v1271 = vadd.f32 %v1187, %v1225
  %v1272 = vadd.f32 %v1188, %v1227
  %v1273 = vsub.f32 0.0, %v1271
  %v1274 = vsub.f32 0.0, %v1272
  %v1275 = vmul.f32 %v1273, 1.442695
  %v1276 = vpow.pop %v1275
  %v1277 = vmul.f32 %v1274, 1.442695
  %v1278 = vpow.pop %v1277
  %v1279 = vadd.f32 %v1276, 1.0
  %v1280 = vadd.f32 %v1278, 1.0
  %v1281 = vrcp.pop %v1279
  %v1282 = vmul.f32 1.0, %v1281
  %v1283 = vrcp.pop %v1280
  %v1284 = vmul.f32 1.0, %v1283
  %v1285 = vmul.f32 %v1282, %v1266
  %v1286 = vadd.f32 %v1189, %v1285
  %v1287 = vtanh.pop %v1286
  %v1288 = vsub.f32 1.0, %v1284
  %v1289 = vmul.f32 %v1288, %v1287
  %v1290 = vmul.f32 %v1284, %v1119
  %v1291 = vadd.f32 %v1289, %v1290
  %v1292 = vpack.c.bf16 %v1291, %v1291
  %s1293 = scalar_lea.vmem %s4, 5
  %1294 = vst.msk [vmem:[%s1293] sm:$0x1] %vm433, %v1292
  %v1297 = vunpack.c.l.s4 1966171168
  %v1298 = vunpack.c.0.s8 %v1297
  %v1299 = vlaneseq
  %v1300 = vshrl.u32 %v1299, 7
  %v1301 = vsub.s32 %v1298, %v1300
  %v1302 = vrot.slane %v1292, %v1301
  %v1304 = vunpack.c.l.s4 1966171168
  %v1305 = vunpack.c.0.s8 %v1304
  %v1306 = vlaneseq
  %v1307 = vshrl.u32 %v1306, 7
  %v1308 = vsub.s32 %v1305, %v1307
  %v1309 = vrot.slane %v1302, %v1308
  %1310 = vrot.lane.b32.xlu0 %v1309, 64
  %v1311 = vpop.permute.xlu0 %1310
  %s1313 = scalar_lea.vmem %s53, 10
  %1314 = vst.msk [vmem:[%s1313] sm:$0x1] %vm433, %v1311
  %s1315 = scalar_lea.vmem %s0, 36
  %v1316 = vld [vmem:[%s1315] sm:$0x3f]
  %s1317 = scalar_lea.vmem %s46, 54
  %v1318 = vld [vmem:[%s1317] sm:$0x3f]
  %v1320 = vcombine.high %v1316, %v1316
  %v1322 = vunpack.c.l.s4 1983009808
  %v1323 = vunpack.c.0.s8 %v1322
  %v1324 = vlaneseq
  %v1325 = vshrl.u32 %v1324, 7
  %v1326 = vsub.s32 %v1323, %v1325
  %v1327 = vrot.slane %v1316, %v1326
  %v1329 = vunpack.c.l.s4 1983009808
  %v1330 = vunpack.c.0.s8 %v1329
  %v1331 = vlaneseq
  %v1332 = vshrl.u32 %v1331, 7
  %v1333 = vsub.s32 %v1330, %v1332
  %v1334 = vrot.slane %v1320, %v1333
  %v1335 = vcombine.high %v1327, %v1327
  %v1340 = vcombine.high %v1318, %v1318
  %v1342 = vunpack.c.l.s4 1983009808
  %v1343 = vunpack.c.0.s8 %v1342
  %v1344 = vlaneseq
  %v1345 = vshrl.u32 %v1344, 7
  %v1346 = vsub.s32 %v1343, %v1345
  %v1347 = vrot.slane %v1318, %v1346
  %v1349 = vunpack.c.l.s4 1983009808
  %v1350 = vunpack.c.0.s8 %v1349
  %v1351 = vlaneseq
  %v1352 = vshrl.u32 %v1351, 7
  %v1353 = vsub.s32 %v1350, %v1352
  %v1354 = vrot.slane %v1340, %v1353
  %v1355 = vcombine.high %v1347, %v1347
  %v1359 = vsel %vm135, %v1327, %v1347
  %v1360 = vsel %vm136, %v1335, %v1355
  %v1361 = vsel %vm137, %v1334, %v1354
  %1362 = vmatprep.subr.bf16.mxu0 %v283
  %1363 = vmatpush1.bf16.msra.mxu0 %v282
  %1364 = vmatprep.subr.bf16.mxu0 %v286
  %1365 = vmatpush1.bf16.msra.mxu0 %v285
  %1366 = vmatprep.subr.bf16.mxu0 %v289
  %1367 = vmatpush1.bf16.msra.mxu0 %v288
  %1368 = vmatprep.subr.bf16.mxu0 %v292
  %1369 = vmatpush1.bf16.msra.mxu0 %v291
  %1370 = vmatprep.subr.bf16.mxu0 %v295
  %1371 = vmatpush1.bf16.msra.mxu0 %v294
  %1372 = vmatprep.subr.bf16.mxu0 %v298
  %1373 = vmatpush1.bf16.msra.mxu0 %v297
  %1374 = vmatprep.subr.bf16.mxu0 %v301
  %1375 = vmatpush1.bf16.msra.mxu0 %v300
  %1376 = vmatprep.subr.bf16.mxu0 %v304
  %1377 = vmatpush1.bf16.msra.mxu0 %v303
  %1378 = vmatprep.subr.bf16.mxu0 0
  %1379 = vmatpush1.bf16.msra.mxu0 0
  %1380 = vmatprep.subr.bf16.mxu0 0
  %1381 = vmatpush1.bf16.msra.mxu0 0
  %1382 = vmatprep.subr.bf16.mxu0 0
  %1383 = vmatpush1.bf16.msra.mxu0 0
  %1384 = vmatprep.subr.bf16.mxu0 0
  %1385 = vmatpush1.bf16.msra.mxu0 0
  %1386 = vmatprep.subr.bf16.mxu0 0
  %1387 = vmatpush1.bf16.msra.mxu0 0
  %1388 = vmatprep.subr.bf16.mxu0 0
  %1389 = vmatpush1.bf16.msra.mxu0 0
  %1390 = vmatprep.subr.bf16.mxu0 0
  %1391 = vmatpush1.bf16.msra.mxu0 0
  %1392 = vmatprep.subr.bf16.mxu0 0
  %1393 = vmatpush1.bf16.msra.mxu0 0
  %1394 = vmatprep.mubr.bf16.mxu0 0
  %1395 = vmatmul.mubr.bf16.gmra.mrb[0].mxu0 %v1292
  %v1396 = vpop.f32.mrb[0].mxu0
  %v1397 = vadd.f32 %v190, %v1396
  %v1398 = vpop.f32.mrb[0].mxu0
  %v1399 = vadd.f32 %v194, %v1398
  %v1400 = vpop.f32.mrb[0].mxu0
  %v1401 = vpop.f32.mrb[0].mxu0
  %1402 = vdwg.mxu0
  %1403 = vmatprep.subr.bf16.mxu0 0
  %1404 = vmatpush1.bf16.msra.mxu0 %v284
  %1405 = vmatprep.subr.bf16.mxu0 0
  %1406 = vmatpush1.bf16.msra.mxu0 %v287
  %1407 = vmatprep.subr.bf16.mxu0 0
  %1408 = vmatpush1.bf16.msra.mxu0 %v290
  %1409 = vmatprep.subr.bf16.mxu0 0
  %1410 = vmatpush1.bf16.msra.mxu0 %v293
  %1411 = vmatprep.subr.bf16.mxu0 0
  %1412 = vmatpush1.bf16.msra.mxu0 %v296
  %1413 = vmatprep.subr.bf16.mxu0 0
  %1414 = vmatpush1.bf16.msra.mxu0 %v299
  %1415 = vmatprep.subr.bf16.mxu0 0
  %1416 = vmatpush1.bf16.msra.mxu0 %v302
  %1417 = vmatprep.subr.bf16.mxu0 0
  %1418 = vmatpush1.bf16.msra.mxu0 %v305
  %1419 = vmatprep.subr.bf16.mxu0 0
  %1420 = vmatpush1.bf16.msra.mxu0 0
  %1421 = vmatprep.subr.bf16.mxu0 0
  %1422 = vmatpush1.bf16.msra.mxu0 0
  %1423 = vmatprep.subr.bf16.mxu0 0
  %1424 = vmatpush1.bf16.msra.mxu0 0
  %1425 = vmatprep.subr.bf16.mxu0 0
  %1426 = vmatpush1.bf16.msra.mxu0 0
  %1427 = vmatprep.subr.bf16.mxu0 0
  %1428 = vmatpush1.bf16.msra.mxu0 0
  %1429 = vmatprep.subr.bf16.mxu0 0
  %1430 = vmatpush1.bf16.msra.mxu0 0
  %1431 = vmatprep.subr.bf16.mxu0 0
  %1432 = vmatpush1.bf16.msra.mxu0 0
  %1433 = vmatprep.subr.bf16.mxu0 0
  %1434 = vmatpush1.bf16.msra.mxu0 0
  %1435 = vmatprep.mubr.bf16.mxu0 0
  %1436 = vmatmul.mubr.bf16.gmra.mrb[0].mxu0 %v1292
  %v1437 = vpop.f32.mrb[0].mxu0
  %v1438 = vadd.f32 %v198, %v1437
  %v1439 = vpop.f32.mrb[0].mxu0
  %v1440 = vpop.f32.mrb[0].mxu0
  %v1441 = vpop.f32.mrb[0].mxu0
  %1442 = vdwg.mxu0
  %v1443 = vadd.f32 %v1359, %v1397
  %v1444 = vadd.f32 %v1360, %v1399
  %v1445 = vsub.f32 0.0, %v1443
  %v1446 = vsub.f32 0.0, %v1444
  %v1447 = vmul.f32 %v1445, 1.442695
  %v1448 = vpow.pop %v1447
  %v1449 = vmul.f32 %v1446, 1.442695
  %v1450 = vpow.pop %v1449
  %v1451 = vadd.f32 %v1448, 1.0
  %v1452 = vadd.f32 %v1450, 1.0
  %v1453 = vrcp.pop %v1451
  %v1454 = vmul.f32 1.0, %v1453
  %v1455 = vrcp.pop %v1452
  %v1456 = vmul.f32 1.0, %v1455
  %v1457 = vmul.f32 %v1454, %v1438
  %v1458 = vadd.f32 %v1361, %v1457
  %v1459 = vtanh.pop %v1458
  %v1460 = vsub.f32 1.0, %v1456
  %v1461 = vmul.f32 %v1460, %v1459
  %v1462 = vmul.f32 %v1456, %v1291
  %v1463 = vadd.f32 %v1461, %v1462
  %v1464 = vpack.c.bf16 %v1463, %v1463
  %s1465 = scalar_lea.vmem %s4, 6
  %1466 = vst.msk [vmem:[%s1465] sm:$0x1] %vm433, %v1464
  %v1469 = vunpack.c.l.s4 1966171168
  %v1470 = vunpack.c.0.s8 %v1469
  %v1471 = vlaneseq
  %v1472 = vshrl.u32 %v1471, 7
  %v1473 = vsub.s32 %v1470, %v1472
  %v1474 = vrot.slane %v1464, %v1473
  %v1476 = vunpack.c.l.s4 1966171168
  %v1477 = vunpack.c.0.s8 %v1476
  %v1478 = vlaneseq
  %v1479 = vshrl.u32 %v1478, 7
  %v1480 = vsub.s32 %v1477, %v1479
  %v1481 = vrot.slane %v1474, %v1480
  %1482 = vrot.lane.b32.xlu0 %v1481, 64
  %v1483 = vpop.permute.xlu0 %1482
  %s1485 = scalar_lea.vmem %s53, 9
  %1486 = vst.msk [vmem:[%s1485] sm:$0x1] %vm433, %v1483
  %s1487 = scalar_lea.vmem %s0, 42
  %v1488 = vld [vmem:[%s1487] sm:$0x3f]
  %s1489 = scalar_lea.vmem %s46, 48
  %v1490 = vld [vmem:[%s1489] sm:$0x3f]
  %v1492 = vcombine.high %v1488, %v1488
  %v1494 = vunpack.c.l.s4 1983009808
  %v1495 = vunpack.c.0.s8 %v1494
  %v1496 = vlaneseq
  %v1497 = vshrl.u32 %v1496, 7
  %v1498 = vsub.s32 %v1495, %v1497
  %v1499 = vrot.slane %v1488, %v1498
  %v1501 = vunpack.c.l.s4 1983009808
  %v1502 = vunpack.c.0.s8 %v1501
  %v1503 = vlaneseq
  %v1504 = vshrl.u32 %v1503, 7
  %v1505 = vsub.s32 %v1502, %v1504
  %v1506 = vrot.slane %v1492, %v1505
  %v1507 = vcombine.high %v1499, %v1499
  %v1512 = vcombine.high %v1490, %v1490
  %v1514 = vunpack.c.l.s4 1983009808
  %v1515 = vunpack.c.0.s8 %v1514
  %v1516 = vlaneseq
  %v1517 = vshrl.u32 %v1516, 7
  %v1518 = vsub.s32 %v1515, %v1517
  %v1519 = vrot.slane %v1490, %v1518
  %v1521 = vunpack.c.l.s4 1983009808
  %v1522 = vunpack.c.0.s8 %v1521
  %v1523 = vlaneseq
  %v1524 = vshrl.u32 %v1523, 7
  %v1525 = vsub.s32 %v1522, %v1524
  %v1526 = vrot.slane %v1512, %v1525
  %v1527 = vcombine.high %v1519, %v1519
  %v1531 = vsel %vm135, %v1499, %v1519
  %v1532 = vsel %vm136, %v1507, %v1527
  %v1533 = vsel %vm137, %v1506, %v1526
  %1534 = vmatprep.subr.bf16.mxu0 %v283
  %1535 = vmatpush1.bf16.msra.mxu0 %v282
  %1536 = vmatprep.subr.bf16.mxu0 %v286
  %1537 = vmatpush1.bf16.msra.mxu0 %v285
  %1538 = vmatprep.subr.bf16.mxu0 %v289
  %1539 = vmatpush1.bf16.msra.mxu0 %v288
  %1540 = vmatprep.subr.bf16.mxu0 %v292
  %1541 = vmatpush1.bf16.msra.mxu0 %v291
  %1542 = vmatprep.subr.bf16.mxu0 %v295
  %1543 = vmatpush1.bf16.msra.mxu0 %v294
  %1544 = vmatprep.subr.bf16.mxu0 %v298
  %1545 = vmatpush1.bf16.msra.mxu0 %v297
  %1546 = vmatprep.subr.bf16.mxu0 %v301
  %1547 = vmatpush1.bf16.msra.mxu0 %v300
  %1548 = vmatprep.subr.bf16.mxu0 %v304
  %1549 = vmatpush1.bf16.msra.mxu0 %v303
  %1550 = vmatprep.subr.bf16.mxu0 0
  %1551 = vmatpush1.bf16.msra.mxu0 0
  %1552 = vmatprep.subr.bf16.mxu0 0
  %1553 = vmatpush1.bf16.msra.mxu0 0
  %1554 = vmatprep.subr.bf16.mxu0 0
  %1555 = vmatpush1.bf16.msra.mxu0 0
  %1556 = vmatprep.subr.bf16.mxu0 0
  %1557 = vmatpush1.bf16.msra.mxu0 0
  %1558 = vmatprep.subr.bf16.mxu0 0
  %1559 = vmatpush1.bf16.msra.mxu0 0
  %1560 = vmatprep.subr.bf16.mxu0 0
  %1561 = vmatpush1.bf16.msra.mxu0 0
  %1562 = vmatprep.subr.bf16.mxu0 0
  %1563 = vmatpush1.bf16.msra.mxu0 0
  %1564 = vmatprep.subr.bf16.mxu0 0
  %1565 = vmatpush1.bf16.msra.mxu0 0
  %1566 = vmatprep.mubr.bf16.mxu0 0
  %1567 = vmatmul.mubr.bf16.gmra.mrb[0].mxu0 %v1464
  %v1568 = vpop.f32.mrb[0].mxu0
  %v1569 = vadd.f32 %v190, %v1568
  %v1570 = vpop.f32.mrb[0].mxu0
  %v1571 = vadd.f32 %v194, %v1570
  %v1572 = vpop.f32.mrb[0].mxu0
  %v1573 = vpop.f32.mrb[0].mxu0
  %1574 = vdwg.mxu0
  %1575 = vmatprep.subr.bf16.mxu0 0
  %1576 = vmatpush1.bf16.msra.mxu0 %v284
  %1577 = vmatprep.subr.bf16.mxu0 0
  %1578 = vmatpush1.bf16.msra.mxu0 %v287
  %1579 = vmatprep.subr.bf16.mxu0 0
  %1580 = vmatpush1.bf16.msra.mxu0 %v290
  %1581 = vmatprep.subr.bf16.mxu0 0
  %1582 = vmatpush1.bf16.msra.mxu0 %v293
  %1583 = vmatprep.subr.bf16.mxu0 0
  %1584 = vmatpush1.bf16.msra.mxu0 %v296
  %1585 = vmatprep.subr.bf16.mxu0 0
  %1586 = vmatpush1.bf16.msra.mxu0 %v299
  %1587 = vmatprep.subr.bf16.mxu0 0
  %1588 = vmatpush1.bf16.msra.mxu0 %v302
  %1589 = vmatprep.subr.bf16.mxu0 0
  %1590 = vmatpush1.bf16.msra.mxu0 %v305
  %1591 = vmatprep.subr.bf16.mxu0 0
  %1592 = vmatpush1.bf16.msra.mxu0 0
  %1593 = vmatprep.subr.bf16.mxu0 0
  %1594 = vmatpush1.bf16.msra.mxu0 0
  %1595 = vmatprep.subr.bf16.mxu0 0
  %1596 = vmatpush1.bf16.msra.mxu0 0
  %1597 = vmatprep.subr.bf16.mxu0 0
  %1598 = vmatpush1.bf16.msra.mxu0 0
  %1599 = vmatprep.subr.bf16.mxu0 0
  %1600 = vmatpush1.bf16.msra.mxu0 0
  %1601 = vmatprep.subr.bf16.mxu0 0
  %1602 = vmatpush1.bf16.msra.mxu0 0
  %1603 = vmatprep.subr.bf16.mxu0 0
  %1604 = vmatpush1.bf16.msra.mxu0 0
  %1605 = vmatprep.subr.bf16.mxu0 0
  %1606 = vmatpush1.bf16.msra.mxu0 0
  %1607 = vmatprep.mubr.bf16.mxu0 0
  %1608 = vmatmul.mubr.bf16.gmra.mrb[0].mxu0 %v1464
  %v1609 = vpop.f32.mrb[0].mxu0
  %v1610 = vadd.f32 %v198, %v1609
  %v1611 = vpop.f32.mrb[0].mxu0
  %v1612 = vpop.f32.mrb[0].mxu0
  %v1613 = vpop.f32.mrb[0].mxu0
  %1614 = vdwg.mxu0
  %v1615 = vadd.f32 %v1531, %v1569
  %v1616 = vadd.f32 %v1532, %v1571
  %v1617 = vsub.f32 0.0, %v1615
  %v1618 = vsub.f32 0.0, %v1616
  %v1619 = vmul.f32 %v1617, 1.442695
  %v1620 = vpow.pop %v1619
  %v1621 = vmul.f32 %v1618, 1.442695
  %v1622 = vpow.pop %v1621
  %v1623 = vadd.f32 %v1620, 1.0
  %v1624 = vadd.f32 %v1622, 1.0
  %v1625 = vrcp.pop %v1623
  %v1626 = vmul.f32 1.0, %v1625
  %v1627 = vrcp.pop %v1624
  %v1628 = vmul.f32 1.0, %v1627
  %v1629 = vmul.f32 %v1626, %v1610
  %v1630 = vadd.f32 %v1533, %v1629
  %v1631 = vtanh.pop %v1630
  %v1632 = vsub.f32 1.0, %v1628
  %v1633 = vmul.f32 %v1632, %v1631
  %v1634 = vmul.f32 %v1628, %v1463
  %v1635 = vadd.f32 %v1633, %v1634
  %v1636 = vpack.c.bf16 %v1635, %v1635
  %s1637 = scalar_lea.vmem %s4, 7
  %1638 = vst.msk [vmem:[%s1637] sm:$0x1] %vm433, %v1636
  %v1641 = vunpack.c.l.s4 1966171168
  %v1642 = vunpack.c.0.s8 %v1641
  %v1643 = vlaneseq
  %v1644 = vshrl.u32 %v1643, 7
  %v1645 = vsub.s32 %v1642, %v1644
  %v1646 = vrot.slane %v1636, %v1645
  %v1648 = vunpack.c.l.s4 1966171168
  %v1649 = vunpack.c.0.s8 %v1648
  %v1650 = vlaneseq
  %v1651 = vshrl.u32 %v1650, 7
  %v1652 = vsub.s32 %v1649, %v1651
  %v1653 = vrot.slane %v1646, %v1652
  %1654 = vrot.lane.b32.xlu0 %v1653, 64
  %v1655 = vpop.permute.xlu0 %1654
  %s1657 = scalar_lea.vmem %s53, 8
  %1658 = vst.msk [vmem:[%s1657] sm:$0x1] %vm433, %v1655
  %s1659 = scalar_lea.vmem %s0, 48
  %v1660 = vld [vmem:[%s1659] sm:$0x3f]
  %s1661 = scalar_lea.vmem %s46, 42
  %v1662 = vld [vmem:[%s1661] sm:$0x3f]
  %v1664 = vcombine.high %v1660, %v1660
  %v1666 = vunpack.c.l.s4 1983009808
  %v1667 = vunpack.c.0.s8 %v1666
  %v1668 = vlaneseq
  %v1669 = vshrl.u32 %v1668, 7
  %v1670 = vsub.s32 %v1667, %v1669
  %v1671 = vrot.slane %v1660, %v1670
  %v1673 = vunpack.c.l.s4 1983009808
  %v1674 = vunpack.c.0.s8 %v1673
  %v1675 = vlaneseq
  %v1676 = vshrl.u32 %v1675, 7
  %v1677 = vsub.s32 %v1674, %v1676
  %v1678 = vrot.slane %v1664, %v1677
  %v1679 = vcombine.high %v1671, %v1671
  %v1684 = vcombine.high %v1662, %v1662
  %v1686 = vunpack.c.l.s4 1983009808
  %v1687 = vunpack.c.0.s8 %v1686
  %v1688 = vlaneseq
  %v1689 = vshrl.u32 %v1688, 7
  %v1690 = vsub.s32 %v1687, %v1689
  %v1691 = vrot.slane %v1662, %v1690
  %v1693 = vunpack.c.l.s4 1983009808
  %v1694 = vunpack.c.0.s8 %v1693
  %v1695 = vlaneseq
  %v1696 = vshrl.u32 %v1695, 7
  %v1697 = vsub.s32 %v1694, %v1696
  %v1698 = vrot.slane %v1684, %v1697
  %v1699 = vcombine.high %v1691, %v1691
  %v1703 = vsel %vm135, %v1671, %v1691
  %v1704 = vsel %vm136, %v1679, %v1699
  %v1705 = vsel %vm137, %v1678, %v1698
  %1706 = vmatprep.subr.bf16.mxu0 %v283
  %1707 = vmatpush1.bf16.msra.mxu0 %v282
  %1708 = vmatprep.subr.bf16.mxu0 %v286
  %1709 = vmatpush1.bf16.msra.mxu0 %v285
  %1710 = vmatprep.subr.bf16.mxu0 %v289
  %1711 = vmatpush1.bf16.msra.mxu0 %v288
  %1712 = vmatprep.subr.bf16.mxu0 %v292
  %1713 = vmatpush1.bf16.msra.mxu0 %v291
  %1714 = vmatprep.subr.bf16.mxu0 %v295
  %1715 = vmatpush1.bf16.msra.mxu0 %v294
  %1716 = vmatprep.subr.bf16.mxu0 %v298
  %1717 = vmatpush1.bf16.msra.mxu0 %v297
  %1718 = vmatprep.subr.bf16.mxu0 %v301
  %1719 = vmatpush1.bf16.msra.mxu0 %v300
  %1720 = vmatprep.subr.bf16.mxu0 %v304
  %1721 = vmatpush1.bf16.msra.mxu0 %v303
  %1722 = vmatprep.subr.bf16.mxu0 0
  %1723 = vmatpush1.bf16.msra.mxu0 0
  %1724 = vmatprep.subr.bf16.mxu0 0
  %1725 = vmatpush1.bf16.msra.mxu0 0
  %1726 = vmatprep.subr.bf16.mxu0 0
  %1727 = vmatpush1.bf16.msra.mxu0 0
  %1728 = vmatprep.subr.bf16.mxu0 0
  %1729 = vmatpush1.bf16.msra.mxu0 0
  %1730 = vmatprep.subr.bf16.mxu0 0
  %1731 = vmatpush1.bf16.msra.mxu0 0
  %1732 = vmatprep.subr.bf16.mxu0 0
  %1733 = vmatpush1.bf16.msra.mxu0 0
  %1734 = vmatprep.subr.bf16.mxu0 0
  %1735 = vmatpush1.bf16.msra.mxu0 0
  %1736 = vmatprep.subr.bf16.mxu0 0
  %1737 = vmatpush1.bf16.msra.mxu0 0
  %1738 = vmatprep.mubr.bf16.mxu0 0
  %1739 = vmatmul.mubr.bf16.gmra.mrb[0].mxu0 %v1636
  %v1740 = vpop.f32.mrb[0].mxu0
  %v1741 = vadd.f32 %v190, %v1740
  %v1742 = vpop.f32.mrb[0].mxu0
  %v1743 = vadd.f32 %v194, %v1742
  %v1744 = vpop.f32.mrb[0].mxu0
  %v1745 = vpop.f32.mrb[0].mxu0
  %1746 = vdwg.mxu0
  %1747 = vmatprep.subr.bf16.mxu0 0
  %1748 = vmatpush1.bf16.msra.mxu0 %v284
  %1749 = vmatprep.subr.bf16.mxu0 0
  %1750 = vmatpush1.bf16.msra.mxu0 %v287
  %1751 = vmatprep.subr.bf16.mxu0 0
  %1752 = vmatpush1.bf16.msra.mxu0 %v290
  %1753 = vmatprep.subr.bf16.mxu0 0
  %1754 = vmatpush1.bf16.msra.mxu0 %v293
  %1755 = vmatprep.subr.bf16.mxu0 0
  %1756 = vmatpush1.bf16.msra.mxu0 %v296
  %1757 = vmatprep.subr.bf16.mxu0 0
  %1758 = vmatpush1.bf16.msra.mxu0 %v299
  %1759 = vmatprep.subr.bf16.mxu0 0
  %1760 = vmatpush1.bf16.msra.mxu0 %v302
  %1761 = vmatprep.subr.bf16.mxu0 0
  %1762 = vmatpush1.bf16.msra.mxu0 %v305
  %1763 = vmatprep.subr.bf16.mxu0 0
  %1764 = vmatpush1.bf16.msra.mxu0 0
  %1765 = vmatprep.subr.bf16.mxu0 0
  %1766 = vmatpush1.bf16.msra.mxu0 0
  %1767 = vmatprep.subr.bf16.mxu0 0
  %1768 = vmatpush1.bf16.msra.mxu0 0
  %1769 = vmatprep.subr.bf16.mxu0 0
  %1770 = vmatpush1.bf16.msra.mxu0 0
  %1771 = vmatprep.subr.bf16.mxu0 0
  %1772 = vmatpush1.bf16.msra.mxu0 0
  %1773 = vmatprep.subr.bf16.mxu0 0
  %1774 = vmatpush1.bf16.msra.mxu0 0
  %1775 = vmatprep.subr.bf16.mxu0 0
  %1776 = vmatpush1.bf16.msra.mxu0 0
  %1777 = vmatprep.subr.bf16.mxu0 0
  %1778 = vmatpush1.bf16.msra.mxu0 0
  %1779 = vmatprep.mubr.bf16.mxu0 0
  %1780 = vmatmul.mubr.bf16.gmra.mrb[0].mxu0 %v1636
  %v1781 = vpop.f32.mrb[0].mxu0
  %v1782 = vadd.f32 %v198, %v1781
  %v1783 = vpop.f32.mrb[0].mxu0
  %v1784 = vpop.f32.mrb[0].mxu0
  %v1785 = vpop.f32.mrb[0].mxu0
  %1786 = vdwg.mxu0
  %v1787 = vadd.f32 %v1703, %v1741
  %v1788 = vadd.f32 %v1704, %v1743
  %v1789 = vsub.f32 0.0, %v1787
  %v1790 = vsub.f32 0.0, %v1788
  %v1791 = vmul.f32 %v1789, 1.442695
  %v1792 = vpow.pop %v1791
  %v1793 = vmul.f32 %v1790, 1.442695
  %v1794 = vpow.pop %v1793
  %v1795 = vadd.f32 %v1792, 1.0
  %v1796 = vadd.f32 %v1794, 1.0
  %v1797 = vrcp.pop %v1795
  %v1798 = vmul.f32 1.0, %v1797
  %v1799 = vrcp.pop %v1796
  %v1800 = vmul.f32 1.0, %v1799
  %v1801 = vmul.f32 %v1798, %v1782
  %v1802 = vadd.f32 %v1705, %v1801
  %v1803 = vtanh.pop %v1802
  %v1804 = vsub.f32 1.0, %v1800
  %v1805 = vmul.f32 %v1804, %v1803
  %v1806 = vmul.f32 %v1800, %v1635
  %v1807 = vadd.f32 %v1805, %v1806
  %v1808 = vpack.c.bf16 %v1807, %v1807
  %s1809 = scalar_lea.vmem %s4, 8
  %1810 = vst.msk [vmem:[%s1809] sm:$0x1] %vm433, %v1808
  %v1813 = vunpack.c.l.s4 1966171168
  %v1814 = vunpack.c.0.s8 %v1813
  %v1815 = vlaneseq
  %v1816 = vshrl.u32 %v1815, 7
  %v1817 = vsub.s32 %v1814, %v1816
  %v1818 = vrot.slane %v1808, %v1817
  %v1820 = vunpack.c.l.s4 1966171168
  %v1821 = vunpack.c.0.s8 %v1820
  %v1822 = vlaneseq
  %v1823 = vshrl.u32 %v1822, 7
  %v1824 = vsub.s32 %v1821, %v1823
  %v1825 = vrot.slane %v1818, %v1824
  %1826 = vrot.lane.b32.xlu0 %v1825, 64
  %v1827 = vpop.permute.xlu0 %1826
  %s1829 = scalar_lea.vmem %s53, 7
  %1830 = vst.msk [vmem:[%s1829] sm:$0x1] %vm433, %v1827
  %s1831 = scalar_lea.vmem %s0, 54
  %v1832 = vld [vmem:[%s1831] sm:$0x3f]
  %s1833 = scalar_lea.vmem %s46, 36
  %v1834 = vld [vmem:[%s1833] sm:$0x3f]
  %v1836 = vcombine.high %v1832, %v1832
  %v1838 = vunpack.c.l.s4 1983009808
  %v1839 = vunpack.c.0.s8 %v1838
  %v1840 = vlaneseq
  %v1841 = vshrl.u32 %v1840, 7
  %v1842 = vsub.s32 %v1839, %v1841
  %v1843 = vrot.slane %v1832, %v1842
  %v1845 = vunpack.c.l.s4 1983009808
  %v1846 = vunpack.c.0.s8 %v1845
  %v1847 = vlaneseq
  %v1848 = vshrl.u32 %v1847, 7
  %v1849 = vsub.s32 %v1846, %v1848
  %v1850 = vrot.slane %v1836, %v1849
  %v1851 = vcombine.high %v1843, %v1843
  %v1856 = vcombine.high %v1834, %v1834
  %v1858 = vunpack.c.l.s4 1983009808
  %v1859 = vunpack.c.0.s8 %v1858
  %v1860 = vlaneseq
  %v1861 = vshrl.u32 %v1860, 7
  %v1862 = vsub.s32 %v1859, %v1861
  %v1863 = vrot.slane %v1834, %v1862
  %v1865 = vunpack.c.l.s4 1983009808
  %v1866 = vunpack.c.0.s8 %v1865
  %v1867 = vlaneseq
  %v1868 = vshrl.u32 %v1867, 7
  %v1869 = vsub.s32 %v1866, %v1868
  %v1870 = vrot.slane %v1856, %v1869
  %v1871 = vcombine.high %v1863, %v1863
  %v1875 = vsel %vm135, %v1843, %v1863
  %v1876 = vsel %vm136, %v1851, %v1871
  %v1877 = vsel %vm137, %v1850, %v1870
  %1878 = vmatprep.subr.bf16.mxu0 %v283
  %1879 = vmatpush1.bf16.msra.mxu0 %v282
  %1880 = vmatprep.subr.bf16.mxu0 %v286
  %1881 = vmatpush1.bf16.msra.mxu0 %v285
  %1882 = vmatprep.subr.bf16.mxu0 %v289
  %1883 = vmatpush1.bf16.msra.mxu0 %v288
  %1884 = vmatprep.subr.bf16.mxu0 %v292
  %1885 = vmatpush1.bf16.msra.mxu0 %v291
  %1886 = vmatprep.subr.bf16.mxu0 %v295
  %1887 = vmatpush1.bf16.msra.mxu0 %v294
  %1888 = vmatprep.subr.bf16.mxu0 %v298
  %1889 = vmatpush1.bf16.msra.mxu0 %v297
  %1890 = vmatprep.subr.bf16.mxu0 %v301
  %1891 = vmatpush1.bf16.msra.mxu0 %v300
  %1892 = vmatprep.subr.bf16.mxu0 %v304
  %1893 = vmatpush1.bf16.msra.mxu0 %v303
  %1894 = vmatprep.subr.bf16.mxu0 0
  %1895 = vmatpush1.bf16.msra.mxu0 0
  %1896 = vmatprep.subr.bf16.mxu0 0
  %1897 = vmatpush1.bf16.msra.mxu0 0
  %1898 = vmatprep.subr.bf16.mxu0 0
  %1899 = vmatpush1.bf16.msra.mxu0 0
  %1900 = vmatprep.subr.bf16.mxu0 0
  %1901 = vmatpush1.bf16.msra.mxu0 0
  %1902 = vmatprep.subr.bf16.mxu0 0
  %1903 = vmatpush1.bf16.msra.mxu0 0
  %1904 = vmatprep.subr.bf16.mxu0 0
  %1905 = vmatpush1.bf16.msra.mxu0 0
  %1906 = vmatprep.subr.bf16.mxu0 0
  %1907 = vmatpush1.bf16.msra.mxu0 0
  %1908 = vmatprep.subr.bf16.mxu0 0
  %1909 = vmatpush1.bf16.msra.mxu0 0
  %1910 = vmatprep.mubr.bf16.mxu0 0
  %1911 = vmatmul.mubr.bf16.gmra.mrb[0].mxu0 %v1808
  %v1912 = vpop.f32.mrb[0].mxu0
  %v1913 = vadd.f32 %v190, %v1912
  %v1914 = vpop.f32.mrb[0].mxu0
  %v1915 = vadd.f32 %v194, %v1914
  %v1916 = vpop.f32.mrb[0].mxu0
  %v1917 = vpop.f32.mrb[0].mxu0
  %1918 = vdwg.mxu0
  %1919 = vmatprep.subr.bf16.mxu0 0
  %1920 = vmatpush1.bf16.msra.mxu0 %v284
  %1921 = vmatprep.subr.bf16.mxu0 0
  %1922 = vmatpush1.bf16.msra.mxu0 %v287
  %1923 = vmatprep.subr.bf16.mxu0 0
  %1924 = vmatpush1.bf16.msra.mxu0 %v290
  %1925 = vmatprep.subr.bf16.mxu0 0
  %1926 = vmatpush1.bf16.msra.mxu0 %v293
  %1927 = vmatprep.subr.bf16.mxu0 0
  %1928 = vmatpush1.bf16.msra.mxu0 %v296
  %1929 = vmatprep.subr.bf16.mxu0 0
  %1930 = vmatpush1.bf16.msra.mxu0 %v299
  %1931 = vmatprep.subr.bf16.mxu0 0
  %1932 = vmatpush1.bf16.msra.mxu0 %v302
  %1933 = vmatprep.subr.bf16.mxu0 0
  %1934 = vmatpush1.bf16.msra.mxu0 %v305
  %1935 = vmatprep.subr.bf16.mxu0 0
  %1936 = vmatpush1.bf16.msra.mxu0 0
  %1937 = vmatprep.subr.bf16.mxu0 0
  %1938 = vmatpush1.bf16.msra.mxu0 0
  %1939 = vmatprep.subr.bf16.mxu0 0
  %1940 = vmatpush1.bf16.msra.mxu0 0
  %1941 = vmatprep.subr.bf16.mxu0 0
  %1942 = vmatpush1.bf16.msra.mxu0 0
  %1943 = vmatprep.subr.bf16.mxu0 0
  %1944 = vmatpush1.bf16.msra.mxu0 0
  %1945 = vmatprep.subr.bf16.mxu0 0
  %1946 = vmatpush1.bf16.msra.mxu0 0
  %1947 = vmatprep.subr.bf16.mxu0 0
  %1948 = vmatpush1.bf16.msra.mxu0 0
  %1949 = vmatprep.subr.bf16.mxu0 0
  %1950 = vmatpush1.bf16.msra.mxu0 0
  %1951 = vmatprep.mubr.bf16.mxu0 0
  %1952 = vmatmul.mubr.bf16.gmra.mrb[0].mxu0 %v1808
  %v1953 = vpop.f32.mrb[0].mxu0
  %v1954 = vadd.f32 %v198, %v1953
  %v1955 = vpop.f32.mrb[0].mxu0
  %v1956 = vpop.f32.mrb[0].mxu0
  %v1957 = vpop.f32.mrb[0].mxu0
  %1958 = vdwg.mxu0
  %v1959 = vadd.f32 %v1875, %v1913
  %v1960 = vadd.f32 %v1876, %v1915
  %v1961 = vsub.f32 0.0, %v1959
  %v1962 = vsub.f32 0.0, %v1960
  %v1963 = vmul.f32 %v1961, 1.442695
  %v1964 = vpow.pop %v1963
  %v1965 = vmul.f32 %v1962, 1.442695
  %v1966 = vpow.pop %v1965
  %v1967 = vadd.f32 %v1964, 1.0
  %v1968 = vadd.f32 %v1966, 1.0
  %v1969 = vrcp.pop %v1967
  %v1970 = vmul.f32 1.0, %v1969
  %v1971 = vrcp.pop %v1968
  %v1972 = vmul.f32 1.0, %v1971
  %v1973 = vmul.f32 %v1970, %v1954
  %v1974 = vadd.f32 %v1877, %v1973
  %v1975 = vtanh.pop %v1974
  %v1976 = vsub.f32 1.0, %v1972
  %v1977 = vmul.f32 %v1976, %v1975
  %v1978 = vmul.f32 %v1972, %v1807
  %v1979 = vadd.f32 %v1977, %v1978
  %v1980 = vpack.c.bf16 %v1979, %v1979
  %s1981 = scalar_lea.vmem %s4, 9
  %1982 = vst.msk [vmem:[%s1981] sm:$0x1] %vm433, %v1980
  %v1985 = vunpack.c.l.s4 1966171168
  %v1986 = vunpack.c.0.s8 %v1985
  %v1987 = vlaneseq
  %v1988 = vshrl.u32 %v1987, 7
  %v1989 = vsub.s32 %v1986, %v1988
  %v1990 = vrot.slane %v1980, %v1989
  %v1992 = vunpack.c.l.s4 1966171168
  %v1993 = vunpack.c.0.s8 %v1992
  %v1994 = vlaneseq
  %v1995 = vshrl.u32 %v1994, 7
  %v1996 = vsub.s32 %v1993, %v1995
  %v1997 = vrot.slane %v1990, %v1996
  %1998 = vrot.lane.b32.xlu0 %v1997, 64
  %v1999 = vpop.permute.xlu0 %1998
  %s2001 = scalar_lea.vmem %s53, 6
  %2002 = vst.msk [vmem:[%s2001] sm:$0x1] %vm433, %v1999
  %s2003 = scalar_lea.vmem %s0, 60
  %v2004 = vld [vmem:[%s2003] sm:$0x3f]
  %s2005 = scalar_lea.vmem %s46, 30
  %v2006 = vld [vmem:[%s2005] sm:$0x3f]
  %v2008 = vcombine.high %v2004, %v2004
  %v2010 = vunpack.c.l.s4 1983009808
  %v2011 = vunpack.c.0.s8 %v2010
  %v2012 = vlaneseq
  %v2013 = vshrl.u32 %v2012, 7
  %v2014 = vsub.s32 %v2011, %v2013
  %v2015 = vrot.slane %v2004, %v2014
  %v2017 = vunpack.c.l.s4 1983009808
  %v2018 = vunpack.c.0.s8 %v2017
  %v2019 = vlaneseq
  %v2020 = vshrl.u32 %v2019, 7
  %v2021 = vsub.s32 %v2018, %v2020
  %v2022 = vrot.slane %v2008, %v2021
  %v2023 = vcombine.high %v2015, %v2015
  %v2028 = vcombine.high %v2006, %v2006
  %v2030 = vunpack.c.l.s4 1983009808
  %v2031 = vunpack.c.0.s8 %v2030
  %v2032 = vlaneseq
  %v2033 = vshrl.u32 %v2032, 7
  %v2034 = vsub.s32 %v2031, %v2033
  %v2035 = vrot.slane %v2006, %v2034
  %v2037 = vunpack.c.l.s4 1983009808
  %v2038 = vunpack.c.0.s8 %v2037
  %v2039 = vlaneseq
  %v2040 = vshrl.u32 %v2039, 7
  %v2041 = vsub.s32 %v2038, %v2040
  %v2042 = vrot.slane %v2028, %v2041
  %v2043 = vcombine.high %v2035, %v2035
  %v2047 = vsel %vm135, %v2015, %v2035
  %v2048 = vsel %vm136, %v2023, %v2043
  %v2049 = vsel %vm137, %v2022, %v2042
  %2050 = vmatprep.subr.bf16.mxu0 %v283
  %2051 = vmatpush1.bf16.msra.mxu0 %v282
  %2052 = vmatprep.subr.bf16.mxu0 %v286
  %2053 = vmatpush1.bf16.msra.mxu0 %v285
  %2054 = vmatprep.subr.bf16.mxu0 %v289
  %2055 = vmatpush1.bf16.msra.mxu0 %v288
  %2056 = vmatprep.subr.bf16.mxu0 %v292
  %2057 = vmatpush1.bf16.msra.mxu0 %v291
  %2058 = vmatprep.subr.bf16.mxu0 %v295
  %2059 = vmatpush1.bf16.msra.mxu0 %v294
  %2060 = vmatprep.subr.bf16.mxu0 %v298
  %2061 = vmatpush1.bf16.msra.mxu0 %v297
  %2062 = vmatprep.subr.bf16.mxu0 %v301
  %2063 = vmatpush1.bf16.msra.mxu0 %v300
  %2064 = vmatprep.subr.bf16.mxu0 %v304
  %2065 = vmatpush1.bf16.msra.mxu0 %v303
  %2066 = vmatprep.subr.bf16.mxu0 0
  %2067 = vmatpush1.bf16.msra.mxu0 0
  %2068 = vmatprep.subr.bf16.mxu0 0
  %2069 = vmatpush1.bf16.msra.mxu0 0
  %2070 = vmatprep.subr.bf16.mxu0 0
  %2071 = vmatpush1.bf16.msra.mxu0 0
  %2072 = vmatprep.subr.bf16.mxu0 0
  %2073 = vmatpush1.bf16.msra.mxu0 0
  %2074 = vmatprep.subr.bf16.mxu0 0
  %2075 = vmatpush1.bf16.msra.mxu0 0
  %2076 = vmatprep.subr.bf16.mxu0 0
  %2077 = vmatpush1.bf16.msra.mxu0 0
  %2078 = vmatprep.subr.bf16.mxu0 0
  %2079 = vmatpush1.bf16.msra.mxu0 0
  %2080 = vmatprep.subr.bf16.mxu0 0
  %2081 = vmatpush1.bf16.msra.mxu0 0
  %2082 = vmatprep.mubr.bf16.mxu0 0
  %2083 = vmatmul.mubr.bf16.gmra.mrb[0].mxu0 %v1980
  %v2084 = vpop.f32.mrb[0].mxu0
  %v2085 = vadd.f32 %v190, %v2084
  %v2086 = vpop.f32.mrb[0].mxu0
  %v2087 = vadd.f32 %v194, %v2086
  %v2088 = vpop.f32.mrb[0].mxu0
  %v2089 = vpop.f32.mrb[0].mxu0
  %2090 = vdwg.mxu0
  %2091 = vmatprep.subr.bf16.mxu0 0
  %2092 = vmatpush1.bf16.msra.mxu0 %v284
  %2093 = vmatprep.subr.bf16.mxu0 0
  %2094 = vmatpush1.bf16.msra.mxu0 %v287
  %2095 = vmatprep.subr.bf16.mxu0 0
  %2096 = vmatpush1.bf16.msra.mxu0 %v290
  %2097 = vmatprep.subr.bf16.mxu0 0
  %2098 = vmatpush1.bf16.msra.mxu0 %v293
  %2099 = vmatprep.subr.bf16.mxu0 0
  %2100 = vmatpush1.bf16.msra.mxu0 %v296
  %2101 = vmatprep.subr.bf16.mxu0 0
  %2102 = vmatpush1.bf16.msra.mxu0 %v299
  %2103 = vmatprep.subr.bf16.mxu0 0
  %2104 = vmatpush1.bf16.msra.mxu0 %v302
  %2105 = vmatprep.subr.bf16.mxu0 0
  %2106 = vmatpush1.bf16.msra.mxu0 %v305
  %2107 = vmatprep.subr.bf16.mxu0 0
  %2108 = vmatpush1.bf16.msra.mxu0 0
  %2109 = vmatprep.subr.bf16.mxu0 0
  %2110 = vmatpush1.bf16.msra.mxu0 0
  %2111 = vmatprep.subr.bf16.mxu0 0
  %2112 = vmatpush1.bf16.msra.mxu0 0
  %2113 = vmatprep.subr.bf16.mxu0 0
  %2114 = vmatpush1.bf16.msra.mxu0 0
  %2115 = vmatprep.subr.bf16.mxu0 0
  %2116 = vmatpush1.bf16.msra.mxu0 0
  %2117 = vmatprep.subr.bf16.mxu0 0
  %2118 = vmatpush1.bf16.msra.mxu0 0
  %2119 = vmatprep.subr.bf16.mxu0 0
  %2120 = vmatpush1.bf16.msra.mxu0 0
  %2121 = vmatprep.subr.bf16.mxu0 0
  %2122 = vmatpush1.bf16.msra.mxu0 0
  %2123 = vmatprep.mubr.bf16.mxu0 0
  %2124 = vmatmul.mubr.bf16.gmra.mrb[0].mxu0 %v1980
  %v2125 = vpop.f32.mrb[0].mxu0
  %v2126 = vadd.f32 %v198, %v2125
  %v2127 = vpop.f32.mrb[0].mxu0
  %v2128 = vpop.f32.mrb[0].mxu0
  %v2129 = vpop.f32.mrb[0].mxu0
  %2130 = vdwg.mxu0
  %v2131 = vadd.f32 %v2047, %v2085
  %v2132 = vadd.f32 %v2048, %v2087
  %v2133 = vsub.f32 0.0, %v2131
  %v2134 = vsub.f32 0.0, %v2132
  %v2135 = vmul.f32 %v2133, 1.442695
  %v2136 = vpow.pop %v2135
  %v2137 = vmul.f32 %v2134, 1.442695
  %v2138 = vpow.pop %v2137
  %v2139 = vadd.f32 %v2136, 1.0
  %v2140 = vadd.f32 %v2138, 1.0
  %v2141 = vrcp.pop %v2139
  %v2142 = vmul.f32 1.0, %v2141
  %v2143 = vrcp.pop %v2140
  %v2144 = vmul.f32 1.0, %v2143
  %v2145 = vmul.f32 %v2142, %v2126
  %v2146 = vadd.f32 %v2049, %v2145
  %v2147 = vtanh.pop %v2146
  %v2148 = vsub.f32 1.0, %v2144
  %v2149 = vmul.f32 %v2148, %v2147
  %v2150 = vmul.f32 %v2144, %v1979
  %v2151 = vadd.f32 %v2149, %v2150
  %v2152 = vpack.c.bf16 %v2151, %v2151
  %s2153 = scalar_lea.vmem %s4, 10
  %2154 = vst.msk [vmem:[%s2153] sm:$0x1] %vm433, %v2152
  %v2157 = vunpack.c.l.s4 1966171168
  %v2158 = vunpack.c.0.s8 %v2157
  %v2159 = vlaneseq
  %v2160 = vshrl.u32 %v2159, 7
  %v2161 = vsub.s32 %v2158, %v2160
  %v2162 = vrot.slane %v2152, %v2161
  %v2164 = vunpack.c.l.s4 1966171168
  %v2165 = vunpack.c.0.s8 %v2164
  %v2166 = vlaneseq
  %v2167 = vshrl.u32 %v2166, 7
  %v2168 = vsub.s32 %v2165, %v2167
  %v2169 = vrot.slane %v2162, %v2168
  %2170 = vrot.lane.b32.xlu0 %v2169, 64
  %v2171 = vpop.permute.xlu0 %2170
  %s2173 = scalar_lea.vmem %s53, 5
  %2174 = vst.msk [vmem:[%s2173] sm:$0x1] %vm433, %v2171
  %s2175 = scalar_lea.vmem %s0, 66
  %v2176 = vld [vmem:[%s2175] sm:$0x3f]
  %s2177 = scalar_lea.vmem %s46, 24
  %v2178 = vld [vmem:[%s2177] sm:$0x3f]
  %v2180 = vcombine.high %v2176, %v2176
  %v2182 = vunpack.c.l.s4 1983009808
  %v2183 = vunpack.c.0.s8 %v2182
  %v2184 = vlaneseq
  %v2185 = vshrl.u32 %v2184, 7
  %v2186 = vsub.s32 %v2183, %v2185
  %v2187 = vrot.slane %v2176, %v2186
  %v2189 = vunpack.c.l.s4 1983009808
  %v2190 = vunpack.c.0.s8 %v2189
  %v2191 = vlaneseq
  %v2192 = vshrl.u32 %v2191, 7
  %v2193 = vsub.s32 %v2190, %v2192
  %v2194 = vrot.slane %v2180, %v2193
  %v2195 = vcombine.high %v2187, %v2187
  %v2200 = vcombine.high %v2178, %v2178
  %v2202 = vunpack.c.l.s4 1983009808
  %v2203 = vunpack.c.0.s8 %v2202
  %v2204 = vlaneseq
  %v2205 = vshrl.u32 %v2204, 7
  %v2206 = vsub.s32 %v2203, %v2205
  %v2207 = vrot.slane %v2178, %v2206
  %v2209 = vunpack.c.l.s4 1983009808
  %v2210 = vunpack.c.0.s8 %v2209
  %v2211 = vlaneseq
  %v2212 = vshrl.u32 %v2211, 7
  %v2213 = vsub.s32 %v2210, %v2212
  %v2214 = vrot.slane %v2200, %v2213
  %v2215 = vcombine.high %v2207, %v2207
  %v2219 = vsel %vm135, %v2187, %v2207
  %v2220 = vsel %vm136, %v2195, %v2215
  %v2221 = vsel %vm137, %v2194, %v2214
  %2222 = vmatprep.subr.bf16.mxu0 %v283
  %2223 = vmatpush1.bf16.msra.mxu0 %v282
  %2224 = vmatprep.subr.bf16.mxu0 %v286
  %2225 = vmatpush1.bf16.msra.mxu0 %v285
  %2226 = vmatprep.subr.bf16.mxu0 %v289
  %2227 = vmatpush1.bf16.msra.mxu0 %v288
  %2228 = vmatprep.subr.bf16.mxu0 %v292
  %2229 = vmatpush1.bf16.msra.mxu0 %v291
  %2230 = vmatprep.subr.bf16.mxu0 %v295
  %2231 = vmatpush1.bf16.msra.mxu0 %v294
  %2232 = vmatprep.subr.bf16.mxu0 %v298
  %2233 = vmatpush1.bf16.msra.mxu0 %v297
  %2234 = vmatprep.subr.bf16.mxu0 %v301
  %2235 = vmatpush1.bf16.msra.mxu0 %v300
  %2236 = vmatprep.subr.bf16.mxu0 %v304
  %2237 = vmatpush1.bf16.msra.mxu0 %v303
  %2238 = vmatprep.subr.bf16.mxu0 0
  %2239 = vmatpush1.bf16.msra.mxu0 0
  %2240 = vmatprep.subr.bf16.mxu0 0
  %2241 = vmatpush1.bf16.msra.mxu0 0
  %2242 = vmatprep.subr.bf16.mxu0 0
  %2243 = vmatpush1.bf16.msra.mxu0 0
  %2244 = vmatprep.subr.bf16.mxu0 0
  %2245 = vmatpush1.bf16.msra.mxu0 0
  %2246 = vmatprep.subr.bf16.mxu0 0
  %2247 = vmatpush1.bf16.msra.mxu0 0
  %2248 = vmatprep.subr.bf16.mxu0 0
  %2249 = vmatpush1.bf16.msra.mxu0 0
  %2250 = vmatprep.subr.bf16.mxu0 0
  %2251 = vmatpush1.bf16.msra.mxu0 0
  %2252 = vmatprep.subr.bf16.mxu0 0
  %2253 = vmatpush1.bf16.msra.mxu0 0
  %2254 = vmatprep.mubr.bf16.mxu0 0
  %2255 = vmatmul.mubr.bf16.gmra.mrb[0].mxu0 %v2152
  %v2256 = vpop.f32.mrb[0].mxu0
  %v2257 = vadd.f32 %v190, %v2256
  %v2258 = vpop.f32.mrb[0].mxu0
  %v2259 = vadd.f32 %v194, %v2258
  %v2260 = vpop.f32.mrb[0].mxu0
  %v2261 = vpop.f32.mrb[0].mxu0
  %2262 = vdwg.mxu0
  %2263 = vmatprep.subr.bf16.mxu0 0
  %2264 = vmatpush1.bf16.msra.mxu0 %v284
  %2265 = vmatprep.subr.bf16.mxu0 0
  %2266 = vmatpush1.bf16.msra.mxu0 %v287
  %2267 = vmatprep.subr.bf16.mxu0 0
  %2268 = vmatpush1.bf16.msra.mxu0 %v290
  %2269 = vmatprep.subr.bf16.mxu0 0
  %2270 = vmatpush1.bf16.msra.mxu0 %v293
  %2271 = vmatprep.subr.bf16.mxu0 0
  %2272 = vmatpush1.bf16.msra.mxu0 %v296
  %2273 = vmatprep.subr.bf16.mxu0 0
  %2274 = vmatpush1.bf16.msra.mxu0 %v299
  %2275 = vmatprep.subr.bf16.mxu0 0
  %2276 = vmatpush1.bf16.msra.mxu0 %v302
  %2277 = vmatprep.subr.bf16.mxu0 0
  %2278 = vmatpush1.bf16.msra.mxu0 %v305
  %2279 = vmatprep.subr.bf16.mxu0 0
  %2280 = vmatpush1.bf16.msra.mxu0 0
  %2281 = vmatprep.subr.bf16.mxu0 0
  %2282 = vmatpush1.bf16.msra.mxu0 0
  %2283 = vmatprep.subr.bf16.mxu0 0
  %2284 = vmatpush1.bf16.msra.mxu0 0
  %2285 = vmatprep.subr.bf16.mxu0 0
  %2286 = vmatpush1.bf16.msra.mxu0 0
  %2287 = vmatprep.subr.bf16.mxu0 0
  %2288 = vmatpush1.bf16.msra.mxu0 0
  %2289 = vmatprep.subr.bf16.mxu0 0
  %2290 = vmatpush1.bf16.msra.mxu0 0
  %2291 = vmatprep.subr.bf16.mxu0 0
  %2292 = vmatpush1.bf16.msra.mxu0 0
  %2293 = vmatprep.subr.bf16.mxu0 0
  %2294 = vmatpush1.bf16.msra.mxu0 0
  %2295 = vmatprep.mubr.bf16.mxu0 0
  %2296 = vmatmul.mubr.bf16.gmra.mrb[0].mxu0 %v2152
  %v2297 = vpop.f32.mrb[0].mxu0
  %v2298 = vadd.f32 %v198, %v2297
  %v2299 = vpop.f32.mrb[0].mxu0
  %v2300 = vpop.f32.mrb[0].mxu0
  %v2301 = vpop.f32.mrb[0].mxu0
  %2302 = vdwg.mxu0
  %v2303 = vadd.f32 %v2219, %v2257
  %v2304 = vadd.f32 %v2220, %v2259
  %v2305 = vsub.f32 0.0, %v2303
  %v2306 = vsub.f32 0.0, %v2304
  %v2307 = vmul.f32 %v2305, 1.442695
  %v2308 = vpow.pop %v2307
  %v2309 = vmul.f32 %v2306, 1.442695
  %v2310 = vpow.pop %v2309
  %v2311 = vadd.f32 %v2308, 1.0
  %v2312 = vadd.f32 %v2310, 1.0
  %v2313 = vrcp.pop %v2311
  %v2314 = vmul.f32 1.0, %v2313
  %v2315 = vrcp.pop %v2312
  %v2316 = vmul.f32 1.0, %v2315
  %v2317 = vmul.f32 %v2314, %v2298
  %v2318 = vadd.f32 %v2221, %v2317
  %v2319 = vtanh.pop %v2318
  %v2320 = vsub.f32 1.0, %v2316
  %v2321 = vmul.f32 %v2320, %v2319
  %v2322 = vmul.f32 %v2316, %v2151
  %v2323 = vadd.f32 %v2321, %v2322
  %v2324 = vpack.c.bf16 %v2323, %v2323
  %s2325 = scalar_lea.vmem %s4, 11
  %2326 = vst.msk [vmem:[%s2325] sm:$0x1] %vm433, %v2324
  %v2329 = vunpack.c.l.s4 1966171168
  %v2330 = vunpack.c.0.s8 %v2329
  %v2331 = vlaneseq
  %v2332 = vshrl.u32 %v2331, 7
  %v2333 = vsub.s32 %v2330, %v2332
  %v2334 = vrot.slane %v2324, %v2333
  %v2336 = vunpack.c.l.s4 1966171168
  %v2337 = vunpack.c.0.s8 %v2336
  %v2338 = vlaneseq
  %v2339 = vshrl.u32 %v2338, 7
  %v2340 = vsub.s32 %v2337, %v2339
  %v2341 = vrot.slane %v2334, %v2340
  %2342 = vrot.lane.b32.xlu0 %v2341, 64
  %v2343 = vpop.permute.xlu0 %2342
  %s2345 = scalar_lea.vmem %s53, 4
  %2346 = vst.msk [vmem:[%s2345] sm:$0x1] %vm433, %v2343
  %s2347 = scalar_lea.vmem %s0, 72
  %v2348 = vld [vmem:[%s2347] sm:$0x3f]
  %s2349 = scalar_lea.vmem %s46, 18
  %v2350 = vld [vmem:[%s2349] sm:$0x3f]
  %v2352 = vcombine.high %v2348, %v2348
  %v2354 = vunpack.c.l.s4 1983009808
  %v2355 = vunpack.c.0.s8 %v2354
  %v2356 = vlaneseq
  %v2357 = vshrl.u32 %v2356, 7
  %v2358 = vsub.s32 %v2355, %v2357
  %v2359 = vrot.slane %v2348, %v2358
  %v2361 = vunpack.c.l.s4 1983009808
  %v2362 = vunpack.c.0.s8 %v2361
  %v2363 = vlaneseq
  %v2364 = vshrl.u32 %v2363, 7
  %v2365 = vsub.s32 %v2362, %v2364
  %v2366 = vrot.slane %v2352, %v2365
  %v2367 = vcombine.high %v2359, %v2359
  %v2372 = vcombine.high %v2350, %v2350
  %v2374 = vunpack.c.l.s4 1983009808
  %v2375 = vunpack.c.0.s8 %v2374
  %v2376 = vlaneseq
  %v2377 = vshrl.u32 %v2376, 7
  %v2378 = vsub.s32 %v2375, %v2377
  %v2379 = vrot.slane %v2350, %v2378
  %v2381 = vunpack.c.l.s4 1983009808
  %v2382 = vunpack.c.0.s8 %v2381
  %v2383 = vlaneseq
  %v2384 = vshrl.u32 %v2383, 7
  %v2385 = vsub.s32 %v2382, %v2384
  %v2386 = vrot.slane %v2372, %v2385
  %v2387 = vcombine.high %v2379, %v2379
  %v2391 = vsel %vm135, %v2359, %v2379
  %v2392 = vsel %vm136, %v2367, %v2387
  %v2393 = vsel %vm137, %v2366, %v2386
  %2394 = vmatprep.subr.bf16.mxu0 %v283
  %2395 = vmatpush1.bf16.msra.mxu0 %v282
  %2396 = vmatprep.subr.bf16.mxu0 %v286
  %2397 = vmatpush1.bf16.msra.mxu0 %v285
  %2398 = vmatprep.subr.bf16.mxu0 %v289
  %2399 = vmatpush1.bf16.msra.mxu0 %v288
  %2400 = vmatprep.subr.bf16.mxu0 %v292
  %2401 = vmatpush1.bf16.msra.mxu0 %v291
  %2402 = vmatprep.subr.bf16.mxu0 %v295
  %2403 = vmatpush1.bf16.msra.mxu0 %v294
  %2404 = vmatprep.subr.bf16.mxu0 %v298
  %2405 = vmatpush1.bf16.msra.mxu0 %v297
  %2406 = vmatprep.subr.bf16.mxu0 %v301
  %2407 = vmatpush1.bf16.msra.mxu0 %v300
  %2408 = vmatprep.subr.bf16.mxu0 %v304
  %2409 = vmatpush1.bf16.msra.mxu0 %v303
  %2410 = vmatprep.subr.bf16.mxu0 0
  %2411 = vmatpush1.bf16.msra.mxu0 0
  %2412 = vmatprep.subr.bf16.mxu0 0
  %2413 = vmatpush1.bf16.msra.mxu0 0
  %2414 = vmatprep.subr.bf16.mxu0 0
  %2415 = vmatpush1.bf16.msra.mxu0 0
  %2416 = vmatprep.subr.bf16.mxu0 0
  %2417 = vmatpush1.bf16.msra.mxu0 0
  %2418 = vmatprep.subr.bf16.mxu0 0
  %2419 = vmatpush1.bf16.msra.mxu0 0
  %2420 = vmatprep.subr.bf16.mxu0 0
  %2421 = vmatpush1.bf16.msra.mxu0 0
  %2422 = vmatprep.subr.bf16.mxu0 0
  %2423 = vmatpush1.bf16.msra.mxu0 0
  %2424 = vmatprep.subr.bf16.mxu0 0
  %2425 = vmatpush1.bf16.msra.mxu0 0
  %2426 = vmatprep.mubr.bf16.mxu0 0
  %2427 = vmatmul.mubr.bf16.gmra.mrb[0].mxu0 %v2324
  %v2428 = vpop.f32.mrb[0].mxu0
  %v2429 = vadd.f32 %v190, %v2428
  %v2430 = vpop.f32.mrb[0].mxu0
  %v2431 = vadd.f32 %v194, %v2430
  %v2432 = vpop.f32.mrb[0].mxu0
  %v2433 = vpop.f32.mrb[0].mxu0
  %2434 = vdwg.mxu0
  %2435 = vmatprep.subr.bf16.mxu0 0
  %2436 = vmatpush1.bf16.msra.mxu0 %v284
  %2437 = vmatprep.subr.bf16.mxu0 0
  %2438 = vmatpush1.bf16.msra.mxu0 %v287
  %2439 = vmatprep.subr.bf16.mxu0 0
  %2440 = vmatpush1.bf16.msra.mxu0 %v290
  %2441 = vmatprep.subr.bf16.mxu0 0
  %2442 = vmatpush1.bf16.msra.mxu0 %v293
  %2443 = vmatprep.subr.bf16.mxu0 0
  %2444 = vmatpush1.bf16.msra.mxu0 %v296
  %2445 = vmatprep.subr.bf16.mxu0 0
  %2446 = vmatpush1.bf16.msra.mxu0 %v299
  %2447 = vmatprep.subr.bf16.mxu0 0
  %2448 = vmatpush1.bf16.msra.mxu0 %v302
  %2449 = vmatprep.subr.bf16.mxu0 0
  %2450 = vmatpush1.bf16.msra.mxu0 %v305
  %2451 = vmatprep.subr.bf16.mxu0 0
  %2452 = vmatpush1.bf16.msra.mxu0 0
  %2453 = vmatprep.subr.bf16.mxu0 0
  %2454 = vmatpush1.bf16.msra.mxu0 0
  %2455 = vmatprep.subr.bf16.mxu0 0
  %2456 = vmatpush1.bf16.msra.mxu0 0
  %2457 = vmatprep.subr.bf16.mxu0 0
  %2458 = vmatpush1.bf16.msra.mxu0 0
  %2459 = vmatprep.subr.bf16.mxu0 0
  %2460 = vmatpush1.bf16.msra.mxu0 0
  %2461 = vmatprep.subr.bf16.mxu0 0
  %2462 = vmatpush1.bf16.msra.mxu0 0
  %2463 = vmatprep.subr.bf16.mxu0 0
  %2464 = vmatpush1.bf16.msra.mxu0 0
  %2465 = vmatprep.subr.bf16.mxu0 0
  %2466 = vmatpush1.bf16.msra.mxu0 0
  %2467 = vmatprep.mubr.bf16.mxu0 0
  %2468 = vmatmul.mubr.bf16.gmra.mrb[0].mxu0 %v2324
  %v2469 = vpop.f32.mrb[0].mxu0
  %v2470 = vadd.f32 %v198, %v2469
  %v2471 = vpop.f32.mrb[0].mxu0
  %v2472 = vpop.f32.mrb[0].mxu0
  %v2473 = vpop.f32.mrb[0].mxu0
  %2474 = vdwg.mxu0
  %v2475 = vadd.f32 %v2391, %v2429
  %v2476 = vadd.f32 %v2392, %v2431
  %v2477 = vsub.f32 0.0, %v2475
  %v2478 = vsub.f32 0.0, %v2476
  %v2479 = vmul.f32 %v2477, 1.442695
  %v2480 = vpow.pop %v2479
  %v2481 = vmul.f32 %v2478, 1.442695
  %v2482 = vpow.pop %v2481
  %v2483 = vadd.f32 %v2480, 1.0
  %v2484 = vadd.f32 %v2482, 1.0
  %v2485 = vrcp.pop %v2483
  %v2486 = vmul.f32 1.0, %v2485
  %v2487 = vrcp.pop %v2484
  %v2488 = vmul.f32 1.0, %v2487
  %v2489 = vmul.f32 %v2486, %v2470
  %v2490 = vadd.f32 %v2393, %v2489
  %v2491 = vtanh.pop %v2490
  %v2492 = vsub.f32 1.0, %v2488
  %v2493 = vmul.f32 %v2492, %v2491
  %v2494 = vmul.f32 %v2488, %v2323
  %v2495 = vadd.f32 %v2493, %v2494
  %v2496 = vpack.c.bf16 %v2495, %v2495
  %s2497 = scalar_lea.vmem %s4, 12
  %2498 = vst.msk [vmem:[%s2497] sm:$0x1] %vm433, %v2496
  %v2501 = vunpack.c.l.s4 1966171168
  %v2502 = vunpack.c.0.s8 %v2501
  %v2503 = vlaneseq
  %v2504 = vshrl.u32 %v2503, 7
  %v2505 = vsub.s32 %v2502, %v2504
  %v2506 = vrot.slane %v2496, %v2505
  %v2508 = vunpack.c.l.s4 1966171168
  %v2509 = vunpack.c.0.s8 %v2508
  %v2510 = vlaneseq
  %v2511 = vshrl.u32 %v2510, 7
  %v2512 = vsub.s32 %v2509, %v2511
  %v2513 = vrot.slane %v2506, %v2512
  %2514 = vrot.lane.b32.xlu0 %v2513, 64
  %v2515 = vpop.permute.xlu0 %2514
  %s2517 = scalar_lea.vmem %s53, 3
  %2518 = vst.msk [vmem:[%s2517] sm:$0x1] %vm433, %v2515
  %s2519 = scalar_lea.vmem %s0, 78
  %v2520 = vld [vmem:[%s2519] sm:$0x3f]
  %s2521 = scalar_lea.vmem %s46, 12
  %v2522 = vld [vmem:[%s2521] sm:$0x3f]
  %v2524 = vcombine.high %v2520, %v2520
  %v2526 = vunpack.c.l.s4 1983009808
  %v2527 = vunpack.c.0.s8 %v2526
  %v2528 = vlaneseq
  %v2529 = vshrl.u32 %v2528, 7
  %v2530 = vsub.s32 %v2527, %v2529
  %v2531 = vrot.slane %v2520, %v2530
  %v2533 = vunpack.c.l.s4 1983009808
  %v2534 = vunpack.c.0.s8 %v2533
  %v2535 = vlaneseq
  %v2536 = vshrl.u32 %v2535, 7
  %v2537 = vsub.s32 %v2534, %v2536
  %v2538 = vrot.slane %v2524, %v2537
  %v2539 = vcombine.high %v2531, %v2531
  %v2544 = vcombine.high %v2522, %v2522
  %v2546 = vunpack.c.l.s4 1983009808
  %v2547 = vunpack.c.0.s8 %v2546
  %v2548 = vlaneseq
  %v2549 = vshrl.u32 %v2548, 7
  %v2550 = vsub.s32 %v2547, %v2549
  %v2551 = vrot.slane %v2522, %v2550
  %v2553 = vunpack.c.l.s4 1983009808
  %v2554 = vunpack.c.0.s8 %v2553
  %v2555 = vlaneseq
  %v2556 = vshrl.u32 %v2555, 7
  %v2557 = vsub.s32 %v2554, %v2556
  %v2558 = vrot.slane %v2544, %v2557
  %v2559 = vcombine.high %v2551, %v2551
  %v2563 = vsel %vm135, %v2531, %v2551
  %v2564 = vsel %vm136, %v2539, %v2559
  %v2565 = vsel %vm137, %v2538, %v2558
  %2566 = vmatprep.subr.bf16.mxu0 %v283
  %2567 = vmatpush1.bf16.msra.mxu0 %v282
  %2568 = vmatprep.subr.bf16.mxu0 %v286
  %2569 = vmatpush1.bf16.msra.mxu0 %v285
  %2570 = vmatprep.subr.bf16.mxu0 %v289
  %2571 = vmatpush1.bf16.msra.mxu0 %v288
  %2572 = vmatprep.subr.bf16.mxu0 %v292
  %2573 = vmatpush1.bf16.msra.mxu0 %v291
  %2574 = vmatprep.subr.bf16.mxu0 %v295
  %2575 = vmatpush1.bf16.msra.mxu0 %v294
  %2576 = vmatprep.subr.bf16.mxu0 %v298
  %2577 = vmatpush1.bf16.msra.mxu0 %v297
  %2578 = vmatprep.subr.bf16.mxu0 %v301
  %2579 = vmatpush1.bf16.msra.mxu0 %v300
  %2580 = vmatprep.subr.bf16.mxu0 %v304
  %2581 = vmatpush1.bf16.msra.mxu0 %v303
  %2582 = vmatprep.subr.bf16.mxu0 0
  %2583 = vmatpush1.bf16.msra.mxu0 0
  %2584 = vmatprep.subr.bf16.mxu0 0
  %2585 = vmatpush1.bf16.msra.mxu0 0
  %2586 = vmatprep.subr.bf16.mxu0 0
  %2587 = vmatpush1.bf16.msra.mxu0 0
  %2588 = vmatprep.subr.bf16.mxu0 0
  %2589 = vmatpush1.bf16.msra.mxu0 0
  %2590 = vmatprep.subr.bf16.mxu0 0
  %2591 = vmatpush1.bf16.msra.mxu0 0
  %2592 = vmatprep.subr.bf16.mxu0 0
  %2593 = vmatpush1.bf16.msra.mxu0 0
  %2594 = vmatprep.subr.bf16.mxu0 0
  %2595 = vmatpush1.bf16.msra.mxu0 0
  %2596 = vmatprep.subr.bf16.mxu0 0
  %2597 = vmatpush1.bf16.msra.mxu0 0
  %2598 = vmatprep.mubr.bf16.mxu0 0
  %2599 = vmatmul.mubr.bf16.gmra.mrb[0].mxu0 %v2496
  %v2600 = vpop.f32.mrb[0].mxu0
  %v2601 = vadd.f32 %v190, %v2600
  %v2602 = vpop.f32.mrb[0].mxu0
  %v2603 = vadd.f32 %v194, %v2602
  %v2604 = vpop.f32.mrb[0].mxu0
  %v2605 = vpop.f32.mrb[0].mxu0
  %2606 = vdwg.mxu0
  %2607 = vmatprep.subr.bf16.mxu0 0
  %2608 = vmatpush1.bf16.msra.mxu0 %v284
  %2609 = vmatprep.subr.bf16.mxu0 0
  %2610 = vmatpush1.bf16.msra.mxu0 %v287
  %2611 = vmatprep.subr.bf16.mxu0 0
  %2612 = vmatpush1.bf16.msra.mxu0 %v290
  %2613 = vmatprep.subr.bf16.mxu0 0
  %2614 = vmatpush1.bf16.msra.mxu0 %v293
  %2615 = vmatprep.subr.bf16.mxu0 0
  %2616 = vmatpush1.bf16.msra.mxu0 %v296
  %2617 = vmatprep.subr.bf16.mxu0 0
  %2618 = vmatpush1.bf16.msra.mxu0 %v299
  %2619 = vmatprep.subr.bf16.mxu0 0
  %2620 = vmatpush1.bf16.msra.mxu0 %v302
  %2621 = vmatprep.subr.bf16.mxu0 0
  %2622 = vmatpush1.bf16.msra.mxu0 %v305
  %2623 = vmatprep.subr.bf16.mxu0 0
  %2624 = vmatpush1.bf16.msra.mxu0 0
  %2625 = vmatprep.subr.bf16.mxu0 0
  %2626 = vmatpush1.bf16.msra.mxu0 0
  %2627 = vmatprep.subr.bf16.mxu0 0
  %2628 = vmatpush1.bf16.msra.mxu0 0
  %2629 = vmatprep.subr.bf16.mxu0 0
  %2630 = vmatpush1.bf16.msra.mxu0 0
  %2631 = vmatprep.subr.bf16.mxu0 0
  %2632 = vmatpush1.bf16.msra.mxu0 0
  %2633 = vmatprep.subr.bf16.mxu0 0
  %2634 = vmatpush1.bf16.msra.mxu0 0
  %2635 = vmatprep.subr.bf16.mxu0 0
  %2636 = vmatpush1.bf16.msra.mxu0 0
  %2637 = vmatprep.subr.bf16.mxu0 0
  %2638 = vmatpush1.bf16.msra.mxu0 0
  %2639 = vmatprep.mubr.bf16.mxu0 0
  %2640 = vmatmul.mubr.bf16.gmra.mrb[0].mxu0 %v2496
  %v2641 = vpop.f32.mrb[0].mxu0
  %v2642 = vadd.f32 %v198, %v2641
  %v2643 = vpop.f32.mrb[0].mxu0
  %v2644 = vpop.f32.mrb[0].mxu0
  %v2645 = vpop.f32.mrb[0].mxu0
  %2646 = vdwg.mxu0
  %v2647 = vadd.f32 %v2563, %v2601
  %v2648 = vadd.f32 %v2564, %v2603
  %v2649 = vsub.f32 0.0, %v2647
  %v2650 = vsub.f32 0.0, %v2648
  %v2651 = vmul.f32 %v2649, 1.442695
  %v2652 = vpow.pop %v2651
  %v2653 = vmul.f32 %v2650, 1.442695
  %v2654 = vpow.pop %v2653
  %v2655 = vadd.f32 %v2652, 1.0
  %v2656 = vadd.f32 %v2654, 1.0
  %v2657 = vrcp.pop %v2655
  %v2658 = vmul.f32 1.0, %v2657
  %v2659 = vrcp.pop %v2656
  %v2660 = vmul.f32 1.0, %v2659
  %v2661 = vmul.f32 %v2658, %v2642
  %v2662 = vadd.f32 %v2565, %v2661
  %v2663 = vtanh.pop %v2662
  %v2664 = vsub.f32 1.0, %v2660
  %v2665 = vmul.f32 %v2664, %v2663
  %v2666 = vmul.f32 %v2660, %v2495
  %v2667 = vadd.f32 %v2665, %v2666
  %v2668 = vpack.c.bf16 %v2667, %v2667
  %s2669 = scalar_lea.vmem %s4, 13
  %2670 = vst.msk [vmem:[%s2669] sm:$0x1] %vm433, %v2668
  %v2673 = vunpack.c.l.s4 1966171168
  %v2674 = vunpack.c.0.s8 %v2673
  %v2675 = vlaneseq
  %v2676 = vshrl.u32 %v2675, 7
  %v2677 = vsub.s32 %v2674, %v2676
  %v2678 = vrot.slane %v2668, %v2677
  %v2680 = vunpack.c.l.s4 1966171168
  %v2681 = vunpack.c.0.s8 %v2680
  %v2682 = vlaneseq
  %v2683 = vshrl.u32 %v2682, 7
  %v2684 = vsub.s32 %v2681, %v2683
  %v2685 = vrot.slane %v2678, %v2684
  %2686 = vrot.lane.b32.xlu0 %v2685, 64
  %v2687 = vpop.permute.xlu0 %2686
  %s2689 = scalar_lea.vmem %s53, 2
  %2690 = vst.msk [vmem:[%s2689] sm:$0x1] %vm433, %v2687
  %s2691 = scalar_lea.vmem %s0, 84
  %v2692 = vld [vmem:[%s2691] sm:$0x3f]
  %s2693 = scalar_lea.vmem %s46, 6
  %v2694 = vld [vmem:[%s2693] sm:$0x3f]
  %v2696 = vcombine.high %v2692, %v2692
  %v2698 = vunpack.c.l.s4 1983009808
  %v2699 = vunpack.c.0.s8 %v2698
  %v2700 = vlaneseq
  %v2701 = vshrl.u32 %v2700, 7
  %v2702 = vsub.s32 %v2699, %v2701
  %v2703 = vrot.slane %v2692, %v2702
  %v2705 = vunpack.c.l.s4 1983009808
  %v2706 = vunpack.c.0.s8 %v2705
  %v2707 = vlaneseq
  %v2708 = vshrl.u32 %v2707, 7
  %v2709 = vsub.s32 %v2706, %v2708
  %v2710 = vrot.slane %v2696, %v2709
  %v2711 = vcombine.high %v2703, %v2703
  %v2716 = vcombine.high %v2694, %v2694
  %v2718 = vunpack.c.l.s4 1983009808
  %v2719 = vunpack.c.0.s8 %v2718
  %v2720 = vlaneseq
  %v2721 = vshrl.u32 %v2720, 7
  %v2722 = vsub.s32 %v2719, %v2721
  %v2723 = vrot.slane %v2694, %v2722
  %v2725 = vunpack.c.l.s4 1983009808
  %v2726 = vunpack.c.0.s8 %v2725
  %v2727 = vlaneseq
  %v2728 = vshrl.u32 %v2727, 7
  %v2729 = vsub.s32 %v2726, %v2728
  %v2730 = vrot.slane %v2716, %v2729
  %v2731 = vcombine.high %v2723, %v2723
  %v2735 = vsel %vm135, %v2703, %v2723
  %v2736 = vsel %vm136, %v2711, %v2731
  %v2737 = vsel %vm137, %v2710, %v2730
  %2738 = vmatprep.subr.bf16.mxu0 %v283
  %2739 = vmatpush1.bf16.msra.mxu0 %v282
  %2740 = vmatprep.subr.bf16.mxu0 %v286
  %2741 = vmatpush1.bf16.msra.mxu0 %v285
  %2742 = vmatprep.subr.bf16.mxu0 %v289
  %2743 = vmatpush1.bf16.msra.mxu0 %v288
  %2744 = vmatprep.subr.bf16.mxu0 %v292
  %2745 = vmatpush1.bf16.msra.mxu0 %v291
  %2746 = vmatprep.subr.bf16.mxu0 %v295
  %2747 = vmatpush1.bf16.msra.mxu0 %v294
  %2748 = vmatprep.subr.bf16.mxu0 %v298
  %2749 = vmatpush1.bf16.msra.mxu0 %v297
  %2750 = vmatprep.subr.bf16.mxu0 %v301
  %2751 = vmatpush1.bf16.msra.mxu0 %v300
  %2752 = vmatprep.subr.bf16.mxu0 %v304
  %2753 = vmatpush1.bf16.msra.mxu0 %v303
  %2754 = vmatprep.subr.bf16.mxu0 0
  %2755 = vmatpush1.bf16.msra.mxu0 0
  %2756 = vmatprep.subr.bf16.mxu0 0
  %2757 = vmatpush1.bf16.msra.mxu0 0
  %2758 = vmatprep.subr.bf16.mxu0 0
  %2759 = vmatpush1.bf16.msra.mxu0 0
  %2760 = vmatprep.subr.bf16.mxu0 0
  %2761 = vmatpush1.bf16.msra.mxu0 0
  %2762 = vmatprep.subr.bf16.mxu0 0
  %2763 = vmatpush1.bf16.msra.mxu0 0
  %2764 = vmatprep.subr.bf16.mxu0 0
  %2765 = vmatpush1.bf16.msra.mxu0 0
  %2766 = vmatprep.subr.bf16.mxu0 0
  %2767 = vmatpush1.bf16.msra.mxu0 0
  %2768 = vmatprep.subr.bf16.mxu0 0
  %2769 = vmatpush1.bf16.msra.mxu0 0
  %2770 = vmatprep.mubr.bf16.mxu0 0
  %2771 = vmatmul.mubr.bf16.gmra.mrb[0].mxu0 %v2668
  %v2772 = vpop.f32.mrb[0].mxu0
  %v2773 = vadd.f32 %v190, %v2772
  %v2774 = vpop.f32.mrb[0].mxu0
  %v2775 = vadd.f32 %v194, %v2774
  %v2776 = vpop.f32.mrb[0].mxu0
  %v2777 = vpop.f32.mrb[0].mxu0
  %2778 = vdwg.mxu0
  %2779 = vmatprep.subr.bf16.mxu0 0
  %2780 = vmatpush1.bf16.msra.mxu0 %v284
  %2781 = vmatprep.subr.bf16.mxu0 0
  %2782 = vmatpush1.bf16.msra.mxu0 %v287
  %2783 = vmatprep.subr.bf16.mxu0 0
  %2784 = vmatpush1.bf16.msra.mxu0 %v290
  %2785 = vmatprep.subr.bf16.mxu0 0
  %2786 = vmatpush1.bf16.msra.mxu0 %v293
  %2787 = vmatprep.subr.bf16.mxu0 0
  %2788 = vmatpush1.bf16.msra.mxu0 %v296
  %2789 = vmatprep.subr.bf16.mxu0 0
  %2790 = vmatpush1.bf16.msra.mxu0 %v299
  %2791 = vmatprep.subr.bf16.mxu0 0
  %2792 = vmatpush1.bf16.msra.mxu0 %v302
  %2793 = vmatprep.subr.bf16.mxu0 0
  %2794 = vmatpush1.bf16.msra.mxu0 %v305
  %2795 = vmatprep.subr.bf16.mxu0 0
  %2796 = vmatpush1.bf16.msra.mxu0 0
  %2797 = vmatprep.subr.bf16.mxu0 0
  %2798 = vmatpush1.bf16.msra.mxu0 0
  %2799 = vmatprep.subr.bf16.mxu0 0
  %2800 = vmatpush1.bf16.msra.mxu0 0
  %2801 = vmatprep.subr.bf16.mxu0 0
  %2802 = vmatpush1.bf16.msra.mxu0 0
  %2803 = vmatprep.subr.bf16.mxu0 0
  %2804 = vmatpush1.bf16.msra.mxu0 0
  %2805 = vmatprep.subr.bf16.mxu0 0
  %2806 = vmatpush1.bf16.msra.mxu0 0
  %2807 = vmatprep.subr.bf16.mxu0 0
  %2808 = vmatpush1.bf16.msra.mxu0 0
  %2809 = vmatprep.subr.bf16.mxu0 0
  %2810 = vmatpush1.bf16.msra.mxu0 0
  %2811 = vmatprep.mubr.bf16.mxu0 0
  %2812 = vmatmul.mubr.bf16.gmra.mrb[0].mxu0 %v2668
  %v2813 = vpop.f32.mrb[0].mxu0
  %v2814 = vadd.f32 %v198, %v2813
  %v2815 = vpop.f32.mrb[0].mxu0
  %v2816 = vpop.f32.mrb[0].mxu0
  %v2817 = vpop.f32.mrb[0].mxu0
  %2818 = vdwg.mxu0
  %v2819 = vadd.f32 %v2735, %v2773
  %v2820 = vadd.f32 %v2736, %v2775
  %v2821 = vsub.f32 0.0, %v2819
  %v2822 = vsub.f32 0.0, %v2820
  %v2823 = vmul.f32 %v2821, 1.442695
  %v2824 = vpow.pop %v2823
  %v2825 = vmul.f32 %v2822, 1.442695
  %v2826 = vpow.pop %v2825
  %v2827 = vadd.f32 %v2824, 1.0
  %v2828 = vadd.f32 %v2826, 1.0
  %v2829 = vrcp.pop %v2827
  %v2830 = vmul.f32 1.0, %v2829
  %v2831 = vrcp.pop %v2828
  %v2832 = vmul.f32 1.0, %v2831
  %v2833 = vmul.f32 %v2830, %v2814
  %v2834 = vadd.f32 %v2737, %v2833
  %v2835 = vtanh.pop %v2834
  %v2836 = vsub.f32 1.0, %v2832
  %v2837 = vmul.f32 %v2836, %v2835
  %v2838 = vmul.f32 %v2832, %v2667
  %v2839 = vadd.f32 %v2837, %v2838
  %v2840 = vpack.c.bf16 %v2839, %v2839
  %s2841 = scalar_lea.vmem %s4, 14
  %2842 = vst.msk [vmem:[%s2841] sm:$0x1] %vm433, %v2840
  %v2845 = vunpack.c.l.s4 1966171168
  %v2846 = vunpack.c.0.s8 %v2845
  %v2847 = vlaneseq
  %v2848 = vshrl.u32 %v2847, 7
  %v2849 = vsub.s32 %v2846, %v2848
  %v2850 = vrot.slane %v2840, %v2849
  %v2852 = vunpack.c.l.s4 1966171168
  %v2853 = vunpack.c.0.s8 %v2852
  %v2854 = vlaneseq
  %v2855 = vshrl.u32 %v2854, 7
  %v2856 = vsub.s32 %v2853, %v2855
  %v2857 = vrot.slane %v2850, %v2856
  %2858 = vrot.lane.b32.xlu0 %v2857, 64
  %v2859 = vpop.permute.xlu0 %2858
  %s2861 = scalar_lea.vmem %s53, 1
  %2862 = vst.msk [vmem:[%s2861] sm:$0x1] %vm433, %v2859
  %s2863 = scalar_lea.vmem %s0, 90
  %v2864 = vld [vmem:[%s2863] sm:$0x3f]
  %v2865 = vld [vmem:[%s46] sm:$0x3f]
  %v2867 = vcombine.high %v2864, %v2864
  %v2869 = vunpack.c.l.s4 1983009808
  %v2870 = vunpack.c.0.s8 %v2869
  %v2871 = vlaneseq
  %v2872 = vshrl.u32 %v2871, 7
  %v2873 = vsub.s32 %v2870, %v2872
  %v2874 = vrot.slane %v2864, %v2873
  %v2876 = vunpack.c.l.s4 1983009808
  %v2877 = vunpack.c.0.s8 %v2876
  %v2878 = vlaneseq
  %v2879 = vshrl.u32 %v2878, 7
  %v2880 = vsub.s32 %v2877, %v2879
  %v2881 = vrot.slane %v2867, %v2880
  %v2882 = vcombine.high %v2874, %v2874
  %v2887 = vcombine.high %v2865, %v2865
  %v2889 = vunpack.c.l.s4 1983009808
  %v2890 = vunpack.c.0.s8 %v2889
  %v2891 = vlaneseq
  %v2892 = vshrl.u32 %v2891, 7
  %v2893 = vsub.s32 %v2890, %v2892
  %v2894 = vrot.slane %v2865, %v2893
  %v2896 = vunpack.c.l.s4 1983009808
  %v2897 = vunpack.c.0.s8 %v2896
  %v2898 = vlaneseq
  %v2899 = vshrl.u32 %v2898, 7
  %v2900 = vsub.s32 %v2897, %v2899
  %v2901 = vrot.slane %v2887, %v2900
  %v2902 = vcombine.high %v2894, %v2894
  %v2906 = vsel %vm135, %v2874, %v2894
  %v2907 = vsel %vm136, %v2882, %v2902
  %v2908 = vsel %vm137, %v2881, %v2901
  %2909 = vmatprep.subr.bf16.mxu0 %v283
  %2910 = vmatpush1.bf16.msra.mxu0 %v282
  %2911 = vmatprep.subr.bf16.mxu0 %v286
  %2912 = vmatpush1.bf16.msra.mxu0 %v285
  %2913 = vmatprep.subr.bf16.mxu0 %v289
  %2914 = vmatpush1.bf16.msra.mxu0 %v288
  %2915 = vmatprep.subr.bf16.mxu0 %v292
  %2916 = vmatpush1.bf16.msra.mxu0 %v291
  %2917 = vmatprep.subr.bf16.mxu0 %v295
  %2918 = vmatpush1.bf16.msra.mxu0 %v294
  %2919 = vmatprep.subr.bf16.mxu0 %v298
  %2920 = vmatpush1.bf16.msra.mxu0 %v297
  %2921 = vmatprep.subr.bf16.mxu0 %v301
  %2922 = vmatpush1.bf16.msra.mxu0 %v300
  %2923 = vmatprep.subr.bf16.mxu0 %v304
  %2924 = vmatpush1.bf16.msra.mxu0 %v303
  %2925 = vmatprep.subr.bf16.mxu0 0
  %2926 = vmatpush1.bf16.msra.mxu0 0
  %2927 = vmatprep.subr.bf16.mxu0 0
  %2928 = vmatpush1.bf16.msra.mxu0 0
  %2929 = vmatprep.subr.bf16.mxu0 0
  %2930 = vmatpush1.bf16.msra.mxu0 0
  %2931 = vmatprep.subr.bf16.mxu0 0
  %2932 = vmatpush1.bf16.msra.mxu0 0
  %2933 = vmatprep.subr.bf16.mxu0 0
  %2934 = vmatpush1.bf16.msra.mxu0 0
  %2935 = vmatprep.subr.bf16.mxu0 0
  %2936 = vmatpush1.bf16.msra.mxu0 0
  %2937 = vmatprep.subr.bf16.mxu0 0
  %2938 = vmatpush1.bf16.msra.mxu0 0
  %2939 = vmatprep.subr.bf16.mxu0 0
  %2940 = vmatpush1.bf16.msra.mxu0 0
  %2941 = vmatprep.mubr.bf16.mxu0 0
  %2942 = vmatmul.mubr.bf16.gmra.mrb[0].mxu0 %v2840
  %v2943 = vpop.f32.mrb[0].mxu0
  %v2944 = vadd.f32 %v190, %v2943
  %v2945 = vpop.f32.mrb[0].mxu0
  %v2946 = vadd.f32 %v194, %v2945
  %v2947 = vpop.f32.mrb[0].mxu0
  %v2948 = vpop.f32.mrb[0].mxu0
  %2949 = vdwg.mxu0
  %2950 = vmatprep.subr.bf16.mxu0 0
  %2951 = vmatpush1.bf16.msra.mxu0 %v284
  %2952 = vmatprep.subr.bf16.mxu0 0
  %2953 = vmatpush1.bf16.msra.mxu0 %v287
  %2954 = vmatprep.subr.bf16.mxu0 0
  %2955 = vmatpush1.bf16.msra.mxu0 %v290
  %2956 = vmatprep.subr.bf16.mxu0 0
  %2957 = vmatpush1.bf16.msra.mxu0 %v293
  %2958 = vmatprep.subr.bf16.mxu0 0
  %2959 = vmatpush1.bf16.msra.mxu0 %v296
  %2960 = vmatprep.subr.bf16.mxu0 0
  %2961 = vmatpush1.bf16.msra.mxu0 %v299
  %2962 = vmatprep.subr.bf16.mxu0 0
  %2963 = vmatpush1.bf16.msra.mxu0 %v302
  %2964 = vmatprep.subr.bf16.mxu0 0
  %2965 = vmatpush1.bf16.msra.mxu0 %v305
  %2966 = vmatprep.subr.bf16.mxu0 0
  %2967 = vmatpush1.bf16.msra.mxu0 0
  %2968 = vmatprep.subr.bf16.mxu0 0
  %2969 = vmatpush1.bf16.msra.mxu0 0
  %2970 = vmatprep.subr.bf16.mxu0 0
  %2971 = vmatpush1.bf16.msra.mxu0 0
  %2972 = vmatprep.subr.bf16.mxu0 0
  %2973 = vmatpush1.bf16.msra.mxu0 0
  %2974 = vmatprep.subr.bf16.mxu0 0
  %2975 = vmatpush1.bf16.msra.mxu0 0
  %2976 = vmatprep.subr.bf16.mxu0 0
  %2977 = vmatpush1.bf16.msra.mxu0 0
  %2978 = vmatprep.subr.bf16.mxu0 0
  %2979 = vmatpush1.bf16.msra.mxu0 0
  %2980 = vmatprep.subr.bf16.mxu0 0
  %2981 = vmatpush1.bf16.msra.mxu0 0
  %2982 = vmatprep.mubr.bf16.mxu0 0
  %2983 = vmatmul.mubr.bf16.gmra.mrb[0].mxu0 %v2840
  %v2984 = vpop.f32.mrb[0].mxu0
  %v2985 = vadd.f32 %v198, %v2984
  %v2986 = vpop.f32.mrb[0].mxu0
  %v2987 = vpop.f32.mrb[0].mxu0
  %v2988 = vpop.f32.mrb[0].mxu0
  %2989 = vdwg.mxu0
  %v2990 = vadd.f32 %v2906, %v2944
  %v2991 = vadd.f32 %v2907, %v2946
  %v2992 = vsub.f32 0.0, %v2990
  %v2993 = vsub.f32 0.0, %v2991
  %v2994 = vmul.f32 %v2992, 1.442695
  %v2995 = vpow.pop %v2994
  %v2996 = vmul.f32 %v2993, 1.442695
  %v2997 = vpow.pop %v2996
  %v2998 = vadd.f32 %v2995, 1.0
  %v2999 = vadd.f32 %v2997, 1.0
  %v3000 = vrcp.pop %v2998
  %v3001 = vmul.f32 1.0, %v3000
  %v3002 = vrcp.pop %v2999
  %v3003 = vmul.f32 1.0, %v3002
  %v3004 = vmul.f32 %v3001, %v2985
  %v3005 = vadd.f32 %v2908, %v3004
  %v3006 = vtanh.pop %v3005
  %v3007 = vsub.f32 1.0, %v3003
  %v3008 = vmul.f32 %v3007, %v3006
  %v3009 = vmul.f32 %v3003, %v2839
  %v3010 = vadd.f32 %v3008, %v3009
  %v3011 = vpack.c.bf16 %v3010, %v3010
  %s3012 = scalar_lea.vmem %s4, 15
  %3013 = vst.msk [vmem:[%s3012] sm:$0x1] %vm433, %v3011
  %v3016 = vunpack.c.l.s4 1966171168
  %v3017 = vunpack.c.0.s8 %v3016
  %v3018 = vlaneseq
  %v3019 = vshrl.u32 %v3018, 7
  %v3020 = vsub.s32 %v3017, %v3019
  %v3021 = vrot.slane %v3011, %v3020
  %v3023 = vunpack.c.l.s4 1966171168
  %v3024 = vunpack.c.0.s8 %v3023
  %v3025 = vlaneseq
  %v3026 = vshrl.u32 %v3025, 7
  %v3027 = vsub.s32 %v3024, %v3026
  %v3028 = vrot.slane %v3021, %v3027
  %3029 = vrot.lane.b32.xlu0 %v3028, 64
  %v3030 = vpop.permute.xlu0 %3029
  %3032 = vst.msk [vmem:[%s53] sm:$0x1] %vm433, %v3030
  %3033 = vst [vmem:[#allocation2] sm:$0x3] %v3010
  %s3034 = ssub.s32 0, 0
  %s3035 = smul.u32 16, %s3034
  %p3036 = scmp.lt.s32.totalorder %s3035, 15
  %s3037 = scalar_select %p3036, %s3035, 15
  %s3038 = scalar_lea.vmem %s5, %s3037
  // Predicated region
  $region22: #{bigru_forward.5} parent=0 // pred_check
    _
  $region23: #{bigru_forward.5} parent=0 // pred_check_branch
    %3040 = sbr.rel (0) target = $region25
  $region24: #{bigru_forward.5} parent=0 // pred_region
    _
  $region25: #{bigru_forward.5} parent=0 // pred_fallthru
    _
  // Predicated region
  $region26: #{bigru_forward.5} parent=0 // pred_check
    _
  $region27: #{bigru_forward.5} parent=0 // pred_check_branch
    %3042 = sbr.rel (0) target = $region29
  $region28: #{bigru_forward.5} parent=0 // pred_region
    %s3043 = ssub.s32 0, 0
    %s3044 = smul.u32 16, %s3043
  $region29: #{bigru_forward.5} parent=0 // pred_fallthru
    _
  // Predicated region
  $region30: #{bigru_forward.5} parent=0 // pred_check
    _
  $region31: #{bigru_forward.5} parent=0 // pred_check_branch
    %3046 = sbr.rel (0) target = $region33
  $region32: #{bigru_forward.5} parent=0 // pred_region
    _
  $region33: #{bigru_forward.5} parent=0 // pred_fallthru
    _
  // Predicated region
  $region34: #{bigru_forward.5} parent=0 // pred_check
    _
  $region35: #{bigru_forward.5} parent=0 // pred_check_branch
    %3048 = sbr.rel (0) target = $region37
  $region36: #{bigru_forward.5} parent=0 // pred_region
    %s3049 = ssub.s32 0, 0
    %s3050 = smul.u32 16, %s3049
    %p3051 = scmp.lt.s32.totalorder %s3050, 15
    %s3052 = scalar_select %p3051, %s3050, 15
    %s3053 = scalar_lea.vmem %s5, %s3052
  $region37: #{bigru_forward.5} parent=0 // pred_fallthru
    _

// kernel: bigru_forward.7
$region0: #{bigru_forward.7}
  #allocation0 [shape = 'u32[]', space=smem, size = 0x4, offset = 0x4, fixed_abs, tag = 'smem constant byte address 0x4 - core index']
  #allocation1 [shape = 'u32[144,128]{1,0:T(1,128)}', space=vmem, size = 0x12000, scoped, tag = 'internal scratch']
  #allocation2 [shape = 'f32[2,128]{1,0:T(2,128)}', space=vmem, size = 0x400, scoped, tag = 'scratch operand']
  #allocation3 [shape = 'f32[2,128]{1,0:T(2,128)}', space=vmem, size = 0x400, scoped, tag = 'scratch operand']
  %s0 = inlined_call_operand.vmem [shape: f32[16,2,384], index: 0, kind: input, shape index: {}, may-alias: {0,1}]
  %s1 = inlined_call_operand.vmem [shape: f32[16,2,384], index: 1, kind: input, shape index: {}, may-alias: {0,1}]
  %s2 = inlined_call_operand.vmem [shape: bf16[128,384], index: 2, kind: input, shape index: {}]
  %s3 = inlined_call_operand.vmem [shape: f32[1,384], index: 3, kind: input, shape index: {}]
  %s4 = inlined_call_operand.vmem [shape: bf16[128,2], index: 4, kind: input, shape index: {}]
  %s5 = inlined_call_operand.vmem [shape: f32[1,2], index: 5, kind: input, shape index: {}]
  %s6 = inlined_call_operand.hbm [shape: f32[2,2], index: 6, kind: output, shape index: {}]
  %s7 = sld [smem:[#allocation0]]
  $region42: #{bigru_forward.7} parent=0
    _
  %s9 = ssub.s32 1, %s7
  %s10 = scalar_select 0, %s9, %s7
  $region1: #{bigru_forward.7} parent=0
    #allocation4 [shape = 'u8[1024]{0}', space=vmem, size = 0x400, scoped, tag = 'output window, operand 0, single buffered']
    #allocation5 [shape = 's32[1]{0}', space=sflag, size = 0x4, scoped, tag = 'scoped memory for bigru_forward.7']
    %11 = vsyncpa [#allocation5], 0
    // Predicated region
    $region2: #{bigru_forward.7} parent=1 // pred_check
      _
    $region3: #{bigru_forward.7} parent=1 // pred_check_branch
      %13 = sbr.rel (0) target = $region5
    $region4: #{bigru_forward.7} parent=1 // pred_region
      _
    $region5: #{bigru_forward.7} parent=1 // pred_fallthru
      _
    // Predicated region
    $region6: #{bigru_forward.7} parent=1 // pred_check
      _
    $region7: #{bigru_forward.7} parent=1 // pred_check_branch
      %15 = sbr.rel (0) target = $region9
    $region8: #{bigru_forward.7} parent=1 // pred_region
      %s16 = ssub.s32 0, 0
      %s17 = smul.u32 16, %s16
      %p18 = scmp.lt.s32.totalorder %s17, 15
      %s19 = scalar_select %p18, %s17, 15
      %s20 = smul.addr %s19, 3
      %s21 = smul.addr %s20, 2
      %s22 = scalar_lea.vmem %s1, %s21
      %s23 = ssub.s32 0, 0
      %s24 = smul.u32 16, %s23
    $region9: #{bigru_forward.7} parent=1 // pred_fallthru
      _
    // Predicated region
    $region10: #{bigru_forward.7} parent=1 // pred_check
      _
    $region11: #{bigru_forward.7} parent=1 // pred_check_branch
      %26 = sbr.rel (0) target = $region13
    $region12: #{bigru_forward.7} parent=1 // pred_region
      _
    $region13: #{bigru_forward.7} parent=1 // pred_fallthru
      _
    // Predicated region
    $region14: #{bigru_forward.7} parent=1 // pred_check
      _
    $region15: #{bigru_forward.7} parent=1 // pred_check_branch
      %28 = sbr.rel (0) target = $region17
    $region16: #{bigru_forward.7} parent=1 // pred_region
      _
    $region17: #{bigru_forward.7} parent=1 // pred_fallthru
      _
    // Predicated region
    $region18: #{bigru_forward.7} parent=1 // pred_check
      _
    $region19: #{bigru_forward.7} parent=1 // pred_check_branch
      %30 = sbr.rel (0) target = $region21
    $region20: #{bigru_forward.7} parent=1 // pred_region
      _
    $region21: #{bigru_forward.7} parent=1 // pred_fallthru
      _
    // Predicated region
    $region22: #{bigru_forward.7} parent=1 // pred_check
      _
    $region23: #{bigru_forward.7} parent=1 // pred_check_branch
      %32 = sbr.rel (0) target = $region25
    $region24: #{bigru_forward.7} parent=1 // pred_region
      _
    $region25: #{bigru_forward.7} parent=1 // pred_fallthru
      _
    %s33 = ssub.s32 0, 0
    %s34 = smul.u32 16, %s33
    %p35 = scmp.lt.s32.totalorder %s34, 15
    %s36 = scalar_select %p35, %s34, 15
    %s37 = smul.addr %s36, 3
    %s38 = smul.addr %s37, 2
    %s39 = scalar_lea.vmem %s1, %s38
    %s40 = ssub.s32 0, 0
    %s41 = smul.u32 16, %s40
    %p42 = scmp.lt.s32.totalorder %s41, 15
    %s43 = scalar_select %p42, %s41, 15
    %s44 = smul.addr %s43, 3
    %s45 = smul.addr %s44, 2
    %s46 = scalar_lea.vmem %s1, %s45
    %s47 = ssub.s32 0, 0
    %s48 = smul.u32 16, %s47
    %p50 = scmp.eq.s32.totalorder 0, 0
    // Predicated region
    $region26: #{bigru_forward.7} parent=1 // pred_check
      %p51 = pneg %p50
    $region27: #{bigru_forward.7} parent=1 // pred_check_branch
      %53 = sbr.rel (%p51) target = $region29
    $region28: #{bigru_forward.7} parent=1 // pred_region
      %54 = vst [vmem:[#allocation2] sm:$0x3] 0.0
      %55 = vst [vmem:[#allocation3] sm:$0x3] 0.0
    $region29: #{bigru_forward.7} parent=1 // pred_fallthru
      _
    %v56 = vld [vmem:[%s2] sm:$0xff]
    %v57 = vld [vmem:[%s2 + $0x8] sm:$0xf]
    %v58 = vld [vmem:[%s2 + $0xc] sm:$0xff]
    %v59 = vld [vmem:[%s2 + $0x14] sm:$0xf]
    %v60 = vld [vmem:[%s2 + $0x18] sm:$0xff]
    %v61 = vld [vmem:[%s2 + $0x20] sm:$0xf]
    %v62 = vld [vmem:[%s2 + $0x24] sm:$0xff]
    %v63 = vld [vmem:[%s2 + $0x2c] sm:$0xf]
    %v64 = vld [vmem:[%s2 + $0x30] sm:$0xff]
    %v65 = vld [vmem:[%s2 + $0x38] sm:$0xf]
    %v66 = vld [vmem:[%s2 + $0x3c] sm:$0xff]
    %v67 = vld [vmem:[%s2 + $0x44] sm:$0xf]
    %v68 = vld [vmem:[%s2 + $0x48] sm:$0xff]
    %v69 = vld [vmem:[%s2 + $0x50] sm:$0xf]
    %v70 = vld [vmem:[%s2 + $0x54] sm:$0xff]
    %v71 = vld [vmem:[%s2 + $0x5c] sm:$0xf]
    %v72 = vld [vmem:[%s2 + $0x60] sm:$0xff]
    %v73 = vld [vmem:[%s2 + $0x68] sm:$0xf]
    %v74 = vld [vmem:[%s2 + $0x6c] sm:$0xff]
    %v75 = vld [vmem:[%s2 + $0x74] sm:$0xf]
    %v76 = vld [vmem:[%s2 + $0x78] sm:$0xff]
    %v77 = vld [vmem:[%s2 + $0x80] sm:$0xf]
    %v78 = vld [vmem:[%s2 + $0x84] sm:$0xff]
    %v79 = vld [vmem:[%s2 + $0x8c] sm:$0xf]
    %v80 = vld [vmem:[%s2 + $0x90] sm:$0xff]
    %v81 = vld [vmem:[%s2 + $0x98] sm:$0xf]
    %v82 = vld [vmem:[%s2 + $0x9c] sm:$0xff]
    %v83 = vld [vmem:[%s2 + $0xa4] sm:$0xf]
    %v84 = vld [vmem:[%s2 + $0xa8] sm:$0xff]
    %v85 = vld [vmem:[%s2 + $0xb0] sm:$0xf]
    %v86 = vld [vmem:[%s2 + $0xb4] sm:$0xff]
    %v87 = vld [vmem:[%s2 + $0xbc] sm:$0xf]
    %v88 = vld [vmem:[%s3] sm:$0x7]
    %v89 = vlaneseq
    %v90 = vand.u32 %v89, 127
    %v91 = vadd.s32 %v90, 128
    %v92 = vadd.s32 %v90, 256
    %vm93 = vcmp.lt.s32.totalorder %v90, 0
    %v94 = vsub.s32 0, %v90
    %v95 = vsel %vm93, %v94, %v90
    %v96 = vshrl.u32 %v95, 7
    %v97 = vand.u32 %v95, 127
    %v98 = vsub.s32 0, %v97
    %v99 = vsel %vm93, %v98, %v97
    %vm100 = vcmp.lt.s32.totalorder %v91, 0
    %v101 = vsub.s32 0, %v91
    %v102 = vsel %vm100, %v101, %v91
    %v103 = vshrl.u32 %v102, 7
    %v104 = vand.u32 %v102, 127
    %v105 = vsub.s32 0, %v104
    %v106 = vsel %vm100, %v105, %v104
    %vm107 = vcmp.lt.s32.totalorder %v92, 0
    %v108 = vsub.s32 0, %v92
    %v109 = vsel %vm107, %v108, %v92
    %v110 = vshrl.u32 %v109, 7
    %v111 = vand.u32 %v109, 127
    %v112 = vsub.s32 0, %v111
    %v113 = vsel %vm107, %v112, %v111
    %vm114 = vcmp.ne.s32.totalorder %v99, 0
    %vm115 = vcmp.ne.s32.totalorder %v106, 0
    %vm116 = vcmp.ne.s32.totalorder %v113, 0
    %vm117 = vcmp.lt.s32.totalorder %v99, 0
    %vm118 = vcmp.lt.s32.totalorder %v106, 0
    %vm119 = vcmp.lt.s32.totalorder %v113, 0
    %vm120 = vmand %vm117, %vm114
    %vm121 = vmand %vm118, %vm115
    %vm122 = vmand %vm119, %vm116
    %v123 = vadd.s32 %v99, 128
    %v124 = vadd.s32 %v106, 128
    %v125 = vadd.s32 %v113, 128
    %v126 = vsel %vm120, %v123, %v99
    %v127 = vsel %vm121, %v124, %v106
    %v128 = vsel %vm122, %v125, %v113
    %vm129 = vcmp.lt.s32.totalorder %v126, 64
    %vm130 = vcmp.lt.s32.totalorder %v127, 64
    %vm131 = vcmp.lt.s32.totalorder %v128, 64
    %v132 = vld [vmem:[#allocation2] sm:$0x3]
    %v133 = vld [vmem:[#allocation3] sm:$0x3]
    %v134 = vld [vmem:[%s0] sm:$0x3f]
    %s135 = scalar_lea.vmem %s46, 90
    %v136 = vld [vmem:[%s135] sm:$0x3f]
    %v138 = vcombine.high %v134, %v134
    %v140 = vunpack.c.l.s4 1983009808
    %v141 = vunpack.c.0.s8 %v140
    %v142 = vlaneseq
    %v143 = vshrl.u32 %v142, 7
    %v144 = vsub.s32 %v141, %v143
    %v145 = vrot.slane %v134, %v144
    %v147 = vunpack.c.l.s4 1983009808
    %v148 = vunpack.c.0.s8 %v147
    %v149 = vlaneseq
    %v150 = vshrl.u32 %v149, 7
    %v151 = vsub.s32 %v148, %v150
    %v152 = vrot.slane %v138, %v151
    %v153 = vcombine.high %v145, %v145
    %v158 = vcombine.high %v136, %v136
    %v160 = vunpack.c.l.s4 1983009808
    %v161 = vunpack.c.0.s8 %v160
    %v162 = vlaneseq
    %v163 = vshrl.u32 %v162, 7
    %v164 = vsub.s32 %v161, %v163
    %v165 = vrot.slane %v136, %v164
    %v167 = vunpack.c.l.s4 1983009808
    %v168 = vunpack.c.0.s8 %v167
    %v169 = vlaneseq
    %v170 = vshrl.u32 %v169, 7
    %v171 = vsub.s32 %v168, %v170
    %v172 = vrot.slane %v158, %v171
    %v173 = vcombine.high %v165, %v165
    %v177 = vsel %vm129, %v145, %v165
    %v178 = vsel %vm130, %v153, %v173
    %v179 = vsel %vm131, %v152, %v172
    %v180 = vpack.c.bf16 %v132, %v132
    %v182 = vlaneseq
    %v183 = vshrl.u32 %v182, 7
    %v184 = vsub.s32 0, %v183
    %v185 = vrot.slane %v88, %v184
    %v186 = vlaneseq
    %v187 = vshrl.u32 %v186, 7
    %v188 = vsub.s32 1, %v187
    %v189 = vrot.slane %v88, %v188
    %v190 = vlaneseq
    %v191 = vshrl.u32 %v190, 7
    %v192 = vsub.s32 2, %v191
    %v193 = vrot.slane %v88, %v192
    %v229 = vunpack.c.l.b16 %v56
    %v230 = vunpack.c.h.b16 %v56
    %v231 = vunpack.c.l.b16 %v57
    %v232 = vunpack.c.l.b16 %v58
    %v233 = vunpack.c.h.b16 %v58
    %v234 = vunpack.c.l.b16 %v59
    %v235 = vunpack.c.l.b16 %v60
    %v236 = vunpack.c.h.b16 %v60
    %v237 = vunpack.c.l.b16 %v61
    %v238 = vunpack.c.l.b16 %v62
    %v239 = vunpack.c.h.b16 %v62
    %v240 = vunpack.c.l.b16 %v63
    %v241 = vunpack.c.l.b16 %v64
    %v242 = vunpack.c.h.b16 %v64
    %v243 = vunpack.c.l.b16 %v65
    %v244 = vunpack.c.l.b16 %v66
    %v245 = vunpack.c.h.b16 %v66
    %v246 = vunpack.c.l.b16 %v67
    %v247 = vunpack.c.l.b16 %v68
    %v248 = vunpack.c.h.b16 %v68
    %v249 = vunpack.c.l.b16 %v69
    %v250 = vunpack.c.l.b16 %v70
    %v251 = vunpack.c.h.b16 %v70
    %v252 = vunpack.c.l.b16 %v71
    %v253 = vunpack.c.l.b16 %v72
    %v254 = vunpack.c.h.b16 %v72
    %v255 = vunpack.c.l.b16 %v73
    %v256 = vunpack.c.l.b16 %v74
    %v257 = vunpack.c.h.b16 %v74
    %v258 = vunpack.c.l.b16 %v75
    %v259 = vunpack.c.l.b16 %v76
    %v260 = vunpack.c.h.b16 %v76
    %v261 = vunpack.c.l.b16 %v77
    %v262 = vunpack.c.l.b16 %v78
    %v263 = vunpack.c.h.b16 %v78
    %v264 = vunpack.c.l.b16 %v79
    %v265 = vunpack.c.l.b16 %v80
    %v266 = vunpack.c.h.b16 %v80
    %v267 = vunpack.c.l.b16 %v81
    %v268 = vunpack.c.l.b16 %v82
    %v269 = vunpack.c.h.b16 %v82
    %v270 = vunpack.c.l.b16 %v83
    %v271 = vunpack.c.l.b16 %v84
    %v272 = vunpack.c.h.b16 %v84
    %v273 = vunpack.c.l.b16 %v85
    %v274 = vunpack.c.l.b16 %v86
    %v275 = vunpack.c.h.b16 %v86
    %v276 = vunpack.c.l.b16 %v87
    %v277 = vpack.c.b16 %v232, %v229
    %v278 = vpack.c.b16 %v233, %v230
    %v279 = vpack.c.b16 %v234, %v231
    %v280 = vpack.c.b16 %v238, %v235
    %v281 = vpack.c.b16 %v239, %v236
    %v282 = vpack.c.b16 %v240, %v237
    %v283 = vpack.c.b16 %v244, %v241
    %v284 = vpack.c.b16 %v245, %v242
    %v285 = vpack.c.b16 %v246, %v243
    %v286 = vpack.c.b16 %v250, %v247
    %v287 = vpack.c.b16 %v251, %v248
    %v288 = vpack.c.b16 %v252, %v249
    %v289 = vpack.c.b16 %v256, %v253
    %v290 = vpack.c.b16 %v257, %v254
    %v291 = vpack.c.b16 %v258, %v255
    %v292 = vpack.c.b16 %v262, %v259
    %v293 = vpack.c.b16 %v263, %v260
    %v294 = vpack.c.b16 %v264, %v261
    %v295 = vpack.c.b16 %v268, %v265
    %v296 = vpack.c.b16 %v269, %v266
    %v297 = vpack.c.b16 %v270, %v267
    %v298 = vpack.c.b16 %v274, %v271
    %v299 = vpack.c.b16 %v275, %v272
    %v300 = vpack.c.b16 %v276, %v273
    %325 = vmatprep.subr.bf16.mxu0 %v278
    %326 = vmatpush1.bf16.msra.mxu0 %v277
    %327 = vmatprep.subr.bf16.mxu0 %v281
    %328 = vmatpush1.bf16.msra.mxu0 %v280
    %329 = vmatprep.subr.bf16.mxu0 %v284
    %330 = vmatpush1.bf16.msra.mxu0 %v283
    %331 = vmatprep.subr.bf16.mxu0 %v287
    %332 = vmatpush1.bf16.msra.mxu0 %v286
    %333 = vmatprep.subr.bf16.mxu0 %v290
    %334 = vmatpush1.bf16.msra.mxu0 %v289
    %335 = vmatprep.subr.bf16.mxu0 %v293
    %336 = vmatpush1.bf16.msra.mxu0 %v292
    %337 = vmatprep.subr.bf16.mxu0 %v296
    %338 = vmatpush1.bf16.msra.mxu0 %v295
    %339 = vmatprep.subr.bf16.mxu0 %v299
    %340 = vmatpush1.bf16.msra.mxu0 %v298
    %341 = vmatprep.subr.bf16.mxu0 0
    %342 = vmatpush1.bf16.msra.mxu0 0
    %343 = vmatprep.subr.bf16.mxu0 0
    %344 = vmatpush1.bf16.msra.mxu0 0
    %345 = vmatprep.subr.bf16.mxu0 0
    %346 = vmatpush1.bf16.msra.mxu0 0
    %347 = vmatprep.subr.bf16.mxu0 0
    %348 = vmatpush1.bf16.msra.mxu0 0
    %349 = vmatprep.subr.bf16.mxu0 0
    %350 = vmatpush1.bf16.msra.mxu0 0
    %351 = vmatprep.subr.bf16.mxu0 0
    %352 = vmatpush1.bf16.msra.mxu0 0
    %353 = vmatprep.subr.bf16.mxu0 0
    %354 = vmatpush1.bf16.msra.mxu0 0
    %355 = vmatprep.subr.bf16.mxu0 0
    %356 = vmatpush1.bf16.msra.mxu0 0
    %357 = vmatprep.mubr.bf16.mxu0 0
    %358 = vmatmul.mubr.bf16.gmra.mrb[0].mxu0 %v180
    %v359 = vpop.f32.mrb[0].mxu0
    %v360 = vadd.f32 %v185, %v359
    %v361 = vpop.f32.mrb[0].mxu0
    %v362 = vadd.f32 %v189, %v361
    %v363 = vpop.f32.mrb[0].mxu0
    %v364 = vpop.f32.mrb[0].mxu0
    %365 = vdwg.mxu0
    %366 = vmatprep.subr.bf16.mxu0 0
    %367 = vmatpush1.bf16.msra.mxu0 %v279
    %368 = vmatprep.subr.bf16.mxu0 0
    %369 = vmatpush1.bf16.msra.mxu0 %v282
    %370 = vmatprep.subr.bf16.mxu0 0
    %371 = vmatpush1.bf16.msra.mxu0 %v285
    %372 = vmatprep.subr.bf16.mxu0 0
    %373 = vmatpush1.bf16.msra.mxu0 %v288
    %374 = vmatprep.subr.bf16.mxu0 0
    %375 = vmatpush1.bf16.msra.mxu0 %v291
    %376 = vmatprep.subr.bf16.mxu0 0
    %377 = vmatpush1.bf16.msra.mxu0 %v294
    %378 = vmatprep.subr.bf16.mxu0 0
    %379 = vmatpush1.bf16.msra.mxu0 %v297
    %380 = vmatprep.subr.bf16.mxu0 0
    %381 = vmatpush1.bf16.msra.mxu0 %v300
    %382 = vmatprep.subr.bf16.mxu0 0
    %383 = vmatpush1.bf16.msra.mxu0 0
    %384 = vmatprep.subr.bf16.mxu0 0
    %385 = vmatpush1.bf16.msra.mxu0 0
    %386 = vmatprep.subr.bf16.mxu0 0
    %387 = vmatpush1.bf16.msra.mxu0 0
    %388 = vmatprep.subr.bf16.mxu0 0
    %389 = vmatpush1.bf16.msra.mxu0 0
    %390 = vmatprep.subr.bf16.mxu0 0
    %391 = vmatpush1.bf16.msra.mxu0 0
    %392 = vmatprep.subr.bf16.mxu0 0
    %393 = vmatpush1.bf16.msra.mxu0 0
    %394 = vmatprep.subr.bf16.mxu0 0
    %395 = vmatpush1.bf16.msra.mxu0 0
    %396 = vmatprep.subr.bf16.mxu0 0
    %397 = vmatpush1.bf16.msra.mxu0 0
    %398 = vmatprep.mubr.bf16.mxu0 0
    %399 = vmatmul.mubr.bf16.gmra.mrb[0].mxu0 %v180
    %v400 = vpop.f32.mrb[0].mxu0
    %v401 = vadd.f32 %v193, %v400
    %v402 = vpop.f32.mrb[0].mxu0
    %v403 = vpop.f32.mrb[0].mxu0
    %v404 = vpop.f32.mrb[0].mxu0
    %405 = vdwg.mxu0
    %v406 = vadd.f32 %v177, %v360
    %v407 = vadd.f32 %v178, %v362
    %v408 = vsub.f32 0.0, %v406
    %v409 = vsub.f32 0.0, %v407
    %v410 = vmul.f32 %v408, 1.442695
    %v411 = vpow.pop %v410
    %v412 = vmul.f32 %v409, 1.442695
    %v413 = vpow.pop %v412
    %v414 = vadd.f32 %v411, 1.0
    %v415 = vadd.f32 %v413, 1.0
    %v416 = vrcp.pop %v414
    %v417 = vmul.f32 1.0, %v416
    %v418 = vrcp.pop %v415
    %v419 = vmul.f32 1.0, %v418
    %v420 = vmul.f32 %v417, %v401
    %v421 = vadd.f32 %v179, %v420
    %v422 = vtanh.pop %v421
    %v423 = vsub.f32 1.0, %v419
    %v424 = vmul.f32 %v423, %v422
    %v425 = vmul.f32 %v419, %v132
    %v426 = vadd.f32 %v424, %v425
    %v427 = vadd.f32 %v133, %v426
    %s428 = scalar_lea.vmem %s0, 6
    %v429 = vld [vmem:[%s428] sm:$0x3f]
    %s430 = scalar_lea.vmem %s46, 84
    %v431 = vld [vmem:[%s430] sm:$0x3f]
    %v433 = vcombine.high %v429, %v429
    %v435 = vunpack.c.l.s4 1983009808
    %v436 = vunpack.c.0.s8 %v435
    %v437 = vlaneseq
    %v438 = vshrl.u32 %v437, 7
    %v439 = vsub.s32 %v436, %v438
    %v440 = vrot.slane %v429, %v439
    %v442 = vunpack.c.l.s4 1983009808
    %v443 = vunpack.c.0.s8 %v442
    %v444 = vlaneseq
    %v445 = vshrl.u32 %v444, 7
    %v446 = vsub.s32 %v443, %v445
    %v447 = vrot.slane %v433, %v446
    %v448 = vcombine.high %v440, %v440
    %v453 = vcombine.high %v431, %v431
    %v455 = vunpack.c.l.s4 1983009808
    %v456 = vunpack.c.0.s8 %v455
    %v457 = vlaneseq
    %v458 = vshrl.u32 %v457, 7
    %v459 = vsub.s32 %v456, %v458
    %v460 = vrot.slane %v431, %v459
    %v462 = vunpack.c.l.s4 1983009808
    %v463 = vunpack.c.0.s8 %v462
    %v464 = vlaneseq
    %v465 = vshrl.u32 %v464, 7
    %v466 = vsub.s32 %v463, %v465
    %v467 = vrot.slane %v453, %v466
    %v468 = vcombine.high %v460, %v460
    %v472 = vsel %vm129, %v440, %v460
    %v473 = vsel %vm130, %v448, %v468
    %v474 = vsel %vm131, %v447, %v467
    %v475 = vpack.c.bf16 %v426, %v426
    %476 = vmatprep.subr.bf16.mxu0 %v278
    %477 = vmatpush1.bf16.msra.mxu0 %v277
    %478 = vmatprep.subr.bf16.mxu0 %v281
    %479 = vmatpush1.bf16.msra.mxu0 %v280
    %480 = vmatprep.subr.bf16.mxu0 %v284
    %481 = vmatpush1.bf16.msra.mxu0 %v283
    %482 = vmatprep.subr.bf16.mxu0 %v287
    %483 = vmatpush1.bf16.msra.mxu0 %v286
    %484 = vmatprep.subr.bf16.mxu0 %v290
    %485 = vmatpush1.bf16.msra.mxu0 %v289
    %486 = vmatprep.subr.bf16.mxu0 %v293
    %487 = vmatpush1.bf16.msra.mxu0 %v292
    %488 = vmatprep.subr.bf16.mxu0 %v296
    %489 = vmatpush1.bf16.msra.mxu0 %v295
    %490 = vmatprep.subr.bf16.mxu0 %v299
    %491 = vmatpush1.bf16.msra.mxu0 %v298
    %492 = vmatprep.subr.bf16.mxu0 0
    %493 = vmatpush1.bf16.msra.mxu0 0
    %494 = vmatprep.subr.bf16.mxu0 0
    %495 = vmatpush1.bf16.msra.mxu0 0
    %496 = vmatprep.subr.bf16.mxu0 0
    %497 = vmatpush1.bf16.msra.mxu0 0
    %498 = vmatprep.subr.bf16.mxu0 0
    %499 = vmatpush1.bf16.msra.mxu0 0
    %500 = vmatprep.subr.bf16.mxu0 0
    %501 = vmatpush1.bf16.msra.mxu0 0
    %502 = vmatprep.subr.bf16.mxu0 0
    %503 = vmatpush1.bf16.msra.mxu0 0
    %504 = vmatprep.subr.bf16.mxu0 0
    %505 = vmatpush1.bf16.msra.mxu0 0
    %506 = vmatprep.subr.bf16.mxu0 0
    %507 = vmatpush1.bf16.msra.mxu0 0
    %508 = vmatprep.mubr.bf16.mxu0 0
    %509 = vmatmul.mubr.bf16.gmra.mrb[0].mxu0 %v475
    %v510 = vpop.f32.mrb[0].mxu0
    %v511 = vadd.f32 %v185, %v510
    %v512 = vpop.f32.mrb[0].mxu0
    %v513 = vadd.f32 %v189, %v512
    %v514 = vpop.f32.mrb[0].mxu0
    %v515 = vpop.f32.mrb[0].mxu0
    %516 = vdwg.mxu0
    %517 = vmatprep.subr.bf16.mxu0 0
    %518 = vmatpush1.bf16.msra.mxu0 %v279
    %519 = vmatprep.subr.bf16.mxu0 0
    %520 = vmatpush1.bf16.msra.mxu0 %v282
    %521 = vmatprep.subr.bf16.mxu0 0
    %522 = vmatpush1.bf16.msra.mxu0 %v285
    %523 = vmatprep.subr.bf16.mxu0 0
    %524 = vmatpush1.bf16.msra.mxu0 %v288
    %525 = vmatprep.subr.bf16.mxu0 0
    %526 = vmatpush1.bf16.msra.mxu0 %v291
    %527 = vmatprep.subr.bf16.mxu0 0
    %528 = vmatpush1.bf16.msra.mxu0 %v294
    %529 = vmatprep.subr.bf16.mxu0 0
    %530 = vmatpush1.bf16.msra.mxu0 %v297
    %531 = vmatprep.subr.bf16.mxu0 0
    %532 = vmatpush1.bf16.msra.mxu0 %v300
    %533 = vmatprep.subr.bf16.mxu0 0
    %534 = vmatpush1.bf16.msra.mxu0 0
    %535 = vmatprep.subr.bf16.mxu0 0
    %536 = vmatpush1.bf16.msra.mxu0 0
    %537 = vmatprep.subr.bf16.mxu0 0
    %538 = vmatpush1.bf16.msra.mxu0 0
    %539 = vmatprep.subr.bf16.mxu0 0
    %540 = vmatpush1.bf16.msra.mxu0 0
    %541 = vmatprep.subr.bf16.mxu0 0
    %542 = vmatpush1.bf16.msra.mxu0 0
    %543 = vmatprep.subr.bf16.mxu0 0
    %544 = vmatpush1.bf16.msra.mxu0 0
    %545 = vmatprep.subr.bf16.mxu0 0
    %546 = vmatpush1.bf16.msra.mxu0 0
    %547 = vmatprep.subr.bf16.mxu0 0
    %548 = vmatpush1.bf16.msra.mxu0 0
    %549 = vmatprep.mubr.bf16.mxu0 0
    %550 = vmatmul.mubr.bf16.gmra.mrb[0].mxu0 %v475
    %v551 = vpop.f32.mrb[0].mxu0
    %v552 = vadd.f32 %v193, %v551
    %v553 = vpop.f32.mrb[0].mxu0
    %v554 = vpop.f32.mrb[0].mxu0
    %v555 = vpop.f32.mrb[0].mxu0
    %556 = vdwg.mxu0
    %v557 = vadd.f32 %v472, %v511
    %v558 = vadd.f32 %v473, %v513
    %v559 = vsub.f32 0.0, %v557
    %v560 = vsub.f32 0.0, %v558
    %v561 = vmul.f32 %v559, 1.442695
    %v562 = vpow.pop %v561
    %v563 = vmul.f32 %v560, 1.442695
    %v564 = vpow.pop %v563
    %v565 = vadd.f32 %v562, 1.0
    %v566 = vadd.f32 %v564, 1.0
    %v567 = vrcp.pop %v565
    %v568 = vmul.f32 1.0, %v567
    %v569 = vrcp.pop %v566
    %v570 = vmul.f32 1.0, %v569
    %v571 = vmul.f32 %v568, %v552
    %v572 = vadd.f32 %v474, %v571
    %v573 = vtanh.pop %v572
    %v574 = vsub.f32 1.0, %v570
    %v575 = vmul.f32 %v574, %v573
    %v576 = vmul.f32 %v570, %v426
    %v577 = vadd.f32 %v575, %v576
    %v578 = vadd.f32 %v427, %v577
    %s579 = scalar_lea.vmem %s0, 12
    %v580 = vld [vmem:[%s579] sm:$0x3f]
    %s581 = scalar_lea.vmem %s46, 78
    %v582 = vld [vmem:[%s581] sm:$0x3f]
    %v584 = vcombine.high %v580, %v580
    %v586 = vunpack.c.l.s4 1983009808
    %v587 = vunpack.c.0.s8 %v586
    %v588 = vlaneseq
    %v589 = vshrl.u32 %v588, 7
    %v590 = vsub.s32 %v587, %v589
    %v591 = vrot.slane %v580, %v590
    %v593 = vunpack.c.l.s4 1983009808
    %v594 = vunpack.c.0.s8 %v593
    %v595 = vlaneseq
    %v596 = vshrl.u32 %v595, 7
    %v597 = vsub.s32 %v594, %v596
    %v598 = vrot.slane %v584, %v597
    %v599 = vcombine.high %v591, %v591
    %v604 = vcombine.high %v582, %v582
    %v606 = vunpack.c.l.s4 1983009808
    %v607 = vunpack.c.0.s8 %v606
    %v608 = vlaneseq
    %v609 = vshrl.u32 %v608, 7
    %v610 = vsub.s32 %v607, %v609
    %v611 = vrot.slane %v582, %v610
    %v613 = vunpack.c.l.s4 1983009808
    %v614 = vunpack.c.0.s8 %v613
    %v615 = vlaneseq
    %v616 = vshrl.u32 %v615, 7
    %v617 = vsub.s32 %v614, %v616
    %v618 = vrot.slane %v604, %v617
    %v619 = vcombine.high %v611, %v611
    %v623 = vsel %vm129, %v591, %v611
    %v624 = vsel %vm130, %v599, %v619
    %v625 = vsel %vm131, %v598, %v618
    %v626 = vpack.c.bf16 %v577, %v577
    %627 = vmatprep.subr.bf16.mxu0 %v278
    %628 = vmatpush1.bf16.msra.mxu0 %v277
    %629 = vmatprep.subr.bf16.mxu0 %v281
    %630 = vmatpush1.bf16.msra.mxu0 %v280
    %631 = vmatprep.subr.bf16.mxu0 %v284
    %632 = vmatpush1.bf16.msra.mxu0 %v283
    %633 = vmatprep.subr.bf16.mxu0 %v287
    %634 = vmatpush1.bf16.msra.mxu0 %v286
    %635 = vmatprep.subr.bf16.mxu0 %v290
    %636 = vmatpush1.bf16.msra.mxu0 %v289
    %637 = vmatprep.subr.bf16.mxu0 %v293
    %638 = vmatpush1.bf16.msra.mxu0 %v292
    %639 = vmatprep.subr.bf16.mxu0 %v296
    %640 = vmatpush1.bf16.msra.mxu0 %v295
    %641 = vmatprep.subr.bf16.mxu0 %v299
    %642 = vmatpush1.bf16.msra.mxu0 %v298
    %643 = vmatprep.subr.bf16.mxu0 0
    %644 = vmatpush1.bf16.msra.mxu0 0
    %645 = vmatprep.subr.bf16.mxu0 0
    %646 = vmatpush1.bf16.msra.mxu0 0
    %647 = vmatprep.subr.bf16.mxu0 0
    %648 = vmatpush1.bf16.msra.mxu0 0
    %649 = vmatprep.subr.bf16.mxu0 0
    %650 = vmatpush1.bf16.msra.mxu0 0
    %651 = vmatprep.subr.bf16.mxu0 0
    %652 = vmatpush1.bf16.msra.mxu0 0
    %653 = vmatprep.subr.bf16.mxu0 0
    %654 = vmatpush1.bf16.msra.mxu0 0
    %655 = vmatprep.subr.bf16.mxu0 0
    %656 = vmatpush1.bf16.msra.mxu0 0
    %657 = vmatprep.subr.bf16.mxu0 0
    %658 = vmatpush1.bf16.msra.mxu0 0
    %659 = vmatprep.mubr.bf16.mxu0 0
    %660 = vmatmul.mubr.bf16.gmra.mrb[0].mxu0 %v626
    %v661 = vpop.f32.mrb[0].mxu0
    %v662 = vadd.f32 %v185, %v661
    %v663 = vpop.f32.mrb[0].mxu0
    %v664 = vadd.f32 %v189, %v663
    %v665 = vpop.f32.mrb[0].mxu0
    %v666 = vpop.f32.mrb[0].mxu0
    %667 = vdwg.mxu0
    %668 = vmatprep.subr.bf16.mxu0 0
    %669 = vmatpush1.bf16.msra.mxu0 %v279
    %670 = vmatprep.subr.bf16.mxu0 0
    %671 = vmatpush1.bf16.msra.mxu0 %v282
    %672 = vmatprep.subr.bf16.mxu0 0
    %673 = vmatpush1.bf16.msra.mxu0 %v285
    %674 = vmatprep.subr.bf16.mxu0 0
    %675 = vmatpush1.bf16.msra.mxu0 %v288
    %676 = vmatprep.subr.bf16.mxu0 0
    %677 = vmatpush1.bf16.msra.mxu0 %v291
    %678 = vmatprep.subr.bf16.mxu0 0
    %679 = vmatpush1.bf16.msra.mxu0 %v294
    %680 = vmatprep.subr.bf16.mxu0 0
    %681 = vmatpush1.bf16.msra.mxu0 %v297
    %682 = vmatprep.subr.bf16.mxu0 0
    %683 = vmatpush1.bf16.msra.mxu0 %v300
    %684 = vmatprep.subr.bf16.mxu0 0
    %685 = vmatpush1.bf16.msra.mxu0 0
    %686 = vmatprep.subr.bf16.mxu0 0
    %687 = vmatpush1.bf16.msra.mxu0 0
    %688 = vmatprep.subr.bf16.mxu0 0
    %689 = vmatpush1.bf16.msra.mxu0 0
    %690 = vmatprep.subr.bf16.mxu0 0
    %691 = vmatpush1.bf16.msra.mxu0 0
    %692 = vmatprep.subr.bf16.mxu0 0
    %693 = vmatpush1.bf16.msra.mxu0 0
    %694 = vmatprep.subr.bf16.mxu0 0
    %695 = vmatpush1.bf16.msra.mxu0 0
    %696 = vmatprep.subr.bf16.mxu0 0
    %697 = vmatpush1.bf16.msra.mxu0 0
    %698 = vmatprep.subr.bf16.mxu0 0
    %699 = vmatpush1.bf16.msra.mxu0 0
    %700 = vmatprep.mubr.bf16.mxu0 0
    %701 = vmatmul.mubr.bf16.gmra.mrb[0].mxu0 %v626
    %v702 = vpop.f32.mrb[0].mxu0
    %v703 = vadd.f32 %v193, %v702
    %v704 = vpop.f32.mrb[0].mxu0
    %v705 = vpop.f32.mrb[0].mxu0
    %v706 = vpop.f32.mrb[0].mxu0
    %707 = vdwg.mxu0
    %v708 = vadd.f32 %v623, %v662
    %v709 = vadd.f32 %v624, %v664
    %v710 = vsub.f32 0.0, %v708
    %v711 = vsub.f32 0.0, %v709
    %v712 = vmul.f32 %v710, 1.442695
    %v713 = vpow.pop %v712
    %v714 = vmul.f32 %v711, 1.442695
    %v715 = vpow.pop %v714
    %v716 = vadd.f32 %v713, 1.0
    %v717 = vadd.f32 %v715, 1.0
    %v718 = vrcp.pop %v716
    %v719 = vmul.f32 1.0, %v718
    %v720 = vrcp.pop %v717
    %v721 = vmul.f32 1.0, %v720
    %v722 = vmul.f32 %v719, %v703
    %v723 = vadd.f32 %v625, %v722
    %v724 = vtanh.pop %v723
    %v725 = vsub.f32 1.0, %v721
    %v726 = vmul.f32 %v725, %v724
    %v727 = vmul.f32 %v721, %v577
    %v728 = vadd.f32 %v726, %v727
    %v729 = vadd.f32 %v578, %v728
    %s730 = scalar_lea.vmem %s0, 18
    %v731 = vld [vmem:[%s730] sm:$0x3f]
    %s732 = scalar_lea.vmem %s46, 72
    %v733 = vld [vmem:[%s732] sm:$0x3f]
    %v735 = vcombine.high %v731, %v731
    %v737 = vunpack.c.l.s4 1983009808
    %v738 = vunpack.c.0.s8 %v737
    %v739 = vlaneseq
    %v740 = vshrl.u32 %v739, 7
    %v741 = vsub.s32 %v738, %v740
    %v742 = vrot.slane %v731, %v741
    %v744 = vunpack.c.l.s4 1983009808
    %v745 = vunpack.c.0.s8 %v744
    %v746 = vlaneseq
    %v747 = vshrl.u32 %v746, 7
    %v748 = vsub.s32 %v745, %v747
    %v749 = vrot.slane %v735, %v748
    %v750 = vcombine.high %v742, %v742
    %v755 = vcombine.high %v733, %v733
    %v757 = vunpack.c.l.s4 1983009808
    %v758 = vunpack.c.0.s8 %v757
    %v759 = vlaneseq
    %v760 = vshrl.u32 %v759, 7
    %v761 = vsub.s32 %v758, %v760
    %v762 = vrot.slane %v733, %v761
    %v764 = vunpack.c.l.s4 1983009808
    %v765 = vunpack.c.0.s8 %v764
    %v766 = vlaneseq
    %v767 = vshrl.u32 %v766, 7
    %v768 = vsub.s32 %v765, %v767
    %v769 = vrot.slane %v755, %v768
    %v770 = vcombine.high %v762, %v762
    %v774 = vsel %vm129, %v742, %v762
    %v775 = vsel %vm130, %v750, %v770
    %v776 = vsel %vm131, %v749, %v769
    %v777 = vpack.c.bf16 %v728, %v728
    %778 = vmatprep.subr.bf16.mxu0 %v278
    %779 = vmatpush1.bf16.msra.mxu0 %v277
    %780 = vmatprep.subr.bf16.mxu0 %v281
    %781 = vmatpush1.bf16.msra.mxu0 %v280
    %782 = vmatprep.subr.bf16.mxu0 %v284
    %783 = vmatpush1.bf16.msra.mxu0 %v283
    %784 = vmatprep.subr.bf16.mxu0 %v287
    %785 = vmatpush1.bf16.msra.mxu0 %v286
    %786 = vmatprep.subr.bf16.mxu0 %v290
    %787 = vmatpush1.bf16.msra.mxu0 %v289
    %788 = vmatprep.subr.bf16.mxu0 %v293
    %789 = vmatpush1.bf16.msra.mxu0 %v292
    %790 = vmatprep.subr.bf16.mxu0 %v296
    %791 = vmatpush1.bf16.msra.mxu0 %v295
    %792 = vmatprep.subr.bf16.mxu0 %v299
    %793 = vmatpush1.bf16.msra.mxu0 %v298
    %794 = vmatprep.subr.bf16.mxu0 0
    %795 = vmatpush1.bf16.msra.mxu0 0
    %796 = vmatprep.subr.bf16.mxu0 0
    %797 = vmatpush1.bf16.msra.mxu0 0
    %798 = vmatprep.subr.bf16.mxu0 0
    %799 = vmatpush1.bf16.msra.mxu0 0
    %800 = vmatprep.subr.bf16.mxu0 0
    %801 = vmatpush1.bf16.msra.mxu0 0
    %802 = vmatprep.subr.bf16.mxu0 0
    %803 = vmatpush1.bf16.msra.mxu0 0
    %804 = vmatprep.subr.bf16.mxu0 0
    %805 = vmatpush1.bf16.msra.mxu0 0
    %806 = vmatprep.subr.bf16.mxu0 0
    %807 = vmatpush1.bf16.msra.mxu0 0
    %808 = vmatprep.subr.bf16.mxu0 0
    %809 = vmatpush1.bf16.msra.mxu0 0
    %810 = vmatprep.mubr.bf16.mxu0 0
    %811 = vmatmul.mubr.bf16.gmra.mrb[0].mxu0 %v777
    %v812 = vpop.f32.mrb[0].mxu0
    %v813 = vadd.f32 %v185, %v812
    %v814 = vpop.f32.mrb[0].mxu0
    %v815 = vadd.f32 %v189, %v814
    %v816 = vpop.f32.mrb[0].mxu0
    %v817 = vpop.f32.mrb[0].mxu0
    %818 = vdwg.mxu0
    %819 = vmatprep.subr.bf16.mxu0 0
    %820 = vmatpush1.bf16.msra.mxu0 %v279
    %821 = vmatprep.subr.bf16.mxu0 0
    %822 = vmatpush1.bf16.msra.mxu0 %v282
    %823 = vmatprep.subr.bf16.mxu0 0
    %824 = vmatpush1.bf16.msra.mxu0 %v285
    %825 = vmatprep.subr.bf16.mxu0 0
    %826 = vmatpush1.bf16.msra.mxu0 %v288
    %827 = vmatprep.subr.bf16.mxu0 0
    %828 = vmatpush1.bf16.msra.mxu0 %v291
    %829 = vmatprep.subr.bf16.mxu0 0
    %830 = vmatpush1.bf16.msra.mxu0 %v294
    %831 = vmatprep.subr.bf16.mxu0 0
    %832 = vmatpush1.bf16.msra.mxu0 %v297
    %833 = vmatprep.subr.bf16.mxu0 0
    %834 = vmatpush1.bf16.msra.mxu0 %v300
    %835 = vmatprep.subr.bf16.mxu0 0
    %836 = vmatpush1.bf16.msra.mxu0 0
    %837 = vmatprep.subr.bf16.mxu0 0
    %838 = vmatpush1.bf16.msra.mxu0 0
    %839 = vmatprep.subr.bf16.mxu0 0
    %840 = vmatpush1.bf16.msra.mxu0 0
    %841 = vmatprep.subr.bf16.mxu0 0
    %842 = vmatpush1.bf16.msra.mxu0 0
    %843 = vmatprep.subr.bf16.mxu0 0
    %844 = vmatpush1.bf16.msra.mxu0 0
    %845 = vmatprep.subr.bf16.mxu0 0
    %846 = vmatpush1.bf16.msra.mxu0 0
    %847 = vmatprep.subr.bf16.mxu0 0
    %848 = vmatpush1.bf16.msra.mxu0 0
    %849 = vmatprep.subr.bf16.mxu0 0
    %850 = vmatpush1.bf16.msra.mxu0 0
    %851 = vmatprep.mubr.bf16.mxu0 0
    %852 = vmatmul.mubr.bf16.gmra.mrb[0].mxu0 %v777
    %v853 = vpop.f32.mrb[0].mxu0
    %v854 = vadd.f32 %v193, %v853
    %v855 = vpop.f32.mrb[0].mxu0
    %v856 = vpop.f32.mrb[0].mxu0
    %v857 = vpop.f32.mrb[0].mxu0
    %858 = vdwg.mxu0
    %v859 = vadd.f32 %v774, %v813
    %v860 = vadd.f32 %v775, %v815
    %v861 = vsub.f32 0.0, %v859
    %v862 = vsub.f32 0.0, %v860
    %v863 = vmul.f32 %v861, 1.442695
    %v864 = vpow.pop %v863
    %v865 = vmul.f32 %v862, 1.442695
    %v866 = vpow.pop %v865
    %v867 = vadd.f32 %v864, 1.0
    %v868 = vadd.f32 %v866, 1.0
    %v869 = vrcp.pop %v867
    %v870 = vmul.f32 1.0, %v869
    %v871 = vrcp.pop %v868
    %v872 = vmul.f32 1.0, %v871
    %v873 = vmul.f32 %v870, %v854
    %v874 = vadd.f32 %v776, %v873
    %v875 = vtanh.pop %v874
    %v876 = vsub.f32 1.0, %v872
    %v877 = vmul.f32 %v876, %v875
    %v878 = vmul.f32 %v872, %v728
    %v879 = vadd.f32 %v877, %v878
    %v880 = vadd.f32 %v729, %v879
    %s881 = scalar_lea.vmem %s0, 24
    %v882 = vld [vmem:[%s881] sm:$0x3f]
    %s883 = scalar_lea.vmem %s46, 66
    %v884 = vld [vmem:[%s883] sm:$0x3f]
    %v886 = vcombine.high %v882, %v882
    %v888 = vunpack.c.l.s4 1983009808
    %v889 = vunpack.c.0.s8 %v888
    %v890 = vlaneseq
    %v891 = vshrl.u32 %v890, 7
    %v892 = vsub.s32 %v889, %v891
    %v893 = vrot.slane %v882, %v892
    %v895 = vunpack.c.l.s4 1983009808
    %v896 = vunpack.c.0.s8 %v895
    %v897 = vlaneseq
    %v898 = vshrl.u32 %v897, 7
    %v899 = vsub.s32 %v896, %v898
    %v900 = vrot.slane %v886, %v899
    %v901 = vcombine.high %v893, %v893
    %v906 = vcombine.high %v884, %v884
    %v908 = vunpack.c.l.s4 1983009808
    %v909 = vunpack.c.0.s8 %v908
    %v910 = vlaneseq
    %v911 = vshrl.u32 %v910, 7
    %v912 = vsub.s32 %v909, %v911
    %v913 = vrot.slane %v884, %v912
    %v915 = vunpack.c.l.s4 1983009808
    %v916 = vunpack.c.0.s8 %v915
    %v917 = vlaneseq
    %v918 = vshrl.u32 %v917, 7
    %v919 = vsub.s32 %v916, %v918
    %v920 = vrot.slane %v906, %v919
    %v921 = vcombine.high %v913, %v913
    %v925 = vsel %vm129, %v893, %v913
    %v926 = vsel %vm130, %v901, %v921
    %v927 = vsel %vm131, %v900, %v920
    %v928 = vpack.c.bf16 %v879, %v879
    %929 = vmatprep.subr.bf16.mxu0 %v278
    %930 = vmatpush1.bf16.msra.mxu0 %v277
    %931 = vmatprep.subr.bf16.mxu0 %v281
    %932 = vmatpush1.bf16.msra.mxu0 %v280
    %933 = vmatprep.subr.bf16.mxu0 %v284
    %934 = vmatpush1.bf16.msra.mxu0 %v283
    %935 = vmatprep.subr.bf16.mxu0 %v287
    %936 = vmatpush1.bf16.msra.mxu0 %v286
    %937 = vmatprep.subr.bf16.mxu0 %v290
    %938 = vmatpush1.bf16.msra.mxu0 %v289
    %939 = vmatprep.subr.bf16.mxu0 %v293
    %940 = vmatpush1.bf16.msra.mxu0 %v292
    %941 = vmatprep.subr.bf16.mxu0 %v296
    %942 = vmatpush1.bf16.msra.mxu0 %v295
    %943 = vmatprep.subr.bf16.mxu0 %v299
    %944 = vmatpush1.bf16.msra.mxu0 %v298
    %945 = vmatprep.subr.bf16.mxu0 0
    %946 = vmatpush1.bf16.msra.mxu0 0
    %947 = vmatprep.subr.bf16.mxu0 0
    %948 = vmatpush1.bf16.msra.mxu0 0
    %949 = vmatprep.subr.bf16.mxu0 0
    %950 = vmatpush1.bf16.msra.mxu0 0
    %951 = vmatprep.subr.bf16.mxu0 0
    %952 = vmatpush1.bf16.msra.mxu0 0
    %953 = vmatprep.subr.bf16.mxu0 0
    %954 = vmatpush1.bf16.msra.mxu0 0
    %955 = vmatprep.subr.bf16.mxu0 0
    %956 = vmatpush1.bf16.msra.mxu0 0
    %957 = vmatprep.subr.bf16.mxu0 0
    %958 = vmatpush1.bf16.msra.mxu0 0
    %959 = vmatprep.subr.bf16.mxu0 0
    %960 = vmatpush1.bf16.msra.mxu0 0
    %961 = vmatprep.mubr.bf16.mxu0 0
    %962 = vmatmul.mubr.bf16.gmra.mrb[0].mxu0 %v928
    %v963 = vpop.f32.mrb[0].mxu0
    %v964 = vadd.f32 %v185, %v963
    %v965 = vpop.f32.mrb[0].mxu0
    %v966 = vadd.f32 %v189, %v965
    %v967 = vpop.f32.mrb[0].mxu0
    %v968 = vpop.f32.mrb[0].mxu0
    %969 = vdwg.mxu0
    %970 = vmatprep.subr.bf16.mxu0 0
    %971 = vmatpush1.bf16.msra.mxu0 %v279
    %972 = vmatprep.subr.bf16.mxu0 0
    %973 = vmatpush1.bf16.msra.mxu0 %v282
    %974 = vmatprep.subr.bf16.mxu0 0
    %975 = vmatpush1.bf16.msra.mxu0 %v285
    %976 = vmatprep.subr.bf16.mxu0 0
    %977 = vmatpush1.bf16.msra.mxu0 %v288
    %978 = vmatprep.subr.bf16.mxu0 0
    %979 = vmatpush1.bf16.msra.mxu0 %v291
    %980 = vmatprep.subr.bf16.mxu0 0
    %981 = vmatpush1.bf16.msra.mxu0 %v294
    %982 = vmatprep.subr.bf16.mxu0 0
    %983 = vmatpush1.bf16.msra.mxu0 %v297
    %984 = vmatprep.subr.bf16.mxu0 0
    %985 = vmatpush1.bf16.msra.mxu0 %v300
    %986 = vmatprep.subr.bf16.mxu0 0
    %987 = vmatpush1.bf16.msra.mxu0 0
    %988 = vmatprep.subr.bf16.mxu0 0
    %989 = vmatpush1.bf16.msra.mxu0 0
    %990 = vmatprep.subr.bf16.mxu0 0
    %991 = vmatpush1.bf16.msra.mxu0 0
    %992 = vmatprep.subr.bf16.mxu0 0
    %993 = vmatpush1.bf16.msra.mxu0 0
    %994 = vmatprep.subr.bf16.mxu0 0
    %995 = vmatpush1.bf16.msra.mxu0 0
    %996 = vmatprep.subr.bf16.mxu0 0
    %997 = vmatpush1.bf16.msra.mxu0 0
    %998 = vmatprep.subr.bf16.mxu0 0
    %999 = vmatpush1.bf16.msra.mxu0 0
    %1000 = vmatprep.subr.bf16.mxu0 0
    %1001 = vmatpush1.bf16.msra.mxu0 0
    %1002 = vmatprep.mubr.bf16.mxu0 0
    %1003 = vmatmul.mubr.bf16.gmra.mrb[0].mxu0 %v928
    %v1004 = vpop.f32.mrb[0].mxu0
    %v1005 = vadd.f32 %v193, %v1004
    %v1006 = vpop.f32.mrb[0].mxu0
    %v1007 = vpop.f32.mrb[0].mxu0
    %v1008 = vpop.f32.mrb[0].mxu0
    %1009 = vdwg.mxu0
    %v1010 = vadd.f32 %v925, %v964
    %v1011 = vadd.f32 %v926, %v966
    %v1012 = vsub.f32 0.0, %v1010
    %v1013 = vsub.f32 0.0, %v1011
    %v1014 = vmul.f32 %v1012, 1.442695
    %v1015 = vpow.pop %v1014
    %v1016 = vmul.f32 %v1013, 1.442695
    %v1017 = vpow.pop %v1016
    %v1018 = vadd.f32 %v1015, 1.0
    %v1019 = vadd.f32 %v1017, 1.0
    %v1020 = vrcp.pop %v1018
    %v1021 = vmul.f32 1.0, %v1020
    %v1022 = vrcp.pop %v1019
    %v1023 = vmul.f32 1.0, %v1022
    %v1024 = vmul.f32 %v1021, %v1005
    %v1025 = vadd.f32 %v927, %v1024
    %v1026 = vtanh.pop %v1025
    %v1027 = vsub.f32 1.0, %v1023
    %v1028 = vmul.f32 %v1027, %v1026
    %v1029 = vmul.f32 %v1023, %v879
    %v1030 = vadd.f32 %v1028, %v1029
    %v1031 = vadd.f32 %v880, %v1030
    %s1032 = scalar_lea.vmem %s0, 30
    %v1033 = vld [vmem:[%s1032] sm:$0x3f]
    %s1034 = scalar_lea.vmem %s46, 60
    %v1035 = vld [vmem:[%s1034] sm:$0x3f]
    %v1037 = vcombine.high %v1033, %v1033
    %v1039 = vunpack.c.l.s4 1983009808
    %v1040 = vunpack.c.0.s8 %v1039
    %v1041 = vlaneseq
    %v1042 = vshrl.u32 %v1041, 7
    %v1043 = vsub.s32 %v1040, %v1042
    %v1044 = vrot.slane %v1033, %v1043
    %v1046 = vunpack.c.l.s4 1983009808
    %v1047 = vunpack.c.0.s8 %v1046
    %v1048 = vlaneseq
    %v1049 = vshrl.u32 %v1048, 7
    %v1050 = vsub.s32 %v1047, %v1049
    %v1051 = vrot.slane %v1037, %v1050
    %v1052 = vcombine.high %v1044, %v1044
    %v1057 = vcombine.high %v1035, %v1035
    %v1059 = vunpack.c.l.s4 1983009808
    %v1060 = vunpack.c.0.s8 %v1059
    %v1061 = vlaneseq
    %v1062 = vshrl.u32 %v1061, 7
    %v1063 = vsub.s32 %v1060, %v1062
    %v1064 = vrot.slane %v1035, %v1063
    %v1066 = vunpack.c.l.s4 1983009808
    %v1067 = vunpack.c.0.s8 %v1066
    %v1068 = vlaneseq
    %v1069 = vshrl.u32 %v1068, 7
    %v1070 = vsub.s32 %v1067, %v1069
    %v1071 = vrot.slane %v1057, %v1070
    %v1072 = vcombine.high %v1064, %v1064
    %v1076 = vsel %vm129, %v1044, %v1064
    %v1077 = vsel %vm130, %v1052, %v1072
    %v1078 = vsel %vm131, %v1051, %v1071
    %v1079 = vpack.c.bf16 %v1030, %v1030
    %1080 = vmatprep.subr.bf16.mxu0 %v278
    %1081 = vmatpush1.bf16.msra.mxu0 %v277
    %1082 = vmatprep.subr.bf16.mxu0 %v281
    %1083 = vmatpush1.bf16.msra.mxu0 %v280
    %1084 = vmatprep.subr.bf16.mxu0 %v284
    %1085 = vmatpush1.bf16.msra.mxu0 %v283
    %1086 = vmatprep.subr.bf16.mxu0 %v287
    %1087 = vmatpush1.bf16.msra.mxu0 %v286
    %1088 = vmatprep.subr.bf16.mxu0 %v290
    %1089 = vmatpush1.bf16.msra.mxu0 %v289
    %1090 = vmatprep.subr.bf16.mxu0 %v293
    %1091 = vmatpush1.bf16.msra.mxu0 %v292
    %1092 = vmatprep.subr.bf16.mxu0 %v296
    %1093 = vmatpush1.bf16.msra.mxu0 %v295
    %1094 = vmatprep.subr.bf16.mxu0 %v299
    %1095 = vmatpush1.bf16.msra.mxu0 %v298
    %1096 = vmatprep.subr.bf16.mxu0 0
    %1097 = vmatpush1.bf16.msra.mxu0 0
    %1098 = vmatprep.subr.bf16.mxu0 0
    %1099 = vmatpush1.bf16.msra.mxu0 0
    %1100 = vmatprep.subr.bf16.mxu0 0
    %1101 = vmatpush1.bf16.msra.mxu0 0
    %1102 = vmatprep.subr.bf16.mxu0 0
    %1103 = vmatpush1.bf16.msra.mxu0 0
    %1104 = vmatprep.subr.bf16.mxu0 0
    %1105 = vmatpush1.bf16.msra.mxu0 0
    %1106 = vmatprep.subr.bf16.mxu0 0
    %1107 = vmatpush1.bf16.msra.mxu0 0
    %1108 = vmatprep.subr.bf16.mxu0 0
    %1109 = vmatpush1.bf16.msra.mxu0 0
    %1110 = vmatprep.subr.bf16.mxu0 0
    %1111 = vmatpush1.bf16.msra.mxu0 0
    %1112 = vmatprep.mubr.bf16.mxu0 0
    %1113 = vmatmul.mubr.bf16.gmra.mrb[0].mxu0 %v1079
    %v1114 = vpop.f32.mrb[0].mxu0
    %v1115 = vadd.f32 %v185, %v1114
    %v1116 = vpop.f32.mrb[0].mxu0
    %v1117 = vadd.f32 %v189, %v1116
    %v1118 = vpop.f32.mrb[0].mxu0
    %v1119 = vpop.f32.mrb[0].mxu0
    %1120 = vdwg.mxu0
    %1121 = vmatprep.subr.bf16.mxu0 0
    %1122 = vmatpush1.bf16.msra.mxu0 %v279
    %1123 = vmatprep.subr.bf16.mxu0 0
    %1124 = vmatpush1.bf16.msra.mxu0 %v282
    %1125 = vmatprep.subr.bf16.mxu0 0
    %1126 = vmatpush1.bf16.msra.mxu0 %v285
    %1127 = vmatprep.subr.bf16.mxu0 0
    %1128 = vmatpush1.bf16.msra.mxu0 %v288
    %1129 = vmatprep.subr.bf16.mxu0 0
    %1130 = vmatpush1.bf16.msra.mxu0 %v291
    %1131 = vmatprep.subr.bf16.mxu0 0
    %1132 = vmatpush1.bf16.msra.mxu0 %v294
    %1133 = vmatprep.subr.bf16.mxu0 0
    %1134 = vmatpush1.bf16.msra.mxu0 %v297
    %1135 = vmatprep.subr.bf16.mxu0 0
    %1136 = vmatpush1.bf16.msra.mxu0 %v300
    %1137 = vmatprep.subr.bf16.mxu0 0
    %1138 = vmatpush1.bf16.msra.mxu0 0
    %1139 = vmatprep.subr.bf16.mxu0 0
    %1140 = vmatpush1.bf16.msra.mxu0 0
    %1141 = vmatprep.subr.bf16.mxu0 0
    %1142 = vmatpush1.bf16.msra.mxu0 0
    %1143 = vmatprep.subr.bf16.mxu0 0
    %1144 = vmatpush1.bf16.msra.mxu0 0
    %1145 = vmatprep.subr.bf16.mxu0 0
    %1146 = vmatpush1.bf16.msra.mxu0 0
    %1147 = vmatprep.subr.bf16.mxu0 0
    %1148 = vmatpush1.bf16.msra.mxu0 0
    %1149 = vmatprep.subr.bf16.mxu0 0
    %1150 = vmatpush1.bf16.msra.mxu0 0
    %1151 = vmatprep.subr.bf16.mxu0 0
    %1152 = vmatpush1.bf16.msra.mxu0 0
    %1153 = vmatprep.mubr.bf16.mxu0 0
    %1154 = vmatmul.mubr.bf16.gmra.mrb[0].mxu0 %v1079
    %v1155 = vpop.f32.mrb[0].mxu0
    %v1156 = vadd.f32 %v193, %v1155
    %v1157 = vpop.f32.mrb[0].mxu0
    %v1158 = vpop.f32.mrb[0].mxu0
    %v1159 = vpop.f32.mrb[0].mxu0
    %1160 = vdwg.mxu0
    %v1161 = vadd.f32 %v1076, %v1115
    %v1162 = vadd.f32 %v1077, %v1117
    %v1163 = vsub.f32 0.0, %v1161
    %v1164 = vsub.f32 0.0, %v1162
    %v1165 = vmul.f32 %v1163, 1.442695
    %v1166 = vpow.pop %v1165
    %v1167 = vmul.f32 %v1164, 1.442695
    %v1168 = vpow.pop %v1167
    %v1169 = vadd.f32 %v1166, 1.0
    %v1170 = vadd.f32 %v1168, 1.0
    %v1171 = vrcp.pop %v1169
    %v1172 = vmul.f32 1.0, %v1171
    %v1173 = vrcp.pop %v1170
    %v1174 = vmul.f32 1.0, %v1173
    %v1175 = vmul.f32 %v1172, %v1156
    %v1176 = vadd.f32 %v1078, %v1175
    %v1177 = vtanh.pop %v1176
    %v1178 = vsub.f32 1.0, %v1174
    %v1179 = vmul.f32 %v1178, %v1177
    %v1180 = vmul.f32 %v1174, %v1030
    %v1181 = vadd.f32 %v1179, %v1180
    %v1182 = vadd.f32 %v1031, %v1181
    %s1183 = scalar_lea.vmem %s0, 36
    %v1184 = vld [vmem:[%s1183] sm:$0x3f]
    %s1185 = scalar_lea.vmem %s46, 54
    %v1186 = vld [vmem:[%s1185] sm:$0x3f]
    %v1188 = vcombine.high %v1184, %v1184
    %v1190 = vunpack.c.l.s4 1983009808
    %v1191 = vunpack.c.0.s8 %v1190
    %v1192 = vlaneseq
    %v1193 = vshrl.u32 %v1192, 7
    %v1194 = vsub.s32 %v1191, %v1193
    %v1195 = vrot.slane %v1184, %v1194
    %v1197 = vunpack.c.l.s4 1983009808
    %v1198 = vunpack.c.0.s8 %v1197
    %v1199 = vlaneseq
    %v1200 = vshrl.u32 %v1199, 7
    %v1201 = vsub.s32 %v1198, %v1200
    %v1202 = vrot.slane %v1188, %v1201
    %v1203 = vcombine.high %v1195, %v1195
    %v1208 = vcombine.high %v1186, %v1186
    %v1210 = vunpack.c.l.s4 1983009808
    %v1211 = vunpack.c.0.s8 %v1210
    %v1212 = vlaneseq
    %v1213 = vshrl.u32 %v1212, 7
    %v1214 = vsub.s32 %v1211, %v1213
    %v1215 = vrot.slane %v1186, %v1214
    %v1217 = vunpack.c.l.s4 1983009808
    %v1218 = vunpack.c.0.s8 %v1217
    %v1219 = vlaneseq
    %v1220 = vshrl.u32 %v1219, 7
    %v1221 = vsub.s32 %v1218, %v1220
    %v1222 = vrot.slane %v1208, %v1221
    %v1223 = vcombine.high %v1215, %v1215
    %v1227 = vsel %vm129, %v1195, %v1215
    %v1228 = vsel %vm130, %v1203, %v1223
    %v1229 = vsel %vm131, %v1202, %v1222
    %v1230 = vpack.c.bf16 %v1181, %v1181
    %1231 = vmatprep.subr.bf16.mxu0 %v278
    %1232 = vmatpush1.bf16.msra.mxu0 %v277
    %1233 = vmatprep.subr.bf16.mxu0 %v281
    %1234 = vmatpush1.bf16.msra.mxu0 %v280
    %1235 = vmatprep.subr.bf16.mxu0 %v284
    %1236 = vmatpush1.bf16.msra.mxu0 %v283
    %1237 = vmatprep.subr.bf16.mxu0 %v287
    %1238 = vmatpush1.bf16.msra.mxu0 %v286
    %1239 = vmatprep.subr.bf16.mxu0 %v290
    %1240 = vmatpush1.bf16.msra.mxu0 %v289
    %1241 = vmatprep.subr.bf16.mxu0 %v293
    %1242 = vmatpush1.bf16.msra.mxu0 %v292
    %1243 = vmatprep.subr.bf16.mxu0 %v296
    %1244 = vmatpush1.bf16.msra.mxu0 %v295
    %1245 = vmatprep.subr.bf16.mxu0 %v299
    %1246 = vmatpush1.bf16.msra.mxu0 %v298
    %1247 = vmatprep.subr.bf16.mxu0 0
    %1248 = vmatpush1.bf16.msra.mxu0 0
    %1249 = vmatprep.subr.bf16.mxu0 0
    %1250 = vmatpush1.bf16.msra.mxu0 0
    %1251 = vmatprep.subr.bf16.mxu0 0
    %1252 = vmatpush1.bf16.msra.mxu0 0
    %1253 = vmatprep.subr.bf16.mxu0 0
    %1254 = vmatpush1.bf16.msra.mxu0 0
    %1255 = vmatprep.subr.bf16.mxu0 0
    %1256 = vmatpush1.bf16.msra.mxu0 0
    %1257 = vmatprep.subr.bf16.mxu0 0
    %1258 = vmatpush1.bf16.msra.mxu0 0
    %1259 = vmatprep.subr.bf16.mxu0 0
    %1260 = vmatpush1.bf16.msra.mxu0 0
    %1261 = vmatprep.subr.bf16.mxu0 0
    %1262 = vmatpush1.bf16.msra.mxu0 0
    %1263 = vmatprep.mubr.bf16.mxu0 0
    %1264 = vmatmul.mubr.bf16.gmra.mrb[0].mxu0 %v1230
    %v1265 = vpop.f32.mrb[0].mxu0
    %v1266 = vadd.f32 %v185, %v1265
    %v1267 = vpop.f32.mrb[0].mxu0
    %v1268 = vadd.f32 %v189, %v1267
    %v1269 = vpop.f32.mrb[0].mxu0
    %v1270 = vpop.f32.mrb[0].mxu0
    %1271 = vdwg.mxu0
    %1272 = vmatprep.subr.bf16.mxu0 0
    %1273 = vmatpush1.bf16.msra.mxu0 %v279
    %1274 = vmatprep.subr.bf16.mxu0 0
    %1275 = vmatpush1.bf16.msra.mxu0 %v282
    %1276 = vmatprep.subr.bf16.mxu0 0
    %1277 = vmatpush1.bf16.msra.mxu0 %v285
    %1278 = vmatprep.subr.bf16.mxu0 0
    %1279 = vmatpush1.bf16.msra.mxu0 %v288
    %1280 = vmatprep.subr.bf16.mxu0 0
    %1281 = vmatpush1.bf16.msra.mxu0 %v291
    %1282 = vmatprep.subr.bf16.mxu0 0
    %1283 = vmatpush1.bf16.msra.mxu0 %v294
    %1284 = vmatprep.subr.bf16.mxu0 0
    %1285 = vmatpush1.bf16.msra.mxu0 %v297
    %1286 = vmatprep.subr.bf16.mxu0 0
    %1287 = vmatpush1.bf16.msra.mxu0 %v300
    %1288 = vmatprep.subr.bf16.mxu0 0
    %1289 = vmatpush1.bf16.msra.mxu0 0
    %1290 = vmatprep.subr.bf16.mxu0 0
    %1291 = vmatpush1.bf16.msra.mxu0 0
    %1292 = vmatprep.subr.bf16.mxu0 0
    %1293 = vmatpush1.bf16.msra.mxu0 0
    %1294 = vmatprep.subr.bf16.mxu0 0
    %1295 = vmatpush1.bf16.msra.mxu0 0
    %1296 = vmatprep.subr.bf16.mxu0 0
    %1297 = vmatpush1.bf16.msra.mxu0 0
    %1298 = vmatprep.subr.bf16.mxu0 0
    %1299 = vmatpush1.bf16.msra.mxu0 0
    %1300 = vmatprep.subr.bf16.mxu0 0
    %1301 = vmatpush1.bf16.msra.mxu0 0
    %1302 = vmatprep.subr.bf16.mxu0 0
    %1303 = vmatpush1.bf16.msra.mxu0 0
    %1304 = vmatprep.mubr.bf16.mxu0 0
    %1305 = vmatmul.mubr.bf16.gmra.mrb[0].mxu0 %v1230
    %v1306 = vpop.f32.mrb[0].mxu0
    %v1307 = vadd.f32 %v193, %v1306
    %v1308 = vpop.f32.mrb[0].mxu0
    %v1309 = vpop.f32.mrb[0].mxu0
    %v1310 = vpop.f32.mrb[0].mxu0
    %1311 = vdwg.mxu0
    %v1312 = vadd.f32 %v1227, %v1266
    %v1313 = vadd.f32 %v1228, %v1268
    %v1314 = vsub.f32 0.0, %v1312
    %v1315 = vsub.f32 0.0, %v1313
    %v1316 = vmul.f32 %v1314, 1.442695
    %v1317 = vpow.pop %v1316
    %v1318 = vmul.f32 %v1315, 1.442695
    %v1319 = vpow.pop %v1318
    %v1320 = vadd.f32 %v1317, 1.0
    %v1321 = vadd.f32 %v1319, 1.0
    %v1322 = vrcp.pop %v1320
    %v1323 = vmul.f32 1.0, %v1322
    %v1324 = vrcp.pop %v1321
    %v1325 = vmul.f32 1.0, %v1324
    %v1326 = vmul.f32 %v1323, %v1307
    %v1327 = vadd.f32 %v1229, %v1326
    %v1328 = vtanh.pop %v1327
    %v1329 = vsub.f32 1.0, %v1325
    %v1330 = vmul.f32 %v1329, %v1328
    %v1331 = vmul.f32 %v1325, %v1181
    %v1332 = vadd.f32 %v1330, %v1331
    %v1333 = vadd.f32 %v1182, %v1332
    %s1334 = scalar_lea.vmem %s0, 42
    %v1335 = vld [vmem:[%s1334] sm:$0x3f]
    %s1336 = scalar_lea.vmem %s46, 48
    %v1337 = vld [vmem:[%s1336] sm:$0x3f]
    %v1339 = vcombine.high %v1335, %v1335
    %v1341 = vunpack.c.l.s4 1983009808
    %v1342 = vunpack.c.0.s8 %v1341
    %v1343 = vlaneseq
    %v1344 = vshrl.u32 %v1343, 7
    %v1345 = vsub.s32 %v1342, %v1344
    %v1346 = vrot.slane %v1335, %v1345
    %v1348 = vunpack.c.l.s4 1983009808
    %v1349 = vunpack.c.0.s8 %v1348
    %v1350 = vlaneseq
    %v1351 = vshrl.u32 %v1350, 7
    %v1352 = vsub.s32 %v1349, %v1351
    %v1353 = vrot.slane %v1339, %v1352
    %v1354 = vcombine.high %v1346, %v1346
    %v1359 = vcombine.high %v1337, %v1337
    %v1361 = vunpack.c.l.s4 1983009808
    %v1362 = vunpack.c.0.s8 %v1361
    %v1363 = vlaneseq
    %v1364 = vshrl.u32 %v1363, 7
    %v1365 = vsub.s32 %v1362, %v1364
    %v1366 = vrot.slane %v1337, %v1365
    %v1368 = vunpack.c.l.s4 1983009808
    %v1369 = vunpack.c.0.s8 %v1368
    %v1370 = vlaneseq
    %v1371 = vshrl.u32 %v1370, 7
    %v1372 = vsub.s32 %v1369, %v1371
    %v1373 = vrot.slane %v1359, %v1372
    %v1374 = vcombine.high %v1366, %v1366
    %v1378 = vsel %vm129, %v1346, %v1366
    %v1379 = vsel %vm130, %v1354, %v1374
    %v1380 = vsel %vm131, %v1353, %v1373
    %v1381 = vpack.c.bf16 %v1332, %v1332
    %1382 = vmatprep.subr.bf16.mxu0 %v278
    %1383 = vmatpush1.bf16.msra.mxu0 %v277
    %1384 = vmatprep.subr.bf16.mxu0 %v281
    %1385 = vmatpush1.bf16.msra.mxu0 %v280
    %1386 = vmatprep.subr.bf16.mxu0 %v284
    %1387 = vmatpush1.bf16.msra.mxu0 %v283
    %1388 = vmatprep.subr.bf16.mxu0 %v287
    %1389 = vmatpush1.bf16.msra.mxu0 %v286
    %1390 = vmatprep.subr.bf16.mxu0 %v290
    %1391 = vmatpush1.bf16.msra.mxu0 %v289
    %1392 = vmatprep.subr.bf16.mxu0 %v293
    %1393 = vmatpush1.bf16.msra.mxu0 %v292
    %1394 = vmatprep.subr.bf16.mxu0 %v296
    %1395 = vmatpush1.bf16.msra.mxu0 %v295
    %1396 = vmatprep.subr.bf16.mxu0 %v299
    %1397 = vmatpush1.bf16.msra.mxu0 %v298
    %1398 = vmatprep.subr.bf16.mxu0 0
    %1399 = vmatpush1.bf16.msra.mxu0 0
    %1400 = vmatprep.subr.bf16.mxu0 0
    %1401 = vmatpush1.bf16.msra.mxu0 0
    %1402 = vmatprep.subr.bf16.mxu0 0
    %1403 = vmatpush1.bf16.msra.mxu0 0
    %1404 = vmatprep.subr.bf16.mxu0 0
    %1405 = vmatpush1.bf16.msra.mxu0 0
    %1406 = vmatprep.subr.bf16.mxu0 0
    %1407 = vmatpush1.bf16.msra.mxu0 0
    %1408 = vmatprep.subr.bf16.mxu0 0
    %1409 = vmatpush1.bf16.msra.mxu0 0
    %1410 = vmatprep.subr.bf16.mxu0 0
    %1411 = vmatpush1.bf16.msra.mxu0 0
    %1412 = vmatprep.subr.bf16.mxu0 0
    %1413 = vmatpush1.bf16.msra.mxu0 0
    %1414 = vmatprep.mubr.bf16.mxu0 0
    %1415 = vmatmul.mubr.bf16.gmra.mrb[0].mxu0 %v1381
    %v1416 = vpop.f32.mrb[0].mxu0
    %v1417 = vadd.f32 %v185, %v1416
    %v1418 = vpop.f32.mrb[0].mxu0
    %v1419 = vadd.f32 %v189, %v1418
    %v1420 = vpop.f32.mrb[0].mxu0
    %v1421 = vpop.f32.mrb[0].mxu0
    %1422 = vdwg.mxu0
    %1423 = vmatprep.subr.bf16.mxu0 0
    %1424 = vmatpush1.bf16.msra.mxu0 %v279
    %1425 = vmatprep.subr.bf16.mxu0 0
    %1426 = vmatpush1.bf16.msra.mxu0 %v282
    %1427 = vmatprep.subr.bf16.mxu0 0
    %1428 = vmatpush1.bf16.msra.mxu0 %v285
    %1429 = vmatprep.subr.bf16.mxu0 0
    %1430 = vmatpush1.bf16.msra.mxu0 %v288
    %1431 = vmatprep.subr.bf16.mxu0 0
    %1432 = vmatpush1.bf16.msra.mxu0 %v291
    %1433 = vmatprep.subr.bf16.mxu0 0
    %1434 = vmatpush1.bf16.msra.mxu0 %v294
    %1435 = vmatprep.subr.bf16.mxu0 0
    %1436 = vmatpush1.bf16.msra.mxu0 %v297
    %1437 = vmatprep.subr.bf16.mxu0 0
    %1438 = vmatpush1.bf16.msra.mxu0 %v300
    %1439 = vmatprep.subr.bf16.mxu0 0
    %1440 = vmatpush1.bf16.msra.mxu0 0
    %1441 = vmatprep.subr.bf16.mxu0 0
    %1442 = vmatpush1.bf16.msra.mxu0 0
    %1443 = vmatprep.subr.bf16.mxu0 0
    %1444 = vmatpush1.bf16.msra.mxu0 0
    %1445 = vmatprep.subr.bf16.mxu0 0
    %1446 = vmatpush1.bf16.msra.mxu0 0
    %1447 = vmatprep.subr.bf16.mxu0 0
    %1448 = vmatpush1.bf16.msra.mxu0 0
    %1449 = vmatprep.subr.bf16.mxu0 0
    %1450 = vmatpush1.bf16.msra.mxu0 0
    %1451 = vmatprep.subr.bf16.mxu0 0
    %1452 = vmatpush1.bf16.msra.mxu0 0
    %1453 = vmatprep.subr.bf16.mxu0 0
    %1454 = vmatpush1.bf16.msra.mxu0 0
    %1455 = vmatprep.mubr.bf16.mxu0 0
    %1456 = vmatmul.mubr.bf16.gmra.mrb[0].mxu0 %v1381
    %v1457 = vpop.f32.mrb[0].mxu0
    %v1458 = vadd.f32 %v193, %v1457
    %v1459 = vpop.f32.mrb[0].mxu0
    %v1460 = vpop.f32.mrb[0].mxu0
    %v1461 = vpop.f32.mrb[0].mxu0
    %1462 = vdwg.mxu0
    %v1463 = vadd.f32 %v1378, %v1417
    %v1464 = vadd.f32 %v1379, %v1419
    %v1465 = vsub.f32 0.0, %v1463
    %v1466 = vsub.f32 0.0, %v1464
    %v1467 = vmul.f32 %v1465, 1.442695
    %v1468 = vpow.pop %v1467
    %v1469 = vmul.f32 %v1466, 1.442695
    %v1470 = vpow.pop %v1469
    %v1471 = vadd.f32 %v1468, 1.0
    %v1472 = vadd.f32 %v1470, 1.0
    %v1473 = vrcp.pop %v1471
    %v1474 = vmul.f32 1.0, %v1473
    %v1475 = vrcp.pop %v1472
    %v1476 = vmul.f32 1.0, %v1475
    %v1477 = vmul.f32 %v1474, %v1458
    %v1478 = vadd.f32 %v1380, %v1477
    %v1479 = vtanh.pop %v1478
    %v1480 = vsub.f32 1.0, %v1476
    %v1481 = vmul.f32 %v1480, %v1479
    %v1482 = vmul.f32 %v1476, %v1332
    %v1483 = vadd.f32 %v1481, %v1482
    %v1484 = vadd.f32 %v1333, %v1483
    %s1485 = scalar_lea.vmem %s0, 48
    %v1486 = vld [vmem:[%s1485] sm:$0x3f]
    %s1487 = scalar_lea.vmem %s46, 42
    %v1488 = vld [vmem:[%s1487] sm:$0x3f]
    %v1490 = vcombine.high %v1486, %v1486
    %v1492 = vunpack.c.l.s4 1983009808
    %v1493 = vunpack.c.0.s8 %v1492
    %v1494 = vlaneseq
    %v1495 = vshrl.u32 %v1494, 7
    %v1496 = vsub.s32 %v1493, %v1495
    %v1497 = vrot.slane %v1486, %v1496
    %v1499 = vunpack.c.l.s4 1983009808
    %v1500 = vunpack.c.0.s8 %v1499
    %v1501 = vlaneseq
    %v1502 = vshrl.u32 %v1501, 7
    %v1503 = vsub.s32 %v1500, %v1502
    %v1504 = vrot.slane %v1490, %v1503
    %v1505 = vcombine.high %v1497, %v1497
    %v1510 = vcombine.high %v1488, %v1488
    %v1512 = vunpack.c.l.s4 1983009808
    %v1513 = vunpack.c.0.s8 %v1512
    %v1514 = vlaneseq
    %v1515 = vshrl.u32 %v1514, 7
    %v1516 = vsub.s32 %v1513, %v1515
    %v1517 = vrot.slane %v1488, %v1516
    %v1519 = vunpack.c.l.s4 1983009808
    %v1520 = vunpack.c.0.s8 %v1519
    %v1521 = vlaneseq
    %v1522 = vshrl.u32 %v1521, 7
    %v1523 = vsub.s32 %v1520, %v1522
    %v1524 = vrot.slane %v1510, %v1523
    %v1525 = vcombine.high %v1517, %v1517
    %v1529 = vsel %vm129, %v1497, %v1517
    %v1530 = vsel %vm130, %v1505, %v1525
    %v1531 = vsel %vm131, %v1504, %v1524
    %v1532 = vpack.c.bf16 %v1483, %v1483
    %1533 = vmatprep.subr.bf16.mxu0 %v278
    %1534 = vmatpush1.bf16.msra.mxu0 %v277
    %1535 = vmatprep.subr.bf16.mxu0 %v281
    %1536 = vmatpush1.bf16.msra.mxu0 %v280
    %1537 = vmatprep.subr.bf16.mxu0 %v284
    %1538 = vmatpush1.bf16.msra.mxu0 %v283
    %1539 = vmatprep.subr.bf16.mxu0 %v287
    %1540 = vmatpush1.bf16.msra.mxu0 %v286
    %1541 = vmatprep.subr.bf16.mxu0 %v290
    %1542 = vmatpush1.bf16.msra.mxu0 %v289
    %1543 = vmatprep.subr.bf16.mxu0 %v293
    %1544 = vmatpush1.bf16.msra.mxu0 %v292
    %1545 = vmatprep.subr.bf16.mxu0 %v296
    %1546 = vmatpush1.bf16.msra.mxu0 %v295
    %1547 = vmatprep.subr.bf16.mxu0 %v299
    %1548 = vmatpush1.bf16.msra.mxu0 %v298
    %1549 = vmatprep.subr.bf16.mxu0 0
    %1550 = vmatpush1.bf16.msra.mxu0 0
    %1551 = vmatprep.subr.bf16.mxu0 0
    %1552 = vmatpush1.bf16.msra.mxu0 0
    %1553 = vmatprep.subr.bf16.mxu0 0
    %1554 = vmatpush1.bf16.msra.mxu0 0
    %1555 = vmatprep.subr.bf16.mxu0 0
    %1556 = vmatpush1.bf16.msra.mxu0 0
    %1557 = vmatprep.subr.bf16.mxu0 0
    %1558 = vmatpush1.bf16.msra.mxu0 0
    %1559 = vmatprep.subr.bf16.mxu0 0
    %1560 = vmatpush1.bf16.msra.mxu0 0
    %1561 = vmatprep.subr.bf16.mxu0 0
    %1562 = vmatpush1.bf16.msra.mxu0 0
    %1563 = vmatprep.subr.bf16.mxu0 0
    %1564 = vmatpush1.bf16.msra.mxu0 0
    %1565 = vmatprep.mubr.bf16.mxu0 0
    %1566 = vmatmul.mubr.bf16.gmra.mrb[0].mxu0 %v1532
    %v1567 = vpop.f32.mrb[0].mxu0
    %v1568 = vadd.f32 %v185, %v1567
    %v1569 = vpop.f32.mrb[0].mxu0
    %v1570 = vadd.f32 %v189, %v1569
    %v1571 = vpop.f32.mrb[0].mxu0
    %v1572 = vpop.f32.mrb[0].mxu0
    %1573 = vdwg.mxu0
    %1574 = vmatprep.subr.bf16.mxu0 0
    %1575 = vmatpush1.bf16.msra.mxu0 %v279
    %1576 = vmatprep.subr.bf16.mxu0 0
    %1577 = vmatpush1.bf16.msra.mxu0 %v282
    %1578 = vmatprep.subr.bf16.mxu0 0
    %1579 = vmatpush1.bf16.msra.mxu0 %v285
    %1580 = vmatprep.subr.bf16.mxu0 0
    %1581 = vmatpush1.bf16.msra.mxu0 %v288
    %1582 = vmatprep.subr.bf16.mxu0 0
    %1583 = vmatpush1.bf16.msra.mxu0 %v291
    %1584 = vmatprep.subr.bf16.mxu0 0
    %1585 = vmatpush1.bf16.msra.mxu0 %v294
    %1586 = vmatprep.subr.bf16.mxu0 0
    %1587 = vmatpush1.bf16.msra.mxu0 %v297
    %1588 = vmatprep.subr.bf16.mxu0 0
    %1589 = vmatpush1.bf16.msra.mxu0 %v300
    %1590 = vmatprep.subr.bf16.mxu0 0
    %1591 = vmatpush1.bf16.msra.mxu0 0
    %1592 = vmatprep.subr.bf16.mxu0 0
    %1593 = vmatpush1.bf16.msra.mxu0 0
    %1594 = vmatprep.subr.bf16.mxu0 0
    %1595 = vmatpush1.bf16.msra.mxu0 0
    %1596 = vmatprep.subr.bf16.mxu0 0
    %1597 = vmatpush1.bf16.msra.mxu0 0
    %1598 = vmatprep.subr.bf16.mxu0 0
    %1599 = vmatpush1.bf16.msra.mxu0 0
    %1600 = vmatprep.subr.bf16.mxu0 0
    %1601 = vmatpush1.bf16.msra.mxu0 0
    %1602 = vmatprep.subr.bf16.mxu0 0
    %1603 = vmatpush1.bf16.msra.mxu0 0
    %1604 = vmatprep.subr.bf16.mxu0 0
    %1605 = vmatpush1.bf16.msra.mxu0 0
    %1606 = vmatprep.mubr.bf16.mxu0 0
    %1607 = vmatmul.mubr.bf16.gmra.mrb[0].mxu0 %v1532
    %v1608 = vpop.f32.mrb[0].mxu0
    %v1609 = vadd.f32 %v193, %v1608
    %v1610 = vpop.f32.mrb[0].mxu0
    %v1611 = vpop.f32.mrb[0].mxu0
    %v1612 = vpop.f32.mrb[0].mxu0
    %1613 = vdwg.mxu0
    %v1614 = vadd.f32 %v1529, %v1568
    %v1615 = vadd.f32 %v1530, %v1570
    %v1616 = vsub.f32 0.0, %v1614
    %v1617 = vsub.f32 0.0, %v1615
    %v1618 = vmul.f32 %v1616, 1.442695
    %v1619 = vpow.pop %v1618
    %v1620 = vmul.f32 %v1617, 1.442695
    %v1621 = vpow.pop %v1620
    %v1622 = vadd.f32 %v1619, 1.0
    %v1623 = vadd.f32 %v1621, 1.0
    %v1624 = vrcp.pop %v1622
    %v1625 = vmul.f32 1.0, %v1624
    %v1626 = vrcp.pop %v1623
    %v1627 = vmul.f32 1.0, %v1626
    %v1628 = vmul.f32 %v1625, %v1609
    %v1629 = vadd.f32 %v1531, %v1628
    %v1630 = vtanh.pop %v1629
    %v1631 = vsub.f32 1.0, %v1627
    %v1632 = vmul.f32 %v1631, %v1630
    %v1633 = vmul.f32 %v1627, %v1483
    %v1634 = vadd.f32 %v1632, %v1633
    %v1635 = vadd.f32 %v1484, %v1634
    %s1636 = scalar_lea.vmem %s0, 54
    %v1637 = vld [vmem:[%s1636] sm:$0x3f]
    %s1638 = scalar_lea.vmem %s46, 36
    %v1639 = vld [vmem:[%s1638] sm:$0x3f]
    %v1641 = vcombine.high %v1637, %v1637
    %v1643 = vunpack.c.l.s4 1983009808
    %v1644 = vunpack.c.0.s8 %v1643
    %v1645 = vlaneseq
    %v1646 = vshrl.u32 %v1645, 7
    %v1647 = vsub.s32 %v1644, %v1646
    %v1648 = vrot.slane %v1637, %v1647
    %v1650 = vunpack.c.l.s4 1983009808
    %v1651 = vunpack.c.0.s8 %v1650
    %v1652 = vlaneseq
    %v1653 = vshrl.u32 %v1652, 7
    %v1654 = vsub.s32 %v1651, %v1653
    %v1655 = vrot.slane %v1641, %v1654
    %v1656 = vcombine.high %v1648, %v1648
    %v1661 = vcombine.high %v1639, %v1639
    %v1663 = vunpack.c.l.s4 1983009808
    %v1664 = vunpack.c.0.s8 %v1663
    %v1665 = vlaneseq
    %v1666 = vshrl.u32 %v1665, 7
    %v1667 = vsub.s32 %v1664, %v1666
    %v1668 = vrot.slane %v1639, %v1667
    %v1670 = vunpack.c.l.s4 1983009808
    %v1671 = vunpack.c.0.s8 %v1670
    %v1672 = vlaneseq
    %v1673 = vshrl.u32 %v1672, 7
    %v1674 = vsub.s32 %v1671, %v1673
    %v1675 = vrot.slane %v1661, %v1674
    %v1676 = vcombine.high %v1668, %v1668
    %v1680 = vsel %vm129, %v1648, %v1668
    %v1681 = vsel %vm130, %v1656, %v1676
    %v1682 = vsel %vm131, %v1655, %v1675
    %v1683 = vpack.c.bf16 %v1634, %v1634
    %1684 = vmatprep.subr.bf16.mxu0 %v278
    %1685 = vmatpush1.bf16.msra.mxu0 %v277
    %1686 = vmatprep.subr.bf16.mxu0 %v281
    %1687 = vmatpush1.bf16.msra.mxu0 %v280
    %1688 = vmatprep.subr.bf16.mxu0 %v284
    %1689 = vmatpush1.bf16.msra.mxu0 %v283
    %1690 = vmatprep.subr.bf16.mxu0 %v287
    %1691 = vmatpush1.bf16.msra.mxu0 %v286
    %1692 = vmatprep.subr.bf16.mxu0 %v290
    %1693 = vmatpush1.bf16.msra.mxu0 %v289
    %1694 = vmatprep.subr.bf16.mxu0 %v293
    %1695 = vmatpush1.bf16.msra.mxu0 %v292
    %1696 = vmatprep.subr.bf16.mxu0 %v296
    %1697 = vmatpush1.bf16.msra.mxu0 %v295
    %1698 = vmatprep.subr.bf16.mxu0 %v299
    %1699 = vmatpush1.bf16.msra.mxu0 %v298
    %1700 = vmatprep.subr.bf16.mxu0 0
    %1701 = vmatpush1.bf16.msra.mxu0 0
    %1702 = vmatprep.subr.bf16.mxu0 0
    %1703 = vmatpush1.bf16.msra.mxu0 0
    %1704 = vmatprep.subr.bf16.mxu0 0
    %1705 = vmatpush1.bf16.msra.mxu0 0
    %1706 = vmatprep.subr.bf16.mxu0 0
    %1707 = vmatpush1.bf16.msra.mxu0 0
    %1708 = vmatprep.subr.bf16.mxu0 0
    %1709 = vmatpush1.bf16.msra.mxu0 0
    %1710 = vmatprep.subr.bf16.mxu0 0
    %1711 = vmatpush1.bf16.msra.mxu0 0
    %1712 = vmatprep.subr.bf16.mxu0 0
    %1713 = vmatpush1.bf16.msra.mxu0 0
    %1714 = vmatprep.subr.bf16.mxu0 0
    %1715 = vmatpush1.bf16.msra.mxu0 0
    %1716 = vmatprep.mubr.bf16.mxu0 0
    %1717 = vmatmul.mubr.bf16.gmra.mrb[0].mxu0 %v1683
    %v1718 = vpop.f32.mrb[0].mxu0
    %v1719 = vadd.f32 %v185, %v1718
    %v1720 = vpop.f32.mrb[0].mxu0
    %v1721 = vadd.f32 %v189, %v1720
    %v1722 = vpop.f32.mrb[0].mxu0
    %v1723 = vpop.f32.mrb[0].mxu0
    %1724 = vdwg.mxu0
    %1725 = vmatprep.subr.bf16.mxu0 0
    %1726 = vmatpush1.bf16.msra.mxu0 %v279
    %1727 = vmatprep.subr.bf16.mxu0 0
    %1728 = vmatpush1.bf16.msra.mxu0 %v282
    %1729 = vmatprep.subr.bf16.mxu0 0
    %1730 = vmatpush1.bf16.msra.mxu0 %v285
    %1731 = vmatprep.subr.bf16.mxu0 0
    %1732 = vmatpush1.bf16.msra.mxu0 %v288
    %1733 = vmatprep.subr.bf16.mxu0 0
    %1734 = vmatpush1.bf16.msra.mxu0 %v291
    %1735 = vmatprep.subr.bf16.mxu0 0
    %1736 = vmatpush1.bf16.msra.mxu0 %v294
    %1737 = vmatprep.subr.bf16.mxu0 0
    %1738 = vmatpush1.bf16.msra.mxu0 %v297
    %1739 = vmatprep.subr.bf16.mxu0 0
    %1740 = vmatpush1.bf16.msra.mxu0 %v300
    %1741 = vmatprep.subr.bf16.mxu0 0
    %1742 = vmatpush1.bf16.msra.mxu0 0
    %1743 = vmatprep.subr.bf16.mxu0 0
    %1744 = vmatpush1.bf16.msra.mxu0 0
    %1745 = vmatprep.subr.bf16.mxu0 0
    %1746 = vmatpush1.bf16.msra.mxu0 0
    %1747 = vmatprep.subr.bf16.mxu0 0
    %1748 = vmatpush1.bf16.msra.mxu0 0
    %1749 = vmatprep.subr.bf16.mxu0 0
    %1750 = vmatpush1.bf16.msra.mxu0 0
    %1751 = vmatprep.subr.bf16.mxu0 0
    %1752 = vmatpush1.bf16.msra.mxu0 0
    %1753 = vmatprep.subr.bf16.mxu0 0
    %1754 = vmatpush1.bf16.msra.mxu0 0
    %1755 = vmatprep.subr.bf16.mxu0 0
    %1756 = vmatpush1.bf16.msra.mxu0 0
    %1757 = vmatprep.mubr.bf16.mxu0 0
    %1758 = vmatmul.mubr.bf16.gmra.mrb[0].mxu0 %v1683
    %v1759 = vpop.f32.mrb[0].mxu0
    %v1760 = vadd.f32 %v193, %v1759
    %v1761 = vpop.f32.mrb[0].mxu0
    %v1762 = vpop.f32.mrb[0].mxu0
    %v1763 = vpop.f32.mrb[0].mxu0
    %1764 = vdwg.mxu0
    %v1765 = vadd.f32 %v1680, %v1719
    %v1766 = vadd.f32 %v1681, %v1721
    %v1767 = vsub.f32 0.0, %v1765
    %v1768 = vsub.f32 0.0, %v1766
    %v1769 = vmul.f32 %v1767, 1.442695
    %v1770 = vpow.pop %v1769
    %v1771 = vmul.f32 %v1768, 1.442695
    %v1772 = vpow.pop %v1771
    %v1773 = vadd.f32 %v1770, 1.0
    %v1774 = vadd.f32 %v1772, 1.0
    %v1775 = vrcp.pop %v1773
    %v1776 = vmul.f32 1.0, %v1775
    %v1777 = vrcp.pop %v1774
    %v1778 = vmul.f32 1.0, %v1777
    %v1779 = vmul.f32 %v1776, %v1760
    %v1780 = vadd.f32 %v1682, %v1779
    %v1781 = vtanh.pop %v1780
    %v1782 = vsub.f32 1.0, %v1778
    %v1783 = vmul.f32 %v1782, %v1781
    %v1784 = vmul.f32 %v1778, %v1634
    %v1785 = vadd.f32 %v1783, %v1784
    %v1786 = vadd.f32 %v1635, %v1785
    %s1787 = scalar_lea.vmem %s0, 60
    %v1788 = vld [vmem:[%s1787] sm:$0x3f]
    %s1789 = scalar_lea.vmem %s46, 30
    %v1790 = vld [vmem:[%s1789] sm:$0x3f]
    %v1792 = vcombine.high %v1788, %v1788
    %v1794 = vunpack.c.l.s4 1983009808
    %v1795 = vunpack.c.0.s8 %v1794
    %v1796 = vlaneseq
    %v1797 = vshrl.u32 %v1796, 7
    %v1798 = vsub.s32 %v1795, %v1797
    %v1799 = vrot.slane %v1788, %v1798
    %v1801 = vunpack.c.l.s4 1983009808
    %v1802 = vunpack.c.0.s8 %v1801
    %v1803 = vlaneseq
    %v1804 = vshrl.u32 %v1803, 7
    %v1805 = vsub.s32 %v1802, %v1804
    %v1806 = vrot.slane %v1792, %v1805
    %v1807 = vcombine.high %v1799, %v1799
    %v1812 = vcombine.high %v1790, %v1790
    %v1814 = vunpack.c.l.s4 1983009808
    %v1815 = vunpack.c.0.s8 %v1814
    %v1816 = vlaneseq
    %v1817 = vshrl.u32 %v1816, 7
    %v1818 = vsub.s32 %v1815, %v1817
    %v1819 = vrot.slane %v1790, %v1818
    %v1821 = vunpack.c.l.s4 1983009808
    %v1822 = vunpack.c.0.s8 %v1821
    %v1823 = vlaneseq
    %v1824 = vshrl.u32 %v1823, 7
    %v1825 = vsub.s32 %v1822, %v1824
    %v1826 = vrot.slane %v1812, %v1825
    %v1827 = vcombine.high %v1819, %v1819
    %v1831 = vsel %vm129, %v1799, %v1819
    %v1832 = vsel %vm130, %v1807, %v1827
    %v1833 = vsel %vm131, %v1806, %v1826
    %v1834 = vpack.c.bf16 %v1785, %v1785
    %1835 = vmatprep.subr.bf16.mxu0 %v278
    %1836 = vmatpush1.bf16.msra.mxu0 %v277
    %1837 = vmatprep.subr.bf16.mxu0 %v281
    %1838 = vmatpush1.bf16.msra.mxu0 %v280
    %1839 = vmatprep.subr.bf16.mxu0 %v284
    %1840 = vmatpush1.bf16.msra.mxu0 %v283
    %1841 = vmatprep.subr.bf16.mxu0 %v287
    %1842 = vmatpush1.bf16.msra.mxu0 %v286
    %1843 = vmatprep.subr.bf16.mxu0 %v290
    %1844 = vmatpush1.bf16.msra.mxu0 %v289
    %1845 = vmatprep.subr.bf16.mxu0 %v293
    %1846 = vmatpush1.bf16.msra.mxu0 %v292
    %1847 = vmatprep.subr.bf16.mxu0 %v296
    %1848 = vmatpush1.bf16.msra.mxu0 %v295
    %1849 = vmatprep.subr.bf16.mxu0 %v299
    %1850 = vmatpush1.bf16.msra.mxu0 %v298
    %1851 = vmatprep.subr.bf16.mxu0 0
    %1852 = vmatpush1.bf16.msra.mxu0 0
    %1853 = vmatprep.subr.bf16.mxu0 0
    %1854 = vmatpush1.bf16.msra.mxu0 0
    %1855 = vmatprep.subr.bf16.mxu0 0
    %1856 = vmatpush1.bf16.msra.mxu0 0
    %1857 = vmatprep.subr.bf16.mxu0 0
    %1858 = vmatpush1.bf16.msra.mxu0 0
    %1859 = vmatprep.subr.bf16.mxu0 0
    %1860 = vmatpush1.bf16.msra.mxu0 0
    %1861 = vmatprep.subr.bf16.mxu0 0
    %1862 = vmatpush1.bf16.msra.mxu0 0
    %1863 = vmatprep.subr.bf16.mxu0 0
    %1864 = vmatpush1.bf16.msra.mxu0 0
    %1865 = vmatprep.subr.bf16.mxu0 0
    %1866 = vmatpush1.bf16.msra.mxu0 0
    %1867 = vmatprep.mubr.bf16.mxu0 0
    %1868 = vmatmul.mubr.bf16.gmra.mrb[0].mxu0 %v1834
    %v1869 = vpop.f32.mrb[0].mxu0
    %v1870 = vadd.f32 %v185, %v1869
    %v1871 = vpop.f32.mrb[0].mxu0
    %v1872 = vadd.f32 %v189, %v1871
    %v1873 = vpop.f32.mrb[0].mxu0
    %v1874 = vpop.f32.mrb[0].mxu0
    %1875 = vdwg.mxu0
    %1876 = vmatprep.subr.bf16.mxu0 0
    %1877 = vmatpush1.bf16.msra.mxu0 %v279
    %1878 = vmatprep.subr.bf16.mxu0 0
    %1879 = vmatpush1.bf16.msra.mxu0 %v282
    %1880 = vmatprep.subr.bf16.mxu0 0
    %1881 = vmatpush1.bf16.msra.mxu0 %v285
    %1882 = vmatprep.subr.bf16.mxu0 0
    %1883 = vmatpush1.bf16.msra.mxu0 %v288
    %1884 = vmatprep.subr.bf16.mxu0 0
    %1885 = vmatpush1.bf16.msra.mxu0 %v291
    %1886 = vmatprep.subr.bf16.mxu0 0
    %1887 = vmatpush1.bf16.msra.mxu0 %v294
    %1888 = vmatprep.subr.bf16.mxu0 0
    %1889 = vmatpush1.bf16.msra.mxu0 %v297
    %1890 = vmatprep.subr.bf16.mxu0 0
    %1891 = vmatpush1.bf16.msra.mxu0 %v300
    %1892 = vmatprep.subr.bf16.mxu0 0
    %1893 = vmatpush1.bf16.msra.mxu0 0
    %1894 = vmatprep.subr.bf16.mxu0 0
    %1895 = vmatpush1.bf16.msra.mxu0 0
    %1896 = vmatprep.subr.bf16.mxu0 0
    %1897 = vmatpush1.bf16.msra.mxu0 0
    %1898 = vmatprep.subr.bf16.mxu0 0
    %1899 = vmatpush1.bf16.msra.mxu0 0
    %1900 = vmatprep.subr.bf16.mxu0 0
    %1901 = vmatpush1.bf16.msra.mxu0 0
    %1902 = vmatprep.subr.bf16.mxu0 0
    %1903 = vmatpush1.bf16.msra.mxu0 0
    %1904 = vmatprep.subr.bf16.mxu0 0
    %1905 = vmatpush1.bf16.msra.mxu0 0
    %1906 = vmatprep.subr.bf16.mxu0 0
    %1907 = vmatpush1.bf16.msra.mxu0 0
    %1908 = vmatprep.mubr.bf16.mxu0 0
    %1909 = vmatmul.mubr.bf16.gmra.mrb[0].mxu0 %v1834
    %v1910 = vpop.f32.mrb[0].mxu0
    %v1911 = vadd.f32 %v193, %v1910
    %v1912 = vpop.f32.mrb[0].mxu0
    %v1913 = vpop.f32.mrb[0].mxu0
    %v1914 = vpop.f32.mrb[0].mxu0
    %1915 = vdwg.mxu0
    %v1916 = vadd.f32 %v1831, %v1870
    %v1917 = vadd.f32 %v1832, %v1872
    %v1918 = vsub.f32 0.0, %v1916
    %v1919 = vsub.f32 0.0, %v1917
    %v1920 = vmul.f32 %v1918, 1.442695
    %v1921 = vpow.pop %v1920
    %v1922 = vmul.f32 %v1919, 1.442695
    %v1923 = vpow.pop %v1922
    %v1924 = vadd.f32 %v1921, 1.0
    %v1925 = vadd.f32 %v1923, 1.0
    %v1926 = vrcp.pop %v1924
    %v1927 = vmul.f32 1.0, %v1926
    %v1928 = vrcp.pop %v1925
    %v1929 = vmul.f32 1.0, %v1928
    %v1930 = vmul.f32 %v1927, %v1911
    %v1931 = vadd.f32 %v1833, %v1930
    %v1932 = vtanh.pop %v1931
    %v1933 = vsub.f32 1.0, %v1929
    %v1934 = vmul.f32 %v1933, %v1932
    %v1935 = vmul.f32 %v1929, %v1785
    %v1936 = vadd.f32 %v1934, %v1935
    %v1937 = vadd.f32 %v1786, %v1936
    %s1938 = scalar_lea.vmem %s0, 66
    %v1939 = vld [vmem:[%s1938] sm:$0x3f]
    %s1940 = scalar_lea.vmem %s46, 24
    %v1941 = vld [vmem:[%s1940] sm:$0x3f]
    %v1943 = vcombine.high %v1939, %v1939
    %v1945 = vunpack.c.l.s4 1983009808
    %v1946 = vunpack.c.0.s8 %v1945
    %v1947 = vlaneseq
    %v1948 = vshrl.u32 %v1947, 7
    %v1949 = vsub.s32 %v1946, %v1948
    %v1950 = vrot.slane %v1939, %v1949
    %v1952 = vunpack.c.l.s4 1983009808
    %v1953 = vunpack.c.0.s8 %v1952
    %v1954 = vlaneseq
    %v1955 = vshrl.u32 %v1954, 7
    %v1956 = vsub.s32 %v1953, %v1955
    %v1957 = vrot.slane %v1943, %v1956
    %v1958 = vcombine.high %v1950, %v1950
    %v1963 = vcombine.high %v1941, %v1941
    %v1965 = vunpack.c.l.s4 1983009808
    %v1966 = vunpack.c.0.s8 %v1965
    %v1967 = vlaneseq
    %v1968 = vshrl.u32 %v1967, 7
    %v1969 = vsub.s32 %v1966, %v1968
    %v1970 = vrot.slane %v1941, %v1969
    %v1972 = vunpack.c.l.s4 1983009808
    %v1973 = vunpack.c.0.s8 %v1972
    %v1974 = vlaneseq
    %v1975 = vshrl.u32 %v1974, 7
    %v1976 = vsub.s32 %v1973, %v1975
    %v1977 = vrot.slane %v1963, %v1976
    %v1978 = vcombine.high %v1970, %v1970
    %v1982 = vsel %vm129, %v1950, %v1970
    %v1983 = vsel %vm130, %v1958, %v1978
    %v1984 = vsel %vm131, %v1957, %v1977
    %v1985 = vpack.c.bf16 %v1936, %v1936
    %1986 = vmatprep.subr.bf16.mxu0 %v278
    %1987 = vmatpush1.bf16.msra.mxu0 %v277
    %1988 = vmatprep.subr.bf16.mxu0 %v281
    %1989 = vmatpush1.bf16.msra.mxu0 %v280
    %1990 = vmatprep.subr.bf16.mxu0 %v284
    %1991 = vmatpush1.bf16.msra.mxu0 %v283
    %1992 = vmatprep.subr.bf16.mxu0 %v287
    %1993 = vmatpush1.bf16.msra.mxu0 %v286
    %1994 = vmatprep.subr.bf16.mxu0 %v290
    %1995 = vmatpush1.bf16.msra.mxu0 %v289
    %1996 = vmatprep.subr.bf16.mxu0 %v293
    %1997 = vmatpush1.bf16.msra.mxu0 %v292
    %1998 = vmatprep.subr.bf16.mxu0 %v296
    %1999 = vmatpush1.bf16.msra.mxu0 %v295
    %2000 = vmatprep.subr.bf16.mxu0 %v299
    %2001 = vmatpush1.bf16.msra.mxu0 %v298
    %2002 = vmatprep.subr.bf16.mxu0 0
    %2003 = vmatpush1.bf16.msra.mxu0 0
    %2004 = vmatprep.subr.bf16.mxu0 0
    %2005 = vmatpush1.bf16.msra.mxu0 0
    %2006 = vmatprep.subr.bf16.mxu0 0
    %2007 = vmatpush1.bf16.msra.mxu0 0
    %2008 = vmatprep.subr.bf16.mxu0 0
    %2009 = vmatpush1.bf16.msra.mxu0 0
    %2010 = vmatprep.subr.bf16.mxu0 0
    %2011 = vmatpush1.bf16.msra.mxu0 0
    %2012 = vmatprep.subr.bf16.mxu0 0
    %2013 = vmatpush1.bf16.msra.mxu0 0
    %2014 = vmatprep.subr.bf16.mxu0 0
    %2015 = vmatpush1.bf16.msra.mxu0 0
    %2016 = vmatprep.subr.bf16.mxu0 0
    %2017 = vmatpush1.bf16.msra.mxu0 0
    %2018 = vmatprep.mubr.bf16.mxu0 0
    %2019 = vmatmul.mubr.bf16.gmra.mrb[0].mxu0 %v1985
    %v2020 = vpop.f32.mrb[0].mxu0
    %v2021 = vadd.f32 %v185, %v2020
    %v2022 = vpop.f32.mrb[0].mxu0
    %v2023 = vadd.f32 %v189, %v2022
    %v2024 = vpop.f32.mrb[0].mxu0
    %v2025 = vpop.f32.mrb[0].mxu0
    %2026 = vdwg.mxu0
    %2027 = vmatprep.subr.bf16.mxu0 0
    %2028 = vmatpush1.bf16.msra.mxu0 %v279
    %2029 = vmatprep.subr.bf16.mxu0 0
    %2030 = vmatpush1.bf16.msra.mxu0 %v282
    %2031 = vmatprep.subr.bf16.mxu0 0
    %2032 = vmatpush1.bf16.msra.mxu0 %v285
    %2033 = vmatprep.subr.bf16.mxu0 0
    %2034 = vmatpush1.bf16.msra.mxu0 %v288
    %2035 = vmatprep.subr.bf16.mxu0 0
    %2036 = vmatpush1.bf16.msra.mxu0 %v291
    %2037 = vmatprep.subr.bf16.mxu0 0
    %2038 = vmatpush1.bf16.msra.mxu0 %v294
    %2039 = vmatprep.subr.bf16.mxu0 0
    %2040 = vmatpush1.bf16.msra.mxu0 %v297
    %2041 = vmatprep.subr.bf16.mxu0 0
    %2042 = vmatpush1.bf16.msra.mxu0 %v300
    %2043 = vmatprep.subr.bf16.mxu0 0
    %2044 = vmatpush1.bf16.msra.mxu0 0
    %2045 = vmatprep.subr.bf16.mxu0 0
    %2046 = vmatpush1.bf16.msra.mxu0 0
    %2047 = vmatprep.subr.bf16.mxu0 0
    %2048 = vmatpush1.bf16.msra.mxu0 0
    %2049 = vmatprep.subr.bf16.mxu0 0
    %2050 = vmatpush1.bf16.msra.mxu0 0
    %2051 = vmatprep.subr.bf16.mxu0 0
    %2052 = vmatpush1.bf16.msra.mxu0 0
    %2053 = vmatprep.subr.bf16.mxu0 0
    %2054 = vmatpush1.bf16.msra.mxu0 0
    %2055 = vmatprep.subr.bf16.mxu0 0
    %2056 = vmatpush1.bf16.msra.mxu0 0
    %2057 = vmatprep.subr.bf16.mxu0 0
    %2058 = vmatpush1.bf16.msra.mxu0 0
    %2059 = vmatprep.mubr.bf16.mxu0 0
    %2060 = vmatmul.mubr.bf16.gmra.mrb[0].mxu0 %v1985
    %v2061 = vpop.f32.mrb[0].mxu0
    %v2062 = vadd.f32 %v193, %v2061
    %v2063 = vpop.f32.mrb[0].mxu0
    %v2064 = vpop.f32.mrb[0].mxu0
    %v2065 = vpop.f32.mrb[0].mxu0
    %2066 = vdwg.mxu0
    %v2067 = vadd.f32 %v1982, %v2021
    %v2068 = vadd.f32 %v1983, %v2023
    %v2069 = vsub.f32 0.0, %v2067
    %v2070 = vsub.f32 0.0, %v2068
    %v2071 = vmul.f32 %v2069, 1.442695
    %v2072 = vpow.pop %v2071
    %v2073 = vmul.f32 %v2070, 1.442695
    %v2074 = vpow.pop %v2073
    %v2075 = vadd.f32 %v2072, 1.0
    %v2076 = vadd.f32 %v2074, 1.0
    %v2077 = vrcp.pop %v2075
    %v2078 = vmul.f32 1.0, %v2077
    %v2079 = vrcp.pop %v2076
    %v2080 = vmul.f32 1.0, %v2079
    %v2081 = vmul.f32 %v2078, %v2062
    %v2082 = vadd.f32 %v1984, %v2081
    %v2083 = vtanh.pop %v2082
    %v2084 = vsub.f32 1.0, %v2080
    %v2085 = vmul.f32 %v2084, %v2083
    %v2086 = vmul.f32 %v2080, %v1936
    %v2087 = vadd.f32 %v2085, %v2086
    %v2088 = vadd.f32 %v1937, %v2087
    %s2089 = scalar_lea.vmem %s0, 72
    %v2090 = vld [vmem:[%s2089] sm:$0x3f]
    %s2091 = scalar_lea.vmem %s46, 18
    %v2092 = vld [vmem:[%s2091] sm:$0x3f]
    %v2094 = vcombine.high %v2090, %v2090
    %v2096 = vunpack.c.l.s4 1983009808
    %v2097 = vunpack.c.0.s8 %v2096
    %v2098 = vlaneseq
    %v2099 = vshrl.u32 %v2098, 7
    %v2100 = vsub.s32 %v2097, %v2099
    %v2101 = vrot.slane %v2090, %v2100
    %v2103 = vunpack.c.l.s4 1983009808
    %v2104 = vunpack.c.0.s8 %v2103
    %v2105 = vlaneseq
    %v2106 = vshrl.u32 %v2105, 7
    %v2107 = vsub.s32 %v2104, %v2106
    %v2108 = vrot.slane %v2094, %v2107
    %v2109 = vcombine.high %v2101, %v2101
    %v2114 = vcombine.high %v2092, %v2092
    %v2116 = vunpack.c.l.s4 1983009808
    %v2117 = vunpack.c.0.s8 %v2116
    %v2118 = vlaneseq
    %v2119 = vshrl.u32 %v2118, 7
    %v2120 = vsub.s32 %v2117, %v2119
    %v2121 = vrot.slane %v2092, %v2120
    %v2123 = vunpack.c.l.s4 1983009808
    %v2124 = vunpack.c.0.s8 %v2123
    %v2125 = vlaneseq
    %v2126 = vshrl.u32 %v2125, 7
    %v2127 = vsub.s32 %v2124, %v2126
    %v2128 = vrot.slane %v2114, %v2127
    %v2129 = vcombine.high %v2121, %v2121
    %v2133 = vsel %vm129, %v2101, %v2121
    %v2134 = vsel %vm130, %v2109, %v2129
    %v2135 = vsel %vm131, %v2108, %v2128
    %v2136 = vpack.c.bf16 %v2087, %v2087
    %2137 = vmatprep.subr.bf16.mxu0 %v278
    %2138 = vmatpush1.bf16.msra.mxu0 %v277
    %2139 = vmatprep.subr.bf16.mxu0 %v281
    %2140 = vmatpush1.bf16.msra.mxu0 %v280
    %2141 = vmatprep.subr.bf16.mxu0 %v284
    %2142 = vmatpush1.bf16.msra.mxu0 %v283
    %2143 = vmatprep.subr.bf16.mxu0 %v287
    %2144 = vmatpush1.bf16.msra.mxu0 %v286
    %2145 = vmatprep.subr.bf16.mxu0 %v290
    %2146 = vmatpush1.bf16.msra.mxu0 %v289
    %2147 = vmatprep.subr.bf16.mxu0 %v293
    %2148 = vmatpush1.bf16.msra.mxu0 %v292
    %2149 = vmatprep.subr.bf16.mxu0 %v296
    %2150 = vmatpush1.bf16.msra.mxu0 %v295
    %2151 = vmatprep.subr.bf16.mxu0 %v299
    %2152 = vmatpush1.bf16.msra.mxu0 %v298
    %2153 = vmatprep.subr.bf16.mxu0 0
    %2154 = vmatpush1.bf16.msra.mxu0 0
    %2155 = vmatprep.subr.bf16.mxu0 0
    %2156 = vmatpush1.bf16.msra.mxu0 0
    %2157 = vmatprep.subr.bf16.mxu0 0
    %2158 = vmatpush1.bf16.msra.mxu0 0
    %2159 = vmatprep.subr.bf16.mxu0 0
    %2160 = vmatpush1.bf16.msra.mxu0 0
    %2161 = vmatprep.subr.bf16.mxu0 0
    %2162 = vmatpush1.bf16.msra.mxu0 0
    %2163 = vmatprep.subr.bf16.mxu0 0
    %2164 = vmatpush1.bf16.msra.mxu0 0
    %2165 = vmatprep.subr.bf16.mxu0 0
    %2166 = vmatpush1.bf16.msra.mxu0 0
    %2167 = vmatprep.subr.bf16.mxu0 0
    %2168 = vmatpush1.bf16.msra.mxu0 0
    %2169 = vmatprep.mubr.bf16.mxu0 0
    %2170 = vmatmul.mubr.bf16.gmra.mrb[0].mxu0 %v2136
    %v2171 = vpop.f32.mrb[0].mxu0
    %v2172 = vadd.f32 %v185, %v2171
    %v2173 = vpop.f32.mrb[0].mxu0
    %v2174 = vadd.f32 %v189, %v2173
    %v2175 = vpop.f32.mrb[0].mxu0
    %v2176 = vpop.f32.mrb[0].mxu0
    %2177 = vdwg.mxu0
    %2178 = vmatprep.subr.bf16.mxu0 0
    %2179 = vmatpush1.bf16.msra.mxu0 %v279
    %2180 = vmatprep.subr.bf16.mxu0 0
    %2181 = vmatpush1.bf16.msra.mxu0 %v282
    %2182 = vmatprep.subr.bf16.mxu0 0
    %2183 = vmatpush1.bf16.msra.mxu0 %v285
    %2184 = vmatprep.subr.bf16.mxu0 0
    %2185 = vmatpush1.bf16.msra.mxu0 %v288
    %2186 = vmatprep.subr.bf16.mxu0 0
    %2187 = vmatpush1.bf16.msra.mxu0 %v291
    %2188 = vmatprep.subr.bf16.mxu0 0
    %2189 = vmatpush1.bf16.msra.mxu0 %v294
    %2190 = vmatprep.subr.bf16.mxu0 0
    %2191 = vmatpush1.bf16.msra.mxu0 %v297
    %2192 = vmatprep.subr.bf16.mxu0 0
    %2193 = vmatpush1.bf16.msra.mxu0 %v300
    %2194 = vmatprep.subr.bf16.mxu0 0
    %2195 = vmatpush1.bf16.msra.mxu0 0
    %2196 = vmatprep.subr.bf16.mxu0 0
    %2197 = vmatpush1.bf16.msra.mxu0 0
    %2198 = vmatprep.subr.bf16.mxu0 0
    %2199 = vmatpush1.bf16.msra.mxu0 0
    %2200 = vmatprep.subr.bf16.mxu0 0
    %2201 = vmatpush1.bf16.msra.mxu0 0
    %2202 = vmatprep.subr.bf16.mxu0 0
    %2203 = vmatpush1.bf16.msra.mxu0 0
    %2204 = vmatprep.subr.bf16.mxu0 0
    %2205 = vmatpush1.bf16.msra.mxu0 0
    %2206 = vmatprep.subr.bf16.mxu0 0
    %2207 = vmatpush1.bf16.msra.mxu0 0
    %2208 = vmatprep.subr.bf16.mxu0 0
    %2209 = vmatpush1.bf16.msra.mxu0 0
    %2210 = vmatprep.mubr.bf16.mxu0 0
    %2211 = vmatmul.mubr.bf16.gmra.mrb[0].mxu0 %v2136
    %v2212 = vpop.f32.mrb[0].mxu0
    %v2213 = vadd.f32 %v193, %v2212
    %v2214 = vpop.f32.mrb[0].mxu0
    %v2215 = vpop.f32.mrb[0].mxu0
    %v2216 = vpop.f32.mrb[0].mxu0
    %2217 = vdwg.mxu0
    %v2218 = vadd.f32 %v2133, %v2172
    %v2219 = vadd.f32 %v2134, %v2174
    %v2220 = vsub.f32 0.0, %v2218
    %v2221 = vsub.f32 0.0, %v2219
    %v2222 = vmul.f32 %v2220, 1.442695
    %v2223 = vpow.pop %v2222
    %v2224 = vmul.f32 %v2221, 1.442695
    %v2225 = vpow.pop %v2224
    %v2226 = vadd.f32 %v2223, 1.0
    %v2227 = vadd.f32 %v2225, 1.0
    %v2228 = vrcp.pop %v2226
    %v2229 = vmul.f32 1.0, %v2228
    %v2230 = vrcp.pop %v2227
    %v2231 = vmul.f32 1.0, %v2230
    %v2232 = vmul.f32 %v2229, %v2213
    %v2233 = vadd.f32 %v2135, %v2232
    %v2234 = vtanh.pop %v2233
    %v2235 = vsub.f32 1.0, %v2231
    %v2236 = vmul.f32 %v2235, %v2234
    %v2237 = vmul.f32 %v2231, %v2087
    %v2238 = vadd.f32 %v2236, %v2237
    %v2239 = vadd.f32 %v2088, %v2238
    %s2240 = scalar_lea.vmem %s0, 78
    %v2241 = vld [vmem:[%s2240] sm:$0x3f]
    %s2242 = scalar_lea.vmem %s46, 12
    %v2243 = vld [vmem:[%s2242] sm:$0x3f]
    %v2245 = vcombine.high %v2241, %v2241
    %v2247 = vunpack.c.l.s4 1983009808
    %v2248 = vunpack.c.0.s8 %v2247
    %v2249 = vlaneseq
    %v2250 = vshrl.u32 %v2249, 7
    %v2251 = vsub.s32 %v2248, %v2250
    %v2252 = vrot.slane %v2241, %v2251
    %v2254 = vunpack.c.l.s4 1983009808
    %v2255 = vunpack.c.0.s8 %v2254
    %v2256 = vlaneseq
    %v2257 = vshrl.u32 %v2256, 7
    %v2258 = vsub.s32 %v2255, %v2257
    %v2259 = vrot.slane %v2245, %v2258
    %v2260 = vcombine.high %v2252, %v2252
    %v2265 = vcombine.high %v2243, %v2243
    %v2267 = vunpack.c.l.s4 1983009808
    %v2268 = vunpack.c.0.s8 %v2267
    %v2269 = vlaneseq
    %v2270 = vshrl.u32 %v2269, 7
    %v2271 = vsub.s32 %v2268, %v2270
    %v2272 = vrot.slane %v2243, %v2271
    %v2274 = vunpack.c.l.s4 1983009808
    %v2275 = vunpack.c.0.s8 %v2274
    %v2276 = vlaneseq
    %v2277 = vshrl.u32 %v2276, 7
    %v2278 = vsub.s32 %v2275, %v2277
    %v2279 = vrot.slane %v2265, %v2278
    %v2280 = vcombine.high %v2272, %v2272
    %v2284 = vsel %vm129, %v2252, %v2272
    %v2285 = vsel %vm130, %v2260, %v2280
    %v2286 = vsel %vm131, %v2259, %v2279
    %v2287 = vpack.c.bf16 %v2238, %v2238
    %2288 = vmatprep.subr.bf16.mxu0 %v278
    %2289 = vmatpush1.bf16.msra.mxu0 %v277
    %2290 = vmatprep.subr.bf16.mxu0 %v281
    %2291 = vmatpush1.bf16.msra.mxu0 %v280
    %2292 = vmatprep.subr.bf16.mxu0 %v284
    %2293 = vmatpush1.bf16.msra.mxu0 %v283
    %2294 = vmatprep.subr.bf16.mxu0 %v287
    %2295 = vmatpush1.bf16.msra.mxu0 %v286
    %2296 = vmatprep.subr.bf16.mxu0 %v290
    %2297 = vmatpush1.bf16.msra.mxu0 %v289
    %2298 = vmatprep.subr.bf16.mxu0 %v293
    %2299 = vmatpush1.bf16.msra.mxu0 %v292
    %2300 = vmatprep.subr.bf16.mxu0 %v296
    %2301 = vmatpush1.bf16.msra.mxu0 %v295
    %2302 = vmatprep.subr.bf16.mxu0 %v299
    %2303 = vmatpush1.bf16.msra.mxu0 %v298
    %2304 = vmatprep.subr.bf16.mxu0 0
    %2305 = vmatpush1.bf16.msra.mxu0 0
    %2306 = vmatprep.subr.bf16.mxu0 0
    %2307 = vmatpush1.bf16.msra.mxu0 0
    %2308 = vmatprep.subr.bf16.mxu0 0
    %2309 = vmatpush1.bf16.msra.mxu0 0
    %2310 = vmatprep.subr.bf16.mxu0 0
    %2311 = vmatpush1.bf16.msra.mxu0 0
    %2312 = vmatprep.subr.bf16.mxu0 0
    %2313 = vmatpush1.bf16.msra.mxu0 0
    %2314 = vmatprep.subr.bf16.mxu0 0
    %2315 = vmatpush1.bf16.msra.mxu0 0
    %2316 = vmatprep.subr.bf16.mxu0 0
    %2317 = vmatpush1.bf16.msra.mxu0 0
    %2318 = vmatprep.subr.bf16.mxu0 0
    %2319 = vmatpush1.bf16.msra.mxu0 0
    %2320 = vmatprep.mubr.bf16.mxu0 0
    %2321 = vmatmul.mubr.bf16.gmra.mrb[0].mxu0 %v2287
    %v2322 = vpop.f32.mrb[0].mxu0
    %v2323 = vadd.f32 %v185, %v2322
    %v2324 = vpop.f32.mrb[0].mxu0
    %v2325 = vadd.f32 %v189, %v2324
    %v2326 = vpop.f32.mrb[0].mxu0
    %v2327 = vpop.f32.mrb[0].mxu0
    %2328 = vdwg.mxu0
    %2329 = vmatprep.subr.bf16.mxu0 0
    %2330 = vmatpush1.bf16.msra.mxu0 %v279
    %2331 = vmatprep.subr.bf16.mxu0 0
    %2332 = vmatpush1.bf16.msra.mxu0 %v282
    %2333 = vmatprep.subr.bf16.mxu0 0
    %2334 = vmatpush1.bf16.msra.mxu0 %v285
    %2335 = vmatprep.subr.bf16.mxu0 0
    %2336 = vmatpush1.bf16.msra.mxu0 %v288
    %2337 = vmatprep.subr.bf16.mxu0 0
    %2338 = vmatpush1.bf16.msra.mxu0 %v291
    %2339 = vmatprep.subr.bf16.mxu0 0
    %2340 = vmatpush1.bf16.msra.mxu0 %v294
    %2341 = vmatprep.subr.bf16.mxu0 0
    %2342 = vmatpush1.bf16.msra.mxu0 %v297
    %2343 = vmatprep.subr.bf16.mxu0 0
    %2344 = vmatpush1.bf16.msra.mxu0 %v300
    %2345 = vmatprep.subr.bf16.mxu0 0
    %2346 = vmatpush1.bf16.msra.mxu0 0
    %2347 = vmatprep.subr.bf16.mxu0 0
    %2348 = vmatpush1.bf16.msra.mxu0 0
    %2349 = vmatprep.subr.bf16.mxu0 0
    %2350 = vmatpush1.bf16.msra.mxu0 0
    %2351 = vmatprep.subr.bf16.mxu0 0
    %2352 = vmatpush1.bf16.msra.mxu0 0
    %2353 = vmatprep.subr.bf16.mxu0 0
    %2354 = vmatpush1.bf16.msra.mxu0 0
    %2355 = vmatprep.subr.bf16.mxu0 0
    %2356 = vmatpush1.bf16.msra.mxu0 0
    %2357 = vmatprep.subr.bf16.mxu0 0
    %2358 = vmatpush1.bf16.msra.mxu0 0
    %2359 = vmatprep.subr.bf16.mxu0 0
    %2360 = vmatpush1.bf16.msra.mxu0 0
    %2361 = vmatprep.mubr.bf16.mxu0 0
    %2362 = vmatmul.mubr.bf16.gmra.mrb[0].mxu0 %v2287
    %v2363 = vpop.f32.mrb[0].mxu0
    %v2364 = vadd.f32 %v193, %v2363
    %v2365 = vpop.f32.mrb[0].mxu0
    %v2366 = vpop.f32.mrb[0].mxu0
    %v2367 = vpop.f32.mrb[0].mxu0
    %2368 = vdwg.mxu0
    %v2369 = vadd.f32 %v2284, %v2323
    %v2370 = vadd.f32 %v2285, %v2325
    %v2371 = vsub.f32 0.0, %v2369
    %v2372 = vsub.f32 0.0, %v2370
    %v2373 = vmul.f32 %v2371, 1.442695
    %v2374 = vpow.pop %v2373
    %v2375 = vmul.f32 %v2372, 1.442695
    %v2376 = vpow.pop %v2375
    %v2377 = vadd.f32 %v2374, 1.0
    %v2378 = vadd.f32 %v2376, 1.0
    %v2379 = vrcp.pop %v2377
    %v2380 = vmul.f32 1.0, %v2379
    %v2381 = vrcp.pop %v2378
    %v2382 = vmul.f32 1.0, %v2381
    %v2383 = vmul.f32 %v2380, %v2364
    %v2384 = vadd.f32 %v2286, %v2383
    %v2385 = vtanh.pop %v2384
    %v2386 = vsub.f32 1.0, %v2382
    %v2387 = vmul.f32 %v2386, %v2385
    %v2388 = vmul.f32 %v2382, %v2238
    %v2389 = vadd.f32 %v2387, %v2388
    %v2390 = vadd.f32 %v2239, %v2389
    %s2391 = scalar_lea.vmem %s0, 84
    %v2392 = vld [vmem:[%s2391] sm:$0x3f]
    %s2393 = scalar_lea.vmem %s46, 6
    %v2394 = vld [vmem:[%s2393] sm:$0x3f]
    %v2396 = vcombine.high %v2392, %v2392
    %v2398 = vunpack.c.l.s4 1983009808
    %v2399 = vunpack.c.0.s8 %v2398
    %v2400 = vlaneseq
    %v2401 = vshrl.u32 %v2400, 7
    %v2402 = vsub.s32 %v2399, %v2401
    %v2403 = vrot.slane %v2392, %v2402
    %v2405 = vunpack.c.l.s4 1983009808
    %v2406 = vunpack.c.0.s8 %v2405
    %v2407 = vlaneseq
    %v2408 = vshrl.u32 %v2407, 7
    %v2409 = vsub.s32 %v2406, %v2408
    %v2410 = vrot.slane %v2396, %v2409
    %v2411 = vcombine.high %v2403, %v2403
    %v2416 = vcombine.high %v2394, %v2394
    %v2418 = vunpack.c.l.s4 1983009808
    %v2419 = vunpack.c.0.s8 %v2418
    %v2420 = vlaneseq
    %v2421 = vshrl.u32 %v2420, 7
    %v2422 = vsub.s32 %v2419, %v2421
    %v2423 = vrot.slane %v2394, %v2422
    %v2425 = vunpack.c.l.s4 1983009808
    %v2426 = vunpack.c.0.s8 %v2425
    %v2427 = vlaneseq
    %v2428 = vshrl.u32 %v2427, 7
    %v2429 = vsub.s32 %v2426, %v2428
    %v2430 = vrot.slane %v2416, %v2429
    %v2431 = vcombine.high %v2423, %v2423
    %v2435 = vsel %vm129, %v2403, %v2423
    %v2436 = vsel %vm130, %v2411, %v2431
    %v2437 = vsel %vm131, %v2410, %v2430
    %v2438 = vpack.c.bf16 %v2389, %v2389
    %2439 = vmatprep.subr.bf16.mxu0 %v278
    %2440 = vmatpush1.bf16.msra.mxu0 %v277
    %2441 = vmatprep.subr.bf16.mxu0 %v281
    %2442 = vmatpush1.bf16.msra.mxu0 %v280
    %2443 = vmatprep.subr.bf16.mxu0 %v284
    %2444 = vmatpush1.bf16.msra.mxu0 %v283
    %2445 = vmatprep.subr.bf16.mxu0 %v287
    %2446 = vmatpush1.bf16.msra.mxu0 %v286
    %2447 = vmatprep.subr.bf16.mxu0 %v290
    %2448 = vmatpush1.bf16.msra.mxu0 %v289
    %2449 = vmatprep.subr.bf16.mxu0 %v293
    %2450 = vmatpush1.bf16.msra.mxu0 %v292
    %2451 = vmatprep.subr.bf16.mxu0 %v296
    %2452 = vmatpush1.bf16.msra.mxu0 %v295
    %2453 = vmatprep.subr.bf16.mxu0 %v299
    %2454 = vmatpush1.bf16.msra.mxu0 %v298
    %2455 = vmatprep.subr.bf16.mxu0 0
    %2456 = vmatpush1.bf16.msra.mxu0 0
    %2457 = vmatprep.subr.bf16.mxu0 0
    %2458 = vmatpush1.bf16.msra.mxu0 0
    %2459 = vmatprep.subr.bf16.mxu0 0
    %2460 = vmatpush1.bf16.msra.mxu0 0
    %2461 = vmatprep.subr.bf16.mxu0 0
    %2462 = vmatpush1.bf16.msra.mxu0 0
    %2463 = vmatprep.subr.bf16.mxu0 0
    %2464 = vmatpush1.bf16.msra.mxu0 0
    %2465 = vmatprep.subr.bf16.mxu0 0
    %2466 = vmatpush1.bf16.msra.mxu0 0
    %2467 = vmatprep.subr.bf16.mxu0 0
    %2468 = vmatpush1.bf16.msra.mxu0 0
    %2469 = vmatprep.subr.bf16.mxu0 0
    %2470 = vmatpush1.bf16.msra.mxu0 0
    %2471 = vmatprep.mubr.bf16.mxu0 0
    %2472 = vmatmul.mubr.bf16.gmra.mrb[0].mxu0 %v2438
    %v2473 = vpop.f32.mrb[0].mxu0
    %v2474 = vadd.f32 %v185, %v2473
    %v2475 = vpop.f32.mrb[0].mxu0
    %v2476 = vadd.f32 %v189, %v2475
    %v2477 = vpop.f32.mrb[0].mxu0
    %v2478 = vpop.f32.mrb[0].mxu0
    %2479 = vdwg.mxu0
    %2480 = vmatprep.subr.bf16.mxu0 0
    %2481 = vmatpush1.bf16.msra.mxu0 %v279
    %2482 = vmatprep.subr.bf16.mxu0 0
    %2483 = vmatpush1.bf16.msra.mxu0 %v282
    %2484 = vmatprep.subr.bf16.mxu0 0
    %2485 = vmatpush1.bf16.msra.mxu0 %v285
    %2486 = vmatprep.subr.bf16.mxu0 0
    %2487 = vmatpush1.bf16.msra.mxu0 %v288
    %2488 = vmatprep.subr.bf16.mxu0 0
    %2489 = vmatpush1.bf16.msra.mxu0 %v291
    %2490 = vmatprep.subr.bf16.mxu0 0
    %2491 = vmatpush1.bf16.msra.mxu0 %v294
    %2492 = vmatprep.subr.bf16.mxu0 0
    %2493 = vmatpush1.bf16.msra.mxu0 %v297
    %2494 = vmatprep.subr.bf16.mxu0 0
    %2495 = vmatpush1.bf16.msra.mxu0 %v300
    %2496 = vmatprep.subr.bf16.mxu0 0
    %2497 = vmatpush1.bf16.msra.mxu0 0
    %2498 = vmatprep.subr.bf16.mxu0 0
    %2499 = vmatpush1.bf16.msra.mxu0 0
    %2500 = vmatprep.subr.bf16.mxu0 0
    %2501 = vmatpush1.bf16.msra.mxu0 0
    %2502 = vmatprep.subr.bf16.mxu0 0
    %2503 = vmatpush1.bf16.msra.mxu0 0
    %2504 = vmatprep.subr.bf16.mxu0 0
    %2505 = vmatpush1.bf16.msra.mxu0 0
    %2506 = vmatprep.subr.bf16.mxu0 0
    %2507 = vmatpush1.bf16.msra.mxu0 0
    %2508 = vmatprep.subr.bf16.mxu0 0
    %2509 = vmatpush1.bf16.msra.mxu0 0
    %2510 = vmatprep.subr.bf16.mxu0 0
    %2511 = vmatpush1.bf16.msra.mxu0 0
    %2512 = vmatprep.mubr.bf16.mxu0 0
    %2513 = vmatmul.mubr.bf16.gmra.mrb[0].mxu0 %v2438
    %v2514 = vpop.f32.mrb[0].mxu0
    %v2515 = vadd.f32 %v193, %v2514
    %v2516 = vpop.f32.mrb[0].mxu0
    %v2517 = vpop.f32.mrb[0].mxu0
    %v2518 = vpop.f32.mrb[0].mxu0
    %2519 = vdwg.mxu0
    %v2520 = vadd.f32 %v2435, %v2474
    %v2521 = vadd.f32 %v2436, %v2476
    %v2522 = vsub.f32 0.0, %v2520
    %v2523 = vsub.f32 0.0, %v2521
    %v2524 = vmul.f32 %v2522, 1.442695
    %v2525 = vpow.pop %v2524
    %v2526 = vmul.f32 %v2523, 1.442695
    %v2527 = vpow.pop %v2526
    %v2528 = vadd.f32 %v2525, 1.0
    %v2529 = vadd.f32 %v2527, 1.0
    %v2530 = vrcp.pop %v2528
    %v2531 = vmul.f32 1.0, %v2530
    %v2532 = vrcp.pop %v2529
    %v2533 = vmul.f32 1.0, %v2532
    %v2534 = vmul.f32 %v2531, %v2515
    %v2535 = vadd.f32 %v2437, %v2534
    %v2536 = vtanh.pop %v2535
    %v2537 = vsub.f32 1.0, %v2533
    %v2538 = vmul.f32 %v2537, %v2536
    %v2539 = vmul.f32 %v2533, %v2389
    %v2540 = vadd.f32 %v2538, %v2539
    %v2541 = vadd.f32 %v2390, %v2540
    %s2542 = scalar_lea.vmem %s0, 90
    %v2543 = vld [vmem:[%s2542] sm:$0x3f]
    %v2544 = vld [vmem:[%s46] sm:$0x3f]
    %v2546 = vcombine.high %v2543, %v2543
    %v2548 = vunpack.c.l.s4 1983009808
    %v2549 = vunpack.c.0.s8 %v2548
    %v2550 = vlaneseq
    %v2551 = vshrl.u32 %v2550, 7
    %v2552 = vsub.s32 %v2549, %v2551
    %v2553 = vrot.slane %v2543, %v2552
    %v2555 = vunpack.c.l.s4 1983009808
    %v2556 = vunpack.c.0.s8 %v2555
    %v2557 = vlaneseq
    %v2558 = vshrl.u32 %v2557, 7
    %v2559 = vsub.s32 %v2556, %v2558
    %v2560 = vrot.slane %v2546, %v2559
    %v2561 = vcombine.high %v2553, %v2553
    %v2566 = vcombine.high %v2544, %v2544
    %v2568 = vunpack.c.l.s4 1983009808
    %v2569 = vunpack.c.0.s8 %v2568
    %v2570 = vlaneseq
    %v2571 = vshrl.u32 %v2570, 7
    %v2572 = vsub.s32 %v2569, %v2571
    %v2573 = vrot.slane %v2544, %v2572
    %v2575 = vunpack.c.l.s4 1983009808
    %v2576 = vunpack.c.0.s8 %v2575
    %v2577 = vlaneseq
    %v2578 = vshrl.u32 %v2577, 7
    %v2579 = vsub.s32 %v2576, %v2578
    %v2580 = vrot.slane %v2566, %v2579
    %v2581 = vcombine.high %v2573, %v2573
    %v2585 = vsel %vm129, %v2553, %v2573
    %v2586 = vsel %vm130, %v2561, %v2581
    %v2587 = vsel %vm131, %v2560, %v2580
    %v2588 = vpack.c.bf16 %v2540, %v2540
    %2589 = vmatprep.subr.bf16.mxu0 %v278
    %2590 = vmatpush1.bf16.msra.mxu0 %v277
    %2591 = vmatprep.subr.bf16.mxu0 %v281
    %2592 = vmatpush1.bf16.msra.mxu0 %v280
    %2593 = vmatprep.subr.bf16.mxu0 %v284
    %2594 = vmatpush1.bf16.msra.mxu0 %v283
    %2595 = vmatprep.subr.bf16.mxu0 %v287
    %2596 = vmatpush1.bf16.msra.mxu0 %v286
    %2597 = vmatprep.subr.bf16.mxu0 %v290
    %2598 = vmatpush1.bf16.msra.mxu0 %v289
    %2599 = vmatprep.subr.bf16.mxu0 %v293
    %2600 = vmatpush1.bf16.msra.mxu0 %v292
    %2601 = vmatprep.subr.bf16.mxu0 %v296
    %2602 = vmatpush1.bf16.msra.mxu0 %v295
    %2603 = vmatprep.subr.bf16.mxu0 %v299
    %2604 = vmatpush1.bf16.msra.mxu0 %v298
    %2605 = vmatprep.subr.bf16.mxu0 0
    %2606 = vmatpush1.bf16.msra.mxu0 0
    %2607 = vmatprep.subr.bf16.mxu0 0
    %2608 = vmatpush1.bf16.msra.mxu0 0
    %2609 = vmatprep.subr.bf16.mxu0 0
    %2610 = vmatpush1.bf16.msra.mxu0 0
    %2611 = vmatprep.subr.bf16.mxu0 0
    %2612 = vmatpush1.bf16.msra.mxu0 0
    %2613 = vmatprep.subr.bf16.mxu0 0
    %2614 = vmatpush1.bf16.msra.mxu0 0
    %2615 = vmatprep.subr.bf16.mxu0 0
    %2616 = vmatpush1.bf16.msra.mxu0 0
    %2617 = vmatprep.subr.bf16.mxu0 0
    %2618 = vmatpush1.bf16.msra.mxu0 0
    %2619 = vmatprep.subr.bf16.mxu0 0
    %2620 = vmatpush1.bf16.msra.mxu0 0
    %2621 = vmatprep.mubr.bf16.mxu0 0
    %2622 = vmatmul.mubr.bf16.gmra.mrb[0].mxu0 %v2588
    %v2623 = vpop.f32.mrb[0].mxu0
    %v2624 = vadd.f32 %v185, %v2623
    %v2625 = vpop.f32.mrb[0].mxu0
    %v2626 = vadd.f32 %v189, %v2625
    %v2627 = vpop.f32.mrb[0].mxu0
    %v2628 = vpop.f32.mrb[0].mxu0
    %2629 = vdwg.mxu0
    %2630 = vmatprep.subr.bf16.mxu0 0
    %2631 = vmatpush1.bf16.msra.mxu0 %v279
    %2632 = vmatprep.subr.bf16.mxu0 0
    %2633 = vmatpush1.bf16.msra.mxu0 %v282
    %2634 = vmatprep.subr.bf16.mxu0 0
    %2635 = vmatpush1.bf16.msra.mxu0 %v285
    %2636 = vmatprep.subr.bf16.mxu0 0
    %2637 = vmatpush1.bf16.msra.mxu0 %v288
    %2638 = vmatprep.subr.bf16.mxu0 0
    %2639 = vmatpush1.bf16.msra.mxu0 %v291
    %2640 = vmatprep.subr.bf16.mxu0 0
    %2641 = vmatpush1.bf16.msra.mxu0 %v294
    %2642 = vmatprep.subr.bf16.mxu0 0
    %2643 = vmatpush1.bf16.msra.mxu0 %v297
    %2644 = vmatprep.subr.bf16.mxu0 0
    %2645 = vmatpush1.bf16.msra.mxu0 %v300
    %2646 = vmatprep.subr.bf16.mxu0 0
    %2647 = vmatpush1.bf16.msra.mxu0 0
    %2648 = vmatprep.subr.bf16.mxu0 0
    %2649 = vmatpush1.bf16.msra.mxu0 0
    %2650 = vmatprep.subr.bf16.mxu0 0
    %2651 = vmatpush1.bf16.msra.mxu0 0
    %2652 = vmatprep.subr.bf16.mxu0 0
    %2653 = vmatpush1.bf16.msra.mxu0 0
    %2654 = vmatprep.subr.bf16.mxu0 0
    %2655 = vmatpush1.bf16.msra.mxu0 0
    %2656 = vmatprep.subr.bf16.mxu0 0
    %2657 = vmatpush1.bf16.msra.mxu0 0
    %2658 = vmatprep.subr.bf16.mxu0 0
    %2659 = vmatpush1.bf16.msra.mxu0 0
    %2660 = vmatprep.subr.bf16.mxu0 0
    %2661 = vmatpush1.bf16.msra.mxu0 0
    %2662 = vmatprep.mubr.bf16.mxu0 0
    %2663 = vmatmul.mubr.bf16.gmra.mrb[0].mxu0 %v2588
    %v2664 = vpop.f32.mrb[0].mxu0
    %v2665 = vadd.f32 %v193, %v2664
    %v2666 = vpop.f32.mrb[0].mxu0
    %v2667 = vpop.f32.mrb[0].mxu0
    %v2668 = vpop.f32.mrb[0].mxu0
    %2669 = vdwg.mxu0
    %v2670 = vadd.f32 %v2585, %v2624
    %v2671 = vadd.f32 %v2586, %v2626
    %v2672 = vsub.f32 0.0, %v2670
    %v2673 = vsub.f32 0.0, %v2671
    %v2674 = vmul.f32 %v2672, 1.442695
    %v2675 = vpow.pop %v2674
    %v2676 = vmul.f32 %v2673, 1.442695
    %v2677 = vpow.pop %v2676
    %v2678 = vadd.f32 %v2675, 1.0
    %v2679 = vadd.f32 %v2677, 1.0
    %v2680 = vrcp.pop %v2678
    %v2681 = vmul.f32 1.0, %v2680
    %v2682 = vrcp.pop %v2679
    %v2683 = vmul.f32 1.0, %v2682
    %v2684 = vmul.f32 %v2681, %v2665
    %v2685 = vadd.f32 %v2587, %v2684
    %v2686 = vtanh.pop %v2685
    %v2687 = vsub.f32 1.0, %v2683
    %v2688 = vmul.f32 %v2687, %v2686
    %v2689 = vmul.f32 %v2683, %v2540
    %v2690 = vadd.f32 %v2688, %v2689
    %v2691 = vadd.f32 %v2541, %v2690
    %2692 = vst [vmem:[#allocation2] sm:$0x3] %v2690
    %2693 = vst [vmem:[#allocation3] sm:$0x3] %v2691
    // Predicated region
    $region30: #{bigru_forward.7} parent=1 // pred_check
      %p2694 = pneg %p50
    $region31: #{bigru_forward.7} parent=1 // pred_check_branch
      %2696 = sbr.rel (%p2694) target = $region33
    $region32: #{bigru_forward.7} parent=1 // pred_region
      %v2697 = vld [vmem:[#allocation3] sm:$0x3]
      %v2698 = vmul.f32 %v2697, 0.0625
      %v2699 = vpack.c.bf16 %v2698, %v2698
      %v2700 = vld [vmem:[%s4] sm:$0xf]
      %v2701 = vld [vmem:[%s4 + $0x4] sm:$0xf]
      %v2702 = vld [vmem:[%s4 + $0x8] sm:$0xf]
      %v2703 = vld [vmem:[%s4 + $0xc] sm:$0xf]
      %v2704 = vld [vmem:[%s4 + $0x10] sm:$0xf]
      %v2705 = vld [vmem:[%s4 + $0x14] sm:$0xf]
      %v2706 = vld [vmem:[%s4 + $0x18] sm:$0xf]
      %v2707 = vld [vmem:[%s4 + $0x1c] sm:$0xf]
      %v2708 = vld [vmem:[%s4 + $0x20] sm:$0xf]
      %v2709 = vld [vmem:[%s4 + $0x24] sm:$0xf]
      %v2710 = vld [vmem:[%s4 + $0x28] sm:$0xf]
      %v2711 = vld [vmem:[%s4 + $0x2c] sm:$0xf]
      %v2712 = vld [vmem:[%s4 + $0x30] sm:$0xf]
      %v2713 = vld [vmem:[%s4 + $0x34] sm:$0xf]
      %v2714 = vld [vmem:[%s4 + $0x38] sm:$0xf]
      %v2715 = vld [vmem:[%s4 + $0x3c] sm:$0xf]
      %v2716 = vld [vmem:[%s5] sm:$0x1]
      %v2718 = vlaneseq
      %v2719 = vshrl.u32 %v2718, 7
      %v2720 = vsub.s32 0, %v2719
      %v2721 = vrot.slane %v2716, %v2720
      %v2739 = vunpack.c.l.b16 %v2700
      %v2740 = vunpack.c.l.b16 %v2701
      %v2741 = vunpack.c.l.b16 %v2702
      %v2742 = vunpack.c.l.b16 %v2703
      %v2743 = vunpack.c.l.b16 %v2704
      %v2744 = vunpack.c.l.b16 %v2705
      %v2745 = vunpack.c.l.b16 %v2706
      %v2746 = vunpack.c.l.b16 %v2707
      %v2747 = vunpack.c.l.b16 %v2708
      %v2748 = vunpack.c.l.b16 %v2709
      %v2749 = vunpack.c.l.b16 %v2710
      %v2750 = vunpack.c.l.b16 %v2711
      %v2751 = vunpack.c.l.b16 %v2712
      %v2752 = vunpack.c.l.b16 %v2713
      %v2753 = vunpack.c.l.b16 %v2714
      %v2754 = vunpack.c.l.b16 %v2715
      %v2755 = vpack.c.b16 %v2740, %v2739
      %v2756 = vpack.c.b16 %v2742, %v2741
      %v2757 = vpack.c.b16 %v2744, %v2743
      %v2758 = vpack.c.b16 %v2746, %v2745
      %v2759 = vpack.c.b16 %v2748, %v2747
      %v2760 = vpack.c.b16 %v2750, %v2749
      %v2761 = vpack.c.b16 %v2752, %v2751
      %v2762 = vpack.c.b16 %v2754, %v2753
      %2771 = vmatprep.subr.bf16.mxu0 0
      %2772 = vmatpush1.bf16.msra.mxu0 %v2755
      %2773 = vmatprep.subr.bf16.mxu0 0
      %2774 = vmatpush1.bf16.msra.mxu0 %v2756
      %2775 = vmatprep.subr.bf16.mxu0 0
      %2776 = vmatpush1.bf16.msra.mxu0 %v2757
      %2777 = vmatprep.subr.bf16.mxu0 0
      %2778 = vmatpush1.bf16.msra.mxu0 %v2758
      %2779 = vmatprep.subr.bf16.mxu0 0
      %2780 = vmatpush1.bf16.msra.mxu0 %v2759
      %2781 = vmatprep.subr.bf16.mxu0 0
      %2782 = vmatpush1.bf16.msra.mxu0 %v2760
      %2783 = vmatprep.subr.bf16.mxu0 0
      %2784 = vmatpush1.bf16.msra.mxu0 %v2761
      %2785 = vmatprep.subr.bf16.mxu0 0
      %2786 = vmatpush1.bf16.msra.mxu0 %v2762
      %2787 = vmatprep.subr.bf16.mxu0 0
      %2788 = vmatpush1.bf16.msra.mxu0 0
      %2789 = vmatprep.subr.bf16.mxu0 0
      %2790 = vmatpush1.bf16.msra.mxu0 0
      %2791 = vmatprep.subr.bf16.mxu0 0
      %2792 = vmatpush1.bf16.msra.mxu0 0
      %2793 = vmatprep.subr.bf16.mxu0 0
      %2794 = vmatpush1.bf16.msra.mxu0 0
      %2795 = vmatprep.subr.bf16.mxu0 0
      %2796 = vmatpush1.bf16.msra.mxu0 0
      %2797 = vmatprep.subr.bf16.mxu0 0
      %2798 = vmatpush1.bf16.msra.mxu0 0
      %2799 = vmatprep.subr.bf16.mxu0 0
      %2800 = vmatpush1.bf16.msra.mxu0 0
      %2801 = vmatprep.subr.bf16.mxu0 0
      %2802 = vmatpush1.bf16.msra.mxu0 0
      %2803 = vmatprep.mubr.bf16.mxu0 0
      %2804 = vmatmul.mubr.bf16.gmra.mrb[0].mxu0 %v2699
      %v2805 = vpop.f32.mrb[0].mxu0
      %v2806 = vadd.f32 %v2721, %v2805
      %v2807 = vpop.f32.mrb[0].mxu0
      %v2808 = vpop.f32.mrb[0].mxu0
      %v2809 = vpop.f32.mrb[0].mxu0
      %2810 = vdwg.mxu0
      %vm2811 = vcmask 9216
      %2812 = vst.msk [vmem:[#allocation4] sm:$0x3] %vm2811, %v2806
    $region33: #{bigru_forward.7} parent=1 // pred_fallthru
      _
    // Predicated region
    $region34: #{bigru_forward.7} parent=1 // pred_check
      _
    $region35: #{bigru_forward.7} parent=1 // pred_check_branch
      %2814 = sbr.rel (0) target = $region37
    $region36: #{bigru_forward.7} parent=1 // pred_region
      %s2816 = ssub.s32 32, 32
      %2817 = vsyncadd [#allocation5], %s2816
      %s2819 = sshll.u32 [#allocation4], 4
      %s2820 = int_to_ptr.vmem [resolvable:$true] %s2819
      %2822 = dma.vmem_to_hbm [thread:$0]  %s2820, 32, %s6, [#allocation5]
    $region37: #{bigru_forward.7} parent=1 // pred_fallthru
      _
    // Predicated region
    $region38: #{bigru_forward.7} parent=1 // pred_check
      _
    $region39: #{bigru_forward.7} parent=1 // pred_check_branch
      %2824 = sbr.rel (0) target = $region41
    $region40: #{bigru_forward.7} parent=1 // pred_region
      %2825 = dma.done [#allocation5], 32
    $region41: #{bigru_forward.7} parent=1 // pred_fallthru
      _
    %2826 = vsyncpa [#allocation5], 1

</llo_original>
